<compile_context>
chip_gen: v7x
topology: tpu7x:2x2x1
jax: 0.10.0
libtpu: 0.0.40
codegen_flags: <defaults>
</compile_context>

<pallas_src>
import functools

import jax
import jax.numpy as jnp
from jax import lax
from jax.experimental import pallas as pl
from jax.experimental.pallas import tpu as pltpu


def _swish(x):
    # exp -> EUP, approximate reciprocal -> EUP: keeps the divide off the VALU.
    return x * pl.reciprocal(1.0 + jnp.exp(-x), approx=True)


def _group_norm(y, gamma, beta, m_gc, m_cg, inv_n, eps=1e-5):
    """GroupNorm of one (C, HW) sample: reduce-first stats, folded affine.

    y: (C, HW) f32; gamma/beta: (C, 1); m_gc: (G, C) / m_cg: (C, G) group
    membership matrices; inv_n = 1 / (HW * channels_per_group).
    """
    stats = jnp.concatenate(
        [jnp.sum(y, axis=1, keepdims=True),
         jnp.sum(y * y, axis=1, keepdims=True)], axis=1)          # (C, 2)
    hp = lax.Precision.HIGHEST   # tiny (G,C)/(C,G) matmuls, kept exact in f32
    g = jnp.dot(m_cg,
                jnp.dot(m_gc, stats, precision=hp,
                        preferred_element_type=jnp.float32),
                precision=hp, preferred_element_type=jnp.float32) * inv_n
    mean = g[:, 0:1]
    var = jnp.maximum(g[:, 1:2] - mean * mean, 0.0)   # guard E[x^2]-m^2 cancel
    scale = gamma * lax.rsqrt(var + eps)
    bias = beta - mean * scale
    return y * scale + bias                            # 2 full-size VPU ops


def _sir_kernel(x_ref, w1t_ref, b1_ref, g1_ref, bt1_ref,
                dww_ref, dwb_ref, g2_ref, bt2_ref,
                w3t_ref, b3_ref, g3_ref, bt3_ref,
                me_gc_ref, me_cg_ref, mo_gc_ref, mo_cg_ref,
                o_ref, *, H, W, inv_n_exp, inv_n_out, is_residual,
                dw_dtype, mm_precision):
    HW = H * W
    cdt = dw_dtype   # depthwise-tap compute dtype (bf16 on v6e/v7x)

    # ---- boundary masks, shape (1, HW), shared by all taps -----------------
    pos = lax.broadcasted_iota(jnp.int32, (1, HW), 1)   # flattened h*W + w
    wc = pos % W
    w_mask_m1 = (wc <= W - 2).astype(cdt)   # valid SOURCE positions, dw = -1
    w_mask_p1 = (wc >= 1).astype(cdt)       # valid SOURCE positions, dw = +1
    h_mask = {-1: (pos >= W).astype(jnp.float32),
              1: (pos < HW - W).astype(jnp.float32)}

    x = x_ref[0].astype(jnp.float32)         # (Cin, HW)
    w1t = w1t_ref[...]                       # (Cexp, Cin)
    w3t = w3t_ref[...]                       # (Cout, Cexp)
    dww = dww_ref[...].astype(cdt)           # (Cexp, 9), col k = kh*3 + kw

    # ---- expansion: 1x1 conv (MXU, single bf16 pass) + swish + GN ----------
    h = jnp.dot(w1t, x, precision=mm_precision,
                preferred_element_type=jnp.float32) + b1_ref[...]
    h = _swish(h)
    h = _group_norm(h, g1_ref[...], bt1_ref[...],
                    me_gc_ref[...], me_cg_ref[...], inv_n_exp)

    # ---- depthwise 3x3 (stride 1, pad 1): 4 lane rolls total ---------------
    hc = h.astype(cdt)
    # Pre-rolled (and boundary-masked) sources for the three w-offsets:
    #   rolled[dw][i] = masked_src[i + dw]   (jnp.roll semantics, shift = -dw)
    rolled = {
        0: hc,
        -1: pltpu.roll(hc * w_mask_m1, shift=1, axis=1),
        1: pltpu.roll(hc * w_mask_p1, shift=HW - 1, axis=1),
    }
    acc = None
    for dh in (-1, 0, 1):
        p = None
        for dw in (-1, 0, 1):                 # 3 weighted taps, no rolls here
            k = (dh + 1) * 3 + (dw + 1)
            term = rolled[dw] * dww[:, k:k + 1]
            p = term if p is None else p + term
        if dh != 0:
            # Roll the whole row partial-sum by +/-W; per-channel weights are
            # lane-invariant so scaling-before-rolling is exact.  h_mask also
            # zeroes the roll wrap-around rows.
            p = pltpu.roll(p, shift=(-dh * W) % HW, axis=1)
            p = p.astype(jnp.float32) * h_mask[dh]
        else:
            p = p.astype(jnp.float32)
        acc = p if acc is None else acc + p
    acc = _swish(acc + dwb_ref[...])
    h2 = _group_norm(acc, g2_ref[...], bt2_ref[...],
                     me_gc_ref[...], me_cg_ref[...], inv_n_exp)

    # ---- projection: 1x1 conv + GN (+ residual) ----------------------------
    h3 = jnp.dot(w3t, h2, precision=mm_precision,
                 preferred_element_type=jnp.float32) + b3_ref[...]
    h3 = _group_norm(h3, g3_ref[...], bt3_ref[...],
                     mo_gc_ref[...], mo_cg_ref[...], inv_n_out)
    if is_residual:
        h3 = h3 + x
    o_ref[0] = h3.astype(o_ref.dtype)


def _group_membership(c, g):
    """(C, G) one-hot channel->group membership (contiguous groups)."""
    gid = jnp.arange(c) // (c // g)
    return (gid[:, None] == jnp.arange(g)[None, :]).astype(jnp.float32)


def _device_kind():
    try:
        return jax.devices()[0].device_kind.lower()
    except Exception:
        return ""


def _default_dw_dtype():
    kind = _device_kind()
    # v6e/v7x have native bf16 VPUs; v5e and older do not (casts only).
    if ("v6" in kind) or ("v7" in kind):
        return jnp.bfloat16
    return jnp.float32


def _default_vmem_limit():
    kind = _device_kind()
    if "v7" in kind:
        return 56 * 1024 * 1024     # v7x: 64 MiB physical per TC
    if any(v in kind for v in ("v4", "v5", "v6")):
        return 100 * 1024 * 1024    # 128 MiB physical
    return None                      # older / unknown: keep the default


def separable_invert_residual(x_nchw, params, *, stride=1, num_groups_norm=4,
                              dw_dtype=None, matmul_precision=None,
                              vmem_limit_bytes=None, is_residual=None):
    """Fused inverted-residual forward pass (NCHW in / NCHW out)."""
    assert stride == 1  # TODO(synk): stride=2 depthwise path not implemented.
    N, Cin, H, W = x_nchw.shape
    Cexp = params["w1"].shape[1]
    Cout = params["w3"].shape[1]
    HW = H * W
    if Cexp % num_groups_norm or Cout % num_groups_norm:
        raise ValueError("expand/out channels must be divisible by num_groups_norm")
    if is_residual is None:          # matches the PyTorch module's auto-detect
        is_residual = (Cin == Cout and stride == 1)

    auto_dtype = dw_dtype is None
    if auto_dtype:
        dw_dtype = _default_dw_dtype()
    if vmem_limit_bytes is None:
        vmem_limit_bytes = _default_vmem_limit()

    # (C, HW) in-kernel layout: NCHW flattens directly — no host transposes.
    x = x_nchw.reshape(N, Cin, HW)

    me_cg = _group_membership(Cexp, num_groups_norm)   # (Cexp, G)
    mo_cg = _group_membership(Cout, num_groups_norm)   # (Cout, G)

    def run(cdt, single_buffer_consts):
        def col(v):
            return v.reshape(-1, 1).astype(jnp.float32)

        wdt = cdt  # weights follow the compute dtype (halves weight DMA/VMEM)
        w1t = jnp.transpose(params["w1"]).astype(wdt)      # (Cexp, Cin)
        w3t = jnp.transpose(params["w3"]).astype(wdt)      # (Cout, Cexp)
        dww = params["dw_w"].reshape(Cexp, 9).astype(wdt)  # col k = kh*3 + kw

        ins = (
            x,
            w1t, col(params["b1"]), col(params["gn1_w"]), col(params["gn1_b"]),
            dww, col(params["dw_b"]), col(params["gn2_w"]), col(params["gn2_b"]),
            w3t, col(params["b3"]), col(params["gn3_w"]), col(params["gn3_b"]),
            jnp.transpose(me_cg), me_cg, jnp.transpose(mo_cg), mo_cg,
        )

        def const_spec(a):
            nd = a.ndim
            if single_buffer_consts:
                # Block index never changes -> single buffer halves the
                # constants' VMEM footprint and DMA descriptor traffic.
                return pl.BlockSpec(a.shape, lambda n, nd=nd: (0,) * nd,
                                    pipeline_mode=pl.Buffered(1))
            return pl.BlockSpec(a.shape, lambda n, nd=nd: (0,) * nd)

        in_specs = [pl.BlockSpec((1, Cin, HW), lambda n: (n, 0, 0))]
        in_specs += [const_spec(a) for a in ins[1:]]
        out_spec = pl.BlockSpec((1, Cout, HW), lambda n: (n, 0, 0))

        kernel = functools.partial(
            _sir_kernel, H=H, W=W,
            inv_n_exp=1.0 / float(HW * (Cexp // num_groups_norm)),
            inv_n_out=1.0 / float(HW * (Cout // num_groups_norm)),
            is_residual=is_residual, dw_dtype=cdt,
            mm_precision=matmul_precision)

        out = pl.pallas_call(
            kernel,
            out_shape=jax.ShapeDtypeStruct((N, Cout, HW), x.dtype),
            grid_spec=pltpu.PrefetchScalarGridSpec(
                num_scalar_prefetch=0,
                grid=(N,),                    # batch on the grid: >=2 steps so
                in_specs=in_specs,            # v7x shards across both TCs
                out_specs=out_spec),
            compiler_params=pltpu.CompilerParams(
                dimension_semantics=("parallel",),
                vmem_limit_bytes=vmem_limit_bytes),
        )(*ins)
        return jax.block_until_ready(out)

    # Try the most optimized configuration first; defensively fall back if the
    # running jax / chip rejects single-buffered specs or the bf16 path.
    candidates = [(dw_dtype, True), (dw_dtype, False)]
    if auto_dtype and dw_dtype != jnp.float32:
        candidates += [(jnp.float32, True), (jnp.float32, False)]
    out, last_err = None, None
    for cdt, single_buf in candidates:
        try:
            out = run(cdt, single_buf)
            break
        except Exception as e:   # pragma: no cover - defensive fallback
            last_err = e
    if out is None:
        raise last_err

    # (N, Cout, H*W) -> NCHW is a pure reshape (no transpose).
    return out.reshape(N, Cout, H, W)


def reference_forward(x_nchw, p, num_groups=4, is_residual=True):
    """Pure-JAX reference mirroring the PyTorch module (NCHW)."""
    def gn(y, w, b, g, eps=1e-5):
        N, C, H, W = y.shape
        yr = y.reshape(N, g, (C // g) * H * W)
        m = yr.mean(axis=2, keepdims=True)
        v = yr.var(axis=2, keepdims=True)
        yn = ((yr - m) / jnp.sqrt(v + eps)).reshape(N, C, H, W)
        return yn * w[None, :, None, None] + b[None, :, None, None]

    dn = ('NCHW', 'OIHW', 'NCHW')
    hp = lax.Precision.HIGHEST
    h = lax.conv_general_dilated(
        x_nchw, jnp.transpose(p["w1"])[:, :, None, None], (1, 1), 'VALID',
        dimension_numbers=dn, precision=hp) + p["b1"][None, :, None, None]
    h = h * jax.nn.sigmoid(h)
    h = gn(h, p["gn1_w"], p["gn1_b"], num_groups)

    cexp = h.shape[1]
    h = lax.conv_general_dilated(
        h, p["dw_w"][:, None, :, :], (1, 1), ((1, 1), (1, 1)),
        dimension_numbers=dn, feature_group_count=cexp,
        precision=hp) + p["dw_b"][None, :, None, None]
    h = h * jax.nn.sigmoid(h)
    h = gn(h, p["gn2_w"], p["gn2_b"], num_groups)

    h = lax.conv_general_dilated(
        h, jnp.transpose(p["w3"])[:, :, None, None], (1, 1), 'VALID',
        dimension_numbers=dn, precision=hp) + p["b3"][None, :, None, None]
    h = gn(h, p["gn3_w"], p["gn3_b"], num_groups)
    if is_residual:
        h = h + x_nchw
    return h


if __name__ == "__main__":
    N, Cin, H, W = 2, 4, 16, 16
    expand_factor, num_groups, stride = 3, 4, 1
    Cout = Cin
    Cexp = expand_factor * Cin

    key = jax.random.PRNGKey(0)
    ks = jax.random.split(key, 13)
    p = {
        "w1": 0.3 * jax.random.normal(ks[0], (Cin, Cexp), jnp.float32),
        "b1": 0.1 * jax.random.normal(ks[1], (Cexp,), jnp.float32),
        "gn1_w": 1.0 + 0.1 * jax.random.normal(ks[2], (Cexp,), jnp.float32),
        "gn1_b": 0.1 * jax.random.normal(ks[3], (Cexp,), jnp.float32),
        "dw_w": 0.3 * jax.random.normal(ks[4], (Cexp, 3, 3), jnp.float32),
        "dw_b": 0.1 * jax.random.normal(ks[5], (Cexp,), jnp.float32),
        "gn2_w": 1.0 + 0.1 * jax.random.normal(ks[6], (Cexp,), jnp.float32),
        "gn2_b": 0.1 * jax.random.normal(ks[7], (Cexp,), jnp.float32),
        "w3": 0.3 * jax.random.normal(ks[8], (Cexp, Cout), jnp.float32),
        "b3": 0.1 * jax.random.normal(ks[9], (Cout,), jnp.float32),
        "gn3_w": 1.0 + 0.1 * jax.random.normal(ks[10], (Cout,), jnp.float32),
        "gn3_b": 0.1 * jax.random.normal(ks[11], (Cout,), jnp.float32),
    }
    x = jax.random.normal(ks[12], (N, Cin, H, W), jnp.float32)

    out = jax.block_until_ready(
        separable_invert_residual(x, p, stride=stride,
                                  num_groups_norm=num_groups))
    ref = jax.block_until_ready(
        reference_forward(x, p, num_groups=num_groups, is_residual=True))

    assert out.shape == ref.shape == (N, Cout, H, W)
    # The 1x1 convs run as single-pass bf16 MXU matmuls (DEFAULT precision),
    # the swish divide is an approximate EUP reciprocal, and on v6e/v7x the
    # depthwise taps run in bf16 — all compared against an f32 HIGHEST
    # reference, so allow a few 1e-2 of deviation.
    err = float(jnp.max(jnp.abs(out - ref)))
    if not jnp.allclose(out, ref, atol=5e-2, rtol=5e-2):
        raise AssertionError(f"mismatch, max abs err = {err}")
    print("KERNEL_OK")
</pallas_src>

<mosaic_0001>
module attributes {stable_mosaic.version = 11 : i64} {
  func.func @_sir_kernel(%arg0: i32, %arg1: memref<1x4x256xf32, #tpu.memory_space<vmem>>, %arg2: memref<12x4xf32, #tpu.memory_space<vmem>>, %arg3: memref<12x1xf32, #tpu.memory_space<vmem>>, %arg4: memref<12x1xf32, #tpu.memory_space<vmem>>, %arg5: memref<12x1xf32, #tpu.memory_space<vmem>>, %arg6: memref<12x9xf32, #tpu.memory_space<vmem>>, %arg7: memref<12x1xf32, #tpu.memory_space<vmem>>, %arg8: memref<12x1xf32, #tpu.memory_space<vmem>>, %arg9: memref<12x1xf32, #tpu.memory_space<vmem>>, %arg10: memref<4x12xf32, #tpu.memory_space<vmem>>, %arg11: memref<4x1xf32, #tpu.memory_space<vmem>>, %arg12: memref<4x1xf32, #tpu.memory_space<vmem>>, %arg13: memref<4x1xf32, #tpu.memory_space<vmem>>, %arg14: memref<4x12xf32, #tpu.memory_space<vmem>>, %arg15: memref<12x4xf32, #tpu.memory_space<vmem>>, %arg16: memref<4x4xf32, #tpu.memory_space<vmem>>, %arg17: memref<4x4xf32, #tpu.memory_space<vmem>>, %arg18: memref<1x4x256xf32, #tpu.memory_space<vmem>>) attributes {dimension_semantics = [#tpu.dimension_semantics<parallel>], iteration_bounds = array<i64: 2>, scalar_prefetch = 0 : i64, scratch_operands = 0 : i64, tpu.core_type = #tpu.core_type<tc>, window_params = [{transform_indices = @transform_0, window_bounds = array<i64: 1, 4, 256>}, {pipeline_mode = #tpu.pipeline_mode<synchronous>, transform_indices = @transform_1, window_bounds = array<i64: 12, 4>}, {pipeline_mode = #tpu.pipeline_mode<synchronous>, transform_indices = @transform_2, window_bounds = array<i64: 12, 1>}, {pipeline_mode = #tpu.pipeline_mode<synchronous>, transform_indices = @transform_3, window_bounds = array<i64: 12, 1>}, {pipeline_mode = #tpu.pipeline_mode<synchronous>, transform_indices = @transform_4, window_bounds = array<i64: 12, 1>}, {pipeline_mode = #tpu.pipeline_mode<synchronous>, transform_indices = @transform_5, window_bounds = array<i64: 12, 9>}, {pipeline_mode = #tpu.pipeline_mode<synchronous>, transform_indices = @transform_6, window_bounds = array<i64: 12, 1>}, {pipeline_mode = #tpu.pipeline_mode<synchronous>, transform_indices = @transform_7, window_bounds = array<i64: 12, 1>}, {pipeline_mode = #tpu.pipeline_mode<synchronous>, transform_indices = @transform_8, window_bounds = array<i64: 12, 1>}, {pipeline_mode = #tpu.pipeline_mode<synchronous>, transform_indices = @transform_9, window_bounds = array<i64: 4, 12>}, {pipeline_mode = #tpu.pipeline_mode<synchronous>, transform_indices = @transform_10, window_bounds = array<i64: 4, 1>}, {pipeline_mode = #tpu.pipeline_mode<synchronous>, transform_indices = @transform_11, window_bounds = array<i64: 4, 1>}, {pipeline_mode = #tpu.pipeline_mode<synchronous>, transform_indices = @transform_12, window_bounds = array<i64: 4, 1>}, {pipeline_mode = #tpu.pipeline_mode<synchronous>, transform_indices = @transform_13, window_bounds = array<i64: 4, 12>}, {pipeline_mode = #tpu.pipeline_mode<synchronous>, transform_indices = @transform_14, window_bounds = array<i64: 12, 4>}, {pipeline_mode = #tpu.pipeline_mode<synchronous>, transform_indices = @transform_15, window_bounds = array<i64: 4, 4>}, {pipeline_mode = #tpu.pipeline_mode<synchronous>, transform_indices = @transform_16, window_bounds = array<i64: 4, 4>}, {transform_indices = @transform_17, window_bounds = array<i64: 1, 4, 256>}]} {
    %0 = tpu.iota {dimensions = array<i32: 1>} : vector<1x256xi32>
    %c16_i32 = arith.constant 16 : i32
    %c0_i32 = arith.constant 0 : i32
    %1 = arith.cmpi eq, %c16_i32, %c0_i32 : i32
    %c1_i32 = arith.constant 1 : i32
    %2 = arith.select %1, %c1_i32, %c16_i32 : i32
    %3 = vector.broadcast %2 : i32 to vector<1x256xi32>
    %4 = arith.remsi %0, %3 : vector<1x256xi32>
    %c0_i32_0 = arith.constant 0 : i32
    %5 = vector.broadcast %c0_i32_0 : i32 to vector<1x256xi32>
    %6 = arith.cmpi ne, %4, %5 : vector<1x256xi32>
    %c0_i32_1 = arith.constant 0 : i32
    %7 = vector.broadcast %c0_i32_1 : i32 to vector<1x256xi32>
    %8 = arith.cmpi slt, %4, %7 : vector<1x256xi32>
    %c0_i32_2 = arith.constant 0 : i32
    %9 = arith.cmpi slt, %2, %c0_i32_2 : i32
    %10 = vector.broadcast %9 : i1 to vector<1x256xi1>
    %11 = vector.broadcast %10 : vector<1x256xi1> to vector<1x256xi1>
    %12 = arith.xori %8, %11 : vector<1x256xi1>
    %13 = arith.andi %12, %6 : vector<1x256xi1>
    %14 = vector.broadcast %2 : i32 to vector<1x256xi32>
    %15 = arith.addi %4, %14 : vector<1x256xi32>
    %16 = arith.select %13, %15, %4 : vector<1x256xi1>, vector<1x256xi32>
    %c14_i32 = arith.constant 14 : i32
    %17 = vector.broadcast %c14_i32 : i32 to vector<1x256xi32>
    %18 = arith.cmpi sle, %16, %17 : vector<1x256xi32>
    %19 = arith.extui %18 : vector<1x256xi1> to vector<1x256xi32>
    %20 = arith.sitofp %19 : vector<1x256xi32> to vector<1x256xf32>
    %c1_i32_3 = arith.constant 1 : i32
    %21 = vector.broadcast %c1_i32_3 : i32 to vector<1x256xi32>
    %22 = arith.cmpi sge, %16, %21 : vector<1x256xi32>
    %23 = arith.extui %22 : vector<1x256xi1> to vector<1x256xi32>
    %24 = arith.sitofp %23 : vector<1x256xi32> to vector<1x256xf32>
    %c16_i32_4 = arith.constant 16 : i32
    %25 = vector.broadcast %c16_i32_4 : i32 to vector<1x256xi32>
    %26 = arith.cmpi sge, %0, %25 : vector<1x256xi32>
    %27 = arith.extui %26 : vector<1x256xi1> to vector<1x256xi32>
    %28 = arith.sitofp %27 : vector<1x256xi32> to vector<1x256xf32>
    %c240_i32 = arith.constant 240 : i32
    %29 = vector.broadcast %c240_i32 : i32 to vector<1x256xi32>
    %30 = arith.cmpi slt, %0, %29 : vector<1x256xi32>
    %31 = arith.extui %30 : vector<1x256xi1> to vector<1x256xi32>
    %32 = arith.sitofp %31 : vector<1x256xi32> to vector<1x256xf32>
    %c0 = arith.constant 0 : index
    %c0_5 = arith.constant 0 : index
    %c0_6 = arith.constant 0 : index
    %33 = vector.load %arg1[%c0, %c0_5, %c0_6] : memref<1x4x256xf32, #tpu.memory_space<vmem>>, vector<1x4x256xf32>
    %34 = vector.shape_cast %33 : vector<1x4x256xf32> to vector<4x256xf32>
    %c0_7 = arith.constant 0 : index
    %c0_8 = arith.constant 0 : index
    %35 = vector.load %arg2[%c0_7, %c0_8] : memref<12x4xf32, #tpu.memory_space<vmem>>, vector<12x4xf32>
    %c0_9 = arith.constant 0 : index
    %c0_10 = arith.constant 0 : index
    %36 = vector.load %arg10[%c0_9, %c0_10] : memref<4x12xf32, #tpu.memory_space<vmem>>, vector<4x12xf32>
    %c0_11 = arith.constant 0 : index
    %c0_12 = arith.constant 0 : index
    %37 = vector.load %arg6[%c0_11, %c0_12] : memref<12x9xf32, #tpu.memory_space<vmem>>, vector<12x9xf32>
    %cst = arith.constant dense<0.000000e+00> : vector<12x256xf32>
    %38 = tpu.matmul %35, %34, %cst {dimension_numbers = #tpu.dot_dimension_numbers<[1], [0], [0], [1], [0, 0, 1, 1], [], []>} : vector<12x4xf32>, vector<4x256xf32>, vector<12x256xf32> -> vector<12x256xf32>
    %c0_13 = arith.constant 0 : index
    %c0_14 = arith.constant 0 : index
    %39 = vector.load %arg3[%c0_13, %c0_14] : memref<12x1xf32, #tpu.memory_space<vmem>>, vector<12x1xf32>
    %40 = vector.broadcast %39 : vector<12x1xf32> to vector<12x256xf32>
    %41 = arith.addf %38, %40 : vector<12x256xf32>
    %cst_15 = arith.constant 0.000000e+00 : f32
    %42 = vector.broadcast %cst_15 : f32 to vector<12x256xf32>
    %43 = arith.subf %42, %41 : vector<12x256xf32>
    %44 = math.exp %43 : vector<12x256xf32>
    %cst_16 = arith.constant 1.000000e+00 : f32
    %45 = vector.broadcast %cst_16 : f32 to vector<12x256xf32>
    %46 = arith.addf %45, %44 : vector<12x256xf32>
    %47 = tpu.reciprocal %46 {approx = true} : vector<12x256xf32> -> vector<12x256xf32>
    %48 = arith.mulf %41, %47 : vector<12x256xf32>
    %c0_17 = arith.constant 0 : index
    %c0_18 = arith.constant 0 : index
    %49 = vector.load %arg4[%c0_17, %c0_18] : memref<12x1xf32, #tpu.memory_space<vmem>>, vector<12x1xf32>
    %c0_19 = arith.constant 0 : index
    %c0_20 = arith.constant 0 : index
    %50 = vector.load %arg5[%c0_19, %c0_20] : memref<12x1xf32, #tpu.memory_space<vmem>>, vector<12x1xf32>
    %c0_21 = arith.constant 0 : index
    %c0_22 = arith.constant 0 : index
    %51 = vector.load %arg14[%c0_21, %c0_22] : memref<4x12xf32, #tpu.memory_space<vmem>>, vector<4x12xf32>
    %c0_23 = arith.constant 0 : index
    %c0_24 = arith.constant 0 : index
    %52 = vector.load %arg15[%c0_23, %c0_24] : memref<12x4xf32, #tpu.memory_space<vmem>>, vector<12x4xf32>
    %cst_25 = arith.constant dense<0.000000e+00> : vector<12xf32>
    %53 = vector.multi_reduction <add>, %48, %cst_25 [1] : vector<12x256xf32> to vector<12xf32>
    %54 = vector.shape_cast %53 : vector<12xf32> to vector<12x1xf32>
    %55 = arith.mulf %48, %48 : vector<12x256xf32>
    %cst_26 = arith.constant dense<0.000000e+00> : vector<12xf32>
    %56 = vector.multi_reduction <add>, %55, %cst_26 [1] : vector<12x256xf32> to vector<12xf32>
    %57 = vector.shape_cast %56 : vector<12xf32> to vector<12x1xf32>
    %58 = tpu.concatenate %54, %57 in 1 : vector<12x1xf32>, vector<12x1xf32> -> vector<12x2xf32>
    %cst_27 = arith.constant dense<0.000000e+00> : vector<4x2xf32>
    %59 = tpu.matmul %51, %58, %cst_27 {dimension_numbers = #tpu.dot_dimension_numbers<[1], [0], [0], [1], [0, 0, 1, 1], [], []>, precision = #tpu.contract_precision<fp32>} : vector<4x12xf32>, vector<12x2xf32>, vector<4x2xf32> -> vector<4x2xf32>
    %cst_28 = arith.constant dense<0.000000e+00> : vector<12x2xf32>
    %60 = tpu.matmul %52, %59, %cst_28 {dimension_numbers = #tpu.dot_dimension_numbers<[1], [0], [0], [1], [0, 0, 1, 1], [], []>, precision = #tpu.contract_precision<fp32>} : vector<12x4xf32>, vector<4x2xf32>, vector<12x2xf32> -> vector<12x2xf32>
    %cst_29 = arith.constant 0.00130208337 : f32
    %61 = vector.broadcast %cst_29 : f32 to vector<12x2xf32>
    %62 = arith.mulf %60, %61 : vector<12x2xf32>
    %63 = vector.extract_strided_slice %62 {offsets = [0, 0], sizes = [12, 1], strides = [1, 1]} : vector<12x2xf32> to vector<12x1xf32>
    %64 = vector.extract_strided_slice %62 {offsets = [0, 1], sizes = [12, 1], strides = [1, 1]} : vector<12x2xf32> to vector<12x1xf32>
    %65 = arith.mulf %63, %63 : vector<12x1xf32>
    %66 = arith.subf %64, %65 : vector<12x1xf32>
    %cst_30 = arith.constant 0.000000e+00 : f32
    %67 = vector.broadcast %cst_30 : f32 to vector<12x1xf32>
    %68 = arith.maximumf %66, %67 : vector<12x1xf32>
    %cst_31 = arith.constant 9.99999974E-6 : f32
    %69 = vector.broadcast %cst_31 : f32 to vector<12x1xf32>
    %70 = arith.addf %68, %69 : vector<12x1xf32>
    %71 = math.rsqrt %70 : vector<12x1xf32>
    %72 = arith.mulf %49, %71 : vector<12x1xf32>
    %73 = arith.mulf %63, %72 : vector<12x1xf32>
    %74 = arith.subf %50, %73 : vector<12x1xf32>
    %75 = vector.broadcast %72 : vector<12x1xf32> to vector<12x256xf32>
    %76 = arith.mulf %48, %75 : vector<12x256xf32>
    %77 = vector.broadcast %74 : vector<12x1xf32> to vector<12x256xf32>
    %78 = arith.addf %76, %77 : vector<12x256xf32>
    %79 = vector.broadcast %20 : vector<1x256xf32> to vector<12x256xf32>
    %80 = arith.mulf %78, %79 : vector<12x256xf32>
    %c1_i32_32 = arith.constant 1 : i32
    %81 = tpu.dynamic_rotate %80 by %c1_i32_32 dim 1 : vector<12x256xf32>, i32 -> vector<12x256xf32>
    %82 = vector.broadcast %24 : vector<1x256xf32> to vector<12x256xf32>
    %83 = arith.mulf %78, %82 : vector<12x256xf32>
    %c255_i32 = arith.constant 255 : i32
    %84 = tpu.dynamic_rotate %83 by %c255_i32 dim 1 : vector<12x256xf32>, i32 -> vector<12x256xf32>
    %85 = vector.extract_strided_slice %37 {offsets = [0, 0], sizes = [12, 1], strides = [1, 1]} : vector<12x9xf32> to vector<12x1xf32>
    %86 = vector.broadcast %85 : vector<12x1xf32> to vector<12x256xf32>
    %87 = arith.mulf %81, %86 : vector<12x256xf32>
    %88 = vector.extract_strided_slice %37 {offsets = [0, 1], sizes = [12, 1], strides = [1, 1]} : vector<12x9xf32> to vector<12x1xf32>
    %89 = vector.broadcast %88 : vector<12x1xf32> to vector<12x256xf32>
    %90 = arith.mulf %78, %89 : vector<12x256xf32>
    %91 = arith.addf %87, %90 : vector<12x256xf32>
    %92 = vector.extract_strided_slice %37 {offsets = [0, 2], sizes = [12, 1], strides = [1, 1]} : vector<12x9xf32> to vector<12x1xf32>
    %93 = vector.broadcast %92 : vector<12x1xf32> to vector<12x256xf32>
    %94 = arith.mulf %84, %93 : vector<12x256xf32>
    %95 = arith.addf %91, %94 : vector<12x256xf32>
    %c16_i32_33 = arith.constant 16 : i32
    %96 = tpu.dynamic_rotate %95 by %c16_i32_33 dim 1 : vector<12x256xf32>, i32 -> vector<12x256xf32>
    %97 = vector.broadcast %28 : vector<1x256xf32> to vector<12x256xf32>
    %98 = arith.mulf %96, %97 : vector<12x256xf32>
    %99 = vector.extract_strided_slice %37 {offsets = [0, 3], sizes = [12, 1], strides = [1, 1]} : vector<12x9xf32> to vector<12x1xf32>
    %100 = vector.broadcast %99 : vector<12x1xf32> to vector<12x256xf32>
    %101 = arith.mulf %81, %100 : vector<12x256xf32>
    %102 = vector.extract_strided_slice %37 {offsets = [0, 4], sizes = [12, 1], strides = [1, 1]} : vector<12x9xf32> to vector<12x1xf32>
    %103 = vector.broadcast %102 : vector<12x1xf32> to vector<12x256xf32>
    %104 = arith.mulf %78, %103 : vector<12x256xf32>
    %105 = arith.addf %101, %104 : vector<12x256xf32>
    %106 = vector.extract_strided_slice %37 {offsets = [0, 5], sizes = [12, 1], strides = [1, 1]} : vector<12x9xf32> to vector<12x1xf32>
    %107 = vector.broadcast %106 : vector<12x1xf32> to vector<12x256xf32>
    %108 = arith.mulf %84, %107 : vector<12x256xf32>
    %109 = arith.addf %105, %108 : vector<12x256xf32>
    %110 = arith.addf %98, %109 : vector<12x256xf32>
    %111 = vector.extract_strided_slice %37 {offsets = [0, 6], sizes = [12, 1], strides = [1, 1]} : vector<12x9xf32> to vector<12x1xf32>
    %112 = vector.broadcast %111 : vector<12x1xf32> to vector<12x256xf32>
    %113 = arith.mulf %81, %112 : vector<12x256xf32>
    %114 = vector.extract_strided_slice %37 {offsets = [0, 7], sizes = [12, 1], strides = [1, 1]} : vector<12x9xf32> to vector<12x1xf32>
    %115 = vector.broadcast %114 : vector<12x1xf32> to vector<12x256xf32>
    %116 = arith.mulf %78, %115 : vector<12x256xf32>
    %117 = arith.addf %113, %116 : vector<12x256xf32>
    %118 = vector.extract_strided_slice %37 {offsets = [0, 8], sizes = [12, 1], strides = [1, 1]} : vector<12x9xf32> to vector<12x1xf32>
    %119 = vector.broadcast %118 : vector<12x1xf32> to vector<12x256xf32>
    %120 = arith.mulf %84, %119 : vector<12x256xf32>
    %121 = arith.addf %117, %120 : vector<12x256xf32>
    %c240_i32_34 = arith.constant 240 : i32
    %122 = tpu.dynamic_rotate %121 by %c240_i32_34 dim 1 : vector<12x256xf32>, i32 -> vector<12x256xf32>
    %123 = vector.broadcast %32 : vector<1x256xf32> to vector<12x256xf32>
    %124 = arith.mulf %122, %123 : vector<12x256xf32>
    %125 = arith.addf %110, %124 : vector<12x256xf32>
    %c0_35 = arith.constant 0 : index
    %c0_36 = arith.constant 0 : index
    %126 = vector.load %arg7[%c0_35, %c0_36] : memref<12x1xf32, #tpu.memory_space<vmem>>, vector<12x1xf32>
    %127 = vector.broadcast %126 : vector<12x1xf32> to vector<12x256xf32>
    %128 = arith.addf %125, %127 : vector<12x256xf32>
    %cst_37 = arith.constant 0.000000e+00 : f32
    %129 = vector.broadcast %cst_37 : f32 to vector<12x256xf32>
    %130 = arith.subf %129, %128 : vector<12x256xf32>
    %131 = math.exp %130 : vector<12x256xf32>
    %cst_38 = arith.constant 1.000000e+00 : f32
    %132 = vector.broadcast %cst_38 : f32 to vector<12x256xf32>
    %133 = arith.addf %132, %131 : vector<12x256xf32>
    %134 = tpu.reciprocal %133 {approx = true} : vector<12x256xf32> -> vector<12x256xf32>
    %135 = arith.mulf %128, %134 : vector<12x256xf32>
    %c0_39 = arith.constant 0 : index
    %c0_40 = arith.constant 0 : index
    %136 = vector.load %arg8[%c0_39, %c0_40] : memref<12x1xf32, #tpu.memory_space<vmem>>, vector<12x1xf32>
    %c0_41 = arith.constant 0 : index
    %c0_42 = arith.constant 0 : index
    %137 = vector.load %arg9[%c0_41, %c0_42] : memref<12x1xf32, #tpu.memory_space<vmem>>, vector<12x1xf32>
    %c0_43 = arith.constant 0 : index
    %c0_44 = arith.constant 0 : index
    %138 = vector.load %arg14[%c0_43, %c0_44] : memref<4x12xf32, #tpu.memory_space<vmem>>, vector<4x12xf32>
    %c0_45 = arith.constant 0 : index
    %c0_46 = arith.constant 0 : index
    %139 = vector.load %arg15[%c0_45, %c0_46] : memref<12x4xf32, #tpu.memory_space<vmem>>, vector<12x4xf32>
    %cst_47 = arith.constant dense<0.000000e+00> : vector<12xf32>
    %140 = vector.multi_reduction <add>, %135, %cst_47 [1] : vector<12x256xf32> to vector<12xf32>
    %141 = vector.shape_cast %140 : vector<12xf32> to vector<12x1xf32>
    %142 = arith.mulf %135, %135 : vector<12x256xf32>
    %cst_48 = arith.constant dense<0.000000e+00> : vector<12xf32>
    %143 = vector.multi_reduction <add>, %142, %cst_48 [1] : vector<12x256xf32> to vector<12xf32>
    %144 = vector.shape_cast %143 : vector<12xf32> to vector<12x1xf32>
    %145 = tpu.concatenate %141, %144 in 1 : vector<12x1xf32>, vector<12x1xf32> -> vector<12x2xf32>
    %cst_49 = arith.constant dense<0.000000e+00> : vector<4x2xf32>
    %146 = tpu.matmul %138, %145, %cst_49 {dimension_numbers = #tpu.dot_dimension_numbers<[1], [0], [0], [1], [0, 0, 1, 1], [], []>, precision = #tpu.contract_precision<fp32>} : vector<4x12xf32>, vector<12x2xf32>, vector<4x2xf32> -> vector<4x2xf32>
    %cst_50 = arith.constant dense<0.000000e+00> : vector<12x2xf32>
    %147 = tpu.matmul %139, %146, %cst_50 {dimension_numbers = #tpu.dot_dimension_numbers<[1], [0], [0], [1], [0, 0, 1, 1], [], []>, precision = #tpu.contract_precision<fp32>} : vector<12x4xf32>, vector<4x2xf32>, vector<12x2xf32> -> vector<12x2xf32>
    %cst_51 = arith.constant 0.00130208337 : f32
    %148 = vector.broadcast %cst_51 : f32 to vector<12x2xf32>
    %149 = arith.mulf %147, %148 : vector<12x2xf32>
    %150 = vector.extract_strided_slice %149 {offsets = [0, 0], sizes = [12, 1], strides = [1, 1]} : vector<12x2xf32> to vector<12x1xf32>
    %151 = vector.extract_strided_slice %149 {offsets = [0, 1], sizes = [12, 1], strides = [1, 1]} : vector<12x2xf32> to vector<12x1xf32>
    %152 = arith.mulf %150, %150 : vector<12x1xf32>
    %153 = arith.subf %151, %152 : vector<12x1xf32>
    %cst_52 = arith.constant 0.000000e+00 : f32
    %154 = vector.broadcast %cst_52 : f32 to vector<12x1xf32>
    %155 = arith.maximumf %153, %154 : vector<12x1xf32>
    %cst_53 = arith.constant 9.99999974E-6 : f32
    %156 = vector.broadcast %cst_53 : f32 to vector<12x1xf32>
    %157 = arith.addf %155, %156 : vector<12x1xf32>
    %158 = math.rsqrt %157 : vector<12x1xf32>
    %159 = arith.mulf %136, %158 : vector<12x1xf32>
    %160 = arith.mulf %150, %159 : vector<12x1xf32>
    %161 = arith.subf %137, %160 : vector<12x1xf32>
    %162 = vector.broadcast %159 : vector<12x1xf32> to vector<12x256xf32>
    %163 = arith.mulf %135, %162 : vector<12x256xf32>
    %164 = vector.broadcast %161 : vector<12x1xf32> to vector<12x256xf32>
    %165 = arith.addf %163, %164 : vector<12x256xf32>
    %cst_54 = arith.constant dense<0.000000e+00> : vector<4x256xf32>
    %166 = tpu.matmul %36, %165, %cst_54 {dimension_numbers = #tpu.dot_dimension_numbers<[1], [0], [0], [1], [0, 0, 1, 1], [], []>} : vector<4x12xf32>, vector<12x256xf32>, vector<4x256xf32> -> vector<4x256xf32>
    %c0_55 = arith.constant 0 : index
    %c0_56 = arith.constant 0 : index
    %167 = vector.load %arg11[%c0_55, %c0_56] : memref<4x1xf32, #tpu.memory_space<vmem>>, vector<4x1xf32>
    %168 = vector.broadcast %167 : vector<4x1xf32> to vector<4x256xf32>
    %169 = arith.addf %166, %168 : vector<4x256xf32>
    %c0_57 = arith.constant 0 : index
    %c0_58 = arith.constant 0 : index
    %170 = vector.load %arg12[%c0_57, %c0_58] : memref<4x1xf32, #tpu.memory_space<vmem>>, vector<4x1xf32>
    %c0_59 = arith.constant 0 : index
    %c0_60 = arith.constant 0 : index
    %171 = vector.load %arg13[%c0_59, %c0_60] : memref<4x1xf32, #tpu.memory_space<vmem>>, vector<4x1xf32>
    %c0_61 = arith.constant 0 : index
    %c0_62 = arith.constant 0 : index
    %172 = vector.load %arg16[%c0_61, %c0_62] : memref<4x4xf32, #tpu.memory_space<vmem>>, vector<4x4xf32>
    %c0_63 = arith.constant 0 : index
    %c0_64 = arith.constant 0 : index
    %173 = vector.load %arg17[%c0_63, %c0_64] : memref<4x4xf32, #tpu.memory_space<vmem>>, vector<4x4xf32>
    %cst_65 = arith.constant dense<0.000000e+00> : vector<4xf32>
    %174 = vector.multi_reduction <add>, %169, %cst_65 [1] : vector<4x256xf32> to vector<4xf32>
    %175 = vector.shape_cast %174 : vector<4xf32> to vector<4x1xf32>
    %176 = arith.mulf %169, %169 : vector<4x256xf32>
    %cst_66 = arith.constant dense<0.000000e+00> : vector<4xf32>
    %177 = vector.multi_reduction <add>, %176, %cst_66 [1] : vector<4x256xf32> to vector<4xf32>
    %178 = vector.shape_cast %177 : vector<4xf32> to vector<4x1xf32>
    %179 = tpu.concatenate %175, %178 in 1 : vector<4x1xf32>, vector<4x1xf32> -> vector<4x2xf32>
    %cst_67 = arith.constant dense<0.000000e+00> : vector<4x2xf32>
    %180 = tpu.matmul %172, %179, %cst_67 {dimension_numbers = #tpu.dot_dimension_numbers<[1], [0], [0], [1], [0, 0, 1, 1], [], []>, precision = #tpu.contract_precision<fp32>} : vector<4x4xf32>, vector<4x2xf32>, vector<4x2xf32> -> vector<4x2xf32>
    %cst_68 = arith.constant dense<0.000000e+00> : vector<4x2xf32>
    %181 = tpu.matmul %173, %180, %cst_68 {dimension_numbers = #tpu.dot_dimension_numbers<[1], [0], [0], [1], [0, 0, 1, 1], [], []>, precision = #tpu.contract_precision<fp32>} : vector<4x4xf32>, vector<4x2xf32>, vector<4x2xf32> -> vector<4x2xf32>
    %cst_69 = arith.constant 3.906250e-03 : f32
    %182 = vector.broadcast %cst_69 : f32 to vector<4x2xf32>
    %183 = arith.mulf %181, %182 : vector<4x2xf32>
    %184 = vector.extract_strided_slice %183 {offsets = [0, 0], sizes = [4, 1], strides = [1, 1]} : vector<4x2xf32> to vector<4x1xf32>
    %185 = vector.extract_strided_slice %183 {offsets = [0, 1], sizes = [4, 1], strides = [1, 1]} : vector<4x2xf32> to vector<4x1xf32>
    %186 = arith.mulf %184, %184 : vector<4x1xf32>
    %187 = arith.subf %185, %186 : vector<4x1xf32>
    %cst_70 = arith.constant 0.000000e+00 : f32
    %188 = vector.broadcast %cst_70 : f32 to vector<4x1xf32>
    %189 = arith.maximumf %187, %188 : vector<4x1xf32>
    %cst_71 = arith.constant 9.99999974E-6 : f32
    %190 = vector.broadcast %cst_71 : f32 to vector<4x1xf32>
    %191 = arith.addf %189, %190 : vector<4x1xf32>
    %192 = math.rsqrt %191 : vector<4x1xf32>
    %193 = arith.mulf %170, %192 : vector<4x1xf32>
    %194 = arith.mulf %184, %193 : vector<4x1xf32>
    %195 = arith.subf %171, %194 : vector<4x1xf32>
    %196 = vector.broadcast %193 : vector<4x1xf32> to vector<4x256xf32>
    %197 = arith.mulf %169, %196 : vector<4x256xf32>
    %198 = vector.broadcast %195 : vector<4x1xf32> to vector<4x256xf32>
    %199 = arith.addf %197, %198 : vector<4x256xf32>
    %200 = arith.addf %199, %34 : vector<4x256xf32>
    %c0_72 = arith.constant 0 : index
    %c0_73 = arith.constant 0 : index
    %c0_74 = arith.constant 0 : index
    %201 = vector.load %arg18[%c0_72, %c0_73, %c0_74] : memref<1x4x256xf32, #tpu.memory_space<vmem>>, vector<1x4x256xf32>
    %202 = vector.shape_cast %201 : vector<1x4x256xf32> to vector<4x256xf32>
    %203 = vector.shape_cast %200 : vector<4x256xf32> to vector<1x4x256xf32>
    tpu.vector_store %arg18[%c0_72, %c0_73, %c0_74], %203 {strides = array<i32>} : memref<1x4x256xf32, #tpu.memory_space<vmem>>, vector<1x4x256xf32>,
    return
  }
  func.func @transform_0(%arg0: i32) -> (i32, i32, i32) {
    %c0_i32 = arith.constant 0 : i32
    %c0_i32_0 = arith.constant 0 : i32
    %c0_i32_1 = arith.constant 0 : i32
    return %arg0, %c0_i32, %c0_i32_0 : i32, i32, i32
  }
  func.func @transform_1(%arg0: i32) -> (i32, i32) {
    %c0_i32 = arith.constant 0 : i32
    %c0_i32_0 = arith.constant 0 : i32
    %c0_i32_1 = arith.constant 0 : i32
    return %c0_i32, %c0_i32_0 : i32, i32
  }
  func.func @transform_2(%arg0: i32) -> (i32, i32) {
    %c0_i32 = arith.constant 0 : i32
    %c0_i32_0 = arith.constant 0 : i32
    %c0_i32_1 = arith.constant 0 : i32
    return %c0_i32, %c0_i32_0 : i32, i32
  }
  func.func @transform_3(%arg0: i32) -> (i32, i32) {
    %c0_i32 = arith.constant 0 : i32
    %c0_i32_0 = arith.constant 0 : i32
    %c0_i32_1 = arith.constant 0 : i32
    return %c0_i32, %c0_i32_0 : i32, i32
  }
  func.func @transform_4(%arg0: i32) -> (i32, i32) {
    %c0_i32 = arith.constant 0 : i32
    %c0_i32_0 = arith.constant 0 : i32
    %c0_i32_1 = arith.constant 0 : i32
    return %c0_i32, %c0_i32_0 : i32, i32
  }
  func.func @transform_5(%arg0: i32) -> (i32, i32) {
    %c0_i32 = arith.constant 0 : i32
    %c0_i32_0 = arith.constant 0 : i32
    %c0_i32_1 = arith.constant 0 : i32
    return %c0_i32, %c0_i32_0 : i32, i32
  }
  func.func @transform_6(%arg0: i32) -> (i32, i32) {
    %c0_i32 = arith.constant 0 : i32
    %c0_i32_0 = arith.constant 0 : i32
    %c0_i32_1 = arith.constant 0 : i32
    return %c0_i32, %c0_i32_0 : i32, i32
  }
  func.func @transform_7(%arg0: i32) -> (i32, i32) {
    %c0_i32 = arith.constant 0 : i32
    %c0_i32_0 = arith.constant 0 : i32
    %c0_i32_1 = arith.constant 0 : i32
    return %c0_i32, %c0_i32_0 : i32, i32
  }
  func.func @transform_8(%arg0: i32) -> (i32, i32) {
    %c0_i32 = arith.constant 0 : i32
    %c0_i32_0 = arith.constant 0 : i32
    %c0_i32_1 = arith.constant 0 : i32
    return %c0_i32, %c0_i32_0 : i32, i32
  }
  func.func @transform_9(%arg0: i32) -> (i32, i32) {
    %c0_i32 = arith.constant 0 : i32
    %c0_i32_0 = arith.constant 0 : i32
    %c0_i32_1 = arith.constant 0 : i32
    return %c0_i32, %c0_i32_0 : i32, i32
  }
  func.func @transform_10(%arg0: i32) -> (i32, i32) {
    %c0_i32 = arith.constant 0 : i32
    %c0_i32_0 = arith.constant 0 : i32
    %c0_i32_1 = arith.constant 0 : i32
    return %c0_i32, %c0_i32_0 : i32, i32
  }
  func.func @transform_11(%arg0: i32) -> (i32, i32) {
    %c0_i32 = arith.constant 0 : i32
    %c0_i32_0 = arith.constant 0 : i32
    %c0_i32_1 = arith.constant 0 : i32
    return %c0_i32, %c0_i32_0 : i32, i32
  }
  func.func @transform_12(%arg0: i32) -> (i32, i32) {
    %c0_i32 = arith.constant 0 : i32
    %c0_i32_0 = arith.constant 0 : i32
    %c0_i32_1 = arith.constant 0 : i32
    return %c0_i32, %c0_i32_0 : i32, i32
  }
  func.func @transform_13(%arg0: i32) -> (i32, i32) {
    %c0_i32 = arith.constant 0 : i32
    %c0_i32_0 = arith.constant 0 : i32
    %c0_i32_1 = arith.constant 0 : i32
    return %c0_i32, %c0_i32_0 : i32, i32
  }
  func.func @transform_14(%arg0: i32) -> (i32, i32) {
    %c0_i32 = arith.constant 0 : i32
    %c0_i32_0 = arith.constant 0 : i32
    %c0_i32_1 = arith.constant 0 : i32
    return %c0_i32, %c0_i32_0 : i32, i32
  }
  func.func @transform_15(%arg0: i32) -> (i32, i32) {
    %c0_i32 = arith.constant 0 : i32
    %c0_i32_0 = arith.constant 0 : i32
    %c0_i32_1 = arith.constant 0 : i32
    return %c0_i32, %c0_i32_0 : i32, i32
  }
  func.func @transform_16(%arg0: i32) -> (i32, i32) {
    %c0_i32 = arith.constant 0 : i32
    %c0_i32_0 = arith.constant 0 : i32
    %c0_i32_1 = arith.constant 0 : i32
    return %c0_i32, %c0_i32_0 : i32, i32
  }
  func.func @transform_17(%arg0: i32) -> (i32, i32, i32) {
    %c0_i32 = arith.constant 0 : i32
    %c0_i32_0 = arith.constant 0 : i32
    %c0_i32_1 = arith.constant 0 : i32
    return %arg0, %c0_i32, %c0_i32_0 : i32, i32, i32
  }
}

module attributes {stable_mosaic.version = 11 : i64} {
  func.func @_sir_kernel(%arg0: i32, %arg1: memref<1x4x256xf32, #tpu.memory_space<vmem>>, %arg2: memref<12x4xf32, #tpu.memory_space<vmem>>, %arg3: memref<12x1xf32, #tpu.memory_space<vmem>>, %arg4: memref<12x1xf32, #tpu.memory_space<vmem>>, %arg5: memref<12x1xf32, #tpu.memory_space<vmem>>, %arg6: memref<12x9xf32, #tpu.memory_space<vmem>>, %arg7: memref<12x1xf32, #tpu.memory_space<vmem>>, %arg8: memref<12x1xf32, #tpu.memory_space<vmem>>, %arg9: memref<12x1xf32, #tpu.memory_space<vmem>>, %arg10: memref<4x12xf32, #tpu.memory_space<vmem>>, %arg11: memref<4x1xf32, #tpu.memory_space<vmem>>, %arg12: memref<4x1xf32, #tpu.memory_space<vmem>>, %arg13: memref<4x1xf32, #tpu.memory_space<vmem>>, %arg14: memref<4x12xf32, #tpu.memory_space<vmem>>, %arg15: memref<12x4xf32, #tpu.memory_space<vmem>>, %arg16: memref<4x4xf32, #tpu.memory_space<vmem>>, %arg17: memref<4x4xf32, #tpu.memory_space<vmem>>, %arg18: memref<1x4x256xf32, #tpu.memory_space<vmem>>) attributes {dimension_semantics = [#tpu.dimension_semantics<parallel>], iteration_bounds = array<i64: 2>, scalar_prefetch = 0 : i64, scratch_operands = 0 : i64, tpu.core_type = #tpu.core_type<tc>, window_params = [{transform_indices = @transform_0, window_bounds = array<i64: 1, 4, 256>}, {pipeline_mode = #tpu.pipeline_mode<synchronous>, transform_indices = @transform_1, window_bounds = array<i64: 12, 4>}, {pipeline_mode = #tpu.pipeline_mode<synchronous>, transform_indices = @transform_2, window_bounds = array<i64: 12, 1>}, {pipeline_mode = #tpu.pipeline_mode<synchronous>, transform_indices = @transform_3, window_bounds = array<i64: 12, 1>}, {pipeline_mode = #tpu.pipeline_mode<synchronous>, transform_indices = @transform_4, window_bounds = array<i64: 12, 1>}, {pipeline_mode = #tpu.pipeline_mode<synchronous>, transform_indices = @transform_5, window_bounds = array<i64: 12, 9>}, {pipeline_mode = #tpu.pipeline_mode<synchronous>, transform_indices = @transform_6, window_bounds = array<i64: 12, 1>}, {pipeline_mode = #tpu.pipeline_mode<synchronous>, transform_indices = @transform_7, window_bounds = array<i64: 12, 1>}, {pipeline_mode = #tpu.pipeline_mode<synchronous>, transform_indices = @transform_8, window_bounds = array<i64: 12, 1>}, {pipeline_mode = #tpu.pipeline_mode<synchronous>, transform_indices = @transform_9, window_bounds = array<i64: 4, 12>}, {pipeline_mode = #tpu.pipeline_mode<synchronous>, transform_indices = @transform_10, window_bounds = array<i64: 4, 1>}, {pipeline_mode = #tpu.pipeline_mode<synchronous>, transform_indices = @transform_11, window_bounds = array<i64: 4, 1>}, {pipeline_mode = #tpu.pipeline_mode<synchronous>, transform_indices = @transform_12, window_bounds = array<i64: 4, 1>}, {pipeline_mode = #tpu.pipeline_mode<synchronous>, transform_indices = @transform_13, window_bounds = array<i64: 4, 12>}, {pipeline_mode = #tpu.pipeline_mode<synchronous>, transform_indices = @transform_14, window_bounds = array<i64: 12, 4>}, {pipeline_mode = #tpu.pipeline_mode<synchronous>, transform_indices = @transform_15, window_bounds = array<i64: 4, 4>}, {pipeline_mode = #tpu.pipeline_mode<synchronous>, transform_indices = @transform_16, window_bounds = array<i64: 4, 4>}, {transform_indices = @transform_17, window_bounds = array<i64: 1, 4, 256>}]} {
    %0 = tpu.iota {dimensions = array<i32: 1>} : vector<1x256xi32>
    %c16_i32 = arith.constant 16 : i32
    %c0_i32 = arith.constant 0 : i32
    %1 = arith.cmpi eq, %c16_i32, %c0_i32 : i32
    %c1_i32 = arith.constant 1 : i32
    %2 = arith.select %1, %c1_i32, %c16_i32 : i32
    %3 = vector.broadcast %2 : i32 to vector<1x256xi32>
    %4 = arith.remsi %0, %3 : vector<1x256xi32>
    %c0_i32_0 = arith.constant 0 : i32
    %5 = vector.broadcast %c0_i32_0 : i32 to vector<1x256xi32>
    %6 = arith.cmpi ne, %4, %5 : vector<1x256xi32>
    %c0_i32_1 = arith.constant 0 : i32
    %7 = vector.broadcast %c0_i32_1 : i32 to vector<1x256xi32>
    %8 = arith.cmpi slt, %4, %7 : vector<1x256xi32>
    %c0_i32_2 = arith.constant 0 : i32
    %9 = arith.cmpi slt, %2, %c0_i32_2 : i32
    %10 = vector.broadcast %9 : i1 to vector<1x256xi1>
    %11 = vector.broadcast %10 : vector<1x256xi1> to vector<1x256xi1>
    %12 = arith.xori %8, %11 : vector<1x256xi1>
    %13 = arith.andi %12, %6 : vector<1x256xi1>
    %14 = vector.broadcast %2 : i32 to vector<1x256xi32>
    %15 = arith.addi %4, %14 : vector<1x256xi32>
    %16 = arith.select %13, %15, %4 : vector<1x256xi1>, vector<1x256xi32>
    %c14_i32 = arith.constant 14 : i32
    %17 = vector.broadcast %c14_i32 : i32 to vector<1x256xi32>
    %18 = arith.cmpi sle, %16, %17 : vector<1x256xi32>
    %19 = arith.extui %18 : vector<1x256xi1> to vector<1x256xi32>
    %20 = arith.sitofp %19 : vector<1x256xi32> to vector<1x256xf32>
    %c1_i32_3 = arith.constant 1 : i32
    %21 = vector.broadcast %c1_i32_3 : i32 to vector<1x256xi32>
    %22 = arith.cmpi sge, %16, %21 : vector<1x256xi32>
    %23 = arith.extui %22 : vector<1x256xi1> to vector<1x256xi32>
    %24 = arith.sitofp %23 : vector<1x256xi32> to vector<1x256xf32>
    %c16_i32_4 = arith.constant 16 : i32
    %25 = vector.broadcast %c16_i32_4 : i32 to vector<1x256xi32>
    %26 = arith.cmpi sge, %0, %25 : vector<1x256xi32>
    %27 = arith.extui %26 : vector<1x256xi1> to vector<1x256xi32>
    %28 = arith.sitofp %27 : vector<1x256xi32> to vector<1x256xf32>
    %c240_i32 = arith.constant 240 : i32
    %29 = vector.broadcast %c240_i32 : i32 to vector<1x256xi32>
    %30 = arith.cmpi slt, %0, %29 : vector<1x256xi32>
    %31 = arith.extui %30 : vector<1x256xi1> to vector<1x256xi32>
    %32 = arith.sitofp %31 : vector<1x256xi32> to vector<1x256xf32>
    %c0 = arith.constant 0 : index
    %c0_5 = arith.constant 0 : index
    %c0_6 = arith.constant 0 : index
    %33 = vector.load %arg1[%c0, %c0_5, %c0_6] : memref<1x4x256xf32, #tpu.memory_space<vmem>>, vector<1x4x256xf32>
    %34 = vector.shape_cast %33 : vector<1x4x256xf32> to vector<4x256xf32>
    %c0_7 = arith.constant 0 : index
    %c0_8 = arith.constant 0 : index
    %35 = vector.load %arg2[%c0_7, %c0_8] : memref<12x4xf32, #tpu.memory_space<vmem>>, vector<12x4xf32>
    %c0_9 = arith.constant 0 : index
    %c0_10 = arith.constant 0 : index
    %36 = vector.load %arg10[%c0_9, %c0_10] : memref<4x12xf32, #tpu.memory_space<vmem>>, vector<4x12xf32>
    %c0_11 = arith.constant 0 : index
    %c0_12 = arith.constant 0 : index
    %37 = vector.load %arg6[%c0_11, %c0_12] : memref<12x9xf32, #tpu.memory_space<vmem>>, vector<12x9xf32>
    %cst = arith.constant dense<0.000000e+00> : vector<12x256xf32>
    %38 = tpu.matmul %35, %34, %cst {dimension_numbers = #tpu.dot_dimension_numbers<[1], [0], [0], [1], [0, 0, 1, 1], [], []>} : vector<12x4xf32>, vector<4x256xf32>, vector<12x256xf32> -> vector<12x256xf32>
    %c0_13 = arith.constant 0 : index
    %c0_14 = arith.constant 0 : index
    %39 = vector.load %arg3[%c0_13, %c0_14] : memref<12x1xf32, #tpu.memory_space<vmem>>, vector<12x1xf32>
    %40 = vector.broadcast %39 : vector<12x1xf32> to vector<12x256xf32>
    %41 = arith.addf %38, %40 : vector<12x256xf32>
    %cst_15 = arith.constant 0.000000e+00 : f32
    %42 = vector.broadcast %cst_15 : f32 to vector<12x256xf32>
    %43 = arith.subf %42, %41 : vector<12x256xf32>
    %44 = math.exp %43 : vector<12x256xf32>
    %cst_16 = arith.constant 1.000000e+00 : f32
    %45 = vector.broadcast %cst_16 : f32 to vector<12x256xf32>
    %46 = arith.addf %45, %44 : vector<12x256xf32>
    %47 = tpu.reciprocal %46 {approx = true} : vector<12x256xf32> -> vector<12x256xf32>
    %48 = arith.mulf %41, %47 : vector<12x256xf32>
    %c0_17 = arith.constant 0 : index
    %c0_18 = arith.constant 0 : index
    %49 = vector.load %arg4[%c0_17, %c0_18] : memref<12x1xf32, #tpu.memory_space<vmem>>, vector<12x1xf32>
    %c0_19 = arith.constant 0 : index
    %c0_20 = arith.constant 0 : index
    %50 = vector.load %arg5[%c0_19, %c0_20] : memref<12x1xf32, #tpu.memory_space<vmem>>, vector<12x1xf32>
    %c0_21 = arith.constant 0 : index
    %c0_22 = arith.constant 0 : index
    %51 = vector.load %arg14[%c0_21, %c0_22] : memref<4x12xf32, #tpu.memory_space<vmem>>, vector<4x12xf32>
    %c0_23 = arith.constant 0 : index
    %c0_24 = arith.constant 0 : index
    %52 = vector.load %arg15[%c0_23, %c0_24] : memref<12x4xf32, #tpu.memory_space<vmem>>, vector<12x4xf32>
    %cst_25 = arith.constant dense<0.000000e+00> : vector<12xf32>
    %53 = vector.multi_reduction <add>, %48, %cst_25 [1] : vector<12x256xf32> to vector<12xf32>
    %54 = vector.shape_cast %53 : vector<12xf32> to vector<12x1xf32>
    %55 = arith.mulf %48, %48 : vector<12x256xf32>
    %cst_26 = arith.constant dense<0.000000e+00> : vector<12xf32>
    %56 = vector.multi_reduction <add>, %55, %cst_26 [1] : vector<12x256xf32> to vector<12xf32>
    %57 = vector.shape_cast %56 : vector<12xf32> to vector<12x1xf32>
    %58 = tpu.concatenate %54, %57 in 1 : vector<12x1xf32>, vector<12x1xf32> -> vector<12x2xf32>
    %cst_27 = arith.constant dense<0.000000e+00> : vector<4x2xf32>
    %59 = tpu.matmul %51, %58, %cst_27 {dimension_numbers = #tpu.dot_dimension_numbers<[1], [0], [0], [1], [0, 0, 1, 1], [], []>, precision = #tpu.contract_precision<fp32>} : vector<4x12xf32>, vector<12x2xf32>, vector<4x2xf32> -> vector<4x2xf32>
    %cst_28 = arith.constant dense<0.000000e+00> : vector<12x2xf32>
    %60 = tpu.matmul %52, %59, %cst_28 {dimension_numbers = #tpu.dot_dimension_numbers<[1], [0], [0], [1], [0, 0, 1, 1], [], []>, precision = #tpu.contract_precision<fp32>} : vector<12x4xf32>, vector<4x2xf32>, vector<12x2xf32> -> vector<12x2xf32>
    %cst_29 = arith.constant 0.00130208337 : f32
    %61 = vector.broadcast %cst_29 : f32 to vector<12x2xf32>
    %62 = arith.mulf %60, %61 : vector<12x2xf32>
    %63 = vector.extract_strided_slice %62 {offsets = [0, 0], sizes = [12, 1], strides = [1, 1]} : vector<12x2xf32> to vector<12x1xf32>
    %64 = vector.extract_strided_slice %62 {offsets = [0, 1], sizes = [12, 1], strides = [1, 1]} : vector<12x2xf32> to vector<12x1xf32>
    %65 = arith.mulf %63, %63 : vector<12x1xf32>
    %66 = arith.subf %64, %65 : vector<12x1xf32>
    %cst_30 = arith.constant 0.000000e+00 : f32
    %67 = vector.broadcast %cst_30 : f32 to vector<12x1xf32>
    %68 = arith.maximumf %66, %67 : vector<12x1xf32>
    %cst_31 = arith.constant 9.99999974E-6 : f32
    %69 = vector.broadcast %cst_31 : f32 to vector<12x1xf32>
    %70 = arith.addf %68, %69 : vector<12x1xf32>
    %71 = math.rsqrt %70 : vector<12x1xf32>
    %72 = arith.mulf %49, %71 : vector<12x1xf32>
    %73 = arith.mulf %63, %72 : vector<12x1xf32>
    %74 = arith.subf %50, %73 : vector<12x1xf32>
    %75 = vector.broadcast %72 : vector<12x1xf32> to vector<12x256xf32>
    %76 = arith.mulf %48, %75 : vector<12x256xf32>
    %77 = vector.broadcast %74 : vector<12x1xf32> to vector<12x256xf32>
    %78 = arith.addf %76, %77 : vector<12x256xf32>
    %79 = vector.broadcast %20 : vector<1x256xf32> to vector<12x256xf32>
    %80 = arith.mulf %78, %79 : vector<12x256xf32>
    %c1_i32_32 = arith.constant 1 : i32
    %81 = tpu.dynamic_rotate %80 by %c1_i32_32 dim 1 : vector<12x256xf32>, i32 -> vector<12x256xf32>
    %82 = vector.broadcast %24 : vector<1x256xf32> to vector<12x256xf32>
    %83 = arith.mulf %78, %82 : vector<12x256xf32>
    %c255_i32 = arith.constant 255 : i32
    %84 = tpu.dynamic_rotate %83 by %c255_i32 dim 1 : vector<12x256xf32>, i32 -> vector<12x256xf32>
    %85 = vector.extract_strided_slice %37 {offsets = [0, 0], sizes = [12, 1], strides = [1, 1]} : vector<12x9xf32> to vector<12x1xf32>
    %86 = vector.broadcast %85 : vector<12x1xf32> to vector<12x256xf32>
    %87 = arith.mulf %81, %86 : vector<12x256xf32>
    %88 = vector.extract_strided_slice %37 {offsets = [0, 1], sizes = [12, 1], strides = [1, 1]} : vector<12x9xf32> to vector<12x1xf32>
    %89 = vector.broadcast %88 : vector<12x1xf32> to vector<12x256xf32>
    %90 = arith.mulf %78, %89 : vector<12x256xf32>
    %91 = arith.addf %87, %90 : vector<12x256xf32>
    %92 = vector.extract_strided_slice %37 {offsets = [0, 2], sizes = [12, 1], strides = [1, 1]} : vector<12x9xf32> to vector<12x1xf32>
    %93 = vector.broadcast %92 : vector<12x1xf32> to vector<12x256xf32>
    %94 = arith.mulf %84, %93 : vector<12x256xf32>
    %95 = arith.addf %91, %94 : vector<12x256xf32>
    %c16_i32_33 = arith.constant 16 : i32
    %96 = tpu.dynamic_rotate %95 by %c16_i32_33 dim 1 : vector<12x256xf32>, i32 -> vector<12x256xf32>
    %97 = vector.broadcast %28 : vector<1x256xf32> to vector<12x256xf32>
    %98 = arith.mulf %96, %97 : vector<12x256xf32>
    %99 = vector.extract_strided_slice %37 {offsets = [0, 3], sizes = [12, 1], strides = [1, 1]} : vector<12x9xf32> to vector<12x1xf32>
    %100 = vector.broadcast %99 : vector<12x1xf32> to vector<12x256xf32>
    %101 = arith.mulf %81, %100 : vector<12x256xf32>
    %102 = vector.extract_strided_slice %37 {offsets = [0, 4], sizes = [12, 1], strides = [1, 1]} : vector<12x9xf32> to vector<12x1xf32>
    %103 = vector.broadcast %102 : vector<12x1xf32> to vector<12x256xf32>
    %104 = arith.mulf %78, %103 : vector<12x256xf32>
    %105 = arith.addf %101, %104 : vector<12x256xf32>
    %106 = vector.extract_strided_slice %37 {offsets = [0, 5], sizes = [12, 1], strides = [1, 1]} : vector<12x9xf32> to vector<12x1xf32>
    %107 = vector.broadcast %106 : vector<12x1xf32> to vector<12x256xf32>
    %108 = arith.mulf %84, %107 : vector<12x256xf32>
    %109 = arith.addf %105, %108 : vector<12x256xf32>
    %110 = arith.addf %98, %109 : vector<12x256xf32>
    %111 = vector.extract_strided_slice %37 {offsets = [0, 6], sizes = [12, 1], strides = [1, 1]} : vector<12x9xf32> to vector<12x1xf32>
    %112 = vector.broadcast %111 : vector<12x1xf32> to vector<12x256xf32>
    %113 = arith.mulf %81, %112 : vector<12x256xf32>
    %114 = vector.extract_strided_slice %37 {offsets = [0, 7], sizes = [12, 1], strides = [1, 1]} : vector<12x9xf32> to vector<12x1xf32>
    %115 = vector.broadcast %114 : vector<12x1xf32> to vector<12x256xf32>
    %116 = arith.mulf %78, %115 : vector<12x256xf32>
    %117 = arith.addf %113, %116 : vector<12x256xf32>
    %118 = vector.extract_strided_slice %37 {offsets = [0, 8], sizes = [12, 1], strides = [1, 1]} : vector<12x9xf32> to vector<12x1xf32>
    %119 = vector.broadcast %118 : vector<12x1xf32> to vector<12x256xf32>
    %120 = arith.mulf %84, %119 : vector<12x256xf32>
    %121 = arith.addf %117, %120 : vector<12x256xf32>
    %c240_i32_34 = arith.constant 240 : i32
    %122 = tpu.dynamic_rotate %121 by %c240_i32_34 dim 1 : vector<12x256xf32>, i32 -> vector<12x256xf32>
    %123 = vector.broadcast %32 : vector<1x256xf32> to vector<12x256xf32>
    %124 = arith.mulf %122, %123 : vector<12x256xf32>
    %125 = arith.addf %110, %124 : vector<12x256xf32>
    %c0_35 = arith.constant 0 : index
    %c0_36 = arith.constant 0 : index
    %126 = vector.load %arg7[%c0_35, %c0_36] : memref<12x1xf32, #tpu.memory_space<vmem>>, vector<12x1xf32>
    %127 = vector.broadcast %126 : vector<12x1xf32> to vector<12x256xf32>
    %128 = arith.addf %125, %127 : vector<12x256xf32>
    %cst_37 = arith.constant 0.000000e+00 : f32
    %129 = vector.broadcast %cst_37 : f32 to vector<12x256xf32>
    %130 = arith.subf %129, %128 : vector<12x256xf32>
    %131 = math.exp %130 : vector<12x256xf32>
    %cst_38 = arith.constant 1.000000e+00 : f32
    %132 = vector.broadcast %cst_38 : f32 to vector<12x256xf32>
    %133 = arith.addf %132, %131 : vector<12x256xf32>
    %134 = tpu.reciprocal %133 {approx = true} : vector<12x256xf32> -> vector<12x256xf32>
    %135 = arith.mulf %128, %134 : vector<12x256xf32>
    %c0_39 = arith.constant 0 : index
    %c0_40 = arith.constant 0 : index
    %136 = vector.load %arg8[%c0_39, %c0_40] : memref<12x1xf32, #tpu.memory_space<vmem>>, vector<12x1xf32>
    %c0_41 = arith.constant 0 : index
    %c0_42 = arith.constant 0 : index
    %137 = vector.load %arg9[%c0_41, %c0_42] : memref<12x1xf32, #tpu.memory_space<vmem>>, vector<12x1xf32>
    %c0_43 = arith.constant 0 : index
    %c0_44 = arith.constant 0 : index
    %138 = vector.load %arg14[%c0_43, %c0_44] : memref<4x12xf32, #tpu.memory_space<vmem>>, vector<4x12xf32>
    %c0_45 = arith.constant 0 : index
    %c0_46 = arith.constant 0 : index
    %139 = vector.load %arg15[%c0_45, %c0_46] : memref<12x4xf32, #tpu.memory_space<vmem>>, vector<12x4xf32>
    %cst_47 = arith.constant dense<0.000000e+00> : vector<12xf32>
    %140 = vector.multi_reduction <add>, %135, %cst_47 [1] : vector<12x256xf32> to vector<12xf32>
    %141 = vector.shape_cast %140 : vector<12xf32> to vector<12x1xf32>
    %142 = arith.mulf %135, %135 : vector<12x256xf32>
    %cst_48 = arith.constant dense<0.000000e+00> : vector<12xf32>
    %143 = vector.multi_reduction <add>, %142, %cst_48 [1] : vector<12x256xf32> to vector<12xf32>
    %144 = vector.shape_cast %143 : vector<12xf32> to vector<12x1xf32>
    %145 = tpu.concatenate %141, %144 in 1 : vector<12x1xf32>, vector<12x1xf32> -> vector<12x2xf32>
    %cst_49 = arith.constant dense<0.000000e+00> : vector<4x2xf32>
    %146 = tpu.matmul %138, %145, %cst_49 {dimension_numbers = #tpu.dot_dimension_numbers<[1], [0], [0], [1], [0, 0, 1, 1], [], []>, precision = #tpu.contract_precision<fp32>} : vector<4x12xf32>, vector<12x2xf32>, vector<4x2xf32> -> vector<4x2xf32>
    %cst_50 = arith.constant dense<0.000000e+00> : vector<12x2xf32>
    %147 = tpu.matmul %139, %146, %cst_50 {dimension_numbers = #tpu.dot_dimension_numbers<[1], [0], [0], [1], [0, 0, 1, 1], [], []>, precision = #tpu.contract_precision<fp32>} : vector<12x4xf32>, vector<4x2xf32>, vector<12x2xf32> -> vector<12x2xf32>
    %cst_51 = arith.constant 0.00130208337 : f32
    %148 = vector.broadcast %cst_51 : f32 to vector<12x2xf32>
    %149 = arith.mulf %147, %148 : vector<12x2xf32>
    %150 = vector.extract_strided_slice %149 {offsets = [0, 0], sizes = [12, 1], strides = [1, 1]} : vector<12x2xf32> to vector<12x1xf32>
    %151 = vector.extract_strided_slice %149 {offsets = [0, 1], sizes = [12, 1], strides = [1, 1]} : vector<12x2xf32> to vector<12x1xf32>
    %152 = arith.mulf %150, %150 : vector<12x1xf32>
    %153 = arith.subf %151, %152 : vector<12x1xf32>
    %cst_52 = arith.constant 0.000000e+00 : f32
    %154 = vector.broadcast %cst_52 : f32 to vector<12x1xf32>
    %155 = arith.maximumf %153, %154 : vector<12x1xf32>
    %cst_53 = arith.constant 9.99999974E-6 : f32
    %156 = vector.broadcast %cst_53 : f32 to vector<12x1xf32>
    %157 = arith.addf %155, %156 : vector<12x1xf32>
    %158 = math.rsqrt %157 : vector<12x1xf32>
    %159 = arith.mulf %136, %158 : vector<12x1xf32>
    %160 = arith.mulf %150, %159 : vector<12x1xf32>
    %161 = arith.subf %137, %160 : vector<12x1xf32>
    %162 = vector.broadcast %159 : vector<12x1xf32> to vector<12x256xf32>
    %163 = arith.mulf %135, %162 : vector<12x256xf32>
    %164 = vector.broadcast %161 : vector<12x1xf32> to vector<12x256xf32>
    %165 = arith.addf %163, %164 : vector<12x256xf32>
    %cst_54 = arith.constant dense<0.000000e+00> : vector<4x256xf32>
    %166 = tpu.matmul %36, %165, %cst_54 {dimension_numbers = #tpu.dot_dimension_numbers<[1], [0], [0], [1], [0, 0, 1, 1], [], []>} : vector<4x12xf32>, vector<12x256xf32>, vector<4x256xf32> -> vector<4x256xf32>
    %c0_55 = arith.constant 0 : index
    %c0_56 = arith.constant 0 : index
    %167 = vector.load %arg11[%c0_55, %c0_56] : memref<4x1xf32, #tpu.memory_space<vmem>>, vector<4x1xf32>
    %168 = vector.broadcast %167 : vector<4x1xf32> to vector<4x256xf32>
    %169 = arith.addf %166, %168 : vector<4x256xf32>
    %c0_57 = arith.constant 0 : index
    %c0_58 = arith.constant 0 : index
    %170 = vector.load %arg12[%c0_57, %c0_58] : memref<4x1xf32, #tpu.memory_space<vmem>>, vector<4x1xf32>
    %c0_59 = arith.constant 0 : index
    %c0_60 = arith.constant 0 : index
    %171 = vector.load %arg13[%c0_59, %c0_60] : memref<4x1xf32, #tpu.memory_space<vmem>>, vector<4x1xf32>
    %c0_61 = arith.constant 0 : index
    %c0_62 = arith.constant 0 : index
    %172 = vector.load %arg16[%c0_61, %c0_62] : memref<4x4xf32, #tpu.memory_space<vmem>>, vector<4x4xf32>
    %c0_63 = arith.constant 0 : index
    %c0_64 = arith.constant 0 : index
    %173 = vector.load %arg17[%c0_63, %c0_64] : memref<4x4xf32, #tpu.memory_space<vmem>>, vector<4x4xf32>
    %cst_65 = arith.constant dense<0.000000e+00> : vector<4xf32>
    %174 = vector.multi_reduction <add>, %169, %cst_65 [1] : vector<4x256xf32> to vector<4xf32>
    %175 = vector.shape_cast %174 : vector<4xf32> to vector<4x1xf32>
    %176 = arith.mulf %169, %169 : vector<4x256xf32>
    %cst_66 = arith.constant dense<0.000000e+00> : vector<4xf32>
    %177 = vector.multi_reduction <add>, %176, %cst_66 [1] : vector<4x256xf32> to vector<4xf32>
    %178 = vector.shape_cast %177 : vector<4xf32> to vector<4x1xf32>
    %179 = tpu.concatenate %175, %178 in 1 : vector<4x1xf32>, vector<4x1xf32> -> vector<4x2xf32>
    %cst_67 = arith.constant dense<0.000000e+00> : vector<4x2xf32>
    %180 = tpu.matmul %172, %179, %cst_67 {dimension_numbers = #tpu.dot_dimension_numbers<[1], [0], [0], [1], [0, 0, 1, 1], [], []>, precision = #tpu.contract_precision<fp32>} : vector<4x4xf32>, vector<4x2xf32>, vector<4x2xf32> -> vector<4x2xf32>
    %cst_68 = arith.constant dense<0.000000e+00> : vector<4x2xf32>
    %181 = tpu.matmul %173, %180, %cst_68 {dimension_numbers = #tpu.dot_dimension_numbers<[1], [0], [0], [1], [0, 0, 1, 1], [], []>, precision = #tpu.contract_precision<fp32>} : vector<4x4xf32>, vector<4x2xf32>, vector<4x2xf32> -> vector<4x2xf32>
    %cst_69 = arith.constant 3.906250e-03 : f32
    %182 = vector.broadcast %cst_69 : f32 to vector<4x2xf32>
    %183 = arith.mulf %181, %182 : vector<4x2xf32>
    %184 = vector.extract_strided_slice %183 {offsets = [0, 0], sizes = [4, 1], strides = [1, 1]} : vector<4x2xf32> to vector<4x1xf32>
    %185 = vector.extract_strided_slice %183 {offsets = [0, 1], sizes = [4, 1], strides = [1, 1]} : vector<4x2xf32> to vector<4x1xf32>
    %186 = arith.mulf %184, %184 : vector<4x1xf32>
    %187 = arith.subf %185, %186 : vector<4x1xf32>
    %cst_70 = arith.constant 0.000000e+00 : f32
    %188 = vector.broadcast %cst_70 : f32 to vector<4x1xf32>
    %189 = arith.maximumf %187, %188 : vector<4x1xf32>
    %cst_71 = arith.constant 9.99999974E-6 : f32
    %190 = vector.broadcast %cst_71 : f32 to vector<4x1xf32>
    %191 = arith.addf %189, %190 : vector<4x1xf32>
    %192 = math.rsqrt %191 : vector<4x1xf32>
    %193 = arith.mulf %170, %192 : vector<4x1xf32>
    %194 = arith.mulf %184, %193 : vector<4x1xf32>
    %195 = arith.subf %171, %194 : vector<4x1xf32>
    %196 = vector.broadcast %193 : vector<4x1xf32> to vector<4x256xf32>
    %197 = arith.mulf %169, %196 : vector<4x256xf32>
    %198 = vector.broadcast %195 : vector<4x1xf32> to vector<4x256xf32>
    %199 = arith.addf %197, %198 : vector<4x256xf32>
    %200 = arith.addf %199, %34 : vector<4x256xf32>
    %c0_72 = arith.constant 0 : index
    %c0_73 = arith.constant 0 : index
    %c0_74 = arith.constant 0 : index
    %201 = vector.load %arg18[%c0_72, %c0_73, %c0_74] : memref<1x4x256xf32, #tpu.memory_space<vmem>>, vector<1x4x256xf32>
    %202 = vector.shape_cast %201 : vector<1x4x256xf32> to vector<4x256xf32>
    %203 = vector.shape_cast %200 : vector<4x256xf32> to vector<1x4x256xf32>
    tpu.vector_store %arg18[%c0_72, %c0_73, %c0_74], %203 {strides = array<i32>} : memref<1x4x256xf32, #tpu.memory_space<vmem>>, vector<1x4x256xf32>,
    return
  }
  func.func @transform_0(%arg0: i32) -> (i32, i32, i32) {
    %c0_i32 = arith.constant 0 : i32
    %c0_i32_0 = arith.constant 0 : i32
    %c0_i32_1 = arith.constant 0 : i32
    return %arg0, %c0_i32, %c0_i32_0 : i32, i32, i32
  }
  func.func @transform_1(%arg0: i32) -> (i32, i32) {
    %c0_i32 = arith.constant 0 : i32
    %c0_i32_0 = arith.constant 0 : i32
    %c0_i32_1 = arith.constant 0 : i32
    return %c0_i32, %c0_i32_0 : i32, i32
  }
  func.func @transform_2(%arg0: i32) -> (i32, i32) {
    %c0_i32 = arith.constant 0 : i32
    %c0_i32_0 = arith.constant 0 : i32
    %c0_i32_1 = arith.constant 0 : i32
    return %c0_i32, %c0_i32_0 : i32, i32
  }
  func.func @transform_3(%arg0: i32) -> (i32, i32) {
    %c0_i32 = arith.constant 0 : i32
    %c0_i32_0 = arith.constant 0 : i32
    %c0_i32_1 = arith.constant 0 : i32
    return %c0_i32, %c0_i32_0 : i32, i32
  }
  func.func @transform_4(%arg0: i32) -> (i32, i32) {
    %c0_i32 = arith.constant 0 : i32
    %c0_i32_0 = arith.constant 0 : i32
    %c0_i32_1 = arith.constant 0 : i32
    return %c0_i32, %c0_i32_0 : i32, i32
  }
  func.func @transform_5(%arg0: i32) -> (i32, i32) {
    %c0_i32 = arith.constant 0 : i32
    %c0_i32_0 = arith.constant 0 : i32
    %c0_i32_1 = arith.constant 0 : i32
    return %c0_i32, %c0_i32_0 : i32, i32
  }
  func.func @transform_6(%arg0: i32) -> (i32, i32) {
    %c0_i32 = arith.constant 0 : i32
    %c0_i32_0 = arith.constant 0 : i32
    %c0_i32_1 = arith.constant 0 : i32
    return %c0_i32, %c0_i32_0 : i32, i32
  }
  func.func @transform_7(%arg0: i32) -> (i32, i32) {
    %c0_i32 = arith.constant 0 : i32
    %c0_i32_0 = arith.constant 0 : i32
    %c0_i32_1 = arith.constant 0 : i32
    return %c0_i32, %c0_i32_0 : i32, i32
  }
  func.func @transform_8(%arg0: i32) -> (i32, i32) {
    %c0_i32 = arith.constant 0 : i32
    %c0_i32_0 = arith.constant 0 : i32
    %c0_i32_1 = arith.constant 0 : i32
    return %c0_i32, %c0_i32_0 : i32, i32
  }
  func.func @transform_9(%arg0: i32) -> (i32, i32) {
    %c0_i32 = arith.constant 0 : i32
    %c0_i32_0 = arith.constant 0 : i32
    %c0_i32_1 = arith.constant 0 : i32
    return %c0_i32, %c0_i32_0 : i32, i32
  }
  func.func @transform_10(%arg0: i32) -> (i32, i32) {
    %c0_i32 = arith.constant 0 : i32
    %c0_i32_0 = arith.constant 0 : i32
    %c0_i32_1 = arith.constant 0 : i32
    return %c0_i32, %c0_i32_0 : i32, i32
  }
  func.func @transform_11(%arg0: i32) -> (i32, i32) {
    %c0_i32 = arith.constant 0 : i32
    %c0_i32_0 = arith.constant 0 : i32
    %c0_i32_1 = arith.constant 0 : i32
    return %c0_i32, %c0_i32_0 : i32, i32
  }
  func.func @transform_12(%arg0: i32) -> (i32, i32) {
    %c0_i32 = arith.constant 0 : i32
    %c0_i32_0 = arith.constant 0 : i32
    %c0_i32_1 = arith.constant 0 : i32
    return %c0_i32, %c0_i32_0 : i32, i32
  }
  func.func @transform_13(%arg0: i32) -> (i32, i32) {
    %c0_i32 = arith.constant 0 : i32
    %c0_i32_0 = arith.constant 0 : i32
    %c0_i32_1 = arith.constant 0 : i32
    return %c0_i32, %c0_i32_0 : i32, i32
  }
  func.func @transform_14(%arg0: i32) -> (i32, i32) {
    %c0_i32 = arith.constant 0 : i32
    %c0_i32_0 = arith.constant 0 : i32
    %c0_i32_1 = arith.constant 0 : i32
    return %c0_i32, %c0_i32_0 : i32, i32
  }
  func.func @transform_15(%arg0: i32) -> (i32, i32) {
    %c0_i32 = arith.constant 0 : i32
    %c0_i32_0 = arith.constant 0 : i32
    %c0_i32_1 = arith.constant 0 : i32
    return %c0_i32, %c0_i32_0 : i32, i32
  }
  func.func @transform_16(%arg0: i32) -> (i32, i32) {
    %c0_i32 = arith.constant 0 : i32
    %c0_i32_0 = arith.constant 0 : i32
    %c0_i32_1 = arith.constant 0 : i32
    return %c0_i32, %c0_i32_0 : i32, i32
  }
  func.func @transform_17(%arg0: i32) -> (i32, i32, i32) {
    %c0_i32 = arith.constant 0 : i32
    %c0_i32_0 = arith.constant 0 : i32
    %c0_i32_1 = arith.constant 0 : i32
    return %arg0, %c0_i32, %c0_i32_0 : i32, i32, i32
  }
}

</mosaic_0001>

<llo_original>
// kernel: tpu_custom_call.1
$region0: #{tpu_custom_call.1}
  #allocation0 [shape = 'u32[]', space=smem, size = 0x4, offset = 0x4, fixed_abs, tag = 'smem constant byte address 0x4 - core index']
  #allocation1 [shape = 'u32[144,128]{1,0:T(1,128)}', space=vmem, size = 0x12000, scoped, tag = 'internal scratch']
  %s0 = inlined_call_operand.vmem [shape: f32[2,4,256], index: 0, kind: input, shape index: {}]
  %s1 = inlined_call_operand.vmem [shape: f32[12,4], index: 1, kind: input, shape index: {}]
  %s2 = inlined_call_operand.vmem [shape: f32[12,1], index: 2, kind: input, shape index: {}]
  %s3 = inlined_call_operand.vmem [shape: f32[12,1], index: 3, kind: input, shape index: {}]
  %s4 = inlined_call_operand.vmem [shape: f32[12,1], index: 4, kind: input, shape index: {}]
  %s5 = inlined_call_operand.vmem [shape: f32[12,9], index: 5, kind: input, shape index: {}]
  %s6 = inlined_call_operand.vmem [shape: f32[12,1], index: 6, kind: input, shape index: {}]
  %s7 = inlined_call_operand.vmem [shape: f32[12,1], index: 7, kind: input, shape index: {}]
  %s8 = inlined_call_operand.vmem [shape: f32[12,1], index: 8, kind: input, shape index: {}]
  %s9 = inlined_call_operand.vmem [shape: f32[4,12], index: 9, kind: input, shape index: {}]
  %s10 = inlined_call_operand.vmem [shape: f32[4,1], index: 10, kind: input, shape index: {}]
  %s11 = inlined_call_operand.vmem [shape: f32[4,1], index: 11, kind: input, shape index: {}]
  %s12 = inlined_call_operand.vmem [shape: f32[4,1], index: 12, kind: input, shape index: {}]
  %s13 = inlined_call_operand.vmem [shape: f32[4,12], index: 13, kind: input, shape index: {}]
  %s14 = inlined_call_operand.vmem [shape: f32[12,4], index: 14, kind: input, shape index: {}]
  %s15 = inlined_call_operand.vmem [shape: f32[4,4], index: 15, kind: input, shape index: {}]
  %s16 = inlined_call_operand.vmem [shape: f32[4,4], index: 16, kind: input, shape index: {}]
  %s17 = inlined_call_operand.hbm [shape: f32[2,4,256], index: 17, kind: output, shape index: {}]
  %s18 = sld [smem:[#allocation0]]
  $region101: #{tpu_custom_call.1} parent=0
    _
  %s20 = ssub.s32 1, %s18
  %s21 = scalar_select 0, %s20, %s18
  $region1: #{tpu_custom_call.1} parent=0
    #allocation2 [shape = 'u8[8192]{0}', space=vmem, size = 0x2000, scoped, tag = 'output window, operand 0']
    #allocation3 [shape = 's32[2]{0}', space=sflag, size = 0x8, scoped, tag = 'scoped memory for tpu_custom_call.1']
    %22 = vsyncpa [#allocation3], 0
    %s23 = scalar_lea.sflag [#allocation3], 1
    %24 = vsyncpa %s23, 0
    loop: start=0, step=1, limit=4
    $region2: #{tpu_custom_call.1} parent=1 // loop_pre_header
      _
    $region3: #{tpu_custom_call.1} parent=1 // loop_header
      %s26 = sphi 0, %s30
      %p27 = scmp.ge.s32.totalorder %s26, 4
      %s36 = sphi 0, %s38
      %s39 = sphi 0, %s36
      %s40 = sphi 0, %s39
      %s56 = sphi 0, %s40
      %s60 = sphi 0, %s60
      %s62 = sphi 0, %s60
      %s63 = sphi 0, %s62
      %s77 = sphi 0, %s63
      %s81 = sphi 0, %s81
      %s83 = sphi 0, %s81
      %s84 = sphi 0, %s83
      %s98 = sphi 0, %s84
      %s102 = sphi 0, %s102
      %s104 = sphi 0, %s102
      %s105 = sphi 0, %s104
      %s119 = sphi 0, %s105
      %s123 = sphi 0, %s123
      %s125 = sphi 0, %s123
      %s126 = sphi 0, %s125
      %s140 = sphi 0, %s126
      %s144 = sphi 0, %s144
      %s146 = sphi 0, %s144
      %s147 = sphi 0, %s146
      %s161 = sphi 0, %s147
      %s165 = sphi 0, %s165
      %s167 = sphi 0, %s165
      %s168 = sphi 0, %s167
      %s182 = sphi 0, %s168
      %s186 = sphi 0, %s186
      %s188 = sphi 0, %s186
      %s189 = sphi 0, %s188
      %s203 = sphi 0, %s189
      %s207 = sphi 0, %s207
      %s209 = sphi 0, %s207
      %s210 = sphi 0, %s209
      %s224 = sphi 0, %s210
      %s228 = sphi 0, %s228
      %s230 = sphi 0, %s228
      %s231 = sphi 0, %s230
      %s245 = sphi 0, %s231
      %s249 = sphi 0, %s249
      %s251 = sphi 0, %s249
      %s252 = sphi 0, %s251
      %s266 = sphi 0, %s252
      %s270 = sphi 0, %s270
      %s272 = sphi 0, %s270
      %s273 = sphi 0, %s272
      %s287 = sphi 0, %s273
      %s291 = sphi 0, %s291
      %s293 = sphi 0, %s291
      %s294 = sphi 0, %s293
      %s308 = sphi 0, %s294
      %s312 = sphi 0, %s312
      %s314 = sphi 0, %s312
      %s315 = sphi 0, %s314
      %s329 = sphi 0, %s315
      %s333 = sphi 0, %s333
      %s335 = sphi 0, %s333
      %s336 = sphi 0, %s335
      %s350 = sphi 0, %s336
      %s354 = sphi 0, %s354
      %s356 = sphi 0, %s354
      %s357 = sphi 0, %s356
      %s371 = sphi 0, %s357
      %s375 = sphi 0, %s375
      %s377 = sphi 0, %s375
      %s378 = sphi 0, %s377
      %s392 = sphi 0, %s378
      %s398 = sphi 0, %s400
      %s401 = sphi 0, %s398
      %s402 = sphi 0, %s401
      %s418 = sphi 0, %s402
    $region4: #{tpu_custom_call.1} parent=1 // loop_header_branch
      %29 = sbr.rel (%p27) target = $region8
    $region5: #{tpu_custom_call.1} parent=1 // loop_body
      %s31 = ssub.s32 %s26, 1
      %s32 = ssub.s32 %s26, 2
      %s33 = sadd.s32 %s26, 1
      %s34 = ssub.s32 %s26, %s33
      %p35 = scmp.eq.s32.totalorder %s34, 0
      %s37 = sadd.s32 %s36, 1
      %s38 = scalar_select %p35, %s36, %s37
      %p41 = pneg %p35
      %p42 = scmp.eq.s32.totalorder %s26, 1
      %p43 = por %p41, %p42
      %p44 = scmp.ne.s32.totalorder %s36, %s39
      %p45 = scmp.eq.s32.totalorder %s26, 0
      %p46 = por %p44, %p45
      %p47 = scmp.ne.s32.totalorder %s36, %s39
      %p48 = scmp.eq.s32.totalorder %s31, 1
      %p49 = por %p47, %p48
      %p50 = scmp.ne.s32.totalorder %s39, %s40
      %p51 = scmp.eq.s32.totalorder %s31, 0
      %p52 = por %p50, %p51
      %p53 = scmp.ne.s32.totalorder %s39, %s40
      %p54 = scmp.eq.s32.totalorder %s32, 1
      %p55 = por %p53, %p54
      %p57 = scmp.ne.s32.totalorder %s40, %s56
      %p58 = scmp.eq.s32.totalorder %s32, 0
      %p59 = por %p57, %p58
      %s61 = sadd.s32 %s60, 1
      %p64 = scmp.eq.s32.totalorder %s26, 1
      %p65 = scmp.ne.s32.totalorder %s60, %s62
      %p66 = scmp.eq.s32.totalorder %s26, 0
      %p67 = por %p65, %p66
      %p68 = scmp.ne.s32.totalorder %s60, %s62
      %p69 = scmp.eq.s32.totalorder %s31, 1
      %p70 = por %p68, %p69
      %p71 = scmp.ne.s32.totalorder %s62, %s63
      %p72 = scmp.eq.s32.totalorder %s31, 0
      %p73 = por %p71, %p72
      %p74 = scmp.ne.s32.totalorder %s62, %s63
      %p75 = scmp.eq.s32.totalorder %s32, 1
      %p76 = por %p74, %p75
      %p78 = scmp.ne.s32.totalorder %s63, %s77
      %p79 = scmp.eq.s32.totalorder %s32, 0
      %p80 = por %p78, %p79
      %s82 = sadd.s32 %s81, 1
      %p85 = scmp.eq.s32.totalorder %s26, 1
      %p86 = scmp.ne.s32.totalorder %s81, %s83
      %p87 = scmp.eq.s32.totalorder %s26, 0
      %p88 = por %p86, %p87
      %p89 = scmp.ne.s32.totalorder %s81, %s83
      %p90 = scmp.eq.s32.totalorder %s31, 1
      %p91 = por %p89, %p90
      %p92 = scmp.ne.s32.totalorder %s83, %s84
      %p93 = scmp.eq.s32.totalorder %s31, 0
      %p94 = por %p92, %p93
      %p95 = scmp.ne.s32.totalorder %s83, %s84
      %p96 = scmp.eq.s32.totalorder %s32, 1
      %p97 = por %p95, %p96
      %p99 = scmp.ne.s32.totalorder %s84, %s98
      %p100 = scmp.eq.s32.totalorder %s32, 0
      %p101 = por %p99, %p100
      %s103 = sadd.s32 %s102, 1
      %p106 = scmp.eq.s32.totalorder %s26, 1
      %p107 = scmp.ne.s32.totalorder %s102, %s104
      %p108 = scmp.eq.s32.totalorder %s26, 0
      %p109 = por %p107, %p108
      %p110 = scmp.ne.s32.totalorder %s102, %s104
      %p111 = scmp.eq.s32.totalorder %s31, 1
      %p112 = por %p110, %p111
      %p113 = scmp.ne.s32.totalorder %s104, %s105
      %p114 = scmp.eq.s32.totalorder %s31, 0
      %p115 = por %p113, %p114
      %p116 = scmp.ne.s32.totalorder %s104, %s105
      %p117 = scmp.eq.s32.totalorder %s32, 1
      %p118 = por %p116, %p117
      %p120 = scmp.ne.s32.totalorder %s105, %s119
      %p121 = scmp.eq.s32.totalorder %s32, 0
      %p122 = por %p120, %p121
      %s124 = sadd.s32 %s123, 1
      %p127 = scmp.eq.s32.totalorder %s26, 1
      %p128 = scmp.ne.s32.totalorder %s123, %s125
      %p129 = scmp.eq.s32.totalorder %s26, 0
      %p130 = por %p128, %p129
      %p131 = scmp.ne.s32.totalorder %s123, %s125
      %p132 = scmp.eq.s32.totalorder %s31, 1
      %p133 = por %p131, %p132
      %p134 = scmp.ne.s32.totalorder %s125, %s126
      %p135 = scmp.eq.s32.totalorder %s31, 0
      %p136 = por %p134, %p135
      %p137 = scmp.ne.s32.totalorder %s125, %s126
      %p138 = scmp.eq.s32.totalorder %s32, 1
      %p139 = por %p137, %p138
      %p141 = scmp.ne.s32.totalorder %s126, %s140
      %p142 = scmp.eq.s32.totalorder %s32, 0
      %p143 = por %p141, %p142
      %s145 = sadd.s32 %s144, 1
      %p148 = scmp.eq.s32.totalorder %s26, 1
      %p149 = scmp.ne.s32.totalorder %s144, %s146
      %p150 = scmp.eq.s32.totalorder %s26, 0
      %p151 = por %p149, %p150
      %p152 = scmp.ne.s32.totalorder %s144, %s146
      %p153 = scmp.eq.s32.totalorder %s31, 1
      %p154 = por %p152, %p153
      %p155 = scmp.ne.s32.totalorder %s146, %s147
      %p156 = scmp.eq.s32.totalorder %s31, 0
      %p157 = por %p155, %p156
      %p158 = scmp.ne.s32.totalorder %s146, %s147
      %p159 = scmp.eq.s32.totalorder %s32, 1
      %p160 = por %p158, %p159
      %p162 = scmp.ne.s32.totalorder %s147, %s161
      %p163 = scmp.eq.s32.totalorder %s32, 0
      %p164 = por %p162, %p163
      %s166 = sadd.s32 %s165, 1
      %p169 = scmp.eq.s32.totalorder %s26, 1
      %p170 = scmp.ne.s32.totalorder %s165, %s167
      %p171 = scmp.eq.s32.totalorder %s26, 0
      %p172 = por %p170, %p171
      %p173 = scmp.ne.s32.totalorder %s165, %s167
      %p174 = scmp.eq.s32.totalorder %s31, 1
      %p175 = por %p173, %p174
      %p176 = scmp.ne.s32.totalorder %s167, %s168
      %p177 = scmp.eq.s32.totalorder %s31, 0
      %p178 = por %p176, %p177
      %p179 = scmp.ne.s32.totalorder %s167, %s168
      %p180 = scmp.eq.s32.totalorder %s32, 1
      %p181 = por %p179, %p180
      %p183 = scmp.ne.s32.totalorder %s168, %s182
      %p184 = scmp.eq.s32.totalorder %s32, 0
      %p185 = por %p183, %p184
      %s187 = sadd.s32 %s186, 1
      %p190 = scmp.eq.s32.totalorder %s26, 1
      %p191 = scmp.ne.s32.totalorder %s186, %s188
      %p192 = scmp.eq.s32.totalorder %s26, 0
      %p193 = por %p191, %p192
      %p194 = scmp.ne.s32.totalorder %s186, %s188
      %p195 = scmp.eq.s32.totalorder %s31, 1
      %p196 = por %p194, %p195
      %p197 = scmp.ne.s32.totalorder %s188, %s189
      %p198 = scmp.eq.s32.totalorder %s31, 0
      %p199 = por %p197, %p198
      %p200 = scmp.ne.s32.totalorder %s188, %s189
      %p201 = scmp.eq.s32.totalorder %s32, 1
      %p202 = por %p200, %p201
      %p204 = scmp.ne.s32.totalorder %s189, %s203
      %p205 = scmp.eq.s32.totalorder %s32, 0
      %p206 = por %p204, %p205
      %s208 = sadd.s32 %s207, 1
      %p211 = scmp.eq.s32.totalorder %s26, 1
      %p212 = scmp.ne.s32.totalorder %s207, %s209
      %p213 = scmp.eq.s32.totalorder %s26, 0
      %p214 = por %p212, %p213
      %p215 = scmp.ne.s32.totalorder %s207, %s209
      %p216 = scmp.eq.s32.totalorder %s31, 1
      %p217 = por %p215, %p216
      %p218 = scmp.ne.s32.totalorder %s209, %s210
      %p219 = scmp.eq.s32.totalorder %s31, 0
      %p220 = por %p218, %p219
      %p221 = scmp.ne.s32.totalorder %s209, %s210
      %p222 = scmp.eq.s32.totalorder %s32, 1
      %p223 = por %p221, %p222
      %p225 = scmp.ne.s32.totalorder %s210, %s224
      %p226 = scmp.eq.s32.totalorder %s32, 0
      %p227 = por %p225, %p226
      %s229 = sadd.s32 %s228, 1
      %p232 = scmp.eq.s32.totalorder %s26, 1
      %p233 = scmp.ne.s32.totalorder %s228, %s230
      %p234 = scmp.eq.s32.totalorder %s26, 0
      %p235 = por %p233, %p234
      %p236 = scmp.ne.s32.totalorder %s228, %s230
      %p237 = scmp.eq.s32.totalorder %s31, 1
      %p238 = por %p236, %p237
      %p239 = scmp.ne.s32.totalorder %s230, %s231
      %p240 = scmp.eq.s32.totalorder %s31, 0
      %p241 = por %p239, %p240
      %p242 = scmp.ne.s32.totalorder %s230, %s231
      %p243 = scmp.eq.s32.totalorder %s32, 1
      %p244 = por %p242, %p243
      %p246 = scmp.ne.s32.totalorder %s231, %s245
      %p247 = scmp.eq.s32.totalorder %s32, 0
      %p248 = por %p246, %p247
      %s250 = sadd.s32 %s249, 1
      %p253 = scmp.eq.s32.totalorder %s26, 1
      %p254 = scmp.ne.s32.totalorder %s249, %s251
      %p255 = scmp.eq.s32.totalorder %s26, 0
      %p256 = por %p254, %p255
      %p257 = scmp.ne.s32.totalorder %s249, %s251
      %p258 = scmp.eq.s32.totalorder %s31, 1
      %p259 = por %p257, %p258
      %p260 = scmp.ne.s32.totalorder %s251, %s252
      %p261 = scmp.eq.s32.totalorder %s31, 0
      %p262 = por %p260, %p261
      %p263 = scmp.ne.s32.totalorder %s251, %s252
      %p264 = scmp.eq.s32.totalorder %s32, 1
      %p265 = por %p263, %p264
      %p267 = scmp.ne.s32.totalorder %s252, %s266
      %p268 = scmp.eq.s32.totalorder %s32, 0
      %p269 = por %p267, %p268
      %s271 = sadd.s32 %s270, 1
      %p274 = scmp.eq.s32.totalorder %s26, 1
      %p275 = scmp.ne.s32.totalorder %s270, %s272
      %p276 = scmp.eq.s32.totalorder %s26, 0
      %p277 = por %p275, %p276
      %p278 = scmp.ne.s32.totalorder %s270, %s272
      %p279 = scmp.eq.s32.totalorder %s31, 1
      %p280 = por %p278, %p279
      %p281 = scmp.ne.s32.totalorder %s272, %s273
      %p282 = scmp.eq.s32.totalorder %s31, 0
      %p283 = por %p281, %p282
      %p284 = scmp.ne.s32.totalorder %s272, %s273
      %p285 = scmp.eq.s32.totalorder %s32, 1
      %p286 = por %p284, %p285
      %p288 = scmp.ne.s32.totalorder %s273, %s287
      %p289 = scmp.eq.s32.totalorder %s32, 0
      %p290 = por %p288, %p289
      %s292 = sadd.s32 %s291, 1
      %p295 = scmp.eq.s32.totalorder %s26, 1
      %p296 = scmp.ne.s32.totalorder %s291, %s293
      %p297 = scmp.eq.s32.totalorder %s26, 0
      %p298 = por %p296, %p297
      %p299 = scmp.ne.s32.totalorder %s291, %s293
      %p300 = scmp.eq.s32.totalorder %s31, 1
      %p301 = por %p299, %p300
      %p302 = scmp.ne.s32.totalorder %s293, %s294
      %p303 = scmp.eq.s32.totalorder %s31, 0
      %p304 = por %p302, %p303
      %p305 = scmp.ne.s32.totalorder %s293, %s294
      %p306 = scmp.eq.s32.totalorder %s32, 1
      %p307 = por %p305, %p306
      %p309 = scmp.ne.s32.totalorder %s294, %s308
      %p310 = scmp.eq.s32.totalorder %s32, 0
      %p311 = por %p309, %p310
      %s313 = sadd.s32 %s312, 1
      %p316 = scmp.eq.s32.totalorder %s26, 1
      %p317 = scmp.ne.s32.totalorder %s312, %s314
      %p318 = scmp.eq.s32.totalorder %s26, 0
      %p319 = por %p317, %p318
      %p320 = scmp.ne.s32.totalorder %s312, %s314
      %p321 = scmp.eq.s32.totalorder %s31, 1
      %p322 = por %p320, %p321
      %p323 = scmp.ne.s32.totalorder %s314, %s315
      %p324 = scmp.eq.s32.totalorder %s31, 0
      %p325 = por %p323, %p324
      %p326 = scmp.ne.s32.totalorder %s314, %s315
      %p327 = scmp.eq.s32.totalorder %s32, 1
      %p328 = por %p326, %p327
      %p330 = scmp.ne.s32.totalorder %s315, %s329
      %p331 = scmp.eq.s32.totalorder %s32, 0
      %p332 = por %p330, %p331
      %s334 = sadd.s32 %s333, 1
      %p337 = scmp.eq.s32.totalorder %s26, 1
      %p338 = scmp.ne.s32.totalorder %s333, %s335
      %p339 = scmp.eq.s32.totalorder %s26, 0
      %p340 = por %p338, %p339
      %p341 = scmp.ne.s32.totalorder %s333, %s335
      %p342 = scmp.eq.s32.totalorder %s31, 1
      %p343 = por %p341, %p342
      %p344 = scmp.ne.s32.totalorder %s335, %s336
      %p345 = scmp.eq.s32.totalorder %s31, 0
      %p346 = por %p344, %p345
      %p347 = scmp.ne.s32.totalorder %s335, %s336
      %p348 = scmp.eq.s32.totalorder %s32, 1
      %p349 = por %p347, %p348
      %p351 = scmp.ne.s32.totalorder %s336, %s350
      %p352 = scmp.eq.s32.totalorder %s32, 0
      %p353 = por %p351, %p352
      %s355 = sadd.s32 %s354, 1
      %p358 = scmp.eq.s32.totalorder %s26, 1
      %p359 = scmp.ne.s32.totalorder %s354, %s356
      %p360 = scmp.eq.s32.totalorder %s26, 0
      %p361 = por %p359, %p360
      %p362 = scmp.ne.s32.totalorder %s354, %s356
      %p363 = scmp.eq.s32.totalorder %s31, 1
      %p364 = por %p362, %p363
      %p365 = scmp.ne.s32.totalorder %s356, %s357
      %p366 = scmp.eq.s32.totalorder %s31, 0
      %p367 = por %p365, %p366
      %p368 = scmp.ne.s32.totalorder %s356, %s357
      %p369 = scmp.eq.s32.totalorder %s32, 1
      %p370 = por %p368, %p369
      %p372 = scmp.ne.s32.totalorder %s357, %s371
      %p373 = scmp.eq.s32.totalorder %s32, 0
      %p374 = por %p372, %p373
      %s376 = sadd.s32 %s375, 1
      %p379 = scmp.eq.s32.totalorder %s26, 1
      %p380 = scmp.ne.s32.totalorder %s375, %s377
      %p381 = scmp.eq.s32.totalorder %s26, 0
      %p382 = por %p380, %p381
      %p383 = scmp.ne.s32.totalorder %s375, %s377
      %p384 = scmp.eq.s32.totalorder %s31, 1
      %p385 = por %p383, %p384
      %p386 = scmp.ne.s32.totalorder %s377, %s378
      %p387 = scmp.eq.s32.totalorder %s31, 0
      %p388 = por %p386, %p387
      %p389 = scmp.ne.s32.totalorder %s377, %s378
      %p390 = scmp.eq.s32.totalorder %s32, 1
      %p391 = por %p389, %p390
      %p393 = scmp.ne.s32.totalorder %s378, %s392
      %p394 = scmp.eq.s32.totalorder %s32, 0
      %p395 = por %p393, %p394
      %s396 = ssub.s32 %s26, %s33
      %p397 = scmp.eq.s32.totalorder %s396, 0
      %s399 = sadd.s32 %s398, 1
      %s400 = scalar_select %p397, %s398, %s399
      %p403 = pneg %p397
      %p404 = scmp.eq.s32.totalorder %s26, 1
      %p405 = por %p403, %p404
      %p406 = scmp.ne.s32.totalorder %s398, %s401
      %p407 = scmp.eq.s32.totalorder %s26, 0
      %p408 = por %p406, %p407
      %p409 = scmp.ne.s32.totalorder %s398, %s401
      %p410 = scmp.eq.s32.totalorder %s31, 1
      %p411 = por %p409, %p410
      %p412 = scmp.ne.s32.totalorder %s401, %s402
      %p413 = scmp.eq.s32.totalorder %s31, 0
      %p414 = por %p412, %p413
      %p415 = scmp.ne.s32.totalorder %s401, %s402
      %p416 = scmp.eq.s32.totalorder %s32, 1
      %p417 = por %p415, %p416
      %p419 = scmp.ne.s32.totalorder %s402, %s418
      %p420 = scmp.eq.s32.totalorder %s32, 0
      %p421 = por %p419, %p420
      %p422 = scmp.le.s32.totalorder 1, %s26
      %p423 = scmp.lt.s32.totalorder %s26, 3
      %p424 = pnand %p422, %p423
      %p425 = pneg %p424
      // Predicated region
      $region9: #{tpu_custom_call.1} parent=5 // pred_check
        _
      $region10: #{tpu_custom_call.1} parent=5 // pred_check_branch
        %427 = sbr.rel (%p424) target = $region12
      $region11: #{tpu_custom_call.1} parent=5 // pred_region
        %s428 = ssub.s32 %s26, 1
        // Predicated region
        $region13: #{tpu_custom_call.1} parent=11 // pred_check
          %p429 = pneg %p73
        $region14: #{tpu_custom_call.1} parent=11 // pred_check_branch
          %431 = sbr.rel (%p429) target = $region16
        $region15: #{tpu_custom_call.1} parent=11 // pred_region
          _
        $region16: #{tpu_custom_call.1} parent=11 // pred_fallthru
          _
        // Predicated region
        $region17: #{tpu_custom_call.1} parent=11 // pred_check
          %p432 = pneg %p94
        $region18: #{tpu_custom_call.1} parent=11 // pred_check_branch
          %434 = sbr.rel (%p432) target = $region20
        $region19: #{tpu_custom_call.1} parent=11 // pred_region
          _
        $region20: #{tpu_custom_call.1} parent=11 // pred_fallthru
          _
        // Predicated region
        $region21: #{tpu_custom_call.1} parent=11 // pred_check
          %p435 = pneg %p115
        $region22: #{tpu_custom_call.1} parent=11 // pred_check_branch
          %437 = sbr.rel (%p435) target = $region24
        $region23: #{tpu_custom_call.1} parent=11 // pred_region
          _
        $region24: #{tpu_custom_call.1} parent=11 // pred_fallthru
          _
        // Predicated region
        $region25: #{tpu_custom_call.1} parent=11 // pred_check
          %p438 = pneg %p136
        $region26: #{tpu_custom_call.1} parent=11 // pred_check_branch
          %440 = sbr.rel (%p438) target = $region28
        $region27: #{tpu_custom_call.1} parent=11 // pred_region
          _
        $region28: #{tpu_custom_call.1} parent=11 // pred_fallthru
          _
        // Predicated region
        $region29: #{tpu_custom_call.1} parent=11 // pred_check
          %p441 = pneg %p157
        $region30: #{tpu_custom_call.1} parent=11 // pred_check_branch
          %443 = sbr.rel (%p441) target = $region32
        $region31: #{tpu_custom_call.1} parent=11 // pred_region
          _
        $region32: #{tpu_custom_call.1} parent=11 // pred_fallthru
          _
        // Predicated region
        $region33: #{tpu_custom_call.1} parent=11 // pred_check
          %p444 = pneg %p178
        $region34: #{tpu_custom_call.1} parent=11 // pred_check_branch
          %446 = sbr.rel (%p444) target = $region36
        $region35: #{tpu_custom_call.1} parent=11 // pred_region
          _
        $region36: #{tpu_custom_call.1} parent=11 // pred_fallthru
          _
        // Predicated region
        $region37: #{tpu_custom_call.1} parent=11 // pred_check
          %p447 = pneg %p199
        $region38: #{tpu_custom_call.1} parent=11 // pred_check_branch
          %449 = sbr.rel (%p447) target = $region40
        $region39: #{tpu_custom_call.1} parent=11 // pred_region
          _
        $region40: #{tpu_custom_call.1} parent=11 // pred_fallthru
          _
        // Predicated region
        $region41: #{tpu_custom_call.1} parent=11 // pred_check
          %p450 = pneg %p220
        $region42: #{tpu_custom_call.1} parent=11 // pred_check_branch
          %452 = sbr.rel (%p450) target = $region44
        $region43: #{tpu_custom_call.1} parent=11 // pred_region
          _
        $region44: #{tpu_custom_call.1} parent=11 // pred_fallthru
          _
        // Predicated region
        $region45: #{tpu_custom_call.1} parent=11 // pred_check
          %p453 = pneg %p241
        $region46: #{tpu_custom_call.1} parent=11 // pred_check_branch
          %455 = sbr.rel (%p453) target = $region48
        $region47: #{tpu_custom_call.1} parent=11 // pred_region
          _
        $region48: #{tpu_custom_call.1} parent=11 // pred_fallthru
          _
        // Predicated region
        $region49: #{tpu_custom_call.1} parent=11 // pred_check
          %p456 = pneg %p262
        $region50: #{tpu_custom_call.1} parent=11 // pred_check_branch
          %458 = sbr.rel (%p456) target = $region52
        $region51: #{tpu_custom_call.1} parent=11 // pred_region
          _
        $region52: #{tpu_custom_call.1} parent=11 // pred_fallthru
          _
        // Predicated region
        $region53: #{tpu_custom_call.1} parent=11 // pred_check
          %p459 = pneg %p283
        $region54: #{tpu_custom_call.1} parent=11 // pred_check_branch
          %461 = sbr.rel (%p459) target = $region56
        $region55: #{tpu_custom_call.1} parent=11 // pred_region
          _
        $region56: #{tpu_custom_call.1} parent=11 // pred_fallthru
          _
        // Predicated region
        $region57: #{tpu_custom_call.1} parent=11 // pred_check
          %p462 = pneg %p304
        $region58: #{tpu_custom_call.1} parent=11 // pred_check_branch
          %464 = sbr.rel (%p462) target = $region60
        $region59: #{tpu_custom_call.1} parent=11 // pred_region
          _
        $region60: #{tpu_custom_call.1} parent=11 // pred_fallthru
          _
        // Predicated region
        $region61: #{tpu_custom_call.1} parent=11 // pred_check
          %p465 = pneg %p325
        $region62: #{tpu_custom_call.1} parent=11 // pred_check_branch
          %467 = sbr.rel (%p465) target = $region64
        $region63: #{tpu_custom_call.1} parent=11 // pred_region
          _
        $region64: #{tpu_custom_call.1} parent=11 // pred_fallthru
          _
        // Predicated region
        $region65: #{tpu_custom_call.1} parent=11 // pred_check
          %p468 = pneg %p346
        $region66: #{tpu_custom_call.1} parent=11 // pred_check_branch
          %470 = sbr.rel (%p468) target = $region68
        $region67: #{tpu_custom_call.1} parent=11 // pred_region
          _
        $region68: #{tpu_custom_call.1} parent=11 // pred_fallthru
          _
        // Predicated region
        $region69: #{tpu_custom_call.1} parent=11 // pred_check
          %p471 = pneg %p367
        $region70: #{tpu_custom_call.1} parent=11 // pred_check_branch
          %473 = sbr.rel (%p471) target = $region72
        $region71: #{tpu_custom_call.1} parent=11 // pred_region
          _
        $region72: #{tpu_custom_call.1} parent=11 // pred_fallthru
          _
        // Predicated region
        $region73: #{tpu_custom_call.1} parent=11 // pred_check
          %p474 = pneg %p388
        $region74: #{tpu_custom_call.1} parent=11 // pred_check_branch
          %476 = sbr.rel (%p474) target = $region76
        $region75: #{tpu_custom_call.1} parent=11 // pred_region
          _
        $region76: #{tpu_custom_call.1} parent=11 // pred_fallthru
          _
      $region12: #{tpu_custom_call.1} parent=5 // pred_fallthru
        _
      %p477 = scmp.lt.s32.totalorder %s26, 2
      // Predicated region
      $region77: #{tpu_custom_call.1} parent=5 // pred_check
        %p478 = pneg %p477
      $region78: #{tpu_custom_call.1} parent=5 // pred_check_branch
        %480 = sbr.rel (%p478) target = $region80
      $region79: #{tpu_custom_call.1} parent=5 // pred_region
        // Predicated region
        $region81: #{tpu_custom_call.1} parent=79 // pred_check
          %p481 = pneg %p46
        $region82: #{tpu_custom_call.1} parent=79 // pred_check_branch
          %483 = sbr.rel (%p481) target = $region84
        $region83: #{tpu_custom_call.1} parent=79 // pred_region
          %p484 = scmp.lt.s32.totalorder %s26, 1
          %s485 = scalar_select %p484, %s26, 1
          %s486 = smul.addr %s485, 2
          %s487 = smul.addr %s486, 4
          %s488 = scalar_lea.vmem %s0, %s487
        $region84: #{tpu_custom_call.1} parent=79 // pred_fallthru
          _
      $region80: #{tpu_custom_call.1} parent=5 // pred_fallthru
        _
      %p489 = scmp.le.s32.totalorder 1, %s26
      %p490 = scmp.lt.s32.totalorder %s26, 3
      %p491 = pnand %p489, %p490
      %p492 = pneg %p491
      // Predicated region
      $region85: #{tpu_custom_call.1} parent=5 // pred_check
        _
      $region86: #{tpu_custom_call.1} parent=5 // pred_check_branch
        %494 = sbr.rel (%p491) target = $region88
      $region87: #{tpu_custom_call.1} parent=5 // pred_region
        %s495 = ssub.s32 %s26, 1
        %p496 = scmp.lt.s32.totalorder %s31, 1
        %s497 = scalar_select %p496, %s31, 1
        %s498 = smul.addr %s497, 2
        %s499 = smul.addr %s498, 4
        %s500 = scalar_lea.vmem %s0, %s499
        %p501 = pneg %p52
        %p502 = pneg %p49
        %p503 = pneg %p73
        %p504 = pneg %p70
        %p505 = pneg %p94
        %p506 = pneg %p91
        %p507 = pneg %p115
        %p508 = pneg %p112
        %p509 = pneg %p136
        %p510 = pneg %p133
        %p511 = pneg %p157
        %p512 = pneg %p154
        %p513 = pneg %p178
        %p514 = pneg %p175
        %p515 = pneg %p199
        %p516 = pneg %p196
        %p517 = pneg %p220
        %p518 = pneg %p217
        %p519 = pneg %p241
        %p520 = pneg %p238
        %p521 = pneg %p262
        %p522 = pneg %p259
        %p523 = pneg %p283
        %p524 = pneg %p280
        %p525 = pneg %p304
        %p526 = pneg %p301
        %p527 = pneg %p325
        %p528 = pneg %p322
        %p529 = pneg %p346
        %p530 = pneg %p343
        %p531 = pneg %p367
        %p532 = pneg %p364
        %p533 = pneg %p388
        %p534 = pneg %p385
        %p535 = pneg %p414
        %p536 = pneg %p411
        %s537 = sand.u32 %s401, 1
        %s538 = scalar_lea.sflag [#allocation3], %s537
        %s539 = sand.u32 %s401, 1
        %s540 = smul.addr %s539, 8
        %s541 = scalar_lea.vmem [#allocation2], %s540
        %p542 = scmp.lt.s32.totalorder %s31, 1
        %s543 = scalar_select %p542, %s31, 1
        %s544 = smul.addr %s543, 2
        %s545 = smul.addr %s544, 4
        %s546 = scalar_lea.vmem %s0, %s545
        %v547 = vlaneseq
        %v548 = vand.u32 %v547, 127
        %v549 = vadd.s32 %v548, 128
        %vm550 = vcmp.lt.s32.totalorder %v548, 0
        %v551 = vsub.s32 0, %v548
        %v552 = vsel %vm550, %v551, %v548
        %v553 = vshrl.u32 %v552, 4
        %v554 = vand.u32 %v552, 15
        %v555 = vsub.s32 0, %v554
        %v556 = vsel %vm550, %v555, %v554
        %vm557 = vcmp.lt.s32.totalorder %v549, 0
        %v558 = vsub.s32 0, %v549
        %v559 = vsel %vm557, %v558, %v549
        %v560 = vshrl.u32 %v559, 4
        %v561 = vand.u32 %v559, 15
        %v562 = vsub.s32 0, %v561
        %v563 = vsel %vm557, %v562, %v561
        %vm564 = vcmp.ne.s32.totalorder %v556, 0
        %vm565 = vcmp.ne.s32.totalorder %v563, 0
        %vm566 = vcmp.lt.s32.totalorder %v556, 0
        %vm567 = vcmp.lt.s32.totalorder %v563, 0
        %vm568 = vmand %vm566, %vm564
        %vm569 = vmand %vm567, %vm565
        %v570 = vadd.s32 %v556, 16
        %v571 = vadd.s32 %v563, 16
        %v572 = vsel %vm568, %v570, %v556
        %v573 = vsel %vm569, %v571, %v563
        %vm574 = vcmp.le.s32.totalorder %v572, 14
        %vm575 = vcmp.le.s32.totalorder %v573, 14
        %v576 = vsel %vm574, 1, 0
        %v577 = vsel %vm575, 1, 0
        %v578 = vcvt.s32.f32 %v576
        %v579 = vcvt.s32.f32 %v577
        %vm580 = vcmp.ge.s32.totalorder %v572, 1
        %vm581 = vcmp.ge.s32.totalorder %v573, 1
        %v582 = vsel %vm580, 1, 0
        %v583 = vsel %vm581, 1, 0
        %v584 = vcvt.s32.f32 %v582
        %v585 = vcvt.s32.f32 %v583
        %vm586 = vcmp.ge.s32.totalorder %v548, 16
        %vm587 = vcmp.ge.s32.totalorder %v549, 16
        %v588 = vsel %vm586, 1, 0
        %v589 = vsel %vm587, 1, 0
        %v590 = vcvt.s32.f32 %v588
        %v591 = vcvt.s32.f32 %v589
        %vm592 = vcmp.lt.s32.totalorder %v548, 240
        %vm593 = vcmp.lt.s32.totalorder %v549, 240
        %v594 = vsel %vm592, 1, 0
        %v595 = vsel %vm593, 1, 0
        %v596 = vcvt.s32.f32 %v594
        %v597 = vcvt.s32.f32 %v595
        %v598 = vld [vmem:[%s546] sm:$0xff]
        %v599 = vld [vmem:[%s1] sm:$0xff]
        %v600 = vld [vmem:[%s1 + $0x8] sm:$0xf]
        %v601 = vld [vmem:[%s9] sm:$0xf]
        %v602 = vld [vmem:[%s5] sm:$0xff]
        %v603 = vld [vmem:[%s5 + $0x8] sm:$0xf]
        %v604 = vld [vmem:[%s2] sm:$0xff]
        %v605 = vld [vmem:[%s2 + $0x8] sm:$0xf]
        %607 = vset.pattern.permute.xlu0 0
        %608 = vperm.xlu0 %607, %v604
        %v609 = vpop.permute.xlu0 %608
        %612 = vset.pattern.permute.xlu0 0
        %613 = vperm.xlu0 %612, %v605
        %v614 = vpop.permute.xlu0 %613
        %v617 = vcombine.high %v598, %v598
        %vm618 = vcmask 31744
        %v620 = vsel %vm618, %v599, 0
        %v623 = vsel %vm618, %v600, 0
        %vm625 = vcmask 1043456
        %v626 = vsel %vm625, %v598, 0
        %v628 = vsel %vm625, %v617, 0
        %630 = vmatprep.subr.mxu0 %v628
        %631 = vmatpush1.msra.mxu0 %v626
        %632 = vmatprep.subr.mxu0 0.0
        %633 = vmatpush1.msra.mxu0 0.0
        %634 = vmatprep.subr.mxu0 0.0
        %635 = vmatpush1.msra.mxu0 0.0
        %636 = vmatprep.subr.mxu0 0.0
        %637 = vmatpush1.msra.mxu0 0.0
        %638 = vmatprep.subr.mxu0 0.0
        %639 = vmatpush1.msra.mxu0 0.0
        %640 = vmatprep.subr.mxu0 0.0
        %641 = vmatpush1.msra.mxu0 0.0
        %642 = vmatprep.subr.mxu0 0.0
        %643 = vmatpush1.msra.mxu0 0.0
        %644 = vmatprep.subr.mxu0 0.0
        %645 = vmatpush1.msra.mxu0 0.0
        %646 = vmatprep.subr.mxu0 0.0
        %647 = vmatpush1.msra.mxu0 0.0
        %648 = vmatprep.subr.mxu0 0.0
        %649 = vmatpush1.msra.mxu0 0.0
        %650 = vmatprep.subr.mxu0 0.0
        %651 = vmatpush1.msra.mxu0 0.0
        %652 = vmatprep.subr.mxu0 0.0
        %653 = vmatpush1.msra.mxu0 0.0
        %654 = vmatprep.subr.mxu0 0.0
        %655 = vmatpush1.msra.mxu0 0.0
        %656 = vmatprep.subr.mxu0 0.0
        %657 = vmatpush1.msra.mxu0 0.0
        %658 = vmatprep.subr.mxu0 0.0
        %659 = vmatpush1.msra.mxu0 0.0
        %660 = vmatprep.subr.mxu0 0.0
        %661 = vmatpush1.msra.mxu0 0.0
        %662 = vmatprep.subr.mxu0 0.0
        %663 = vmatpush1.msra.mxu0 0.0
        %664 = vmatprep.subr.mxu0 0.0
        %665 = vmatpush1.msra.mxu0 0.0
        %666 = vmatprep.subr.mxu0 0.0
        %667 = vmatpush1.msra.mxu0 0.0
        %668 = vmatprep.subr.mxu0 0.0
        %669 = vmatpush1.msra.mxu0 0.0
        %670 = vmatprep.subr.mxu0 0.0
        %671 = vmatpush1.msra.mxu0 0.0
        %672 = vmatprep.subr.mxu0 0.0
        %673 = vmatpush1.msra.mxu0 0.0
        %674 = vmatprep.subr.mxu0 0.0
        %675 = vmatpush1.msra.mxu0 0.0
        %676 = vmatprep.subr.mxu0 0.0
        %677 = vmatpush1.msra.mxu0 0.0
        %678 = vmatprep.subr.mxu0 0.0
        %679 = vmatpush1.msra.mxu0 0.0
        %680 = vmatprep.subr.mxu0 0.0
        %681 = vmatpush1.msra.mxu0 0.0
        %682 = vmatprep.subr.mxu0 0.0
        %683 = vmatpush1.msra.mxu0 0.0
        %684 = vmatprep.subr.mxu0 0.0
        %685 = vmatpush1.msra.mxu0 0.0
        %686 = vmatprep.subr.mxu0 0.0
        %687 = vmatpush1.msra.mxu0 0.0
        %688 = vmatprep.subr.mxu0 0.0
        %689 = vmatpush1.msra.mxu0 0.0
        %690 = vmatprep.subr.mxu0 0.0
        %691 = vmatpush1.msra.mxu0 0.0
        %692 = vmatprep.subr.mxu0 0.0
        %693 = vmatpush1.msra.mxu0 0.0
        %694 = vmatprep.mubr.f32.mxu0 0.0
        %695 = vmatmul.mubr.f32.gmra.mrb[0].mxu0 %v620
        %v696 = vpop.f32.mrb[0].mxu0
        %v697 = vadd.f32 %v609, %v696
        %v698 = vpop.f32.mrb[0].mxu0
        %v699 = vadd.f32 %v609, %v698
        %700 = vmatprep.mubr.f32.mxu0 0.0
        %701 = vmatmul.mubr.f32.gmra.mrb[0].mxu0 %v623
        %v702 = vpop.f32.mrb[0].mxu0
        %v703 = vadd.f32 %v614, %v702
        %v704 = vpop.f32.mrb[0].mxu0
        %v705 = vadd.f32 %v614, %v704
        %706 = vdwg.mxu0
        %v707 = vsub.f32 0.0, %v697
        %v708 = vsub.f32 0.0, %v699
        %v709 = vsub.f32 0.0, %v703
        %v710 = vsub.f32 0.0, %v705
        %v711 = vmul.f32 %v707, 1.442695
        %v712 = vpow.pop %v711
        %v713 = vmul.f32 %v708, 1.442695
        %v714 = vpow.pop %v713
        %v715 = vmul.f32 %v709, 1.442695
        %v716 = vpow.pop %v715
        %v717 = vmul.f32 %v710, 1.442695
        %v718 = vpow.pop %v717
        %v719 = vadd.f32 %v712, 1.0
        %v720 = vadd.f32 %v714, 1.0
        %v721 = vadd.f32 %v716, 1.0
        %v722 = vadd.f32 %v718, 1.0
        %v723 = vrcp.pop %v719
        %v724 = vrcp.pop %v720
        %v725 = vrcp.pop %v721
        %v726 = vrcp.pop %v722
        %v727 = vmul.f32 %v697, %v723
        %v728 = vmul.f32 %v699, %v724
        %v729 = vmul.f32 %v703, %v725
        %v730 = vmul.f32 %v705, %v726
        %v731 = vld [vmem:[%s3] sm:$0xff]
        %v732 = vld [vmem:[%s3 + $0x8] sm:$0xf]
        %v733 = vld [vmem:[%s4] sm:$0xff]
        %v734 = vld [vmem:[%s4 + $0x8] sm:$0xf]
        %v735 = vld [vmem:[%s13] sm:$0xf]
        %v736 = vld [vmem:[%s14] sm:$0xff]
        %v737 = vld [vmem:[%s14 + $0x8] sm:$0xf]
        %v738 = vadd.f32 %v727, %v728
        %739 = vadd.xlane.f32.xlu0 %v738
        %v740 = vpop.xlane.xlu0 %739
        %v741 = vsel %vm625, %v729, 0.0
        %v742 = vsel %vm625, %v730, 0.0
        %v743 = vadd.f32 %v741, %v742
        %744 = vadd.xlane.f32.xlu0 %v743
        %v745 = vpop.xlane.xlu0 %744
        %v746 = vmul.f32 %v727, %v727
        %v747 = vmul.f32 %v728, %v728
        %v748 = vmul.f32 %v729, %v729
        %v749 = vmul.f32 %v730, %v730
        %v750 = vadd.f32 %v746, %v747
        %751 = vadd.xlane.f32.xlu0 %v750
        %v752 = vpop.xlane.xlu0 %751
        %v753 = vsel %vm625, %v748, 0.0
        %v754 = vsel %vm625, %v749, 0.0
        %v755 = vadd.f32 %v753, %v754
        %756 = vadd.xlane.f32.xlu0 %v755
        %v757 = vpop.xlane.xlu0 %756
        %vm758 = vcmask 7168
        %v759 = vsel %vm758, %v740, %v752
        %v760 = vsel %vm758, %v745, %v757
        %vm761 = vcmask 97280
        %v763 = vsel %vm761, %v735, 0
        %v766 = vsel %vm625, %v760, 0
        %768 = vmatprep.subr.mxu0 0.0
        %v769 = vand.u32 %v759, 4294901760
        %770 = vmatpush1.msra.mxu0 %v769
        %771 = vmatprep.subr.mxu0 0.0
        %v772 = vand.u32 %v766, 4294901760
        %773 = vmatpush1.msra.mxu0 %v772
        %774 = vmatprep.subr.mxu0 0.0
        %775 = vmatpush1.msra.mxu0 0.0
        %776 = vmatprep.subr.mxu0 0.0
        %777 = vmatpush1.msra.mxu0 0.0
        %778 = vmatprep.subr.mxu0 0.0
        %779 = vmatpush1.msra.mxu0 0.0
        %780 = vmatprep.subr.mxu0 0.0
        %781 = vmatpush1.msra.mxu0 0.0
        %782 = vmatprep.subr.mxu0 0.0
        %783 = vmatpush1.msra.mxu0 0.0
        %784 = vmatprep.subr.mxu0 0.0
        %785 = vmatpush1.msra.mxu0 0.0
        %786 = vmatprep.subr.mxu0 0.0
        %787 = vmatpush1.msra.mxu0 0.0
        %788 = vmatprep.subr.mxu0 0.0
        %789 = vmatpush1.msra.mxu0 0.0
        %790 = vmatprep.subr.mxu0 0.0
        %791 = vmatpush1.msra.mxu0 0.0
        %792 = vmatprep.subr.mxu0 0.0
        %793 = vmatpush1.msra.mxu0 0.0
        %794 = vmatprep.subr.mxu0 0.0
        %795 = vmatpush1.msra.mxu0 0.0
        %796 = vmatprep.subr.mxu0 0.0
        %797 = vmatpush1.msra.mxu0 0.0
        %798 = vmatprep.subr.mxu0 0.0
        %799 = vmatpush1.msra.mxu0 0.0
        %800 = vmatprep.subr.mxu0 0.0
        %801 = vmatpush1.msra.mxu0 0.0
        %802 = vmatprep.subr.mxu0 0.0
        %803 = vmatpush1.msra.mxu0 0.0
        %804 = vmatprep.subr.mxu0 0.0
        %805 = vmatpush1.msra.mxu0 0.0
        %806 = vmatprep.subr.mxu0 0.0
        %807 = vmatpush1.msra.mxu0 0.0
        %808 = vmatprep.subr.mxu0 0.0
        %809 = vmatpush1.msra.mxu0 0.0
        %810 = vmatprep.subr.mxu0 0.0
        %811 = vmatpush1.msra.mxu0 0.0
        %812 = vmatprep.subr.mxu0 0.0
        %813 = vmatpush1.msra.mxu0 0.0
        %814 = vmatprep.subr.mxu0 0.0
        %815 = vmatpush1.msra.mxu0 0.0
        %816 = vmatprep.subr.mxu0 0.0
        %817 = vmatpush1.msra.mxu0 0.0
        %818 = vmatprep.subr.mxu0 0.0
        %819 = vmatpush1.msra.mxu0 0.0
        %820 = vmatprep.subr.mxu0 0.0
        %821 = vmatpush1.msra.mxu0 0.0
        %822 = vmatprep.subr.mxu0 0.0
        %823 = vmatpush1.msra.mxu0 0.0
        %824 = vmatprep.subr.mxu0 0.0
        %825 = vmatpush1.msra.mxu0 0.0
        %826 = vmatprep.subr.mxu0 0.0
        %827 = vmatpush1.msra.mxu0 0.0
        %828 = vmatprep.subr.mxu0 0.0
        %829 = vmatpush1.msra.mxu0 0.0
        %830 = vmatprep.subr.mxu0 0.0
        %831 = vmatpush1.msra.mxu0 0.0
        %832 = vmatprep.subr.mxu0 0.0
        %833 = vmatpush1.msra.mxu0 0.0
        %834 = vmatprep.mubr.f32.mxu0 0.0
        %v835 = vand.u32 %v763, 4294901760
        %v836 = vsub.f32 %v763, %v835
        %v837 = vand.u32 %v836, 4294901760
        %v838 = vsub.f32 %v836, %v837
        %v839 = vand.u32 %v838, 4294901760
        %840 = vmatmul.mubr.f32.gmra.mrb[0].mxu0 %v839
        %v841 = vpop.f32.mrb[0].mxu0
        %v842 = vadd.f32 0.0, %v841
        %v843 = vpop.f32.mrb[0].mxu0
        %844 = vdwg.mxu0
        %845 = vmatprep.subr.mxu0 0.0
        %v846 = vand.u32 %v759, 4294901760
        %v847 = vsub.f32 %v759, %v846
        %v848 = vand.u32 %v847, 4294901760
        %v849 = vsub.f32 %v847, %v848
        %v850 = vand.u32 %v849, 4294901760
        %851 = vmatpush1.msra.mxu0 %v850
        %852 = vmatprep.subr.mxu0 0.0
        %v853 = vand.u32 %v766, 4294901760
        %v854 = vsub.f32 %v766, %v853
        %v855 = vand.u32 %v854, 4294901760
        %v856 = vsub.f32 %v854, %v855
        %v857 = vand.u32 %v856, 4294901760
        %858 = vmatpush1.msra.mxu0 %v857
        %859 = vmatprep.subr.mxu0 0.0
        %860 = vmatpush1.msra.mxu0 0.0
        %861 = vmatprep.subr.mxu0 0.0
        %862 = vmatpush1.msra.mxu0 0.0
        %863 = vmatprep.subr.mxu0 0.0
        %864 = vmatpush1.msra.mxu0 0.0
        %865 = vmatprep.subr.mxu0 0.0
        %866 = vmatpush1.msra.mxu0 0.0
        %867 = vmatprep.subr.mxu0 0.0
        %868 = vmatpush1.msra.mxu0 0.0
        %869 = vmatprep.subr.mxu0 0.0
        %870 = vmatpush1.msra.mxu0 0.0
        %871 = vmatprep.subr.mxu0 0.0
        %872 = vmatpush1.msra.mxu0 0.0
        %873 = vmatprep.subr.mxu0 0.0
        %874 = vmatpush1.msra.mxu0 0.0
        %875 = vmatprep.subr.mxu0 0.0
        %876 = vmatpush1.msra.mxu0 0.0
        %877 = vmatprep.subr.mxu0 0.0
        %878 = vmatpush1.msra.mxu0 0.0
        %879 = vmatprep.subr.mxu0 0.0
        %880 = vmatpush1.msra.mxu0 0.0
        %881 = vmatprep.subr.mxu0 0.0
        %882 = vmatpush1.msra.mxu0 0.0
        %883 = vmatprep.subr.mxu0 0.0
        %884 = vmatpush1.msra.mxu0 0.0
        %885 = vmatprep.subr.mxu0 0.0
        %886 = vmatpush1.msra.mxu0 0.0
        %887 = vmatprep.subr.mxu0 0.0
        %888 = vmatpush1.msra.mxu0 0.0
        %889 = vmatprep.subr.mxu0 0.0
        %890 = vmatpush1.msra.mxu0 0.0
        %891 = vmatprep.subr.mxu0 0.0
        %892 = vmatpush1.msra.mxu0 0.0
        %893 = vmatprep.subr.mxu0 0.0
        %894 = vmatpush1.msra.mxu0 0.0
        %895 = vmatprep.subr.mxu0 0.0
        %896 = vmatpush1.msra.mxu0 0.0
        %897 = vmatprep.subr.mxu0 0.0
        %898 = vmatpush1.msra.mxu0 0.0
        %899 = vmatprep.subr.mxu0 0.0
        %900 = vmatpush1.msra.mxu0 0.0
        %901 = vmatprep.subr.mxu0 0.0
        %902 = vmatpush1.msra.mxu0 0.0
        %903 = vmatprep.subr.mxu0 0.0
        %904 = vmatpush1.msra.mxu0 0.0
        %905 = vmatprep.subr.mxu0 0.0
        %906 = vmatpush1.msra.mxu0 0.0
        %907 = vmatprep.subr.mxu0 0.0
        %908 = vmatpush1.msra.mxu0 0.0
        %909 = vmatprep.subr.mxu0 0.0
        %910 = vmatpush1.msra.mxu0 0.0
        %911 = vmatprep.subr.mxu0 0.0
        %912 = vmatpush1.msra.mxu0 0.0
        %913 = vmatprep.subr.mxu0 0.0
        %914 = vmatpush1.msra.mxu0 0.0
        %915 = vmatprep.subr.mxu0 0.0
        %916 = vmatpush1.msra.mxu0 0.0
        %917 = vmatprep.subr.mxu0 0.0
        %918 = vmatpush1.msra.mxu0 0.0
        %919 = vmatprep.mubr.f32.mxu0 0.0
        %v920 = vand.u32 %v763, 4294901760
        %921 = vmatmul.mubr.f32.gmra.mrb[0].mxu0 %v920
        %v922 = vpop.f32.mrb[0].mxu0
        %v923 = vadd.f32 %v842, %v922
        %v924 = vpop.f32.mrb[0].mxu0
        %925 = vdwg.mxu0
        %926 = vmatprep.subr.mxu0 0.0
        %v927 = vand.u32 %v759, 4294901760
        %v928 = vsub.f32 %v759, %v927
        %929 = vmatpush1.msra.mxu0 %v928
        %930 = vmatprep.subr.mxu0 0.0
        %v931 = vand.u32 %v766, 4294901760
        %v932 = vsub.f32 %v766, %v931
        %933 = vmatpush1.msra.mxu0 %v932
        %934 = vmatprep.subr.mxu0 0.0
        %935 = vmatpush1.msra.mxu0 0.0
        %936 = vmatprep.subr.mxu0 0.0
        %937 = vmatpush1.msra.mxu0 0.0
        %938 = vmatprep.subr.mxu0 0.0
        %939 = vmatpush1.msra.mxu0 0.0
        %940 = vmatprep.subr.mxu0 0.0
        %941 = vmatpush1.msra.mxu0 0.0
        %942 = vmatprep.subr.mxu0 0.0
        %943 = vmatpush1.msra.mxu0 0.0
        %944 = vmatprep.subr.mxu0 0.0
        %945 = vmatpush1.msra.mxu0 0.0
        %946 = vmatprep.subr.mxu0 0.0
        %947 = vmatpush1.msra.mxu0 0.0
        %948 = vmatprep.subr.mxu0 0.0
        %949 = vmatpush1.msra.mxu0 0.0
        %950 = vmatprep.subr.mxu0 0.0
        %951 = vmatpush1.msra.mxu0 0.0
        %952 = vmatprep.subr.mxu0 0.0
        %953 = vmatpush1.msra.mxu0 0.0
        %954 = vmatprep.subr.mxu0 0.0
        %955 = vmatpush1.msra.mxu0 0.0
        %956 = vmatprep.subr.mxu0 0.0
        %957 = vmatpush1.msra.mxu0 0.0
        %958 = vmatprep.subr.mxu0 0.0
        %959 = vmatpush1.msra.mxu0 0.0
        %960 = vmatprep.subr.mxu0 0.0
        %961 = vmatpush1.msra.mxu0 0.0
        %962 = vmatprep.subr.mxu0 0.0
        %963 = vmatpush1.msra.mxu0 0.0
        %964 = vmatprep.subr.mxu0 0.0
        %965 = vmatpush1.msra.mxu0 0.0
        %966 = vmatprep.subr.mxu0 0.0
        %967 = vmatpush1.msra.mxu0 0.0
        %968 = vmatprep.subr.mxu0 0.0
        %969 = vmatpush1.msra.mxu0 0.0
        %970 = vmatprep.subr.mxu0 0.0
        %971 = vmatpush1.msra.mxu0 0.0
        %972 = vmatprep.subr.mxu0 0.0
        %973 = vmatpush1.msra.mxu0 0.0
        %974 = vmatprep.subr.mxu0 0.0
        %975 = vmatpush1.msra.mxu0 0.0
        %976 = vmatprep.subr.mxu0 0.0
        %977 = vmatpush1.msra.mxu0 0.0
        %978 = vmatprep.subr.mxu0 0.0
        %979 = vmatpush1.msra.mxu0 0.0
        %980 = vmatprep.subr.mxu0 0.0
        %981 = vmatpush1.msra.mxu0 0.0
        %982 = vmatprep.subr.mxu0 0.0
        %983 = vmatpush1.msra.mxu0 0.0
        %984 = vmatprep.subr.mxu0 0.0
        %985 = vmatpush1.msra.mxu0 0.0
        %986 = vmatprep.subr.mxu0 0.0
        %987 = vmatpush1.msra.mxu0 0.0
        %988 = vmatprep.subr.mxu0 0.0
        %989 = vmatpush1.msra.mxu0 0.0
        %990 = vmatprep.subr.mxu0 0.0
        %991 = vmatpush1.msra.mxu0 0.0
        %992 = vmatprep.subr.mxu0 0.0
        %993 = vmatpush1.msra.mxu0 0.0
        %994 = vmatprep.mubr.f32.mxu0 0.0
        %v995 = vand.u32 %v763, 4294901760
        %v996 = vsub.f32 %v763, %v995
        %997 = vmatmul.mubr.f32.gmra.mrb[0].mxu0 %v996
        %v998 = vpop.f32.mrb[0].mxu0
        %v999 = vadd.f32 %v923, %v998
        %v1000 = vpop.f32.mrb[0].mxu0
        %1001 = vdwg.mxu0
        %1002 = vmatprep.subr.mxu0 0.0
        %v1003 = vand.u32 %v759, 4294901760
        %1004 = vmatpush1.msra.mxu0 %v1003
        %1005 = vmatprep.subr.mxu0 0.0
        %v1006 = vand.u32 %v766, 4294901760
        %1007 = vmatpush1.msra.mxu0 %v1006
        %1008 = vmatprep.subr.mxu0 0.0
        %1009 = vmatpush1.msra.mxu0 0.0
        %1010 = vmatprep.subr.mxu0 0.0
        %1011 = vmatpush1.msra.mxu0 0.0
        %1012 = vmatprep.subr.mxu0 0.0
        %1013 = vmatpush1.msra.mxu0 0.0
        %1014 = vmatprep.subr.mxu0 0.0
        %1015 = vmatpush1.msra.mxu0 0.0
        %1016 = vmatprep.subr.mxu0 0.0
        %1017 = vmatpush1.msra.mxu0 0.0
        %1018 = vmatprep.subr.mxu0 0.0
        %1019 = vmatpush1.msra.mxu0 0.0
        %1020 = vmatprep.subr.mxu0 0.0
        %1021 = vmatpush1.msra.mxu0 0.0
        %1022 = vmatprep.subr.mxu0 0.0
        %1023 = vmatpush1.msra.mxu0 0.0
        %1024 = vmatprep.subr.mxu0 0.0
        %1025 = vmatpush1.msra.mxu0 0.0
        %1026 = vmatprep.subr.mxu0 0.0
        %1027 = vmatpush1.msra.mxu0 0.0
        %1028 = vmatprep.subr.mxu0 0.0
        %1029 = vmatpush1.msra.mxu0 0.0
        %1030 = vmatprep.subr.mxu0 0.0
        %1031 = vmatpush1.msra.mxu0 0.0
        %1032 = vmatprep.subr.mxu0 0.0
        %1033 = vmatpush1.msra.mxu0 0.0
        %1034 = vmatprep.subr.mxu0 0.0
        %1035 = vmatpush1.msra.mxu0 0.0
        %1036 = vmatprep.subr.mxu0 0.0
        %1037 = vmatpush1.msra.mxu0 0.0
        %1038 = vmatprep.subr.mxu0 0.0
        %1039 = vmatpush1.msra.mxu0 0.0
        %1040 = vmatprep.subr.mxu0 0.0
        %1041 = vmatpush1.msra.mxu0 0.0
        %1042 = vmatprep.subr.mxu0 0.0
        %1043 = vmatpush1.msra.mxu0 0.0
        %1044 = vmatprep.subr.mxu0 0.0
        %1045 = vmatpush1.msra.mxu0 0.0
        %1046 = vmatprep.subr.mxu0 0.0
        %1047 = vmatpush1.msra.mxu0 0.0
        %1048 = vmatprep.subr.mxu0 0.0
        %1049 = vmatpush1.msra.mxu0 0.0
        %1050 = vmatprep.subr.mxu0 0.0
        %1051 = vmatpush1.msra.mxu0 0.0
        %1052 = vmatprep.subr.mxu0 0.0
        %1053 = vmatpush1.msra.mxu0 0.0
        %1054 = vmatprep.subr.mxu0 0.0
        %1055 = vmatpush1.msra.mxu0 0.0
        %1056 = vmatprep.subr.mxu0 0.0
        %1057 = vmatpush1.msra.mxu0 0.0
        %1058 = vmatprep.subr.mxu0 0.0
        %1059 = vmatpush1.msra.mxu0 0.0
        %1060 = vmatprep.subr.mxu0 0.0
        %1061 = vmatpush1.msra.mxu0 0.0
        %1062 = vmatprep.subr.mxu0 0.0
        %1063 = vmatpush1.msra.mxu0 0.0
        %1064 = vmatprep.subr.mxu0 0.0
        %1065 = vmatpush1.msra.mxu0 0.0
        %1066 = vmatprep.subr.mxu0 0.0
        %1067 = vmatpush1.msra.mxu0 0.0
        %1068 = vmatprep.mubr.f32.mxu0 0.0
        %v1069 = vand.u32 %v763, 4294901760
        %v1070 = vsub.f32 %v763, %v1069
        %v1071 = vand.u32 %v1070, 4294901760
        %1072 = vmatmul.mubr.f32.gmra.mrb[0].mxu0 %v1071
        %v1073 = vpop.f32.mrb[0].mxu0
        %v1074 = vadd.f32 %v999, %v1073
        %v1075 = vpop.f32.mrb[0].mxu0
        %1076 = vdwg.mxu0
        %1077 = vmatprep.subr.mxu0 0.0
        %v1078 = vand.u32 %v759, 4294901760
        %v1079 = vsub.f32 %v759, %v1078
        %v1080 = vand.u32 %v1079, 4294901760
        %1081 = vmatpush1.msra.mxu0 %v1080
        %1082 = vmatprep.subr.mxu0 0.0
        %v1083 = vand.u32 %v766, 4294901760
        %v1084 = vsub.f32 %v766, %v1083
        %v1085 = vand.u32 %v1084, 4294901760
        %1086 = vmatpush1.msra.mxu0 %v1085
        %1087 = vmatprep.subr.mxu0 0.0
        %1088 = vmatpush1.msra.mxu0 0.0
        %1089 = vmatprep.subr.mxu0 0.0
        %1090 = vmatpush1.msra.mxu0 0.0
        %1091 = vmatprep.subr.mxu0 0.0
        %1092 = vmatpush1.msra.mxu0 0.0
        %1093 = vmatprep.subr.mxu0 0.0
        %1094 = vmatpush1.msra.mxu0 0.0
        %1095 = vmatprep.subr.mxu0 0.0
        %1096 = vmatpush1.msra.mxu0 0.0
        %1097 = vmatprep.subr.mxu0 0.0
        %1098 = vmatpush1.msra.mxu0 0.0
        %1099 = vmatprep.subr.mxu0 0.0
        %1100 = vmatpush1.msra.mxu0 0.0
        %1101 = vmatprep.subr.mxu0 0.0
        %1102 = vmatpush1.msra.mxu0 0.0
        %1103 = vmatprep.subr.mxu0 0.0
        %1104 = vmatpush1.msra.mxu0 0.0
        %1105 = vmatprep.subr.mxu0 0.0
        %1106 = vmatpush1.msra.mxu0 0.0
        %1107 = vmatprep.subr.mxu0 0.0
        %1108 = vmatpush1.msra.mxu0 0.0
        %1109 = vmatprep.subr.mxu0 0.0
        %1110 = vmatpush1.msra.mxu0 0.0
        %1111 = vmatprep.subr.mxu0 0.0
        %1112 = vmatpush1.msra.mxu0 0.0
        %1113 = vmatprep.subr.mxu0 0.0
        %1114 = vmatpush1.msra.mxu0 0.0
        %1115 = vmatprep.subr.mxu0 0.0
        %1116 = vmatpush1.msra.mxu0 0.0
        %1117 = vmatprep.subr.mxu0 0.0
        %1118 = vmatpush1.msra.mxu0 0.0
        %1119 = vmatprep.subr.mxu0 0.0
        %1120 = vmatpush1.msra.mxu0 0.0
        %1121 = vmatprep.subr.mxu0 0.0
        %1122 = vmatpush1.msra.mxu0 0.0
        %1123 = vmatprep.subr.mxu0 0.0
        %1124 = vmatpush1.msra.mxu0 0.0
        %1125 = vmatprep.subr.mxu0 0.0
        %1126 = vmatpush1.msra.mxu0 0.0
        %1127 = vmatprep.subr.mxu0 0.0
        %1128 = vmatpush1.msra.mxu0 0.0
        %1129 = vmatprep.subr.mxu0 0.0
        %1130 = vmatpush1.msra.mxu0 0.0
        %1131 = vmatprep.subr.mxu0 0.0
        %1132 = vmatpush1.msra.mxu0 0.0
        %1133 = vmatprep.subr.mxu0 0.0
        %1134 = vmatpush1.msra.mxu0 0.0
        %1135 = vmatprep.subr.mxu0 0.0
        %1136 = vmatpush1.msra.mxu0 0.0
        %1137 = vmatprep.subr.mxu0 0.0
        %1138 = vmatpush1.msra.mxu0 0.0
        %1139 = vmatprep.subr.mxu0 0.0
        %1140 = vmatpush1.msra.mxu0 0.0
        %1141 = vmatprep.subr.mxu0 0.0
        %1142 = vmatpush1.msra.mxu0 0.0
        %1143 = vmatprep.subr.mxu0 0.0
        %1144 = vmatpush1.msra.mxu0 0.0
        %1145 = vmatprep.subr.mxu0 0.0
        %1146 = vmatpush1.msra.mxu0 0.0
        %1147 = vmatprep.mubr.f32.mxu0 0.0
        %v1148 = vand.u32 %v763, 4294901760
        %1149 = vmatmul.mubr.f32.gmra.mrb[0].mxu0 %v1148
        %v1150 = vpop.f32.mrb[0].mxu0
        %v1151 = vadd.f32 %v1074, %v1150
        %v1152 = vpop.f32.mrb[0].mxu0
        %1153 = vdwg.mxu0
        %1154 = vmatprep.subr.mxu0 0.0
        %v1155 = vand.u32 %v759, 4294901760
        %1156 = vmatpush1.msra.mxu0 %v1155
        %1157 = vmatprep.subr.mxu0 0.0
        %v1158 = vand.u32 %v766, 4294901760
        %1159 = vmatpush1.msra.mxu0 %v1158
        %1160 = vmatprep.subr.mxu0 0.0
        %1161 = vmatpush1.msra.mxu0 0.0
        %1162 = vmatprep.subr.mxu0 0.0
        %1163 = vmatpush1.msra.mxu0 0.0
        %1164 = vmatprep.subr.mxu0 0.0
        %1165 = vmatpush1.msra.mxu0 0.0
        %1166 = vmatprep.subr.mxu0 0.0
        %1167 = vmatpush1.msra.mxu0 0.0
        %1168 = vmatprep.subr.mxu0 0.0
        %1169 = vmatpush1.msra.mxu0 0.0
        %1170 = vmatprep.subr.mxu0 0.0
        %1171 = vmatpush1.msra.mxu0 0.0
        %1172 = vmatprep.subr.mxu0 0.0
        %1173 = vmatpush1.msra.mxu0 0.0
        %1174 = vmatprep.subr.mxu0 0.0
        %1175 = vmatpush1.msra.mxu0 0.0
        %1176 = vmatprep.subr.mxu0 0.0
        %1177 = vmatpush1.msra.mxu0 0.0
        %1178 = vmatprep.subr.mxu0 0.0
        %1179 = vmatpush1.msra.mxu0 0.0
        %1180 = vmatprep.subr.mxu0 0.0
        %1181 = vmatpush1.msra.mxu0 0.0
        %1182 = vmatprep.subr.mxu0 0.0
        %1183 = vmatpush1.msra.mxu0 0.0
        %1184 = vmatprep.subr.mxu0 0.0
        %1185 = vmatpush1.msra.mxu0 0.0
        %1186 = vmatprep.subr.mxu0 0.0
        %1187 = vmatpush1.msra.mxu0 0.0
        %1188 = vmatprep.subr.mxu0 0.0
        %1189 = vmatpush1.msra.mxu0 0.0
        %1190 = vmatprep.subr.mxu0 0.0
        %1191 = vmatpush1.msra.mxu0 0.0
        %1192 = vmatprep.subr.mxu0 0.0
        %1193 = vmatpush1.msra.mxu0 0.0
        %1194 = vmatprep.subr.mxu0 0.0
        %1195 = vmatpush1.msra.mxu0 0.0
        %1196 = vmatprep.subr.mxu0 0.0
        %1197 = vmatpush1.msra.mxu0 0.0
        %1198 = vmatprep.subr.mxu0 0.0
        %1199 = vmatpush1.msra.mxu0 0.0
        %1200 = vmatprep.subr.mxu0 0.0
        %1201 = vmatpush1.msra.mxu0 0.0
        %1202 = vmatprep.subr.mxu0 0.0
        %1203 = vmatpush1.msra.mxu0 0.0
        %1204 = vmatprep.subr.mxu0 0.0
        %1205 = vmatpush1.msra.mxu0 0.0
        %1206 = vmatprep.subr.mxu0 0.0
        %1207 = vmatpush1.msra.mxu0 0.0
        %1208 = vmatprep.subr.mxu0 0.0
        %1209 = vmatpush1.msra.mxu0 0.0
        %1210 = vmatprep.subr.mxu0 0.0
        %1211 = vmatpush1.msra.mxu0 0.0
        %1212 = vmatprep.subr.mxu0 0.0
        %1213 = vmatpush1.msra.mxu0 0.0
        %1214 = vmatprep.subr.mxu0 0.0
        %1215 = vmatpush1.msra.mxu0 0.0
        %1216 = vmatprep.subr.mxu0 0.0
        %1217 = vmatpush1.msra.mxu0 0.0
        %1218 = vmatprep.subr.mxu0 0.0
        %1219 = vmatpush1.msra.mxu0 0.0
        %1220 = vmatprep.mubr.f32.mxu0 0.0
        %v1221 = vand.u32 %v763, 4294901760
        %1222 = vmatmul.mubr.f32.gmra.mrb[0].mxu0 %v1221
        %v1223 = vpop.f32.mrb[0].mxu0
        %v1224 = vadd.f32 %v1151, %v1223
        %v1225 = vpop.f32.mrb[0].mxu0
        %1226 = vdwg.mxu0
        %v1228 = vsel %vm618, %v736, 0
        %v1231 = vsel %vm618, %v737, 0
        %v1234 = vsel %vm625, %v1224, 0
        %1236 = vmatprep.subr.mxu0 0.0
        %v1237 = vand.u32 %v1234, 4294901760
        %1238 = vmatpush1.msra.mxu0 %v1237
        %1239 = vmatprep.subr.mxu0 0.0
        %1240 = vmatpush1.msra.mxu0 0.0
        %1241 = vmatprep.subr.mxu0 0.0
        %1242 = vmatpush1.msra.mxu0 0.0
        %1243 = vmatprep.subr.mxu0 0.0
        %1244 = vmatpush1.msra.mxu0 0.0
        %1245 = vmatprep.subr.mxu0 0.0
        %1246 = vmatpush1.msra.mxu0 0.0
        %1247 = vmatprep.subr.mxu0 0.0
        %1248 = vmatpush1.msra.mxu0 0.0
        %1249 = vmatprep.subr.mxu0 0.0
        %1250 = vmatpush1.msra.mxu0 0.0
        %1251 = vmatprep.subr.mxu0 0.0
        %1252 = vmatpush1.msra.mxu0 0.0
        %1253 = vmatprep.subr.mxu0 0.0
        %1254 = vmatpush1.msra.mxu0 0.0
        %1255 = vmatprep.subr.mxu0 0.0
        %1256 = vmatpush1.msra.mxu0 0.0
        %1257 = vmatprep.subr.mxu0 0.0
        %1258 = vmatpush1.msra.mxu0 0.0
        %1259 = vmatprep.subr.mxu0 0.0
        %1260 = vmatpush1.msra.mxu0 0.0
        %1261 = vmatprep.subr.mxu0 0.0
        %1262 = vmatpush1.msra.mxu0 0.0
        %1263 = vmatprep.subr.mxu0 0.0
        %1264 = vmatpush1.msra.mxu0 0.0
        %1265 = vmatprep.subr.mxu0 0.0
        %1266 = vmatpush1.msra.mxu0 0.0
        %1267 = vmatprep.subr.mxu0 0.0
        %1268 = vmatpush1.msra.mxu0 0.0
        %1269 = vmatprep.subr.mxu0 0.0
        %1270 = vmatpush1.msra.mxu0 0.0
        %1271 = vmatprep.subr.mxu0 0.0
        %1272 = vmatpush1.msra.mxu0 0.0
        %1273 = vmatprep.subr.mxu0 0.0
        %1274 = vmatpush1.msra.mxu0 0.0
        %1275 = vmatprep.subr.mxu0 0.0
        %1276 = vmatpush1.msra.mxu0 0.0
        %1277 = vmatprep.subr.mxu0 0.0
        %1278 = vmatpush1.msra.mxu0 0.0
        %1279 = vmatprep.subr.mxu0 0.0
        %1280 = vmatpush1.msra.mxu0 0.0
        %1281 = vmatprep.subr.mxu0 0.0
        %1282 = vmatpush1.msra.mxu0 0.0
        %1283 = vmatprep.subr.mxu0 0.0
        %1284 = vmatpush1.msra.mxu0 0.0
        %1285 = vmatprep.subr.mxu0 0.0
        %1286 = vmatpush1.msra.mxu0 0.0
        %1287 = vmatprep.subr.mxu0 0.0
        %1288 = vmatpush1.msra.mxu0 0.0
        %1289 = vmatprep.subr.mxu0 0.0
        %1290 = vmatpush1.msra.mxu0 0.0
        %1291 = vmatprep.subr.mxu0 0.0
        %1292 = vmatpush1.msra.mxu0 0.0
        %1293 = vmatprep.subr.mxu0 0.0
        %1294 = vmatpush1.msra.mxu0 0.0
        %1295 = vmatprep.subr.mxu0 0.0
        %1296 = vmatpush1.msra.mxu0 0.0
        %1297 = vmatprep.subr.mxu0 0.0
        %1298 = vmatpush1.msra.mxu0 0.0
        %1299 = vmatprep.subr.mxu0 0.0
        %1300 = vmatpush1.msra.mxu0 0.0
        %1301 = vmatprep.mubr.f32.mxu0 0.0
        %v1302 = vand.u32 %v1228, 4294901760
        %v1303 = vsub.f32 %v1228, %v1302
        %v1304 = vand.u32 %v1303, 4294901760
        %v1305 = vsub.f32 %v1303, %v1304
        %v1306 = vand.u32 %v1305, 4294901760
        %1307 = vmatmul.mubr.f32.gmra.mrb[0].mxu0 %v1306
        %v1308 = vpop.f32.mrb[0].mxu0
        %v1309 = vadd.f32 0.0, %v1308
        %v1310 = vpop.f32.mrb[0].mxu0
        %1311 = vmatprep.mubr.f32.mxu0 0.0
        %v1312 = vand.u32 %v1231, 4294901760
        %v1313 = vsub.f32 %v1231, %v1312
        %v1314 = vand.u32 %v1313, 4294901760
        %v1315 = vsub.f32 %v1313, %v1314
        %v1316 = vand.u32 %v1315, 4294901760
        %1317 = vmatmul.mubr.f32.gmra.mrb[0].mxu0 %v1316
        %v1318 = vpop.f32.mrb[0].mxu0
        %v1319 = vadd.f32 0.0, %v1318
        %v1320 = vpop.f32.mrb[0].mxu0
        %1321 = vdwg.mxu0
        %1322 = vmatprep.subr.mxu0 0.0
        %v1323 = vand.u32 %v1234, 4294901760
        %v1324 = vsub.f32 %v1234, %v1323
        %v1325 = vand.u32 %v1324, 4294901760
        %v1326 = vsub.f32 %v1324, %v1325
        %v1327 = vand.u32 %v1326, 4294901760
        %1328 = vmatpush1.msra.mxu0 %v1327
        %1329 = vmatprep.subr.mxu0 0.0
        %1330 = vmatpush1.msra.mxu0 0.0
        %1331 = vmatprep.subr.mxu0 0.0
        %1332 = vmatpush1.msra.mxu0 0.0
        %1333 = vmatprep.subr.mxu0 0.0
        %1334 = vmatpush1.msra.mxu0 0.0
        %1335 = vmatprep.subr.mxu0 0.0
        %1336 = vmatpush1.msra.mxu0 0.0
        %1337 = vmatprep.subr.mxu0 0.0
        %1338 = vmatpush1.msra.mxu0 0.0
        %1339 = vmatprep.subr.mxu0 0.0
        %1340 = vmatpush1.msra.mxu0 0.0
        %1341 = vmatprep.subr.mxu0 0.0
        %1342 = vmatpush1.msra.mxu0 0.0
        %1343 = vmatprep.subr.mxu0 0.0
        %1344 = vmatpush1.msra.mxu0 0.0
        %1345 = vmatprep.subr.mxu0 0.0
        %1346 = vmatpush1.msra.mxu0 0.0
        %1347 = vmatprep.subr.mxu0 0.0
        %1348 = vmatpush1.msra.mxu0 0.0
        %1349 = vmatprep.subr.mxu0 0.0
        %1350 = vmatpush1.msra.mxu0 0.0
        %1351 = vmatprep.subr.mxu0 0.0
        %1352 = vmatpush1.msra.mxu0 0.0
        %1353 = vmatprep.subr.mxu0 0.0
        %1354 = vmatpush1.msra.mxu0 0.0
        %1355 = vmatprep.subr.mxu0 0.0
        %1356 = vmatpush1.msra.mxu0 0.0
        %1357 = vmatprep.subr.mxu0 0.0
        %1358 = vmatpush1.msra.mxu0 0.0
        %1359 = vmatprep.subr.mxu0 0.0
        %1360 = vmatpush1.msra.mxu0 0.0
        %1361 = vmatprep.subr.mxu0 0.0
        %1362 = vmatpush1.msra.mxu0 0.0
        %1363 = vmatprep.subr.mxu0 0.0
        %1364 = vmatpush1.msra.mxu0 0.0
        %1365 = vmatprep.subr.mxu0 0.0
        %1366 = vmatpush1.msra.mxu0 0.0
        %1367 = vmatprep.subr.mxu0 0.0
        %1368 = vmatpush1.msra.mxu0 0.0
        %1369 = vmatprep.subr.mxu0 0.0
        %1370 = vmatpush1.msra.mxu0 0.0
        %1371 = vmatprep.subr.mxu0 0.0
        %1372 = vmatpush1.msra.mxu0 0.0
        %1373 = vmatprep.subr.mxu0 0.0
        %1374 = vmatpush1.msra.mxu0 0.0
        %1375 = vmatprep.subr.mxu0 0.0
        %1376 = vmatpush1.msra.mxu0 0.0
        %1377 = vmatprep.subr.mxu0 0.0
        %1378 = vmatpush1.msra.mxu0 0.0
        %1379 = vmatprep.subr.mxu0 0.0
        %1380 = vmatpush1.msra.mxu0 0.0
        %1381 = vmatprep.subr.mxu0 0.0
        %1382 = vmatpush1.msra.mxu0 0.0
        %1383 = vmatprep.subr.mxu0 0.0
        %1384 = vmatpush1.msra.mxu0 0.0
        %1385 = vmatprep.subr.mxu0 0.0
        %1386 = vmatpush1.msra.mxu0 0.0
        %1387 = vmatprep.subr.mxu0 0.0
        %1388 = vmatpush1.msra.mxu0 0.0
        %1389 = vmatprep.subr.mxu0 0.0
        %1390 = vmatpush1.msra.mxu0 0.0
        %1391 = vmatprep.mubr.f32.mxu0 0.0
        %v1392 = vand.u32 %v1228, 4294901760
        %1393 = vmatmul.mubr.f32.gmra.mrb[0].mxu0 %v1392
        %v1394 = vpop.f32.mrb[0].mxu0
        %v1395 = vadd.f32 %v1309, %v1394
        %v1396 = vpop.f32.mrb[0].mxu0
        %1397 = vmatprep.mubr.f32.mxu0 0.0
        %v1398 = vand.u32 %v1231, 4294901760
        %1399 = vmatmul.mubr.f32.gmra.mrb[0].mxu0 %v1398
        %v1400 = vpop.f32.mrb[0].mxu0
        %v1401 = vadd.f32 %v1319, %v1400
        %v1402 = vpop.f32.mrb[0].mxu0
        %1403 = vdwg.mxu0
        %1404 = vmatprep.subr.mxu0 0.0
        %v1405 = vand.u32 %v1234, 4294901760
        %v1406 = vsub.f32 %v1234, %v1405
        %1407 = vmatpush1.msra.mxu0 %v1406
        %1408 = vmatprep.subr.mxu0 0.0
        %1409 = vmatpush1.msra.mxu0 0.0
        %1410 = vmatprep.subr.mxu0 0.0
        %1411 = vmatpush1.msra.mxu0 0.0
        %1412 = vmatprep.subr.mxu0 0.0
        %1413 = vmatpush1.msra.mxu0 0.0
        %1414 = vmatprep.subr.mxu0 0.0
        %1415 = vmatpush1.msra.mxu0 0.0
        %1416 = vmatprep.subr.mxu0 0.0
        %1417 = vmatpush1.msra.mxu0 0.0
        %1418 = vmatprep.subr.mxu0 0.0
        %1419 = vmatpush1.msra.mxu0 0.0
        %1420 = vmatprep.subr.mxu0 0.0
        %1421 = vmatpush1.msra.mxu0 0.0
        %1422 = vmatprep.subr.mxu0 0.0
        %1423 = vmatpush1.msra.mxu0 0.0
        %1424 = vmatprep.subr.mxu0 0.0
        %1425 = vmatpush1.msra.mxu0 0.0
        %1426 = vmatprep.subr.mxu0 0.0
        %1427 = vmatpush1.msra.mxu0 0.0
        %1428 = vmatprep.subr.mxu0 0.0
        %1429 = vmatpush1.msra.mxu0 0.0
        %1430 = vmatprep.subr.mxu0 0.0
        %1431 = vmatpush1.msra.mxu0 0.0
        %1432 = vmatprep.subr.mxu0 0.0
        %1433 = vmatpush1.msra.mxu0 0.0
        %1434 = vmatprep.subr.mxu0 0.0
        %1435 = vmatpush1.msra.mxu0 0.0
        %1436 = vmatprep.subr.mxu0 0.0
        %1437 = vmatpush1.msra.mxu0 0.0
        %1438 = vmatprep.subr.mxu0 0.0
        %1439 = vmatpush1.msra.mxu0 0.0
        %1440 = vmatprep.subr.mxu0 0.0
        %1441 = vmatpush1.msra.mxu0 0.0
        %1442 = vmatprep.subr.mxu0 0.0
        %1443 = vmatpush1.msra.mxu0 0.0
        %1444 = vmatprep.subr.mxu0 0.0
        %1445 = vmatpush1.msra.mxu0 0.0
        %1446 = vmatprep.subr.mxu0 0.0
        %1447 = vmatpush1.msra.mxu0 0.0
        %1448 = vmatprep.subr.mxu0 0.0
        %1449 = vmatpush1.msra.mxu0 0.0
        %1450 = vmatprep.subr.mxu0 0.0
        %1451 = vmatpush1.msra.mxu0 0.0
        %1452 = vmatprep.subr.mxu0 0.0
        %1453 = vmatpush1.msra.mxu0 0.0
        %1454 = vmatprep.subr.mxu0 0.0
        %1455 = vmatpush1.msra.mxu0 0.0
        %1456 = vmatprep.subr.mxu0 0.0
        %1457 = vmatpush1.msra.mxu0 0.0
        %1458 = vmatprep.subr.mxu0 0.0
        %1459 = vmatpush1.msra.mxu0 0.0
        %1460 = vmatprep.subr.mxu0 0.0
        %1461 = vmatpush1.msra.mxu0 0.0
        %1462 = vmatprep.subr.mxu0 0.0
        %1463 = vmatpush1.msra.mxu0 0.0
        %1464 = vmatprep.subr.mxu0 0.0
        %1465 = vmatpush1.msra.mxu0 0.0
        %1466 = vmatprep.subr.mxu0 0.0
        %1467 = vmatpush1.msra.mxu0 0.0
        %1468 = vmatprep.subr.mxu0 0.0
        %1469 = vmatpush1.msra.mxu0 0.0
        %1470 = vmatprep.mubr.f32.mxu0 0.0
        %v1471 = vand.u32 %v1228, 4294901760
        %v1472 = vsub.f32 %v1228, %v1471
        %1473 = vmatmul.mubr.f32.gmra.mrb[0].mxu0 %v1472
        %v1474 = vpop.f32.mrb[0].mxu0
        %v1475 = vadd.f32 %v1395, %v1474
        %v1476 = vpop.f32.mrb[0].mxu0
        %1477 = vmatprep.mubr.f32.mxu0 0.0
        %v1478 = vand.u32 %v1231, 4294901760
        %v1479 = vsub.f32 %v1231, %v1478
        %1480 = vmatmul.mubr.f32.gmra.mrb[0].mxu0 %v1479
        %v1481 = vpop.f32.mrb[0].mxu0
        %v1482 = vadd.f32 %v1401, %v1481
        %v1483 = vpop.f32.mrb[0].mxu0
        %1484 = vdwg.mxu0
        %1485 = vmatprep.subr.mxu0 0.0
        %v1486 = vand.u32 %v1234, 4294901760
        %1487 = vmatpush1.msra.mxu0 %v1486
        %1488 = vmatprep.subr.mxu0 0.0
        %1489 = vmatpush1.msra.mxu0 0.0
        %1490 = vmatprep.subr.mxu0 0.0
        %1491 = vmatpush1.msra.mxu0 0.0
        %1492 = vmatprep.subr.mxu0 0.0
        %1493 = vmatpush1.msra.mxu0 0.0
        %1494 = vmatprep.subr.mxu0 0.0
        %1495 = vmatpush1.msra.mxu0 0.0
        %1496 = vmatprep.subr.mxu0 0.0
        %1497 = vmatpush1.msra.mxu0 0.0
        %1498 = vmatprep.subr.mxu0 0.0
        %1499 = vmatpush1.msra.mxu0 0.0
        %1500 = vmatprep.subr.mxu0 0.0
        %1501 = vmatpush1.msra.mxu0 0.0
        %1502 = vmatprep.subr.mxu0 0.0
        %1503 = vmatpush1.msra.mxu0 0.0
        %1504 = vmatprep.subr.mxu0 0.0
        %1505 = vmatpush1.msra.mxu0 0.0
        %1506 = vmatprep.subr.mxu0 0.0
        %1507 = vmatpush1.msra.mxu0 0.0
        %1508 = vmatprep.subr.mxu0 0.0
        %1509 = vmatpush1.msra.mxu0 0.0
        %1510 = vmatprep.subr.mxu0 0.0
        %1511 = vmatpush1.msra.mxu0 0.0
        %1512 = vmatprep.subr.mxu0 0.0
        %1513 = vmatpush1.msra.mxu0 0.0
        %1514 = vmatprep.subr.mxu0 0.0
        %1515 = vmatpush1.msra.mxu0 0.0
        %1516 = vmatprep.subr.mxu0 0.0
        %1517 = vmatpush1.msra.mxu0 0.0
        %1518 = vmatprep.subr.mxu0 0.0
        %1519 = vmatpush1.msra.mxu0 0.0
        %1520 = vmatprep.subr.mxu0 0.0
        %1521 = vmatpush1.msra.mxu0 0.0
        %1522 = vmatprep.subr.mxu0 0.0
        %1523 = vmatpush1.msra.mxu0 0.0
        %1524 = vmatprep.subr.mxu0 0.0
        %1525 = vmatpush1.msra.mxu0 0.0
        %1526 = vmatprep.subr.mxu0 0.0
        %1527 = vmatpush1.msra.mxu0 0.0
        %1528 = vmatprep.subr.mxu0 0.0
        %1529 = vmatpush1.msra.mxu0 0.0
        %1530 = vmatprep.subr.mxu0 0.0
        %1531 = vmatpush1.msra.mxu0 0.0
        %1532 = vmatprep.subr.mxu0 0.0
        %1533 = vmatpush1.msra.mxu0 0.0
        %1534 = vmatprep.subr.mxu0 0.0
        %1535 = vmatpush1.msra.mxu0 0.0
        %1536 = vmatprep.subr.mxu0 0.0
        %1537 = vmatpush1.msra.mxu0 0.0
        %1538 = vmatprep.subr.mxu0 0.0
        %1539 = vmatpush1.msra.mxu0 0.0
        %1540 = vmatprep.subr.mxu0 0.0
        %1541 = vmatpush1.msra.mxu0 0.0
        %1542 = vmatprep.subr.mxu0 0.0
        %1543 = vmatpush1.msra.mxu0 0.0
        %1544 = vmatprep.subr.mxu0 0.0
        %1545 = vmatpush1.msra.mxu0 0.0
        %1546 = vmatprep.subr.mxu0 0.0
        %1547 = vmatpush1.msra.mxu0 0.0
        %1548 = vmatprep.subr.mxu0 0.0
        %1549 = vmatpush1.msra.mxu0 0.0
        %1550 = vmatprep.mubr.f32.mxu0 0.0
        %v1551 = vand.u32 %v1228, 4294901760
        %v1552 = vsub.f32 %v1228, %v1551
        %v1553 = vand.u32 %v1552, 4294901760
        %1554 = vmatmul.mubr.f32.gmra.mrb[0].mxu0 %v1553
        %v1555 = vpop.f32.mrb[0].mxu0
        %v1556 = vadd.f32 %v1475, %v1555
        %v1557 = vpop.f32.mrb[0].mxu0
        %1558 = vmatprep.mubr.f32.mxu0 0.0
        %v1559 = vand.u32 %v1231, 4294901760
        %v1560 = vsub.f32 %v1231, %v1559
        %v1561 = vand.u32 %v1560, 4294901760
        %1562 = vmatmul.mubr.f32.gmra.mrb[0].mxu0 %v1561
        %v1563 = vpop.f32.mrb[0].mxu0
        %v1564 = vadd.f32 %v1482, %v1563
        %v1565 = vpop.f32.mrb[0].mxu0
        %1566 = vdwg.mxu0
        %1567 = vmatprep.subr.mxu0 0.0
        %v1568 = vand.u32 %v1234, 4294901760
        %v1569 = vsub.f32 %v1234, %v1568
        %v1570 = vand.u32 %v1569, 4294901760
        %1571 = vmatpush1.msra.mxu0 %v1570
        %1572 = vmatprep.subr.mxu0 0.0
        %1573 = vmatpush1.msra.mxu0 0.0
        %1574 = vmatprep.subr.mxu0 0.0
        %1575 = vmatpush1.msra.mxu0 0.0
        %1576 = vmatprep.subr.mxu0 0.0
        %1577 = vmatpush1.msra.mxu0 0.0
        %1578 = vmatprep.subr.mxu0 0.0
        %1579 = vmatpush1.msra.mxu0 0.0
        %1580 = vmatprep.subr.mxu0 0.0
        %1581 = vmatpush1.msra.mxu0 0.0
        %1582 = vmatprep.subr.mxu0 0.0
        %1583 = vmatpush1.msra.mxu0 0.0
        %1584 = vmatprep.subr.mxu0 0.0
        %1585 = vmatpush1.msra.mxu0 0.0
        %1586 = vmatprep.subr.mxu0 0.0
        %1587 = vmatpush1.msra.mxu0 0.0
        %1588 = vmatprep.subr.mxu0 0.0
        %1589 = vmatpush1.msra.mxu0 0.0
        %1590 = vmatprep.subr.mxu0 0.0
        %1591 = vmatpush1.msra.mxu0 0.0
        %1592 = vmatprep.subr.mxu0 0.0
        %1593 = vmatpush1.msra.mxu0 0.0
        %1594 = vmatprep.subr.mxu0 0.0
        %1595 = vmatpush1.msra.mxu0 0.0
        %1596 = vmatprep.subr.mxu0 0.0
        %1597 = vmatpush1.msra.mxu0 0.0
        %1598 = vmatprep.subr.mxu0 0.0
        %1599 = vmatpush1.msra.mxu0 0.0
        %1600 = vmatprep.subr.mxu0 0.0
        %1601 = vmatpush1.msra.mxu0 0.0
        %1602 = vmatprep.subr.mxu0 0.0
        %1603 = vmatpush1.msra.mxu0 0.0
        %1604 = vmatprep.subr.mxu0 0.0
        %1605 = vmatpush1.msra.mxu0 0.0
        %1606 = vmatprep.subr.mxu0 0.0
        %1607 = vmatpush1.msra.mxu0 0.0
        %1608 = vmatprep.subr.mxu0 0.0
        %1609 = vmatpush1.msra.mxu0 0.0
        %1610 = vmatprep.subr.mxu0 0.0
        %1611 = vmatpush1.msra.mxu0 0.0
        %1612 = vmatprep.subr.mxu0 0.0
        %1613 = vmatpush1.msra.mxu0 0.0
        %1614 = vmatprep.subr.mxu0 0.0
        %1615 = vmatpush1.msra.mxu0 0.0
        %1616 = vmatprep.subr.mxu0 0.0
        %1617 = vmatpush1.msra.mxu0 0.0
        %1618 = vmatprep.subr.mxu0 0.0
        %1619 = vmatpush1.msra.mxu0 0.0
        %1620 = vmatprep.subr.mxu0 0.0
        %1621 = vmatpush1.msra.mxu0 0.0
        %1622 = vmatprep.subr.mxu0 0.0
        %1623 = vmatpush1.msra.mxu0 0.0
        %1624 = vmatprep.subr.mxu0 0.0
        %1625 = vmatpush1.msra.mxu0 0.0
        %1626 = vmatprep.subr.mxu0 0.0
        %1627 = vmatpush1.msra.mxu0 0.0
        %1628 = vmatprep.subr.mxu0 0.0
        %1629 = vmatpush1.msra.mxu0 0.0
        %1630 = vmatprep.subr.mxu0 0.0
        %1631 = vmatpush1.msra.mxu0 0.0
        %1632 = vmatprep.subr.mxu0 0.0
        %1633 = vmatpush1.msra.mxu0 0.0
        %1634 = vmatprep.mubr.f32.mxu0 0.0
        %v1635 = vand.u32 %v1228, 4294901760
        %1636 = vmatmul.mubr.f32.gmra.mrb[0].mxu0 %v1635
        %v1637 = vpop.f32.mrb[0].mxu0
        %v1638 = vadd.f32 %v1556, %v1637
        %v1639 = vpop.f32.mrb[0].mxu0
        %1640 = vmatprep.mubr.f32.mxu0 0.0
        %v1641 = vand.u32 %v1231, 4294901760
        %1642 = vmatmul.mubr.f32.gmra.mrb[0].mxu0 %v1641
        %v1643 = vpop.f32.mrb[0].mxu0
        %v1644 = vadd.f32 %v1564, %v1643
        %v1645 = vpop.f32.mrb[0].mxu0
        %1646 = vdwg.mxu0
        %1647 = vmatprep.subr.mxu0 0.0
        %v1648 = vand.u32 %v1234, 4294901760
        %1649 = vmatpush1.msra.mxu0 %v1648
        %1650 = vmatprep.subr.mxu0 0.0
        %1651 = vmatpush1.msra.mxu0 0.0
        %1652 = vmatprep.subr.mxu0 0.0
        %1653 = vmatpush1.msra.mxu0 0.0
        %1654 = vmatprep.subr.mxu0 0.0
        %1655 = vmatpush1.msra.mxu0 0.0
        %1656 = vmatprep.subr.mxu0 0.0
        %1657 = vmatpush1.msra.mxu0 0.0
        %1658 = vmatprep.subr.mxu0 0.0
        %1659 = vmatpush1.msra.mxu0 0.0
        %1660 = vmatprep.subr.mxu0 0.0
        %1661 = vmatpush1.msra.mxu0 0.0
        %1662 = vmatprep.subr.mxu0 0.0
        %1663 = vmatpush1.msra.mxu0 0.0
        %1664 = vmatprep.subr.mxu0 0.0
        %1665 = vmatpush1.msra.mxu0 0.0
        %1666 = vmatprep.subr.mxu0 0.0
        %1667 = vmatpush1.msra.mxu0 0.0
        %1668 = vmatprep.subr.mxu0 0.0
        %1669 = vmatpush1.msra.mxu0 0.0
        %1670 = vmatprep.subr.mxu0 0.0
        %1671 = vmatpush1.msra.mxu0 0.0
        %1672 = vmatprep.subr.mxu0 0.0
        %1673 = vmatpush1.msra.mxu0 0.0
        %1674 = vmatprep.subr.mxu0 0.0
        %1675 = vmatpush1.msra.mxu0 0.0
        %1676 = vmatprep.subr.mxu0 0.0
        %1677 = vmatpush1.msra.mxu0 0.0
        %1678 = vmatprep.subr.mxu0 0.0
        %1679 = vmatpush1.msra.mxu0 0.0
        %1680 = vmatprep.subr.mxu0 0.0
        %1681 = vmatpush1.msra.mxu0 0.0
        %1682 = vmatprep.subr.mxu0 0.0
        %1683 = vmatpush1.msra.mxu0 0.0
        %1684 = vmatprep.subr.mxu0 0.0
        %1685 = vmatpush1.msra.mxu0 0.0
        %1686 = vmatprep.subr.mxu0 0.0
        %1687 = vmatpush1.msra.mxu0 0.0
        %1688 = vmatprep.subr.mxu0 0.0
        %1689 = vmatpush1.msra.mxu0 0.0
        %1690 = vmatprep.subr.mxu0 0.0
        %1691 = vmatpush1.msra.mxu0 0.0
        %1692 = vmatprep.subr.mxu0 0.0
        %1693 = vmatpush1.msra.mxu0 0.0
        %1694 = vmatprep.subr.mxu0 0.0
        %1695 = vmatpush1.msra.mxu0 0.0
        %1696 = vmatprep.subr.mxu0 0.0
        %1697 = vmatpush1.msra.mxu0 0.0
        %1698 = vmatprep.subr.mxu0 0.0
        %1699 = vmatpush1.msra.mxu0 0.0
        %1700 = vmatprep.subr.mxu0 0.0
        %1701 = vmatpush1.msra.mxu0 0.0
        %1702 = vmatprep.subr.mxu0 0.0
        %1703 = vmatpush1.msra.mxu0 0.0
        %1704 = vmatprep.subr.mxu0 0.0
        %1705 = vmatpush1.msra.mxu0 0.0
        %1706 = vmatprep.subr.mxu0 0.0
        %1707 = vmatpush1.msra.mxu0 0.0
        %1708 = vmatprep.subr.mxu0 0.0
        %1709 = vmatpush1.msra.mxu0 0.0
        %1710 = vmatprep.subr.mxu0 0.0
        %1711 = vmatpush1.msra.mxu0 0.0
        %1712 = vmatprep.mubr.f32.mxu0 0.0
        %v1713 = vand.u32 %v1228, 4294901760
        %1714 = vmatmul.mubr.f32.gmra.mrb[0].mxu0 %v1713
        %v1715 = vpop.f32.mrb[0].mxu0
        %v1716 = vadd.f32 %v1638, %v1715
        %v1717 = vpop.f32.mrb[0].mxu0
        %1718 = vmatprep.mubr.f32.mxu0 0.0
        %v1719 = vand.u32 %v1231, 4294901760
        %1720 = vmatmul.mubr.f32.gmra.mrb[0].mxu0 %v1719
        %v1721 = vpop.f32.mrb[0].mxu0
        %v1722 = vadd.f32 %v1644, %v1721
        %v1723 = vpop.f32.mrb[0].mxu0
        %1724 = vdwg.mxu0
        %v1725 = vmul.f32 %v1716, 0.0013020834
        %v1726 = vmul.f32 %v1722, 0.0013020834
        %v1727 = vmul.f32 %v1725, %v1725
        %v1728 = vmul.f32 %v1726, %v1726
        %1731 = vrot.lane.b32.xlu0 %v1727, 1
        %v1732 = vpop.permute.xlu0 %1731
        %1733 = vrot.lane.b32.xlu0 %v1728, 1
        %v1734 = vpop.permute.xlu0 %1733
        %v1737 = vsub.f32 %v1725, %v1732
        %v1738 = vsub.f32 %v1726, %v1734
        %v1739 = vmax.f32 %v1737, 0.0
        %v1740 = vmax.f32 %v1738, 0.0
        %v1741 = vadd.f32 %v1739, 1e-05
        %v1742 = vadd.f32 %v1740, 1e-05
        %v1743 = vrsqrt.pop %v1741
        %v1744 = vrsqrt.pop %v1742
        %1747 = vrot.lane.b32.xlu0 %v1743, 127
        %v1748 = vpop.permute.xlu0 %1747
        %1749 = vrot.lane.b32.xlu0 %v1744, 127
        %v1750 = vpop.permute.xlu0 %1749
        %v1753 = vmul.f32 %v731, %v1748
        %v1754 = vmul.f32 %v732, %v1750
        %v1755 = vmul.f32 %v1725, %v1753
        %v1756 = vmul.f32 %v1726, %v1754
        %v1757 = vsub.f32 %v733, %v1755
        %v1758 = vsub.f32 %v734, %v1756
        %1760 = vset.pattern.permute.xlu0 0
        %1761 = vperm.xlu0 %1760, %v1753
        %v1762 = vpop.permute.xlu0 %1761
        %1765 = vset.pattern.permute.xlu0 0
        %1766 = vperm.xlu0 %1765, %v1754
        %v1767 = vpop.permute.xlu0 %1766
        %v1769 = vmul.f32 %v727, %v1762
        %v1770 = vmul.f32 %v728, %v1762
        %v1771 = vmul.f32 %v729, %v1767
        %v1772 = vmul.f32 %v730, %v1767
        %1774 = vset.pattern.permute.xlu0 0
        %1775 = vperm.xlu0 %1774, %v1757
        %v1776 = vpop.permute.xlu0 %1775
        %1779 = vset.pattern.permute.xlu0 0
        %1780 = vperm.xlu0 %1779, %v1758
        %v1781 = vpop.permute.xlu0 %1780
        %v1783 = vadd.f32 %v1769, %v1776
        %v1784 = vadd.f32 %v1770, %v1776
        %v1785 = vadd.f32 %v1771, %v1781
        %v1786 = vadd.f32 %v1772, %v1781
        %v1787 = vmul.f32 %v1783, %v578
        %v1788 = vmul.f32 %v1784, %v579
        %v1789 = vmul.f32 %v1785, %v578
        %v1790 = vmul.f32 %v1786, %v579
        %1791 = vrot.lane.b32.xlu0 %v1787, 1
        %v1792 = vpop.permute.xlu0 %1791
        %1793 = vrot.lane.b32.xlu0 %v1789, 1
        %v1794 = vpop.permute.xlu0 %1793
        %1795 = vrot.lane.b32.xlu0 %v1788, 1
        %v1796 = vpop.permute.xlu0 %1795
        %1797 = vrot.lane.b32.xlu0 %v1790, 1
        %v1798 = vpop.permute.xlu0 %1797
        %vm1799 = vcmp.lt.s32.totalorder %v548, 1
        %v1800 = vsel %vm1799, %v1792, %v1796
        %v1801 = vsel %vm1799, %v1794, %v1798
        %v1802 = vsel %vm1799, %v1796, %v1792
        %v1803 = vsel %vm1799, %v1798, %v1794
        %v1804 = vmul.f32 %v1783, %v584
        %v1805 = vmul.f32 %v1784, %v585
        %v1806 = vmul.f32 %v1785, %v584
        %v1807 = vmul.f32 %v1786, %v585
        %1808 = vrot.lane.b32.xlu0 %v1804, 127
        %v1809 = vpop.permute.xlu0 %1808
        %1810 = vrot.lane.b32.xlu0 %v1806, 127
        %v1811 = vpop.permute.xlu0 %1810
        %1812 = vrot.lane.b32.xlu0 %v1805, 127
        %v1813 = vpop.permute.xlu0 %1812
        %1814 = vrot.lane.b32.xlu0 %v1807, 127
        %v1815 = vpop.permute.xlu0 %1814
        %vm1816 = vcmp.lt.s32.totalorder %v548, 127
        %v1817 = vsel %vm1816, %v1809, %v1813
        %v1818 = vsel %vm1816, %v1811, %v1815
        %v1819 = vsel %vm1816, %v1813, %v1809
        %v1820 = vsel %vm1816, %v1815, %v1811
        %1822 = vset.pattern.permute.xlu0 0
        %1823 = vperm.xlu0 %1822, %v602
        %v1824 = vpop.permute.xlu0 %1823
        %1827 = vset.pattern.permute.xlu0 0
        %1828 = vperm.xlu0 %1827, %v603
        %v1829 = vpop.permute.xlu0 %1828
        %v1831 = vmul.f32 %v1802, %v1824
        %v1832 = vmul.f32 %v1800, %v1824
        %v1833 = vmul.f32 %v1803, %v1829
        %v1834 = vmul.f32 %v1801, %v1829
        %1835 = vset.pattern.permute.xlu0 1
        %1836 = vperm.xlu0 %1835, %v602
        %v1837 = vpop.permute.xlu0 %1836
        %1839 = vset.pattern.permute.xlu0 1
        %1840 = vperm.xlu0 %1839, %v603
        %v1841 = vpop.permute.xlu0 %1840
        %v1843 = vmul.f32 %v1783, %v1837
        %v1844 = vmul.f32 %v1784, %v1837
        %v1845 = vmul.f32 %v1785, %v1841
        %v1846 = vmul.f32 %v1786, %v1841
        %v1847 = vadd.f32 %v1831, %v1843
        %v1848 = vadd.f32 %v1832, %v1844
        %v1849 = vadd.f32 %v1833, %v1845
        %v1850 = vadd.f32 %v1834, %v1846
        %1851 = vset.pattern.permute.xlu0 2
        %1852 = vperm.xlu0 %1851, %v602
        %v1853 = vpop.permute.xlu0 %1852
        %1855 = vset.pattern.permute.xlu0 2
        %1856 = vperm.xlu0 %1855, %v603
        %v1857 = vpop.permute.xlu0 %1856
        %v1859 = vmul.f32 %v1817, %v1853
        %v1860 = vmul.f32 %v1819, %v1853
        %v1861 = vmul.f32 %v1818, %v1857
        %v1862 = vmul.f32 %v1820, %v1857
        %v1863 = vadd.f32 %v1847, %v1859
        %v1864 = vadd.f32 %v1848, %v1860
        %v1865 = vadd.f32 %v1849, %v1861
        %v1866 = vadd.f32 %v1850, %v1862
        %1867 = vrot.lane.b32.xlu0 %v1863, 16
        %v1868 = vpop.permute.xlu0 %1867
        %1869 = vrot.lane.b32.xlu0 %v1865, 16
        %v1870 = vpop.permute.xlu0 %1869
        %1871 = vrot.lane.b32.xlu0 %v1864, 16
        %v1872 = vpop.permute.xlu0 %1871
        %1873 = vrot.lane.b32.xlu0 %v1866, 16
        %v1874 = vpop.permute.xlu0 %1873
        %vm1875 = vcmp.lt.s32.totalorder %v548, 16
        %v1876 = vsel %vm1875, %v1868, %v1872
        %v1877 = vsel %vm1875, %v1870, %v1874
        %v1878 = vsel %vm1875, %v1872, %v1868
        %v1879 = vsel %vm1875, %v1874, %v1870
        %v1880 = vmul.f32 %v1878, %v590
        %v1881 = vmul.f32 %v1876, %v591
        %v1882 = vmul.f32 %v1879, %v590
        %v1883 = vmul.f32 %v1877, %v591
        %1884 = vset.pattern.permute.xlu0 3
        %1885 = vperm.xlu0 %1884, %v602
        %v1886 = vpop.permute.xlu0 %1885
        %1888 = vset.pattern.permute.xlu0 3
        %1889 = vperm.xlu0 %1888, %v603
        %v1890 = vpop.permute.xlu0 %1889
        %v1892 = vmul.f32 %v1802, %v1886
        %v1893 = vmul.f32 %v1800, %v1886
        %v1894 = vmul.f32 %v1803, %v1890
        %v1895 = vmul.f32 %v1801, %v1890
        %1896 = vset.pattern.permute.xlu0 4
        %1897 = vperm.xlu0 %1896, %v602
        %v1898 = vpop.permute.xlu0 %1897
        %1900 = vset.pattern.permute.xlu0 4
        %1901 = vperm.xlu0 %1900, %v603
        %v1902 = vpop.permute.xlu0 %1901
        %v1904 = vmul.f32 %v1783, %v1898
        %v1905 = vmul.f32 %v1784, %v1898
        %v1906 = vmul.f32 %v1785, %v1902
        %v1907 = vmul.f32 %v1786, %v1902
        %v1908 = vadd.f32 %v1892, %v1904
        %v1909 = vadd.f32 %v1893, %v1905
        %v1910 = vadd.f32 %v1894, %v1906
        %v1911 = vadd.f32 %v1895, %v1907
        %1912 = vset.pattern.permute.xlu0 5
        %1913 = vperm.xlu0 %1912, %v602
        %v1914 = vpop.permute.xlu0 %1913
        %1916 = vset.pattern.permute.xlu0 5
        %1917 = vperm.xlu0 %1916, %v603
        %v1918 = vpop.permute.xlu0 %1917
        %v1920 = vmul.f32 %v1817, %v1914
        %v1921 = vmul.f32 %v1819, %v1914
        %v1922 = vmul.f32 %v1818, %v1918
        %v1923 = vmul.f32 %v1820, %v1918
        %v1924 = vadd.f32 %v1908, %v1920
        %v1925 = vadd.f32 %v1909, %v1921
        %v1926 = vadd.f32 %v1910, %v1922
        %v1927 = vadd.f32 %v1911, %v1923
        %v1928 = vadd.f32 %v1880, %v1924
        %v1929 = vadd.f32 %v1881, %v1925
        %v1930 = vadd.f32 %v1882, %v1926
        %v1931 = vadd.f32 %v1883, %v1927
        %1932 = vset.pattern.permute.xlu0 6
        %1933 = vperm.xlu0 %1932, %v602
        %v1934 = vpop.permute.xlu0 %1933
        %1936 = vset.pattern.permute.xlu0 6
        %1937 = vperm.xlu0 %1936, %v603
        %v1938 = vpop.permute.xlu0 %1937
        %v1940 = vmul.f32 %v1802, %v1934
        %v1941 = vmul.f32 %v1800, %v1934
        %v1942 = vmul.f32 %v1803, %v1938
        %v1943 = vmul.f32 %v1801, %v1938
        %1944 = vset.pattern.permute.xlu0 7
        %1945 = vperm.xlu0 %1944, %v602
        %v1946 = vpop.permute.xlu0 %1945
        %1948 = vset.pattern.permute.xlu0 7
        %1949 = vperm.xlu0 %1948, %v603
        %v1950 = vpop.permute.xlu0 %1949
        %v1952 = vmul.f32 %v1783, %v1946
        %v1953 = vmul.f32 %v1784, %v1946
        %v1954 = vmul.f32 %v1785, %v1950
        %v1955 = vmul.f32 %v1786, %v1950
        %v1956 = vadd.f32 %v1940, %v1952
        %v1957 = vadd.f32 %v1941, %v1953
        %v1958 = vadd.f32 %v1942, %v1954
        %v1959 = vadd.f32 %v1943, %v1955
        %1960 = vset.pattern.permute.xlu0 8
        %1961 = vperm.xlu0 %1960, %v602
        %v1962 = vpop.permute.xlu0 %1961
        %1964 = vset.pattern.permute.xlu0 8
        %1965 = vperm.xlu0 %1964, %v603
        %v1966 = vpop.permute.xlu0 %1965
        %v1968 = vmul.f32 %v1817, %v1962
        %v1969 = vmul.f32 %v1819, %v1962
        %v1970 = vmul.f32 %v1818, %v1966
        %v1971 = vmul.f32 %v1820, %v1966
        %v1972 = vadd.f32 %v1956, %v1968
        %v1973 = vadd.f32 %v1957, %v1969
        %v1974 = vadd.f32 %v1958, %v1970
        %v1975 = vadd.f32 %v1959, %v1971
        %1976 = vrot.lane.b32.xlu0 %v1972, 112
        %v1977 = vpop.permute.xlu0 %1976
        %1978 = vrot.lane.b32.xlu0 %v1974, 112
        %v1979 = vpop.permute.xlu0 %1978
        %1980 = vrot.lane.b32.xlu0 %v1973, 112
        %v1981 = vpop.permute.xlu0 %1980
        %1982 = vrot.lane.b32.xlu0 %v1975, 112
        %v1983 = vpop.permute.xlu0 %1982
        %vm1984 = vcmp.lt.s32.totalorder %v548, 112
        %v1985 = vsel %vm1984, %v1977, %v1981
        %v1986 = vsel %vm1984, %v1979, %v1983
        %v1987 = vsel %vm1984, %v1981, %v1977
        %v1988 = vsel %vm1984, %v1983, %v1979
        %v1989 = vmul.f32 %v1985, %v596
        %v1990 = vmul.f32 %v1987, %v597
        %v1991 = vmul.f32 %v1986, %v596
        %v1992 = vmul.f32 %v1988, %v597
        %v1993 = vadd.f32 %v1928, %v1989
        %v1994 = vadd.f32 %v1929, %v1990
        %v1995 = vadd.f32 %v1930, %v1991
        %v1996 = vadd.f32 %v1931, %v1992
        %v1997 = vld [vmem:[%s6] sm:$0xff]
        %v1998 = vld [vmem:[%s6 + $0x8] sm:$0xf]
        %2000 = vset.pattern.permute.xlu0 0
        %2001 = vperm.xlu0 %2000, %v1997
        %v2002 = vpop.permute.xlu0 %2001
        %2005 = vset.pattern.permute.xlu0 0
        %2006 = vperm.xlu0 %2005, %v1998
        %v2007 = vpop.permute.xlu0 %2006
        %v2009 = vadd.f32 %v1993, %v2002
        %v2010 = vadd.f32 %v1994, %v2002
        %v2011 = vadd.f32 %v1995, %v2007
        %v2012 = vadd.f32 %v1996, %v2007
        %v2013 = vsub.f32 0.0, %v2009
        %v2014 = vsub.f32 0.0, %v2010
        %v2015 = vsub.f32 0.0, %v2011
        %v2016 = vsub.f32 0.0, %v2012
        %v2017 = vmul.f32 %v2013, 1.442695
        %v2018 = vpow.pop %v2017
        %v2019 = vmul.f32 %v2014, 1.442695
        %v2020 = vpow.pop %v2019
        %v2021 = vmul.f32 %v2015, 1.442695
        %v2022 = vpow.pop %v2021
        %v2023 = vmul.f32 %v2016, 1.442695
        %v2024 = vpow.pop %v2023
        %v2025 = vadd.f32 %v2018, 1.0
        %v2026 = vadd.f32 %v2020, 1.0
        %v2027 = vadd.f32 %v2022, 1.0
        %v2028 = vadd.f32 %v2024, 1.0
        %v2029 = vrcp.pop %v2025
        %v2030 = vrcp.pop %v2026
        %v2031 = vrcp.pop %v2027
        %v2032 = vrcp.pop %v2028
        %v2033 = vmul.f32 %v2009, %v2029
        %v2034 = vmul.f32 %v2010, %v2030
        %v2035 = vmul.f32 %v2011, %v2031
        %v2036 = vmul.f32 %v2012, %v2032
        %v2037 = vld [vmem:[%s7] sm:$0xff]
        %v2038 = vld [vmem:[%s7 + $0x8] sm:$0xf]
        %v2039 = vld [vmem:[%s8] sm:$0xff]
        %v2040 = vld [vmem:[%s8 + $0x8] sm:$0xf]
        %v2041 = vadd.f32 %v2033, %v2034
        %2042 = vadd.xlane.f32.xlu0 %v2041
        %v2043 = vpop.xlane.xlu0 %2042
        %v2044 = vsel %vm625, %v2035, 0.0
        %v2045 = vsel %vm625, %v2036, 0.0
        %v2046 = vadd.f32 %v2044, %v2045
        %2047 = vadd.xlane.f32.xlu0 %v2046
        %v2048 = vpop.xlane.xlu0 %2047
        %v2049 = vmul.f32 %v2033, %v2033
        %v2050 = vmul.f32 %v2034, %v2034
        %v2051 = vmul.f32 %v2035, %v2035
        %v2052 = vmul.f32 %v2036, %v2036
        %v2053 = vadd.f32 %v2049, %v2050
        %2054 = vadd.xlane.f32.xlu0 %v2053
        %v2055 = vpop.xlane.xlu0 %2054
        %v2056 = vsel %vm625, %v2051, 0.0
        %v2057 = vsel %vm625, %v2052, 0.0
        %v2058 = vadd.f32 %v2056, %v2057
        %2059 = vadd.xlane.f32.xlu0 %v2058
        %v2060 = vpop.xlane.xlu0 %2059
        %v2061 = vsel %vm758, %v2043, %v2055
        %v2062 = vsel %vm758, %v2048, %v2060
        %v2064 = vsel %vm625, %v2062, 0
        %2066 = vmatprep.subr.mxu0 0.0
        %v2067 = vand.u32 %v2061, 4294901760
        %2068 = vmatpush1.msra.mxu0 %v2067
        %2069 = vmatprep.subr.mxu0 0.0
        %v2070 = vand.u32 %v2064, 4294901760
        %2071 = vmatpush1.msra.mxu0 %v2070
        %2072 = vmatprep.subr.mxu0 0.0
        %2073 = vmatpush1.msra.mxu0 0.0
        %2074 = vmatprep.subr.mxu0 0.0
        %2075 = vmatpush1.msra.mxu0 0.0
        %2076 = vmatprep.subr.mxu0 0.0
        %2077 = vmatpush1.msra.mxu0 0.0
        %2078 = vmatprep.subr.mxu0 0.0
        %2079 = vmatpush1.msra.mxu0 0.0
        %2080 = vmatprep.subr.mxu0 0.0
        %2081 = vmatpush1.msra.mxu0 0.0
        %2082 = vmatprep.subr.mxu0 0.0
        %2083 = vmatpush1.msra.mxu0 0.0
        %2084 = vmatprep.subr.mxu0 0.0
        %2085 = vmatpush1.msra.mxu0 0.0
        %2086 = vmatprep.subr.mxu0 0.0
        %2087 = vmatpush1.msra.mxu0 0.0
        %2088 = vmatprep.subr.mxu0 0.0
        %2089 = vmatpush1.msra.mxu0 0.0
        %2090 = vmatprep.subr.mxu0 0.0
        %2091 = vmatpush1.msra.mxu0 0.0
        %2092 = vmatprep.subr.mxu0 0.0
        %2093 = vmatpush1.msra.mxu0 0.0
        %2094 = vmatprep.subr.mxu0 0.0
        %2095 = vmatpush1.msra.mxu0 0.0
        %2096 = vmatprep.subr.mxu0 0.0
        %2097 = vmatpush1.msra.mxu0 0.0
        %2098 = vmatprep.subr.mxu0 0.0
        %2099 = vmatpush1.msra.mxu0 0.0
        %2100 = vmatprep.subr.mxu0 0.0
        %2101 = vmatpush1.msra.mxu0 0.0
        %2102 = vmatprep.subr.mxu0 0.0
        %2103 = vmatpush1.msra.mxu0 0.0
        %2104 = vmatprep.subr.mxu0 0.0
        %2105 = vmatpush1.msra.mxu0 0.0
        %2106 = vmatprep.subr.mxu0 0.0
        %2107 = vmatpush1.msra.mxu0 0.0
        %2108 = vmatprep.subr.mxu0 0.0
        %2109 = vmatpush1.msra.mxu0 0.0
        %2110 = vmatprep.subr.mxu0 0.0
        %2111 = vmatpush1.msra.mxu0 0.0
        %2112 = vmatprep.subr.mxu0 0.0
        %2113 = vmatpush1.msra.mxu0 0.0
        %2114 = vmatprep.subr.mxu0 0.0
        %2115 = vmatpush1.msra.mxu0 0.0
        %2116 = vmatprep.subr.mxu0 0.0
        %2117 = vmatpush1.msra.mxu0 0.0
        %2118 = vmatprep.subr.mxu0 0.0
        %2119 = vmatpush1.msra.mxu0 0.0
        %2120 = vmatprep.subr.mxu0 0.0
        %2121 = vmatpush1.msra.mxu0 0.0
        %2122 = vmatprep.subr.mxu0 0.0
        %2123 = vmatpush1.msra.mxu0 0.0
        %2124 = vmatprep.subr.mxu0 0.0
        %2125 = vmatpush1.msra.mxu0 0.0
        %2126 = vmatprep.subr.mxu0 0.0
        %2127 = vmatpush1.msra.mxu0 0.0
        %2128 = vmatprep.subr.mxu0 0.0
        %2129 = vmatpush1.msra.mxu0 0.0
        %2130 = vmatprep.subr.mxu0 0.0
        %2131 = vmatpush1.msra.mxu0 0.0
        %2132 = vmatprep.mubr.f32.mxu0 0.0
        %v2133 = vand.u32 %v763, 4294901760
        %v2134 = vsub.f32 %v763, %v2133
        %v2135 = vand.u32 %v2134, 4294901760
        %v2136 = vsub.f32 %v2134, %v2135
        %v2137 = vand.u32 %v2136, 4294901760
        %2138 = vmatmul.mubr.f32.gmra.mrb[0].mxu0 %v2137
        %v2139 = vpop.f32.mrb[0].mxu0
        %v2140 = vadd.f32 0.0, %v2139
        %v2141 = vpop.f32.mrb[0].mxu0
        %2142 = vdwg.mxu0
        %2143 = vmatprep.subr.mxu0 0.0
        %v2144 = vand.u32 %v2061, 4294901760
        %v2145 = vsub.f32 %v2061, %v2144
        %v2146 = vand.u32 %v2145, 4294901760
        %v2147 = vsub.f32 %v2145, %v2146
        %v2148 = vand.u32 %v2147, 4294901760
        %2149 = vmatpush1.msra.mxu0 %v2148
        %2150 = vmatprep.subr.mxu0 0.0
        %v2151 = vand.u32 %v2064, 4294901760
        %v2152 = vsub.f32 %v2064, %v2151
        %v2153 = vand.u32 %v2152, 4294901760
        %v2154 = vsub.f32 %v2152, %v2153
        %v2155 = vand.u32 %v2154, 4294901760
        %2156 = vmatpush1.msra.mxu0 %v2155
        %2157 = vmatprep.subr.mxu0 0.0
        %2158 = vmatpush1.msra.mxu0 0.0
        %2159 = vmatprep.subr.mxu0 0.0
        %2160 = vmatpush1.msra.mxu0 0.0
        %2161 = vmatprep.subr.mxu0 0.0
        %2162 = vmatpush1.msra.mxu0 0.0
        %2163 = vmatprep.subr.mxu0 0.0
        %2164 = vmatpush1.msra.mxu0 0.0
        %2165 = vmatprep.subr.mxu0 0.0
        %2166 = vmatpush1.msra.mxu0 0.0
        %2167 = vmatprep.subr.mxu0 0.0
        %2168 = vmatpush1.msra.mxu0 0.0
        %2169 = vmatprep.subr.mxu0 0.0
        %2170 = vmatpush1.msra.mxu0 0.0
        %2171 = vmatprep.subr.mxu0 0.0
        %2172 = vmatpush1.msra.mxu0 0.0
        %2173 = vmatprep.subr.mxu0 0.0
        %2174 = vmatpush1.msra.mxu0 0.0
        %2175 = vmatprep.subr.mxu0 0.0
        %2176 = vmatpush1.msra.mxu0 0.0
        %2177 = vmatprep.subr.mxu0 0.0
        %2178 = vmatpush1.msra.mxu0 0.0
        %2179 = vmatprep.subr.mxu0 0.0
        %2180 = vmatpush1.msra.mxu0 0.0
        %2181 = vmatprep.subr.mxu0 0.0
        %2182 = vmatpush1.msra.mxu0 0.0
        %2183 = vmatprep.subr.mxu0 0.0
        %2184 = vmatpush1.msra.mxu0 0.0
        %2185 = vmatprep.subr.mxu0 0.0
        %2186 = vmatpush1.msra.mxu0 0.0
        %2187 = vmatprep.subr.mxu0 0.0
        %2188 = vmatpush1.msra.mxu0 0.0
        %2189 = vmatprep.subr.mxu0 0.0
        %2190 = vmatpush1.msra.mxu0 0.0
        %2191 = vmatprep.subr.mxu0 0.0
        %2192 = vmatpush1.msra.mxu0 0.0
        %2193 = vmatprep.subr.mxu0 0.0
        %2194 = vmatpush1.msra.mxu0 0.0
        %2195 = vmatprep.subr.mxu0 0.0
        %2196 = vmatpush1.msra.mxu0 0.0
        %2197 = vmatprep.subr.mxu0 0.0
        %2198 = vmatpush1.msra.mxu0 0.0
        %2199 = vmatprep.subr.mxu0 0.0
        %2200 = vmatpush1.msra.mxu0 0.0
        %2201 = vmatprep.subr.mxu0 0.0
        %2202 = vmatpush1.msra.mxu0 0.0
        %2203 = vmatprep.subr.mxu0 0.0
        %2204 = vmatpush1.msra.mxu0 0.0
        %2205 = vmatprep.subr.mxu0 0.0
        %2206 = vmatpush1.msra.mxu0 0.0
        %2207 = vmatprep.subr.mxu0 0.0
        %2208 = vmatpush1.msra.mxu0 0.0
        %2209 = vmatprep.subr.mxu0 0.0
        %2210 = vmatpush1.msra.mxu0 0.0
        %2211 = vmatprep.subr.mxu0 0.0
        %2212 = vmatpush1.msra.mxu0 0.0
        %2213 = vmatprep.subr.mxu0 0.0
        %2214 = vmatpush1.msra.mxu0 0.0
        %2215 = vmatprep.subr.mxu0 0.0
        %2216 = vmatpush1.msra.mxu0 0.0
        %2217 = vmatprep.mubr.f32.mxu0 0.0
        %v2218 = vand.u32 %v763, 4294901760
        %2219 = vmatmul.mubr.f32.gmra.mrb[0].mxu0 %v2218
        %v2220 = vpop.f32.mrb[0].mxu0
        %v2221 = vadd.f32 %v2140, %v2220
        %v2222 = vpop.f32.mrb[0].mxu0
        %2223 = vdwg.mxu0
        %2224 = vmatprep.subr.mxu0 0.0
        %v2225 = vand.u32 %v2061, 4294901760
        %v2226 = vsub.f32 %v2061, %v2225
        %2227 = vmatpush1.msra.mxu0 %v2226
        %2228 = vmatprep.subr.mxu0 0.0
        %v2229 = vand.u32 %v2064, 4294901760
        %v2230 = vsub.f32 %v2064, %v2229
        %2231 = vmatpush1.msra.mxu0 %v2230
        %2232 = vmatprep.subr.mxu0 0.0
        %2233 = vmatpush1.msra.mxu0 0.0
        %2234 = vmatprep.subr.mxu0 0.0
        %2235 = vmatpush1.msra.mxu0 0.0
        %2236 = vmatprep.subr.mxu0 0.0
        %2237 = vmatpush1.msra.mxu0 0.0
        %2238 = vmatprep.subr.mxu0 0.0
        %2239 = vmatpush1.msra.mxu0 0.0
        %2240 = vmatprep.subr.mxu0 0.0
        %2241 = vmatpush1.msra.mxu0 0.0
        %2242 = vmatprep.subr.mxu0 0.0
        %2243 = vmatpush1.msra.mxu0 0.0
        %2244 = vmatprep.subr.mxu0 0.0
        %2245 = vmatpush1.msra.mxu0 0.0
        %2246 = vmatprep.subr.mxu0 0.0
        %2247 = vmatpush1.msra.mxu0 0.0
        %2248 = vmatprep.subr.mxu0 0.0
        %2249 = vmatpush1.msra.mxu0 0.0
        %2250 = vmatprep.subr.mxu0 0.0
        %2251 = vmatpush1.msra.mxu0 0.0
        %2252 = vmatprep.subr.mxu0 0.0
        %2253 = vmatpush1.msra.mxu0 0.0
        %2254 = vmatprep.subr.mxu0 0.0
        %2255 = vmatpush1.msra.mxu0 0.0
        %2256 = vmatprep.subr.mxu0 0.0
        %2257 = vmatpush1.msra.mxu0 0.0
        %2258 = vmatprep.subr.mxu0 0.0
        %2259 = vmatpush1.msra.mxu0 0.0
        %2260 = vmatprep.subr.mxu0 0.0
        %2261 = vmatpush1.msra.mxu0 0.0
        %2262 = vmatprep.subr.mxu0 0.0
        %2263 = vmatpush1.msra.mxu0 0.0
        %2264 = vmatprep.subr.mxu0 0.0
        %2265 = vmatpush1.msra.mxu0 0.0
        %2266 = vmatprep.subr.mxu0 0.0
        %2267 = vmatpush1.msra.mxu0 0.0
        %2268 = vmatprep.subr.mxu0 0.0
        %2269 = vmatpush1.msra.mxu0 0.0
        %2270 = vmatprep.subr.mxu0 0.0
        %2271 = vmatpush1.msra.mxu0 0.0
        %2272 = vmatprep.subr.mxu0 0.0
        %2273 = vmatpush1.msra.mxu0 0.0
        %2274 = vmatprep.subr.mxu0 0.0
        %2275 = vmatpush1.msra.mxu0 0.0
        %2276 = vmatprep.subr.mxu0 0.0
        %2277 = vmatpush1.msra.mxu0 0.0
        %2278 = vmatprep.subr.mxu0 0.0
        %2279 = vmatpush1.msra.mxu0 0.0
        %2280 = vmatprep.subr.mxu0 0.0
        %2281 = vmatpush1.msra.mxu0 0.0
        %2282 = vmatprep.subr.mxu0 0.0
        %2283 = vmatpush1.msra.mxu0 0.0
        %2284 = vmatprep.subr.mxu0 0.0
        %2285 = vmatpush1.msra.mxu0 0.0
        %2286 = vmatprep.subr.mxu0 0.0
        %2287 = vmatpush1.msra.mxu0 0.0
        %2288 = vmatprep.subr.mxu0 0.0
        %2289 = vmatpush1.msra.mxu0 0.0
        %2290 = vmatprep.subr.mxu0 0.0
        %2291 = vmatpush1.msra.mxu0 0.0
        %2292 = vmatprep.mubr.f32.mxu0 0.0
        %v2293 = vand.u32 %v763, 4294901760
        %v2294 = vsub.f32 %v763, %v2293
        %2295 = vmatmul.mubr.f32.gmra.mrb[0].mxu0 %v2294
        %v2296 = vpop.f32.mrb[0].mxu0
        %v2297 = vadd.f32 %v2221, %v2296
        %v2298 = vpop.f32.mrb[0].mxu0
        %2299 = vdwg.mxu0
        %2300 = vmatprep.subr.mxu0 0.0
        %v2301 = vand.u32 %v2061, 4294901760
        %2302 = vmatpush1.msra.mxu0 %v2301
        %2303 = vmatprep.subr.mxu0 0.0
        %v2304 = vand.u32 %v2064, 4294901760
        %2305 = vmatpush1.msra.mxu0 %v2304
        %2306 = vmatprep.subr.mxu0 0.0
        %2307 = vmatpush1.msra.mxu0 0.0
        %2308 = vmatprep.subr.mxu0 0.0
        %2309 = vmatpush1.msra.mxu0 0.0
        %2310 = vmatprep.subr.mxu0 0.0
        %2311 = vmatpush1.msra.mxu0 0.0
        %2312 = vmatprep.subr.mxu0 0.0
        %2313 = vmatpush1.msra.mxu0 0.0
        %2314 = vmatprep.subr.mxu0 0.0
        %2315 = vmatpush1.msra.mxu0 0.0
        %2316 = vmatprep.subr.mxu0 0.0
        %2317 = vmatpush1.msra.mxu0 0.0
        %2318 = vmatprep.subr.mxu0 0.0
        %2319 = vmatpush1.msra.mxu0 0.0
        %2320 = vmatprep.subr.mxu0 0.0
        %2321 = vmatpush1.msra.mxu0 0.0
        %2322 = vmatprep.subr.mxu0 0.0
        %2323 = vmatpush1.msra.mxu0 0.0
        %2324 = vmatprep.subr.mxu0 0.0
        %2325 = vmatpush1.msra.mxu0 0.0
        %2326 = vmatprep.subr.mxu0 0.0
        %2327 = vmatpush1.msra.mxu0 0.0
        %2328 = vmatprep.subr.mxu0 0.0
        %2329 = vmatpush1.msra.mxu0 0.0
        %2330 = vmatprep.subr.mxu0 0.0
        %2331 = vmatpush1.msra.mxu0 0.0
        %2332 = vmatprep.subr.mxu0 0.0
        %2333 = vmatpush1.msra.mxu0 0.0
        %2334 = vmatprep.subr.mxu0 0.0
        %2335 = vmatpush1.msra.mxu0 0.0
        %2336 = vmatprep.subr.mxu0 0.0
        %2337 = vmatpush1.msra.mxu0 0.0
        %2338 = vmatprep.subr.mxu0 0.0
        %2339 = vmatpush1.msra.mxu0 0.0
        %2340 = vmatprep.subr.mxu0 0.0
        %2341 = vmatpush1.msra.mxu0 0.0
        %2342 = vmatprep.subr.mxu0 0.0
        %2343 = vmatpush1.msra.mxu0 0.0
        %2344 = vmatprep.subr.mxu0 0.0
        %2345 = vmatpush1.msra.mxu0 0.0
        %2346 = vmatprep.subr.mxu0 0.0
        %2347 = vmatpush1.msra.mxu0 0.0
        %2348 = vmatprep.subr.mxu0 0.0
        %2349 = vmatpush1.msra.mxu0 0.0
        %2350 = vmatprep.subr.mxu0 0.0
        %2351 = vmatpush1.msra.mxu0 0.0
        %2352 = vmatprep.subr.mxu0 0.0
        %2353 = vmatpush1.msra.mxu0 0.0
        %2354 = vmatprep.subr.mxu0 0.0
        %2355 = vmatpush1.msra.mxu0 0.0
        %2356 = vmatprep.subr.mxu0 0.0
        %2357 = vmatpush1.msra.mxu0 0.0
        %2358 = vmatprep.subr.mxu0 0.0
        %2359 = vmatpush1.msra.mxu0 0.0
        %2360 = vmatprep.subr.mxu0 0.0
        %2361 = vmatpush1.msra.mxu0 0.0
        %2362 = vmatprep.subr.mxu0 0.0
        %2363 = vmatpush1.msra.mxu0 0.0
        %2364 = vmatprep.subr.mxu0 0.0
        %2365 = vmatpush1.msra.mxu0 0.0
        %2366 = vmatprep.mubr.f32.mxu0 0.0
        %v2367 = vand.u32 %v763, 4294901760
        %v2368 = vsub.f32 %v763, %v2367
        %v2369 = vand.u32 %v2368, 4294901760
        %2370 = vmatmul.mubr.f32.gmra.mrb[0].mxu0 %v2369
        %v2371 = vpop.f32.mrb[0].mxu0
        %v2372 = vadd.f32 %v2297, %v2371
        %v2373 = vpop.f32.mrb[0].mxu0
        %2374 = vdwg.mxu0
        %2375 = vmatprep.subr.mxu0 0.0
        %v2376 = vand.u32 %v2061, 4294901760
        %v2377 = vsub.f32 %v2061, %v2376
        %v2378 = vand.u32 %v2377, 4294901760
        %2379 = vmatpush1.msra.mxu0 %v2378
        %2380 = vmatprep.subr.mxu0 0.0
        %v2381 = vand.u32 %v2064, 4294901760
        %v2382 = vsub.f32 %v2064, %v2381
        %v2383 = vand.u32 %v2382, 4294901760
        %2384 = vmatpush1.msra.mxu0 %v2383
        %2385 = vmatprep.subr.mxu0 0.0
        %2386 = vmatpush1.msra.mxu0 0.0
        %2387 = vmatprep.subr.mxu0 0.0
        %2388 = vmatpush1.msra.mxu0 0.0
        %2389 = vmatprep.subr.mxu0 0.0
        %2390 = vmatpush1.msra.mxu0 0.0
        %2391 = vmatprep.subr.mxu0 0.0
        %2392 = vmatpush1.msra.mxu0 0.0
        %2393 = vmatprep.subr.mxu0 0.0
        %2394 = vmatpush1.msra.mxu0 0.0
        %2395 = vmatprep.subr.mxu0 0.0
        %2396 = vmatpush1.msra.mxu0 0.0
        %2397 = vmatprep.subr.mxu0 0.0
        %2398 = vmatpush1.msra.mxu0 0.0
        %2399 = vmatprep.subr.mxu0 0.0
        %2400 = vmatpush1.msra.mxu0 0.0
        %2401 = vmatprep.subr.mxu0 0.0
        %2402 = vmatpush1.msra.mxu0 0.0
        %2403 = vmatprep.subr.mxu0 0.0
        %2404 = vmatpush1.msra.mxu0 0.0
        %2405 = vmatprep.subr.mxu0 0.0
        %2406 = vmatpush1.msra.mxu0 0.0
        %2407 = vmatprep.subr.mxu0 0.0
        %2408 = vmatpush1.msra.mxu0 0.0
        %2409 = vmatprep.subr.mxu0 0.0
        %2410 = vmatpush1.msra.mxu0 0.0
        %2411 = vmatprep.subr.mxu0 0.0
        %2412 = vmatpush1.msra.mxu0 0.0
        %2413 = vmatprep.subr.mxu0 0.0
        %2414 = vmatpush1.msra.mxu0 0.0
        %2415 = vmatprep.subr.mxu0 0.0
        %2416 = vmatpush1.msra.mxu0 0.0
        %2417 = vmatprep.subr.mxu0 0.0
        %2418 = vmatpush1.msra.mxu0 0.0
        %2419 = vmatprep.subr.mxu0 0.0
        %2420 = vmatpush1.msra.mxu0 0.0
        %2421 = vmatprep.subr.mxu0 0.0
        %2422 = vmatpush1.msra.mxu0 0.0
        %2423 = vmatprep.subr.mxu0 0.0
        %2424 = vmatpush1.msra.mxu0 0.0
        %2425 = vmatprep.subr.mxu0 0.0
        %2426 = vmatpush1.msra.mxu0 0.0
        %2427 = vmatprep.subr.mxu0 0.0
        %2428 = vmatpush1.msra.mxu0 0.0
        %2429 = vmatprep.subr.mxu0 0.0
        %2430 = vmatpush1.msra.mxu0 0.0
        %2431 = vmatprep.subr.mxu0 0.0
        %2432 = vmatpush1.msra.mxu0 0.0
        %2433 = vmatprep.subr.mxu0 0.0
        %2434 = vmatpush1.msra.mxu0 0.0
        %2435 = vmatprep.subr.mxu0 0.0
        %2436 = vmatpush1.msra.mxu0 0.0
        %2437 = vmatprep.subr.mxu0 0.0
        %2438 = vmatpush1.msra.mxu0 0.0
        %2439 = vmatprep.subr.mxu0 0.0
        %2440 = vmatpush1.msra.mxu0 0.0
        %2441 = vmatprep.subr.mxu0 0.0
        %2442 = vmatpush1.msra.mxu0 0.0
        %2443 = vmatprep.subr.mxu0 0.0
        %2444 = vmatpush1.msra.mxu0 0.0
        %2445 = vmatprep.mubr.f32.mxu0 0.0
        %v2446 = vand.u32 %v763, 4294901760
        %2447 = vmatmul.mubr.f32.gmra.mrb[0].mxu0 %v2446
        %v2448 = vpop.f32.mrb[0].mxu0
        %v2449 = vadd.f32 %v2372, %v2448
        %v2450 = vpop.f32.mrb[0].mxu0
        %2451 = vdwg.mxu0
        %2452 = vmatprep.subr.mxu0 0.0
        %v2453 = vand.u32 %v2061, 4294901760
        %2454 = vmatpush1.msra.mxu0 %v2453
        %2455 = vmatprep.subr.mxu0 0.0
        %v2456 = vand.u32 %v2064, 4294901760
        %2457 = vmatpush1.msra.mxu0 %v2456
        %2458 = vmatprep.subr.mxu0 0.0
        %2459 = vmatpush1.msra.mxu0 0.0
        %2460 = vmatprep.subr.mxu0 0.0
        %2461 = vmatpush1.msra.mxu0 0.0
        %2462 = vmatprep.subr.mxu0 0.0
        %2463 = vmatpush1.msra.mxu0 0.0
        %2464 = vmatprep.subr.mxu0 0.0
        %2465 = vmatpush1.msra.mxu0 0.0
        %2466 = vmatprep.subr.mxu0 0.0
        %2467 = vmatpush1.msra.mxu0 0.0
        %2468 = vmatprep.subr.mxu0 0.0
        %2469 = vmatpush1.msra.mxu0 0.0
        %2470 = vmatprep.subr.mxu0 0.0
        %2471 = vmatpush1.msra.mxu0 0.0
        %2472 = vmatprep.subr.mxu0 0.0
        %2473 = vmatpush1.msra.mxu0 0.0
        %2474 = vmatprep.subr.mxu0 0.0
        %2475 = vmatpush1.msra.mxu0 0.0
        %2476 = vmatprep.subr.mxu0 0.0
        %2477 = vmatpush1.msra.mxu0 0.0
        %2478 = vmatprep.subr.mxu0 0.0
        %2479 = vmatpush1.msra.mxu0 0.0
        %2480 = vmatprep.subr.mxu0 0.0
        %2481 = vmatpush1.msra.mxu0 0.0
        %2482 = vmatprep.subr.mxu0 0.0
        %2483 = vmatpush1.msra.mxu0 0.0
        %2484 = vmatprep.subr.mxu0 0.0
        %2485 = vmatpush1.msra.mxu0 0.0
        %2486 = vmatprep.subr.mxu0 0.0
        %2487 = vmatpush1.msra.mxu0 0.0
        %2488 = vmatprep.subr.mxu0 0.0
        %2489 = vmatpush1.msra.mxu0 0.0
        %2490 = vmatprep.subr.mxu0 0.0
        %2491 = vmatpush1.msra.mxu0 0.0
        %2492 = vmatprep.subr.mxu0 0.0
        %2493 = vmatpush1.msra.mxu0 0.0
        %2494 = vmatprep.subr.mxu0 0.0
        %2495 = vmatpush1.msra.mxu0 0.0
        %2496 = vmatprep.subr.mxu0 0.0
        %2497 = vmatpush1.msra.mxu0 0.0
        %2498 = vmatprep.subr.mxu0 0.0
        %2499 = vmatpush1.msra.mxu0 0.0
        %2500 = vmatprep.subr.mxu0 0.0
        %2501 = vmatpush1.msra.mxu0 0.0
        %2502 = vmatprep.subr.mxu0 0.0
        %2503 = vmatpush1.msra.mxu0 0.0
        %2504 = vmatprep.subr.mxu0 0.0
        %2505 = vmatpush1.msra.mxu0 0.0
        %2506 = vmatprep.subr.mxu0 0.0
        %2507 = vmatpush1.msra.mxu0 0.0
        %2508 = vmatprep.subr.mxu0 0.0
        %2509 = vmatpush1.msra.mxu0 0.0
        %2510 = vmatprep.subr.mxu0 0.0
        %2511 = vmatpush1.msra.mxu0 0.0
        %2512 = vmatprep.subr.mxu0 0.0
        %2513 = vmatpush1.msra.mxu0 0.0
        %2514 = vmatprep.subr.mxu0 0.0
        %2515 = vmatpush1.msra.mxu0 0.0
        %2516 = vmatprep.subr.mxu0 0.0
        %2517 = vmatpush1.msra.mxu0 0.0
        %2518 = vmatprep.mubr.f32.mxu0 0.0
        %v2519 = vand.u32 %v763, 4294901760
        %2520 = vmatmul.mubr.f32.gmra.mrb[0].mxu0 %v2519
        %v2521 = vpop.f32.mrb[0].mxu0
        %v2522 = vadd.f32 %v2449, %v2521
        %v2523 = vpop.f32.mrb[0].mxu0
        %2524 = vdwg.mxu0
        %v2526 = vsel %vm625, %v2522, 0
        %2528 = vmatprep.subr.mxu0 0.0
        %v2529 = vand.u32 %v2526, 4294901760
        %2530 = vmatpush1.msra.mxu0 %v2529
        %2531 = vmatprep.subr.mxu0 0.0
        %2532 = vmatpush1.msra.mxu0 0.0
        %2533 = vmatprep.subr.mxu0 0.0
        %2534 = vmatpush1.msra.mxu0 0.0
        %2535 = vmatprep.subr.mxu0 0.0
        %2536 = vmatpush1.msra.mxu0 0.0
        %2537 = vmatprep.subr.mxu0 0.0
        %2538 = vmatpush1.msra.mxu0 0.0
        %2539 = vmatprep.subr.mxu0 0.0
        %2540 = vmatpush1.msra.mxu0 0.0
        %2541 = vmatprep.subr.mxu0 0.0
        %2542 = vmatpush1.msra.mxu0 0.0
        %2543 = vmatprep.subr.mxu0 0.0
        %2544 = vmatpush1.msra.mxu0 0.0
        %2545 = vmatprep.subr.mxu0 0.0
        %2546 = vmatpush1.msra.mxu0 0.0
        %2547 = vmatprep.subr.mxu0 0.0
        %2548 = vmatpush1.msra.mxu0 0.0
        %2549 = vmatprep.subr.mxu0 0.0
        %2550 = vmatpush1.msra.mxu0 0.0
        %2551 = vmatprep.subr.mxu0 0.0
        %2552 = vmatpush1.msra.mxu0 0.0
        %2553 = vmatprep.subr.mxu0 0.0
        %2554 = vmatpush1.msra.mxu0 0.0
        %2555 = vmatprep.subr.mxu0 0.0
        %2556 = vmatpush1.msra.mxu0 0.0
        %2557 = vmatprep.subr.mxu0 0.0
        %2558 = vmatpush1.msra.mxu0 0.0
        %2559 = vmatprep.subr.mxu0 0.0
        %2560 = vmatpush1.msra.mxu0 0.0
        %2561 = vmatprep.subr.mxu0 0.0
        %2562 = vmatpush1.msra.mxu0 0.0
        %2563 = vmatprep.subr.mxu0 0.0
        %2564 = vmatpush1.msra.mxu0 0.0
        %2565 = vmatprep.subr.mxu0 0.0
        %2566 = vmatpush1.msra.mxu0 0.0
        %2567 = vmatprep.subr.mxu0 0.0
        %2568 = vmatpush1.msra.mxu0 0.0
        %2569 = vmatprep.subr.mxu0 0.0
        %2570 = vmatpush1.msra.mxu0 0.0
        %2571 = vmatprep.subr.mxu0 0.0
        %2572 = vmatpush1.msra.mxu0 0.0
        %2573 = vmatprep.subr.mxu0 0.0
        %2574 = vmatpush1.msra.mxu0 0.0
        %2575 = vmatprep.subr.mxu0 0.0
        %2576 = vmatpush1.msra.mxu0 0.0
        %2577 = vmatprep.subr.mxu0 0.0
        %2578 = vmatpush1.msra.mxu0 0.0
        %2579 = vmatprep.subr.mxu0 0.0
        %2580 = vmatpush1.msra.mxu0 0.0
        %2581 = vmatprep.subr.mxu0 0.0
        %2582 = vmatpush1.msra.mxu0 0.0
        %2583 = vmatprep.subr.mxu0 0.0
        %2584 = vmatpush1.msra.mxu0 0.0
        %2585 = vmatprep.subr.mxu0 0.0
        %2586 = vmatpush1.msra.mxu0 0.0
        %2587 = vmatprep.subr.mxu0 0.0
        %2588 = vmatpush1.msra.mxu0 0.0
        %2589 = vmatprep.subr.mxu0 0.0
        %2590 = vmatpush1.msra.mxu0 0.0
        %2591 = vmatprep.subr.mxu0 0.0
        %2592 = vmatpush1.msra.mxu0 0.0
        %2593 = vmatprep.mubr.f32.mxu0 0.0
        %v2594 = vand.u32 %v1228, 4294901760
        %v2595 = vsub.f32 %v1228, %v2594
        %v2596 = vand.u32 %v2595, 4294901760
        %v2597 = vsub.f32 %v2595, %v2596
        %v2598 = vand.u32 %v2597, 4294901760
        %2599 = vmatmul.mubr.f32.gmra.mrb[0].mxu0 %v2598
        %v2600 = vpop.f32.mrb[0].mxu0
        %v2601 = vadd.f32 0.0, %v2600
        %v2602 = vpop.f32.mrb[0].mxu0
        %2603 = vmatprep.mubr.f32.mxu0 0.0
        %v2604 = vand.u32 %v1231, 4294901760
        %v2605 = vsub.f32 %v1231, %v2604
        %v2606 = vand.u32 %v2605, 4294901760
        %v2607 = vsub.f32 %v2605, %v2606
        %v2608 = vand.u32 %v2607, 4294901760
        %2609 = vmatmul.mubr.f32.gmra.mrb[0].mxu0 %v2608
        %v2610 = vpop.f32.mrb[0].mxu0
        %v2611 = vadd.f32 0.0, %v2610
        %v2612 = vpop.f32.mrb[0].mxu0
        %2613 = vdwg.mxu0
        %2614 = vmatprep.subr.mxu0 0.0
        %v2615 = vand.u32 %v2526, 4294901760
        %v2616 = vsub.f32 %v2526, %v2615
        %v2617 = vand.u32 %v2616, 4294901760
        %v2618 = vsub.f32 %v2616, %v2617
        %v2619 = vand.u32 %v2618, 4294901760
        %2620 = vmatpush1.msra.mxu0 %v2619
        %2621 = vmatprep.subr.mxu0 0.0
        %2622 = vmatpush1.msra.mxu0 0.0
        %2623 = vmatprep.subr.mxu0 0.0
        %2624 = vmatpush1.msra.mxu0 0.0
        %2625 = vmatprep.subr.mxu0 0.0
        %2626 = vmatpush1.msra.mxu0 0.0
        %2627 = vmatprep.subr.mxu0 0.0
        %2628 = vmatpush1.msra.mxu0 0.0
        %2629 = vmatprep.subr.mxu0 0.0
        %2630 = vmatpush1.msra.mxu0 0.0
        %2631 = vmatprep.subr.mxu0 0.0
        %2632 = vmatpush1.msra.mxu0 0.0
        %2633 = vmatprep.subr.mxu0 0.0
        %2634 = vmatpush1.msra.mxu0 0.0
        %2635 = vmatprep.subr.mxu0 0.0
        %2636 = vmatpush1.msra.mxu0 0.0
        %2637 = vmatprep.subr.mxu0 0.0
        %2638 = vmatpush1.msra.mxu0 0.0
        %2639 = vmatprep.subr.mxu0 0.0
        %2640 = vmatpush1.msra.mxu0 0.0
        %2641 = vmatprep.subr.mxu0 0.0
        %2642 = vmatpush1.msra.mxu0 0.0
        %2643 = vmatprep.subr.mxu0 0.0
        %2644 = vmatpush1.msra.mxu0 0.0
        %2645 = vmatprep.subr.mxu0 0.0
        %2646 = vmatpush1.msra.mxu0 0.0
        %2647 = vmatprep.subr.mxu0 0.0
        %2648 = vmatpush1.msra.mxu0 0.0
        %2649 = vmatprep.subr.mxu0 0.0
        %2650 = vmatpush1.msra.mxu0 0.0
        %2651 = vmatprep.subr.mxu0 0.0
        %2652 = vmatpush1.msra.mxu0 0.0
        %2653 = vmatprep.subr.mxu0 0.0
        %2654 = vmatpush1.msra.mxu0 0.0
        %2655 = vmatprep.subr.mxu0 0.0
        %2656 = vmatpush1.msra.mxu0 0.0
        %2657 = vmatprep.subr.mxu0 0.0
        %2658 = vmatpush1.msra.mxu0 0.0
        %2659 = vmatprep.subr.mxu0 0.0
        %2660 = vmatpush1.msra.mxu0 0.0
        %2661 = vmatprep.subr.mxu0 0.0
        %2662 = vmatpush1.msra.mxu0 0.0
        %2663 = vmatprep.subr.mxu0 0.0
        %2664 = vmatpush1.msra.mxu0 0.0
        %2665 = vmatprep.subr.mxu0 0.0
        %2666 = vmatpush1.msra.mxu0 0.0
        %2667 = vmatprep.subr.mxu0 0.0
        %2668 = vmatpush1.msra.mxu0 0.0
        %2669 = vmatprep.subr.mxu0 0.0
        %2670 = vmatpush1.msra.mxu0 0.0
        %2671 = vmatprep.subr.mxu0 0.0
        %2672 = vmatpush1.msra.mxu0 0.0
        %2673 = vmatprep.subr.mxu0 0.0
        %2674 = vmatpush1.msra.mxu0 0.0
        %2675 = vmatprep.subr.mxu0 0.0
        %2676 = vmatpush1.msra.mxu0 0.0
        %2677 = vmatprep.subr.mxu0 0.0
        %2678 = vmatpush1.msra.mxu0 0.0
        %2679 = vmatprep.subr.mxu0 0.0
        %2680 = vmatpush1.msra.mxu0 0.0
        %2681 = vmatprep.subr.mxu0 0.0
        %2682 = vmatpush1.msra.mxu0 0.0
        %2683 = vmatprep.mubr.f32.mxu0 0.0
        %v2684 = vand.u32 %v1228, 4294901760
        %2685 = vmatmul.mubr.f32.gmra.mrb[0].mxu0 %v2684
        %v2686 = vpop.f32.mrb[0].mxu0
        %v2687 = vadd.f32 %v2601, %v2686
        %v2688 = vpop.f32.mrb[0].mxu0
        %2689 = vmatprep.mubr.f32.mxu0 0.0
        %v2690 = vand.u32 %v1231, 4294901760
        %2691 = vmatmul.mubr.f32.gmra.mrb[0].mxu0 %v2690
        %v2692 = vpop.f32.mrb[0].mxu0
        %v2693 = vadd.f32 %v2611, %v2692
        %v2694 = vpop.f32.mrb[0].mxu0
        %2695 = vdwg.mxu0
        %2696 = vmatprep.subr.mxu0 0.0
        %v2697 = vand.u32 %v2526, 4294901760
        %v2698 = vsub.f32 %v2526, %v2697
        %2699 = vmatpush1.msra.mxu0 %v2698
        %2700 = vmatprep.subr.mxu0 0.0
        %2701 = vmatpush1.msra.mxu0 0.0
        %2702 = vmatprep.subr.mxu0 0.0
        %2703 = vmatpush1.msra.mxu0 0.0
        %2704 = vmatprep.subr.mxu0 0.0
        %2705 = vmatpush1.msra.mxu0 0.0
        %2706 = vmatprep.subr.mxu0 0.0
        %2707 = vmatpush1.msra.mxu0 0.0
        %2708 = vmatprep.subr.mxu0 0.0
        %2709 = vmatpush1.msra.mxu0 0.0
        %2710 = vmatprep.subr.mxu0 0.0
        %2711 = vmatpush1.msra.mxu0 0.0
        %2712 = vmatprep.subr.mxu0 0.0
        %2713 = vmatpush1.msra.mxu0 0.0
        %2714 = vmatprep.subr.mxu0 0.0
        %2715 = vmatpush1.msra.mxu0 0.0
        %2716 = vmatprep.subr.mxu0 0.0
        %2717 = vmatpush1.msra.mxu0 0.0
        %2718 = vmatprep.subr.mxu0 0.0
        %2719 = vmatpush1.msra.mxu0 0.0
        %2720 = vmatprep.subr.mxu0 0.0
        %2721 = vmatpush1.msra.mxu0 0.0
        %2722 = vmatprep.subr.mxu0 0.0
        %2723 = vmatpush1.msra.mxu0 0.0
        %2724 = vmatprep.subr.mxu0 0.0
        %2725 = vmatpush1.msra.mxu0 0.0
        %2726 = vmatprep.subr.mxu0 0.0
        %2727 = vmatpush1.msra.mxu0 0.0
        %2728 = vmatprep.subr.mxu0 0.0
        %2729 = vmatpush1.msra.mxu0 0.0
        %2730 = vmatprep.subr.mxu0 0.0
        %2731 = vmatpush1.msra.mxu0 0.0
        %2732 = vmatprep.subr.mxu0 0.0
        %2733 = vmatpush1.msra.mxu0 0.0
        %2734 = vmatprep.subr.mxu0 0.0
        %2735 = vmatpush1.msra.mxu0 0.0
        %2736 = vmatprep.subr.mxu0 0.0
        %2737 = vmatpush1.msra.mxu0 0.0
        %2738 = vmatprep.subr.mxu0 0.0
        %2739 = vmatpush1.msra.mxu0 0.0
        %2740 = vmatprep.subr.mxu0 0.0
        %2741 = vmatpush1.msra.mxu0 0.0
        %2742 = vmatprep.subr.mxu0 0.0
        %2743 = vmatpush1.msra.mxu0 0.0
        %2744 = vmatprep.subr.mxu0 0.0
        %2745 = vmatpush1.msra.mxu0 0.0
        %2746 = vmatprep.subr.mxu0 0.0
        %2747 = vmatpush1.msra.mxu0 0.0
        %2748 = vmatprep.subr.mxu0 0.0
        %2749 = vmatpush1.msra.mxu0 0.0
        %2750 = vmatprep.subr.mxu0 0.0
        %2751 = vmatpush1.msra.mxu0 0.0
        %2752 = vmatprep.subr.mxu0 0.0
        %2753 = vmatpush1.msra.mxu0 0.0
        %2754 = vmatprep.subr.mxu0 0.0
        %2755 = vmatpush1.msra.mxu0 0.0
        %2756 = vmatprep.subr.mxu0 0.0
        %2757 = vmatpush1.msra.mxu0 0.0
        %2758 = vmatprep.subr.mxu0 0.0
        %2759 = vmatpush1.msra.mxu0 0.0
        %2760 = vmatprep.subr.mxu0 0.0
        %2761 = vmatpush1.msra.mxu0 0.0
        %2762 = vmatprep.mubr.f32.mxu0 0.0
        %v2763 = vand.u32 %v1228, 4294901760
        %v2764 = vsub.f32 %v1228, %v2763
        %2765 = vmatmul.mubr.f32.gmra.mrb[0].mxu0 %v2764
        %v2766 = vpop.f32.mrb[0].mxu0
        %v2767 = vadd.f32 %v2687, %v2766
        %v2768 = vpop.f32.mrb[0].mxu0
        %2769 = vmatprep.mubr.f32.mxu0 0.0
        %v2770 = vand.u32 %v1231, 4294901760
        %v2771 = vsub.f32 %v1231, %v2770
        %2772 = vmatmul.mubr.f32.gmra.mrb[0].mxu0 %v2771
        %v2773 = vpop.f32.mrb[0].mxu0
        %v2774 = vadd.f32 %v2693, %v2773
        %v2775 = vpop.f32.mrb[0].mxu0
        %2776 = vdwg.mxu0
        %2777 = vmatprep.subr.mxu0 0.0
        %v2778 = vand.u32 %v2526, 4294901760
        %2779 = vmatpush1.msra.mxu0 %v2778
        %2780 = vmatprep.subr.mxu0 0.0
        %2781 = vmatpush1.msra.mxu0 0.0
        %2782 = vmatprep.subr.mxu0 0.0
        %2783 = vmatpush1.msra.mxu0 0.0
        %2784 = vmatprep.subr.mxu0 0.0
        %2785 = vmatpush1.msra.mxu0 0.0
        %2786 = vmatprep.subr.mxu0 0.0
        %2787 = vmatpush1.msra.mxu0 0.0
        %2788 = vmatprep.subr.mxu0 0.0
        %2789 = vmatpush1.msra.mxu0 0.0
        %2790 = vmatprep.subr.mxu0 0.0
        %2791 = vmatpush1.msra.mxu0 0.0
        %2792 = vmatprep.subr.mxu0 0.0
        %2793 = vmatpush1.msra.mxu0 0.0
        %2794 = vmatprep.subr.mxu0 0.0
        %2795 = vmatpush1.msra.mxu0 0.0
        %2796 = vmatprep.subr.mxu0 0.0
        %2797 = vmatpush1.msra.mxu0 0.0
        %2798 = vmatprep.subr.mxu0 0.0
        %2799 = vmatpush1.msra.mxu0 0.0
        %2800 = vmatprep.subr.mxu0 0.0
        %2801 = vmatpush1.msra.mxu0 0.0
        %2802 = vmatprep.subr.mxu0 0.0
        %2803 = vmatpush1.msra.mxu0 0.0
        %2804 = vmatprep.subr.mxu0 0.0
        %2805 = vmatpush1.msra.mxu0 0.0
        %2806 = vmatprep.subr.mxu0 0.0
        %2807 = vmatpush1.msra.mxu0 0.0
        %2808 = vmatprep.subr.mxu0 0.0
        %2809 = vmatpush1.msra.mxu0 0.0
        %2810 = vmatprep.subr.mxu0 0.0
        %2811 = vmatpush1.msra.mxu0 0.0
        %2812 = vmatprep.subr.mxu0 0.0
        %2813 = vmatpush1.msra.mxu0 0.0
        %2814 = vmatprep.subr.mxu0 0.0
        %2815 = vmatpush1.msra.mxu0 0.0
        %2816 = vmatprep.subr.mxu0 0.0
        %2817 = vmatpush1.msra.mxu0 0.0
        %2818 = vmatprep.subr.mxu0 0.0
        %2819 = vmatpush1.msra.mxu0 0.0
        %2820 = vmatprep.subr.mxu0 0.0
        %2821 = vmatpush1.msra.mxu0 0.0
        %2822 = vmatprep.subr.mxu0 0.0
        %2823 = vmatpush1.msra.mxu0 0.0
        %2824 = vmatprep.subr.mxu0 0.0
        %2825 = vmatpush1.msra.mxu0 0.0
        %2826 = vmatprep.subr.mxu0 0.0
        %2827 = vmatpush1.msra.mxu0 0.0
        %2828 = vmatprep.subr.mxu0 0.0
        %2829 = vmatpush1.msra.mxu0 0.0
        %2830 = vmatprep.subr.mxu0 0.0
        %2831 = vmatpush1.msra.mxu0 0.0
        %2832 = vmatprep.subr.mxu0 0.0
        %2833 = vmatpush1.msra.mxu0 0.0
        %2834 = vmatprep.subr.mxu0 0.0
        %2835 = vmatpush1.msra.mxu0 0.0
        %2836 = vmatprep.subr.mxu0 0.0
        %2837 = vmatpush1.msra.mxu0 0.0
        %2838 = vmatprep.subr.mxu0 0.0
        %2839 = vmatpush1.msra.mxu0 0.0
        %2840 = vmatprep.subr.mxu0 0.0
        %2841 = vmatpush1.msra.mxu0 0.0
        %2842 = vmatprep.mubr.f32.mxu0 0.0
        %v2843 = vand.u32 %v1228, 4294901760
        %v2844 = vsub.f32 %v1228, %v2843
        %v2845 = vand.u32 %v2844, 4294901760
        %2846 = vmatmul.mubr.f32.gmra.mrb[0].mxu0 %v2845
        %v2847 = vpop.f32.mrb[0].mxu0
        %v2848 = vadd.f32 %v2767, %v2847
        %v2849 = vpop.f32.mrb[0].mxu0
        %2850 = vmatprep.mubr.f32.mxu0 0.0
        %v2851 = vand.u32 %v1231, 4294901760
        %v2852 = vsub.f32 %v1231, %v2851
        %v2853 = vand.u32 %v2852, 4294901760
        %2854 = vmatmul.mubr.f32.gmra.mrb[0].mxu0 %v2853
        %v2855 = vpop.f32.mrb[0].mxu0
        %v2856 = vadd.f32 %v2774, %v2855
        %v2857 = vpop.f32.mrb[0].mxu0
        %2858 = vdwg.mxu0
        %2859 = vmatprep.subr.mxu0 0.0
        %v2860 = vand.u32 %v2526, 4294901760
        %v2861 = vsub.f32 %v2526, %v2860
        %v2862 = vand.u32 %v2861, 4294901760
        %2863 = vmatpush1.msra.mxu0 %v2862
        %2864 = vmatprep.subr.mxu0 0.0
        %2865 = vmatpush1.msra.mxu0 0.0
        %2866 = vmatprep.subr.mxu0 0.0
        %2867 = vmatpush1.msra.mxu0 0.0
        %2868 = vmatprep.subr.mxu0 0.0
        %2869 = vmatpush1.msra.mxu0 0.0
        %2870 = vmatprep.subr.mxu0 0.0
        %2871 = vmatpush1.msra.mxu0 0.0
        %2872 = vmatprep.subr.mxu0 0.0
        %2873 = vmatpush1.msra.mxu0 0.0
        %2874 = vmatprep.subr.mxu0 0.0
        %2875 = vmatpush1.msra.mxu0 0.0
        %2876 = vmatprep.subr.mxu0 0.0
        %2877 = vmatpush1.msra.mxu0 0.0
        %2878 = vmatprep.subr.mxu0 0.0
        %2879 = vmatpush1.msra.mxu0 0.0
        %2880 = vmatprep.subr.mxu0 0.0
        %2881 = vmatpush1.msra.mxu0 0.0
        %2882 = vmatprep.subr.mxu0 0.0
        %2883 = vmatpush1.msra.mxu0 0.0
        %2884 = vmatprep.subr.mxu0 0.0
        %2885 = vmatpush1.msra.mxu0 0.0
        %2886 = vmatprep.subr.mxu0 0.0
        %2887 = vmatpush1.msra.mxu0 0.0
        %2888 = vmatprep.subr.mxu0 0.0
        %2889 = vmatpush1.msra.mxu0 0.0
        %2890 = vmatprep.subr.mxu0 0.0
        %2891 = vmatpush1.msra.mxu0 0.0
        %2892 = vmatprep.subr.mxu0 0.0
        %2893 = vmatpush1.msra.mxu0 0.0
        %2894 = vmatprep.subr.mxu0 0.0
        %2895 = vmatpush1.msra.mxu0 0.0
        %2896 = vmatprep.subr.mxu0 0.0
        %2897 = vmatpush1.msra.mxu0 0.0
        %2898 = vmatprep.subr.mxu0 0.0
        %2899 = vmatpush1.msra.mxu0 0.0
        %2900 = vmatprep.subr.mxu0 0.0
        %2901 = vmatpush1.msra.mxu0 0.0
        %2902 = vmatprep.subr.mxu0 0.0
        %2903 = vmatpush1.msra.mxu0 0.0
        %2904 = vmatprep.subr.mxu0 0.0
        %2905 = vmatpush1.msra.mxu0 0.0
        %2906 = vmatprep.subr.mxu0 0.0
        %2907 = vmatpush1.msra.mxu0 0.0
        %2908 = vmatprep.subr.mxu0 0.0
        %2909 = vmatpush1.msra.mxu0 0.0
        %2910 = vmatprep.subr.mxu0 0.0
        %2911 = vmatpush1.msra.mxu0 0.0
        %2912 = vmatprep.subr.mxu0 0.0
        %2913 = vmatpush1.msra.mxu0 0.0
        %2914 = vmatprep.subr.mxu0 0.0
        %2915 = vmatpush1.msra.mxu0 0.0
        %2916 = vmatprep.subr.mxu0 0.0
        %2917 = vmatpush1.msra.mxu0 0.0
        %2918 = vmatprep.subr.mxu0 0.0
        %2919 = vmatpush1.msra.mxu0 0.0
        %2920 = vmatprep.subr.mxu0 0.0
        %2921 = vmatpush1.msra.mxu0 0.0
        %2922 = vmatprep.subr.mxu0 0.0
        %2923 = vmatpush1.msra.mxu0 0.0
        %2924 = vmatprep.subr.mxu0 0.0
        %2925 = vmatpush1.msra.mxu0 0.0
        %2926 = vmatprep.mubr.f32.mxu0 0.0
        %v2927 = vand.u32 %v1228, 4294901760
        %2928 = vmatmul.mubr.f32.gmra.mrb[0].mxu0 %v2927
        %v2929 = vpop.f32.mrb[0].mxu0
        %v2930 = vadd.f32 %v2848, %v2929
        %v2931 = vpop.f32.mrb[0].mxu0
        %2932 = vmatprep.mubr.f32.mxu0 0.0
        %v2933 = vand.u32 %v1231, 4294901760
        %2934 = vmatmul.mubr.f32.gmra.mrb[0].mxu0 %v2933
        %v2935 = vpop.f32.mrb[0].mxu0
        %v2936 = vadd.f32 %v2856, %v2935
        %v2937 = vpop.f32.mrb[0].mxu0
        %2938 = vdwg.mxu0
        %2939 = vmatprep.subr.mxu0 0.0
        %v2940 = vand.u32 %v2526, 4294901760
        %2941 = vmatpush1.msra.mxu0 %v2940
        %2942 = vmatprep.subr.mxu0 0.0
        %2943 = vmatpush1.msra.mxu0 0.0
        %2944 = vmatprep.subr.mxu0 0.0
        %2945 = vmatpush1.msra.mxu0 0.0
        %2946 = vmatprep.subr.mxu0 0.0
        %2947 = vmatpush1.msra.mxu0 0.0
        %2948 = vmatprep.subr.mxu0 0.0
        %2949 = vmatpush1.msra.mxu0 0.0
        %2950 = vmatprep.subr.mxu0 0.0
        %2951 = vmatpush1.msra.mxu0 0.0
        %2952 = vmatprep.subr.mxu0 0.0
        %2953 = vmatpush1.msra.mxu0 0.0
        %2954 = vmatprep.subr.mxu0 0.0
        %2955 = vmatpush1.msra.mxu0 0.0
        %2956 = vmatprep.subr.mxu0 0.0
        %2957 = vmatpush1.msra.mxu0 0.0
        %2958 = vmatprep.subr.mxu0 0.0
        %2959 = vmatpush1.msra.mxu0 0.0
        %2960 = vmatprep.subr.mxu0 0.0
        %2961 = vmatpush1.msra.mxu0 0.0
        %2962 = vmatprep.subr.mxu0 0.0
        %2963 = vmatpush1.msra.mxu0 0.0
        %2964 = vmatprep.subr.mxu0 0.0
        %2965 = vmatpush1.msra.mxu0 0.0
        %2966 = vmatprep.subr.mxu0 0.0
        %2967 = vmatpush1.msra.mxu0 0.0
        %2968 = vmatprep.subr.mxu0 0.0
        %2969 = vmatpush1.msra.mxu0 0.0
        %2970 = vmatprep.subr.mxu0 0.0
        %2971 = vmatpush1.msra.mxu0 0.0
        %2972 = vmatprep.subr.mxu0 0.0
        %2973 = vmatpush1.msra.mxu0 0.0
        %2974 = vmatprep.subr.mxu0 0.0
        %2975 = vmatpush1.msra.mxu0 0.0
        %2976 = vmatprep.subr.mxu0 0.0
        %2977 = vmatpush1.msra.mxu0 0.0
        %2978 = vmatprep.subr.mxu0 0.0
        %2979 = vmatpush1.msra.mxu0 0.0
        %2980 = vmatprep.subr.mxu0 0.0
        %2981 = vmatpush1.msra.mxu0 0.0
        %2982 = vmatprep.subr.mxu0 0.0
        %2983 = vmatpush1.msra.mxu0 0.0
        %2984 = vmatprep.subr.mxu0 0.0
        %2985 = vmatpush1.msra.mxu0 0.0
        %2986 = vmatprep.subr.mxu0 0.0
        %2987 = vmatpush1.msra.mxu0 0.0
        %2988 = vmatprep.subr.mxu0 0.0
        %2989 = vmatpush1.msra.mxu0 0.0
        %2990 = vmatprep.subr.mxu0 0.0
        %2991 = vmatpush1.msra.mxu0 0.0
        %2992 = vmatprep.subr.mxu0 0.0
        %2993 = vmatpush1.msra.mxu0 0.0
        %2994 = vmatprep.subr.mxu0 0.0
        %2995 = vmatpush1.msra.mxu0 0.0
        %2996 = vmatprep.subr.mxu0 0.0
        %2997 = vmatpush1.msra.mxu0 0.0
        %2998 = vmatprep.subr.mxu0 0.0
        %2999 = vmatpush1.msra.mxu0 0.0
        %3000 = vmatprep.subr.mxu0 0.0
        %3001 = vmatpush1.msra.mxu0 0.0
        %3002 = vmatprep.subr.mxu0 0.0
        %3003 = vmatpush1.msra.mxu0 0.0
        %3004 = vmatprep.mubr.f32.mxu0 0.0
        %v3005 = vand.u32 %v1228, 4294901760
        %3006 = vmatmul.mubr.f32.gmra.mrb[0].mxu0 %v3005
        %v3007 = vpop.f32.mrb[0].mxu0
        %v3008 = vadd.f32 %v2930, %v3007
        %v3009 = vpop.f32.mrb[0].mxu0
        %3010 = vmatprep.mubr.f32.mxu0 0.0
        %v3011 = vand.u32 %v1231, 4294901760
        %3012 = vmatmul.mubr.f32.gmra.mrb[0].mxu0 %v3011
        %v3013 = vpop.f32.mrb[0].mxu0
        %v3014 = vadd.f32 %v2936, %v3013
        %v3015 = vpop.f32.mrb[0].mxu0
        %3016 = vdwg.mxu0
        %v3017 = vmul.f32 %v3008, 0.0013020834
        %v3018 = vmul.f32 %v3014, 0.0013020834
        %v3019 = vmul.f32 %v3017, %v3017
        %v3020 = vmul.f32 %v3018, %v3018
        %3023 = vrot.lane.b32.xlu0 %v3019, 1
        %v3024 = vpop.permute.xlu0 %3023
        %3025 = vrot.lane.b32.xlu0 %v3020, 1
        %v3026 = vpop.permute.xlu0 %3025
        %v3029 = vsub.f32 %v3017, %v3024
        %v3030 = vsub.f32 %v3018, %v3026
        %v3031 = vmax.f32 %v3029, 0.0
        %v3032 = vmax.f32 %v3030, 0.0
        %v3033 = vadd.f32 %v3031, 1e-05
        %v3034 = vadd.f32 %v3032, 1e-05
        %v3035 = vrsqrt.pop %v3033
        %v3036 = vrsqrt.pop %v3034
        %3039 = vrot.lane.b32.xlu0 %v3035, 127
        %v3040 = vpop.permute.xlu0 %3039
        %3041 = vrot.lane.b32.xlu0 %v3036, 127
        %v3042 = vpop.permute.xlu0 %3041
        %v3045 = vmul.f32 %v2037, %v3040
        %v3046 = vmul.f32 %v2038, %v3042
        %v3047 = vmul.f32 %v3017, %v3045
        %v3048 = vmul.f32 %v3018, %v3046
        %v3049 = vsub.f32 %v2039, %v3047
        %v3050 = vsub.f32 %v2040, %v3048
        %3052 = vset.pattern.permute.xlu0 0
        %3053 = vperm.xlu0 %3052, %v3045
        %v3054 = vpop.permute.xlu0 %3053
        %3057 = vset.pattern.permute.xlu0 0
        %3058 = vperm.xlu0 %3057, %v3046
        %v3059 = vpop.permute.xlu0 %3058
        %v3061 = vmul.f32 %v2033, %v3054
        %v3062 = vmul.f32 %v2034, %v3054
        %v3063 = vmul.f32 %v2035, %v3059
        %v3064 = vmul.f32 %v2036, %v3059
        %3066 = vset.pattern.permute.xlu0 0
        %3067 = vperm.xlu0 %3066, %v3049
        %v3068 = vpop.permute.xlu0 %3067
        %3071 = vset.pattern.permute.xlu0 0
        %3072 = vperm.xlu0 %3071, %v3050
        %v3073 = vpop.permute.xlu0 %3072
        %v3075 = vadd.f32 %v3061, %v3068
        %v3076 = vadd.f32 %v3062, %v3068
        %v3077 = vadd.f32 %v3063, %v3073
        %v3078 = vadd.f32 %v3064, %v3073
        %v3079 = vld [vmem:[%s10] sm:$0xf]
        %3081 = vset.pattern.permute.xlu0 0
        %3082 = vperm.xlu0 %3081, %v3079
        %v3083 = vpop.permute.xlu0 %3082
        %v3086 = vsel %vm761, %v601, 0
        %v3089 = vsel %vm625, %v3077, 0
        %v3092 = vsel %vm625, %v3078, 0
        %3094 = vmatprep.subr.mxu0 %v3076
        %3095 = vmatpush1.msra.mxu0 %v3075
        %3096 = vmatprep.subr.mxu0 %v3092
        %3097 = vmatpush1.msra.mxu0 %v3089
        %3098 = vmatprep.subr.mxu0 0.0
        %3099 = vmatpush1.msra.mxu0 0.0
        %3100 = vmatprep.subr.mxu0 0.0
        %3101 = vmatpush1.msra.mxu0 0.0
        %3102 = vmatprep.subr.mxu0 0.0
        %3103 = vmatpush1.msra.mxu0 0.0
        %3104 = vmatprep.subr.mxu0 0.0
        %3105 = vmatpush1.msra.mxu0 0.0
        %3106 = vmatprep.subr.mxu0 0.0
        %3107 = vmatpush1.msra.mxu0 0.0
        %3108 = vmatprep.subr.mxu0 0.0
        %3109 = vmatpush1.msra.mxu0 0.0
        %3110 = vmatprep.subr.mxu0 0.0
        %3111 = vmatpush1.msra.mxu0 0.0
        %3112 = vmatprep.subr.mxu0 0.0
        %3113 = vmatpush1.msra.mxu0 0.0
        %3114 = vmatprep.subr.mxu0 0.0
        %3115 = vmatpush1.msra.mxu0 0.0
        %3116 = vmatprep.subr.mxu0 0.0
        %3117 = vmatpush1.msra.mxu0 0.0
        %3118 = vmatprep.subr.mxu0 0.0
        %3119 = vmatpush1.msra.mxu0 0.0
        %3120 = vmatprep.subr.mxu0 0.0
        %3121 = vmatpush1.msra.mxu0 0.0
        %3122 = vmatprep.subr.mxu0 0.0
        %3123 = vmatpush1.msra.mxu0 0.0
        %3124 = vmatprep.subr.mxu0 0.0
        %3125 = vmatpush1.msra.mxu0 0.0
        %3126 = vmatprep.subr.mxu0 0.0
        %3127 = vmatpush1.msra.mxu0 0.0
        %3128 = vmatprep.subr.mxu0 0.0
        %3129 = vmatpush1.msra.mxu0 0.0
        %3130 = vmatprep.subr.mxu0 0.0
        %3131 = vmatpush1.msra.mxu0 0.0
        %3132 = vmatprep.subr.mxu0 0.0
        %3133 = vmatpush1.msra.mxu0 0.0
        %3134 = vmatprep.subr.mxu0 0.0
        %3135 = vmatpush1.msra.mxu0 0.0
        %3136 = vmatprep.subr.mxu0 0.0
        %3137 = vmatpush1.msra.mxu0 0.0
        %3138 = vmatprep.subr.mxu0 0.0
        %3139 = vmatpush1.msra.mxu0 0.0
        %3140 = vmatprep.subr.mxu0 0.0
        %3141 = vmatpush1.msra.mxu0 0.0
        %3142 = vmatprep.subr.mxu0 0.0
        %3143 = vmatpush1.msra.mxu0 0.0
        %3144 = vmatprep.subr.mxu0 0.0
        %3145 = vmatpush1.msra.mxu0 0.0
        %3146 = vmatprep.subr.mxu0 0.0
        %3147 = vmatpush1.msra.mxu0 0.0
        %3148 = vmatprep.subr.mxu0 0.0
        %3149 = vmatpush1.msra.mxu0 0.0
        %3150 = vmatprep.subr.mxu0 0.0
        %3151 = vmatpush1.msra.mxu0 0.0
        %3152 = vmatprep.subr.mxu0 0.0
        %3153 = vmatpush1.msra.mxu0 0.0
        %3154 = vmatprep.subr.mxu0 0.0
        %3155 = vmatpush1.msra.mxu0 0.0
        %3156 = vmatprep.subr.mxu0 0.0
        %3157 = vmatpush1.msra.mxu0 0.0
        %3158 = vmatprep.mubr.f32.mxu0 0.0
        %3159 = vmatmul.mubr.f32.gmra.mrb[0].mxu0 %v3086
        %v3160 = vpop.f32.mrb[0].mxu0
        %v3161 = vadd.f32 %v3083, %v3160
        %v3162 = vpop.f32.mrb[0].mxu0
        %v3163 = vadd.f32 %v3083, %v3162
        %3164 = vdwg.mxu0
        %v3165 = vld [vmem:[%s11] sm:$0xf]
        %v3166 = vld [vmem:[%s12] sm:$0xf]
        %v3167 = vld [vmem:[%s15] sm:$0xf]
        %v3168 = vld [vmem:[%s16] sm:$0xf]
        %v3169 = vsel %vm625, %v3161, 0.0
        %v3170 = vsel %vm625, %v3163, 0.0
        %v3171 = vadd.f32 %v3169, %v3170
        %3172 = vadd.xlane.f32.xlu0 %v3171
        %v3173 = vpop.xlane.xlu0 %3172
        %v3174 = vmul.f32 %v3161, %v3161
        %v3175 = vmul.f32 %v3163, %v3163
        %v3176 = vsel %vm625, %v3174, 0.0
        %v3177 = vsel %vm625, %v3175, 0.0
        %v3178 = vadd.f32 %v3176, %v3177
        %3179 = vadd.xlane.f32.xlu0 %v3178
        %v3180 = vpop.xlane.xlu0 %3179
        %v3181 = vsel %vm758, %v3173, %v3180
        %v3183 = vsel %vm618, %v3167, 0
        %v3186 = vsel %vm625, %v3181, 0
        %3188 = vmatprep.subr.mxu0 0.0
        %v3189 = vand.u32 %v3186, 4294901760
        %3190 = vmatpush1.msra.mxu0 %v3189
        %3191 = vmatprep.subr.mxu0 0.0
        %3192 = vmatpush1.msra.mxu0 0.0
        %3193 = vmatprep.subr.mxu0 0.0
        %3194 = vmatpush1.msra.mxu0 0.0
        %3195 = vmatprep.subr.mxu0 0.0
        %3196 = vmatpush1.msra.mxu0 0.0
        %3197 = vmatprep.subr.mxu0 0.0
        %3198 = vmatpush1.msra.mxu0 0.0
        %3199 = vmatprep.subr.mxu0 0.0
        %3200 = vmatpush1.msra.mxu0 0.0
        %3201 = vmatprep.subr.mxu0 0.0
        %3202 = vmatpush1.msra.mxu0 0.0
        %3203 = vmatprep.subr.mxu0 0.0
        %3204 = vmatpush1.msra.mxu0 0.0
        %3205 = vmatprep.subr.mxu0 0.0
        %3206 = vmatpush1.msra.mxu0 0.0
        %3207 = vmatprep.subr.mxu0 0.0
        %3208 = vmatpush1.msra.mxu0 0.0
        %3209 = vmatprep.subr.mxu0 0.0
        %3210 = vmatpush1.msra.mxu0 0.0
        %3211 = vmatprep.subr.mxu0 0.0
        %3212 = vmatpush1.msra.mxu0 0.0
        %3213 = vmatprep.subr.mxu0 0.0
        %3214 = vmatpush1.msra.mxu0 0.0
        %3215 = vmatprep.subr.mxu0 0.0
        %3216 = vmatpush1.msra.mxu0 0.0
        %3217 = vmatprep.subr.mxu0 0.0
        %3218 = vmatpush1.msra.mxu0 0.0
        %3219 = vmatprep.subr.mxu0 0.0
        %3220 = vmatpush1.msra.mxu0 0.0
        %3221 = vmatprep.subr.mxu0 0.0
        %3222 = vmatpush1.msra.mxu0 0.0
        %3223 = vmatprep.subr.mxu0 0.0
        %3224 = vmatpush1.msra.mxu0 0.0
        %3225 = vmatprep.subr.mxu0 0.0
        %3226 = vmatpush1.msra.mxu0 0.0
        %3227 = vmatprep.subr.mxu0 0.0
        %3228 = vmatpush1.msra.mxu0 0.0
        %3229 = vmatprep.subr.mxu0 0.0
        %3230 = vmatpush1.msra.mxu0 0.0
        %3231 = vmatprep.subr.mxu0 0.0
        %3232 = vmatpush1.msra.mxu0 0.0
        %3233 = vmatprep.subr.mxu0 0.0
        %3234 = vmatpush1.msra.mxu0 0.0
        %3235 = vmatprep.subr.mxu0 0.0
        %3236 = vmatpush1.msra.mxu0 0.0
        %3237 = vmatprep.subr.mxu0 0.0
        %3238 = vmatpush1.msra.mxu0 0.0
        %3239 = vmatprep.subr.mxu0 0.0
        %3240 = vmatpush1.msra.mxu0 0.0
        %3241 = vmatprep.subr.mxu0 0.0
        %3242 = vmatpush1.msra.mxu0 0.0
        %3243 = vmatprep.subr.mxu0 0.0
        %3244 = vmatpush1.msra.mxu0 0.0
        %3245 = vmatprep.subr.mxu0 0.0
        %3246 = vmatpush1.msra.mxu0 0.0
        %3247 = vmatprep.subr.mxu0 0.0
        %3248 = vmatpush1.msra.mxu0 0.0
        %3249 = vmatprep.subr.mxu0 0.0
        %3250 = vmatpush1.msra.mxu0 0.0
        %3251 = vmatprep.subr.mxu0 0.0
        %3252 = vmatpush1.msra.mxu0 0.0
        %3253 = vmatprep.mubr.f32.mxu0 0.0
        %v3254 = vand.u32 %v3183, 4294901760
        %v3255 = vsub.f32 %v3183, %v3254
        %v3256 = vand.u32 %v3255, 4294901760
        %v3257 = vsub.f32 %v3255, %v3256
        %v3258 = vand.u32 %v3257, 4294901760
        %3259 = vmatmul.mubr.f32.gmra.mrb[0].mxu0 %v3258
        %v3260 = vpop.f32.mrb[0].mxu0
        %v3261 = vadd.f32 0.0, %v3260
        %v3262 = vpop.f32.mrb[0].mxu0
        %3263 = vdwg.mxu0
        %3264 = vmatprep.subr.mxu0 0.0
        %v3265 = vand.u32 %v3186, 4294901760
        %v3266 = vsub.f32 %v3186, %v3265
        %v3267 = vand.u32 %v3266, 4294901760
        %v3268 = vsub.f32 %v3266, %v3267
        %v3269 = vand.u32 %v3268, 4294901760
        %3270 = vmatpush1.msra.mxu0 %v3269
        %3271 = vmatprep.subr.mxu0 0.0
        %3272 = vmatpush1.msra.mxu0 0.0
        %3273 = vmatprep.subr.mxu0 0.0
        %3274 = vmatpush1.msra.mxu0 0.0
        %3275 = vmatprep.subr.mxu0 0.0
        %3276 = vmatpush1.msra.mxu0 0.0
        %3277 = vmatprep.subr.mxu0 0.0
        %3278 = vmatpush1.msra.mxu0 0.0
        %3279 = vmatprep.subr.mxu0 0.0
        %3280 = vmatpush1.msra.mxu0 0.0
        %3281 = vmatprep.subr.mxu0 0.0
        %3282 = vmatpush1.msra.mxu0 0.0
        %3283 = vmatprep.subr.mxu0 0.0
        %3284 = vmatpush1.msra.mxu0 0.0
        %3285 = vmatprep.subr.mxu0 0.0
        %3286 = vmatpush1.msra.mxu0 0.0
        %3287 = vmatprep.subr.mxu0 0.0
        %3288 = vmatpush1.msra.mxu0 0.0
        %3289 = vmatprep.subr.mxu0 0.0
        %3290 = vmatpush1.msra.mxu0 0.0
        %3291 = vmatprep.subr.mxu0 0.0
        %3292 = vmatpush1.msra.mxu0 0.0
        %3293 = vmatprep.subr.mxu0 0.0
        %3294 = vmatpush1.msra.mxu0 0.0
        %3295 = vmatprep.subr.mxu0 0.0
        %3296 = vmatpush1.msra.mxu0 0.0
        %3297 = vmatprep.subr.mxu0 0.0
        %3298 = vmatpush1.msra.mxu0 0.0
        %3299 = vmatprep.subr.mxu0 0.0
        %3300 = vmatpush1.msra.mxu0 0.0
        %3301 = vmatprep.subr.mxu0 0.0
        %3302 = vmatpush1.msra.mxu0 0.0
        %3303 = vmatprep.subr.mxu0 0.0
        %3304 = vmatpush1.msra.mxu0 0.0
        %3305 = vmatprep.subr.mxu0 0.0
        %3306 = vmatpush1.msra.mxu0 0.0
        %3307 = vmatprep.subr.mxu0 0.0
        %3308 = vmatpush1.msra.mxu0 0.0
        %3309 = vmatprep.subr.mxu0 0.0
        %3310 = vmatpush1.msra.mxu0 0.0
        %3311 = vmatprep.subr.mxu0 0.0
        %3312 = vmatpush1.msra.mxu0 0.0
        %3313 = vmatprep.subr.mxu0 0.0
        %3314 = vmatpush1.msra.mxu0 0.0
        %3315 = vmatprep.subr.mxu0 0.0
        %3316 = vmatpush1.msra.mxu0 0.0
        %3317 = vmatprep.subr.mxu0 0.0
        %3318 = vmatpush1.msra.mxu0 0.0
        %3319 = vmatprep.subr.mxu0 0.0
        %3320 = vmatpush1.msra.mxu0 0.0
        %3321 = vmatprep.subr.mxu0 0.0
        %3322 = vmatpush1.msra.mxu0 0.0
        %3323 = vmatprep.subr.mxu0 0.0
        %3324 = vmatpush1.msra.mxu0 0.0
        %3325 = vmatprep.subr.mxu0 0.0
        %3326 = vmatpush1.msra.mxu0 0.0
        %3327 = vmatprep.subr.mxu0 0.0
        %3328 = vmatpush1.msra.mxu0 0.0
        %3329 = vmatprep.subr.mxu0 0.0
        %3330 = vmatpush1.msra.mxu0 0.0
        %3331 = vmatprep.subr.mxu0 0.0
        %3332 = vmatpush1.msra.mxu0 0.0
        %3333 = vmatprep.mubr.f32.mxu0 0.0
        %v3334 = vand.u32 %v3183, 4294901760
        %3335 = vmatmul.mubr.f32.gmra.mrb[0].mxu0 %v3334
        %v3336 = vpop.f32.mrb[0].mxu0
        %v3337 = vadd.f32 %v3261, %v3336
        %v3338 = vpop.f32.mrb[0].mxu0
        %3339 = vdwg.mxu0
        %3340 = vmatprep.subr.mxu0 0.0
        %v3341 = vand.u32 %v3186, 4294901760
        %v3342 = vsub.f32 %v3186, %v3341
        %3343 = vmatpush1.msra.mxu0 %v3342
        %3344 = vmatprep.subr.mxu0 0.0
        %3345 = vmatpush1.msra.mxu0 0.0
        %3346 = vmatprep.subr.mxu0 0.0
        %3347 = vmatpush1.msra.mxu0 0.0
        %3348 = vmatprep.subr.mxu0 0.0
        %3349 = vmatpush1.msra.mxu0 0.0
        %3350 = vmatprep.subr.mxu0 0.0
        %3351 = vmatpush1.msra.mxu0 0.0
        %3352 = vmatprep.subr.mxu0 0.0
        %3353 = vmatpush1.msra.mxu0 0.0
        %3354 = vmatprep.subr.mxu0 0.0
        %3355 = vmatpush1.msra.mxu0 0.0
        %3356 = vmatprep.subr.mxu0 0.0
        %3357 = vmatpush1.msra.mxu0 0.0
        %3358 = vmatprep.subr.mxu0 0.0
        %3359 = vmatpush1.msra.mxu0 0.0
        %3360 = vmatprep.subr.mxu0 0.0
        %3361 = vmatpush1.msra.mxu0 0.0
        %3362 = vmatprep.subr.mxu0 0.0
        %3363 = vmatpush1.msra.mxu0 0.0
        %3364 = vmatprep.subr.mxu0 0.0
        %3365 = vmatpush1.msra.mxu0 0.0
        %3366 = vmatprep.subr.mxu0 0.0
        %3367 = vmatpush1.msra.mxu0 0.0
        %3368 = vmatprep.subr.mxu0 0.0
        %3369 = vmatpush1.msra.mxu0 0.0
        %3370 = vmatprep.subr.mxu0 0.0
        %3371 = vmatpush1.msra.mxu0 0.0
        %3372 = vmatprep.subr.mxu0 0.0
        %3373 = vmatpush1.msra.mxu0 0.0
        %3374 = vmatprep.subr.mxu0 0.0
        %3375 = vmatpush1.msra.mxu0 0.0
        %3376 = vmatprep.subr.mxu0 0.0
        %3377 = vmatpush1.msra.mxu0 0.0
        %3378 = vmatprep.subr.mxu0 0.0
        %3379 = vmatpush1.msra.mxu0 0.0
        %3380 = vmatprep.subr.mxu0 0.0
        %3381 = vmatpush1.msra.mxu0 0.0
        %3382 = vmatprep.subr.mxu0 0.0
        %3383 = vmatpush1.msra.mxu0 0.0
        %3384 = vmatprep.subr.mxu0 0.0
        %3385 = vmatpush1.msra.mxu0 0.0
        %3386 = vmatprep.subr.mxu0 0.0
        %3387 = vmatpush1.msra.mxu0 0.0
        %3388 = vmatprep.subr.mxu0 0.0
        %3389 = vmatpush1.msra.mxu0 0.0
        %3390 = vmatprep.subr.mxu0 0.0
        %3391 = vmatpush1.msra.mxu0 0.0
        %3392 = vmatprep.subr.mxu0 0.0
        %3393 = vmatpush1.msra.mxu0 0.0
        %3394 = vmatprep.subr.mxu0 0.0
        %3395 = vmatpush1.msra.mxu0 0.0
        %3396 = vmatprep.subr.mxu0 0.0
        %3397 = vmatpush1.msra.mxu0 0.0
        %3398 = vmatprep.subr.mxu0 0.0
        %3399 = vmatpush1.msra.mxu0 0.0
        %3400 = vmatprep.subr.mxu0 0.0
        %3401 = vmatpush1.msra.mxu0 0.0
        %3402 = vmatprep.subr.mxu0 0.0
        %3403 = vmatpush1.msra.mxu0 0.0
        %3404 = vmatprep.subr.mxu0 0.0
        %3405 = vmatpush1.msra.mxu0 0.0
        %3406 = vmatprep.mubr.f32.mxu0 0.0
        %v3407 = vand.u32 %v3183, 4294901760
        %v3408 = vsub.f32 %v3183, %v3407
        %3409 = vmatmul.mubr.f32.gmra.mrb[0].mxu0 %v3408
        %v3410 = vpop.f32.mrb[0].mxu0
        %v3411 = vadd.f32 %v3337, %v3410
        %v3412 = vpop.f32.mrb[0].mxu0
        %3413 = vdwg.mxu0
        %3414 = vmatprep.subr.mxu0 0.0
        %v3415 = vand.u32 %v3186, 4294901760
        %3416 = vmatpush1.msra.mxu0 %v3415
        %3417 = vmatprep.subr.mxu0 0.0
        %3418 = vmatpush1.msra.mxu0 0.0
        %3419 = vmatprep.subr.mxu0 0.0
        %3420 = vmatpush1.msra.mxu0 0.0
        %3421 = vmatprep.subr.mxu0 0.0
        %3422 = vmatpush1.msra.mxu0 0.0
        %3423 = vmatprep.subr.mxu0 0.0
        %3424 = vmatpush1.msra.mxu0 0.0
        %3425 = vmatprep.subr.mxu0 0.0
        %3426 = vmatpush1.msra.mxu0 0.0
        %3427 = vmatprep.subr.mxu0 0.0
        %3428 = vmatpush1.msra.mxu0 0.0
        %3429 = vmatprep.subr.mxu0 0.0
        %3430 = vmatpush1.msra.mxu0 0.0
        %3431 = vmatprep.subr.mxu0 0.0
        %3432 = vmatpush1.msra.mxu0 0.0
        %3433 = vmatprep.subr.mxu0 0.0
        %3434 = vmatpush1.msra.mxu0 0.0
        %3435 = vmatprep.subr.mxu0 0.0
        %3436 = vmatpush1.msra.mxu0 0.0
        %3437 = vmatprep.subr.mxu0 0.0
        %3438 = vmatpush1.msra.mxu0 0.0
        %3439 = vmatprep.subr.mxu0 0.0
        %3440 = vmatpush1.msra.mxu0 0.0
        %3441 = vmatprep.subr.mxu0 0.0
        %3442 = vmatpush1.msra.mxu0 0.0
        %3443 = vmatprep.subr.mxu0 0.0
        %3444 = vmatpush1.msra.mxu0 0.0
        %3445 = vmatprep.subr.mxu0 0.0
        %3446 = vmatpush1.msra.mxu0 0.0
        %3447 = vmatprep.subr.mxu0 0.0
        %3448 = vmatpush1.msra.mxu0 0.0
        %3449 = vmatprep.subr.mxu0 0.0
        %3450 = vmatpush1.msra.mxu0 0.0
        %3451 = vmatprep.subr.mxu0 0.0
        %3452 = vmatpush1.msra.mxu0 0.0
        %3453 = vmatprep.subr.mxu0 0.0
        %3454 = vmatpush1.msra.mxu0 0.0
        %3455 = vmatprep.subr.mxu0 0.0
        %3456 = vmatpush1.msra.mxu0 0.0
        %3457 = vmatprep.subr.mxu0 0.0
        %3458 = vmatpush1.msra.mxu0 0.0
        %3459 = vmatprep.subr.mxu0 0.0
        %3460 = vmatpush1.msra.mxu0 0.0
        %3461 = vmatprep.subr.mxu0 0.0
        %3462 = vmatpush1.msra.mxu0 0.0
        %3463 = vmatprep.subr.mxu0 0.0
        %3464 = vmatpush1.msra.mxu0 0.0
        %3465 = vmatprep.subr.mxu0 0.0
        %3466 = vmatpush1.msra.mxu0 0.0
        %3467 = vmatprep.subr.mxu0 0.0
        %3468 = vmatpush1.msra.mxu0 0.0
        %3469 = vmatprep.subr.mxu0 0.0
        %3470 = vmatpush1.msra.mxu0 0.0
        %3471 = vmatprep.subr.mxu0 0.0
        %3472 = vmatpush1.msra.mxu0 0.0
        %3473 = vmatprep.subr.mxu0 0.0
        %3474 = vmatpush1.msra.mxu0 0.0
        %3475 = vmatprep.subr.mxu0 0.0
        %3476 = vmatpush1.msra.mxu0 0.0
        %3477 = vmatprep.subr.mxu0 0.0
        %3478 = vmatpush1.msra.mxu0 0.0
        %3479 = vmatprep.mubr.f32.mxu0 0.0
        %v3480 = vand.u32 %v3183, 4294901760
        %v3481 = vsub.f32 %v3183, %v3480
        %v3482 = vand.u32 %v3481, 4294901760
        %3483 = vmatmul.mubr.f32.gmra.mrb[0].mxu0 %v3482
        %v3484 = vpop.f32.mrb[0].mxu0
        %v3485 = vadd.f32 %v3411, %v3484
        %v3486 = vpop.f32.mrb[0].mxu0
        %3487 = vdwg.mxu0
        %3488 = vmatprep.subr.mxu0 0.0
        %v3489 = vand.u32 %v3186, 4294901760
        %v3490 = vsub.f32 %v3186, %v3489
        %v3491 = vand.u32 %v3490, 4294901760
        %3492 = vmatpush1.msra.mxu0 %v3491
        %3493 = vmatprep.subr.mxu0 0.0
        %3494 = vmatpush1.msra.mxu0 0.0
        %3495 = vmatprep.subr.mxu0 0.0
        %3496 = vmatpush1.msra.mxu0 0.0
        %3497 = vmatprep.subr.mxu0 0.0
        %3498 = vmatpush1.msra.mxu0 0.0
        %3499 = vmatprep.subr.mxu0 0.0
        %3500 = vmatpush1.msra.mxu0 0.0
        %3501 = vmatprep.subr.mxu0 0.0
        %3502 = vmatpush1.msra.mxu0 0.0
        %3503 = vmatprep.subr.mxu0 0.0
        %3504 = vmatpush1.msra.mxu0 0.0
        %3505 = vmatprep.subr.mxu0 0.0
        %3506 = vmatpush1.msra.mxu0 0.0
        %3507 = vmatprep.subr.mxu0 0.0
        %3508 = vmatpush1.msra.mxu0 0.0
        %3509 = vmatprep.subr.mxu0 0.0
        %3510 = vmatpush1.msra.mxu0 0.0
        %3511 = vmatprep.subr.mxu0 0.0
        %3512 = vmatpush1.msra.mxu0 0.0
        %3513 = vmatprep.subr.mxu0 0.0
        %3514 = vmatpush1.msra.mxu0 0.0
        %3515 = vmatprep.subr.mxu0 0.0
        %3516 = vmatpush1.msra.mxu0 0.0
        %3517 = vmatprep.subr.mxu0 0.0
        %3518 = vmatpush1.msra.mxu0 0.0
        %3519 = vmatprep.subr.mxu0 0.0
        %3520 = vmatpush1.msra.mxu0 0.0
        %3521 = vmatprep.subr.mxu0 0.0
        %3522 = vmatpush1.msra.mxu0 0.0
        %3523 = vmatprep.subr.mxu0 0.0
        %3524 = vmatpush1.msra.mxu0 0.0
        %3525 = vmatprep.subr.mxu0 0.0
        %3526 = vmatpush1.msra.mxu0 0.0
        %3527 = vmatprep.subr.mxu0 0.0
        %3528 = vmatpush1.msra.mxu0 0.0
        %3529 = vmatprep.subr.mxu0 0.0
        %3530 = vmatpush1.msra.mxu0 0.0
        %3531 = vmatprep.subr.mxu0 0.0
        %3532 = vmatpush1.msra.mxu0 0.0
        %3533 = vmatprep.subr.mxu0 0.0
        %3534 = vmatpush1.msra.mxu0 0.0
        %3535 = vmatprep.subr.mxu0 0.0
        %3536 = vmatpush1.msra.mxu0 0.0
        %3537 = vmatprep.subr.mxu0 0.0
        %3538 = vmatpush1.msra.mxu0 0.0
        %3539 = vmatprep.subr.mxu0 0.0
        %3540 = vmatpush1.msra.mxu0 0.0
        %3541 = vmatprep.subr.mxu0 0.0
        %3542 = vmatpush1.msra.mxu0 0.0
        %3543 = vmatprep.subr.mxu0 0.0
        %3544 = vmatpush1.msra.mxu0 0.0
        %3545 = vmatprep.subr.mxu0 0.0
        %3546 = vmatpush1.msra.mxu0 0.0
        %3547 = vmatprep.subr.mxu0 0.0
        %3548 = vmatpush1.msra.mxu0 0.0
        %3549 = vmatprep.subr.mxu0 0.0
        %3550 = vmatpush1.msra.mxu0 0.0
        %3551 = vmatprep.subr.mxu0 0.0
        %3552 = vmatpush1.msra.mxu0 0.0
        %3553 = vmatprep.subr.mxu0 0.0
        %3554 = vmatpush1.msra.mxu0 0.0
        %3555 = vmatprep.mubr.f32.mxu0 0.0
        %v3556 = vand.u32 %v3183, 4294901760
        %3557 = vmatmul.mubr.f32.gmra.mrb[0].mxu0 %v3556
        %v3558 = vpop.f32.mrb[0].mxu0
        %v3559 = vadd.f32 %v3485, %v3558
        %v3560 = vpop.f32.mrb[0].mxu0
        %3561 = vdwg.mxu0
        %3562 = vmatprep.subr.mxu0 0.0
        %v3563 = vand.u32 %v3186, 4294901760
        %3564 = vmatpush1.msra.mxu0 %v3563
        %3565 = vmatprep.subr.mxu0 0.0
        %3566 = vmatpush1.msra.mxu0 0.0
        %3567 = vmatprep.subr.mxu0 0.0
        %3568 = vmatpush1.msra.mxu0 0.0
        %3569 = vmatprep.subr.mxu0 0.0
        %3570 = vmatpush1.msra.mxu0 0.0
        %3571 = vmatprep.subr.mxu0 0.0
        %3572 = vmatpush1.msra.mxu0 0.0
        %3573 = vmatprep.subr.mxu0 0.0
        %3574 = vmatpush1.msra.mxu0 0.0
        %3575 = vmatprep.subr.mxu0 0.0
        %3576 = vmatpush1.msra.mxu0 0.0
        %3577 = vmatprep.subr.mxu0 0.0
        %3578 = vmatpush1.msra.mxu0 0.0
        %3579 = vmatprep.subr.mxu0 0.0
        %3580 = vmatpush1.msra.mxu0 0.0
        %3581 = vmatprep.subr.mxu0 0.0
        %3582 = vmatpush1.msra.mxu0 0.0
        %3583 = vmatprep.subr.mxu0 0.0
        %3584 = vmatpush1.msra.mxu0 0.0
        %3585 = vmatprep.subr.mxu0 0.0
        %3586 = vmatpush1.msra.mxu0 0.0
        %3587 = vmatprep.subr.mxu0 0.0
        %3588 = vmatpush1.msra.mxu0 0.0
        %3589 = vmatprep.subr.mxu0 0.0
        %3590 = vmatpush1.msra.mxu0 0.0
        %3591 = vmatprep.subr.mxu0 0.0
        %3592 = vmatpush1.msra.mxu0 0.0
        %3593 = vmatprep.subr.mxu0 0.0
        %3594 = vmatpush1.msra.mxu0 0.0
        %3595 = vmatprep.subr.mxu0 0.0
        %3596 = vmatpush1.msra.mxu0 0.0
        %3597 = vmatprep.subr.mxu0 0.0
        %3598 = vmatpush1.msra.mxu0 0.0
        %3599 = vmatprep.subr.mxu0 0.0
        %3600 = vmatpush1.msra.mxu0 0.0
        %3601 = vmatprep.subr.mxu0 0.0
        %3602 = vmatpush1.msra.mxu0 0.0
        %3603 = vmatprep.subr.mxu0 0.0
        %3604 = vmatpush1.msra.mxu0 0.0
        %3605 = vmatprep.subr.mxu0 0.0
        %3606 = vmatpush1.msra.mxu0 0.0
        %3607 = vmatprep.subr.mxu0 0.0
        %3608 = vmatpush1.msra.mxu0 0.0
        %3609 = vmatprep.subr.mxu0 0.0
        %3610 = vmatpush1.msra.mxu0 0.0
        %3611 = vmatprep.subr.mxu0 0.0
        %3612 = vmatpush1.msra.mxu0 0.0
        %3613 = vmatprep.subr.mxu0 0.0
        %3614 = vmatpush1.msra.mxu0 0.0
        %3615 = vmatprep.subr.mxu0 0.0
        %3616 = vmatpush1.msra.mxu0 0.0
        %3617 = vmatprep.subr.mxu0 0.0
        %3618 = vmatpush1.msra.mxu0 0.0
        %3619 = vmatprep.subr.mxu0 0.0
        %3620 = vmatpush1.msra.mxu0 0.0
        %3621 = vmatprep.subr.mxu0 0.0
        %3622 = vmatpush1.msra.mxu0 0.0
        %3623 = vmatprep.subr.mxu0 0.0
        %3624 = vmatpush1.msra.mxu0 0.0
        %3625 = vmatprep.subr.mxu0 0.0
        %3626 = vmatpush1.msra.mxu0 0.0
        %3627 = vmatprep.mubr.f32.mxu0 0.0
        %v3628 = vand.u32 %v3183, 4294901760
        %3629 = vmatmul.mubr.f32.gmra.mrb[0].mxu0 %v3628
        %v3630 = vpop.f32.mrb[0].mxu0
        %v3631 = vadd.f32 %v3559, %v3630
        %v3632 = vpop.f32.mrb[0].mxu0
        %3633 = vdwg.mxu0
        %v3635 = vsel %vm618, %v3168, 0
        %v3638 = vsel %vm625, %v3631, 0
        %3640 = vmatprep.subr.mxu0 0.0
        %v3641 = vand.u32 %v3638, 4294901760
        %3642 = vmatpush1.msra.mxu0 %v3641
        %3643 = vmatprep.subr.mxu0 0.0
        %3644 = vmatpush1.msra.mxu0 0.0
        %3645 = vmatprep.subr.mxu0 0.0
        %3646 = vmatpush1.msra.mxu0 0.0
        %3647 = vmatprep.subr.mxu0 0.0
        %3648 = vmatpush1.msra.mxu0 0.0
        %3649 = vmatprep.subr.mxu0 0.0
        %3650 = vmatpush1.msra.mxu0 0.0
        %3651 = vmatprep.subr.mxu0 0.0
        %3652 = vmatpush1.msra.mxu0 0.0
        %3653 = vmatprep.subr.mxu0 0.0
        %3654 = vmatpush1.msra.mxu0 0.0
        %3655 = vmatprep.subr.mxu0 0.0
        %3656 = vmatpush1.msra.mxu0 0.0
        %3657 = vmatprep.subr.mxu0 0.0
        %3658 = vmatpush1.msra.mxu0 0.0
        %3659 = vmatprep.subr.mxu0 0.0
        %3660 = vmatpush1.msra.mxu0 0.0
        %3661 = vmatprep.subr.mxu0 0.0
        %3662 = vmatpush1.msra.mxu0 0.0
        %3663 = vmatprep.subr.mxu0 0.0
        %3664 = vmatpush1.msra.mxu0 0.0
        %3665 = vmatprep.subr.mxu0 0.0
        %3666 = vmatpush1.msra.mxu0 0.0
        %3667 = vmatprep.subr.mxu0 0.0
        %3668 = vmatpush1.msra.mxu0 0.0
        %3669 = vmatprep.subr.mxu0 0.0
        %3670 = vmatpush1.msra.mxu0 0.0
        %3671 = vmatprep.subr.mxu0 0.0
        %3672 = vmatpush1.msra.mxu0 0.0
        %3673 = vmatprep.subr.mxu0 0.0
        %3674 = vmatpush1.msra.mxu0 0.0
        %3675 = vmatprep.subr.mxu0 0.0
        %3676 = vmatpush1.msra.mxu0 0.0
        %3677 = vmatprep.subr.mxu0 0.0
        %3678 = vmatpush1.msra.mxu0 0.0
        %3679 = vmatprep.subr.mxu0 0.0
        %3680 = vmatpush1.msra.mxu0 0.0
        %3681 = vmatprep.subr.mxu0 0.0
        %3682 = vmatpush1.msra.mxu0 0.0
        %3683 = vmatprep.subr.mxu0 0.0
        %3684 = vmatpush1.msra.mxu0 0.0
        %3685 = vmatprep.subr.mxu0 0.0
        %3686 = vmatpush1.msra.mxu0 0.0
        %3687 = vmatprep.subr.mxu0 0.0
        %3688 = vmatpush1.msra.mxu0 0.0
        %3689 = vmatprep.subr.mxu0 0.0
        %3690 = vmatpush1.msra.mxu0 0.0
        %3691 = vmatprep.subr.mxu0 0.0
        %3692 = vmatpush1.msra.mxu0 0.0
        %3693 = vmatprep.subr.mxu0 0.0
        %3694 = vmatpush1.msra.mxu0 0.0
        %3695 = vmatprep.subr.mxu0 0.0
        %3696 = vmatpush1.msra.mxu0 0.0
        %3697 = vmatprep.subr.mxu0 0.0
        %3698 = vmatpush1.msra.mxu0 0.0
        %3699 = vmatprep.subr.mxu0 0.0
        %3700 = vmatpush1.msra.mxu0 0.0
        %3701 = vmatprep.subr.mxu0 0.0
        %3702 = vmatpush1.msra.mxu0 0.0
        %3703 = vmatprep.subr.mxu0 0.0
        %3704 = vmatpush1.msra.mxu0 0.0
        %3705 = vmatprep.mubr.f32.mxu0 0.0
        %v3706 = vand.u32 %v3635, 4294901760
        %v3707 = vsub.f32 %v3635, %v3706
        %v3708 = vand.u32 %v3707, 4294901760
        %v3709 = vsub.f32 %v3707, %v3708
        %v3710 = vand.u32 %v3709, 4294901760
        %3711 = vmatmul.mubr.f32.gmra.mrb[0].mxu0 %v3710
        %v3712 = vpop.f32.mrb[0].mxu0
        %v3713 = vadd.f32 0.0, %v3712
        %v3714 = vpop.f32.mrb[0].mxu0
        %3715 = vdwg.mxu0
        %3716 = vmatprep.subr.mxu0 0.0
        %v3717 = vand.u32 %v3638, 4294901760
        %v3718 = vsub.f32 %v3638, %v3717
        %v3719 = vand.u32 %v3718, 4294901760
        %v3720 = vsub.f32 %v3718, %v3719
        %v3721 = vand.u32 %v3720, 4294901760
        %3722 = vmatpush1.msra.mxu0 %v3721
        %3723 = vmatprep.subr.mxu0 0.0
        %3724 = vmatpush1.msra.mxu0 0.0
        %3725 = vmatprep.subr.mxu0 0.0
        %3726 = vmatpush1.msra.mxu0 0.0
        %3727 = vmatprep.subr.mxu0 0.0
        %3728 = vmatpush1.msra.mxu0 0.0
        %3729 = vmatprep.subr.mxu0 0.0
        %3730 = vmatpush1.msra.mxu0 0.0
        %3731 = vmatprep.subr.mxu0 0.0
        %3732 = vmatpush1.msra.mxu0 0.0
        %3733 = vmatprep.subr.mxu0 0.0
        %3734 = vmatpush1.msra.mxu0 0.0
        %3735 = vmatprep.subr.mxu0 0.0
        %3736 = vmatpush1.msra.mxu0 0.0
        %3737 = vmatprep.subr.mxu0 0.0
        %3738 = vmatpush1.msra.mxu0 0.0
        %3739 = vmatprep.subr.mxu0 0.0
        %3740 = vmatpush1.msra.mxu0 0.0
        %3741 = vmatprep.subr.mxu0 0.0
        %3742 = vmatpush1.msra.mxu0 0.0
        %3743 = vmatprep.subr.mxu0 0.0
        %3744 = vmatpush1.msra.mxu0 0.0
        %3745 = vmatprep.subr.mxu0 0.0
        %3746 = vmatpush1.msra.mxu0 0.0
        %3747 = vmatprep.subr.mxu0 0.0
        %3748 = vmatpush1.msra.mxu0 0.0
        %3749 = vmatprep.subr.mxu0 0.0
        %3750 = vmatpush1.msra.mxu0 0.0
        %3751 = vmatprep.subr.mxu0 0.0
        %3752 = vmatpush1.msra.mxu0 0.0
        %3753 = vmatprep.subr.mxu0 0.0
        %3754 = vmatpush1.msra.mxu0 0.0
        %3755 = vmatprep.subr.mxu0 0.0
        %3756 = vmatpush1.msra.mxu0 0.0
        %3757 = vmatprep.subr.mxu0 0.0
        %3758 = vmatpush1.msra.mxu0 0.0
        %3759 = vmatprep.subr.mxu0 0.0
        %3760 = vmatpush1.msra.mxu0 0.0
        %3761 = vmatprep.subr.mxu0 0.0
        %3762 = vmatpush1.msra.mxu0 0.0
        %3763 = vmatprep.subr.mxu0 0.0
        %3764 = vmatpush1.msra.mxu0 0.0
        %3765 = vmatprep.subr.mxu0 0.0
        %3766 = vmatpush1.msra.mxu0 0.0
        %3767 = vmatprep.subr.mxu0 0.0
        %3768 = vmatpush1.msra.mxu0 0.0
        %3769 = vmatprep.subr.mxu0 0.0
        %3770 = vmatpush1.msra.mxu0 0.0
        %3771 = vmatprep.subr.mxu0 0.0
        %3772 = vmatpush1.msra.mxu0 0.0
        %3773 = vmatprep.subr.mxu0 0.0
        %3774 = vmatpush1.msra.mxu0 0.0
        %3775 = vmatprep.subr.mxu0 0.0
        %3776 = vmatpush1.msra.mxu0 0.0
        %3777 = vmatprep.subr.mxu0 0.0
        %3778 = vmatpush1.msra.mxu0 0.0
        %3779 = vmatprep.subr.mxu0 0.0
        %3780 = vmatpush1.msra.mxu0 0.0
        %3781 = vmatprep.subr.mxu0 0.0
        %3782 = vmatpush1.msra.mxu0 0.0
        %3783 = vmatprep.subr.mxu0 0.0
        %3784 = vmatpush1.msra.mxu0 0.0
        %3785 = vmatprep.mubr.f32.mxu0 0.0
        %v3786 = vand.u32 %v3635, 4294901760
        %3787 = vmatmul.mubr.f32.gmra.mrb[0].mxu0 %v3786
        %v3788 = vpop.f32.mrb[0].mxu0
        %v3789 = vadd.f32 %v3713, %v3788
        %v3790 = vpop.f32.mrb[0].mxu0
        %3791 = vdwg.mxu0
        %3792 = vmatprep.subr.mxu0 0.0
        %v3793 = vand.u32 %v3638, 4294901760
        %v3794 = vsub.f32 %v3638, %v3793
        %3795 = vmatpush1.msra.mxu0 %v3794
        %3796 = vmatprep.subr.mxu0 0.0
        %3797 = vmatpush1.msra.mxu0 0.0
        %3798 = vmatprep.subr.mxu0 0.0
        %3799 = vmatpush1.msra.mxu0 0.0
        %3800 = vmatprep.subr.mxu0 0.0
        %3801 = vmatpush1.msra.mxu0 0.0
        %3802 = vmatprep.subr.mxu0 0.0
        %3803 = vmatpush1.msra.mxu0 0.0
        %3804 = vmatprep.subr.mxu0 0.0
        %3805 = vmatpush1.msra.mxu0 0.0
        %3806 = vmatprep.subr.mxu0 0.0
        %3807 = vmatpush1.msra.mxu0 0.0
        %3808 = vmatprep.subr.mxu0 0.0
        %3809 = vmatpush1.msra.mxu0 0.0
        %3810 = vmatprep.subr.mxu0 0.0
        %3811 = vmatpush1.msra.mxu0 0.0
        %3812 = vmatprep.subr.mxu0 0.0
        %3813 = vmatpush1.msra.mxu0 0.0
        %3814 = vmatprep.subr.mxu0 0.0
        %3815 = vmatpush1.msra.mxu0 0.0
        %3816 = vmatprep.subr.mxu0 0.0
        %3817 = vmatpush1.msra.mxu0 0.0
        %3818 = vmatprep.subr.mxu0 0.0
        %3819 = vmatpush1.msra.mxu0 0.0
        %3820 = vmatprep.subr.mxu0 0.0
        %3821 = vmatpush1.msra.mxu0 0.0
        %3822 = vmatprep.subr.mxu0 0.0
        %3823 = vmatpush1.msra.mxu0 0.0
        %3824 = vmatprep.subr.mxu0 0.0
        %3825 = vmatpush1.msra.mxu0 0.0
        %3826 = vmatprep.subr.mxu0 0.0
        %3827 = vmatpush1.msra.mxu0 0.0
        %3828 = vmatprep.subr.mxu0 0.0
        %3829 = vmatpush1.msra.mxu0 0.0
        %3830 = vmatprep.subr.mxu0 0.0
        %3831 = vmatpush1.msra.mxu0 0.0
        %3832 = vmatprep.subr.mxu0 0.0
        %3833 = vmatpush1.msra.mxu0 0.0
        %3834 = vmatprep.subr.mxu0 0.0
        %3835 = vmatpush1.msra.mxu0 0.0
        %3836 = vmatprep.subr.mxu0 0.0
        %3837 = vmatpush1.msra.mxu0 0.0
        %3838 = vmatprep.subr.mxu0 0.0
        %3839 = vmatpush1.msra.mxu0 0.0
        %3840 = vmatprep.subr.mxu0 0.0
        %3841 = vmatpush1.msra.mxu0 0.0
        %3842 = vmatprep.subr.mxu0 0.0
        %3843 = vmatpush1.msra.mxu0 0.0
        %3844 = vmatprep.subr.mxu0 0.0
        %3845 = vmatpush1.msra.mxu0 0.0
        %3846 = vmatprep.subr.mxu0 0.0
        %3847 = vmatpush1.msra.mxu0 0.0
        %3848 = vmatprep.subr.mxu0 0.0
        %3849 = vmatpush1.msra.mxu0 0.0
        %3850 = vmatprep.subr.mxu0 0.0
        %3851 = vmatpush1.msra.mxu0 0.0
        %3852 = vmatprep.subr.mxu0 0.0
        %3853 = vmatpush1.msra.mxu0 0.0
        %3854 = vmatprep.subr.mxu0 0.0
        %3855 = vmatpush1.msra.mxu0 0.0
        %3856 = vmatprep.subr.mxu0 0.0
        %3857 = vmatpush1.msra.mxu0 0.0
        %3858 = vmatprep.mubr.f32.mxu0 0.0
        %v3859 = vand.u32 %v3635, 4294901760
        %v3860 = vsub.f32 %v3635, %v3859
        %3861 = vmatmul.mubr.f32.gmra.mrb[0].mxu0 %v3860
        %v3862 = vpop.f32.mrb[0].mxu0
        %v3863 = vadd.f32 %v3789, %v3862
        %v3864 = vpop.f32.mrb[0].mxu0
        %3865 = vdwg.mxu0
        %3866 = vmatprep.subr.mxu0 0.0
        %v3867 = vand.u32 %v3638, 4294901760
        %3868 = vmatpush1.msra.mxu0 %v3867
        %3869 = vmatprep.subr.mxu0 0.0
        %3870 = vmatpush1.msra.mxu0 0.0
        %3871 = vmatprep.subr.mxu0 0.0
        %3872 = vmatpush1.msra.mxu0 0.0
        %3873 = vmatprep.subr.mxu0 0.0
        %3874 = vmatpush1.msra.mxu0 0.0
        %3875 = vmatprep.subr.mxu0 0.0
        %3876 = vmatpush1.msra.mxu0 0.0
        %3877 = vmatprep.subr.mxu0 0.0
        %3878 = vmatpush1.msra.mxu0 0.0
        %3879 = vmatprep.subr.mxu0 0.0
        %3880 = vmatpush1.msra.mxu0 0.0
        %3881 = vmatprep.subr.mxu0 0.0
        %3882 = vmatpush1.msra.mxu0 0.0
        %3883 = vmatprep.subr.mxu0 0.0
        %3884 = vmatpush1.msra.mxu0 0.0
        %3885 = vmatprep.subr.mxu0 0.0
        %3886 = vmatpush1.msra.mxu0 0.0
        %3887 = vmatprep.subr.mxu0 0.0
        %3888 = vmatpush1.msra.mxu0 0.0
        %3889 = vmatprep.subr.mxu0 0.0
        %3890 = vmatpush1.msra.mxu0 0.0
        %3891 = vmatprep.subr.mxu0 0.0
        %3892 = vmatpush1.msra.mxu0 0.0
        %3893 = vmatprep.subr.mxu0 0.0
        %3894 = vmatpush1.msra.mxu0 0.0
        %3895 = vmatprep.subr.mxu0 0.0
        %3896 = vmatpush1.msra.mxu0 0.0
        %3897 = vmatprep.subr.mxu0 0.0
        %3898 = vmatpush1.msra.mxu0 0.0
        %3899 = vmatprep.subr.mxu0 0.0
        %3900 = vmatpush1.msra.mxu0 0.0
        %3901 = vmatprep.subr.mxu0 0.0
        %3902 = vmatpush1.msra.mxu0 0.0
        %3903 = vmatprep.subr.mxu0 0.0
        %3904 = vmatpush1.msra.mxu0 0.0
        %3905 = vmatprep.subr.mxu0 0.0
        %3906 = vmatpush1.msra.mxu0 0.0
        %3907 = vmatprep.subr.mxu0 0.0
        %3908 = vmatpush1.msra.mxu0 0.0
        %3909 = vmatprep.subr.mxu0 0.0
        %3910 = vmatpush1.msra.mxu0 0.0
        %3911 = vmatprep.subr.mxu0 0.0
        %3912 = vmatpush1.msra.mxu0 0.0
        %3913 = vmatprep.subr.mxu0 0.0
        %3914 = vmatpush1.msra.mxu0 0.0
        %3915 = vmatprep.subr.mxu0 0.0
        %3916 = vmatpush1.msra.mxu0 0.0
        %3917 = vmatprep.subr.mxu0 0.0
        %3918 = vmatpush1.msra.mxu0 0.0
        %3919 = vmatprep.subr.mxu0 0.0
        %3920 = vmatpush1.msra.mxu0 0.0
        %3921 = vmatprep.subr.mxu0 0.0
        %3922 = vmatpush1.msra.mxu0 0.0
        %3923 = vmatprep.subr.mxu0 0.0
        %3924 = vmatpush1.msra.mxu0 0.0
        %3925 = vmatprep.subr.mxu0 0.0
        %3926 = vmatpush1.msra.mxu0 0.0
        %3927 = vmatprep.subr.mxu0 0.0
        %3928 = vmatpush1.msra.mxu0 0.0
        %3929 = vmatprep.subr.mxu0 0.0
        %3930 = vmatpush1.msra.mxu0 0.0
        %3931 = vmatprep.mubr.f32.mxu0 0.0
        %v3932 = vand.u32 %v3635, 4294901760
        %v3933 = vsub.f32 %v3635, %v3932
        %v3934 = vand.u32 %v3933, 4294901760
        %3935 = vmatmul.mubr.f32.gmra.mrb[0].mxu0 %v3934
        %v3936 = vpop.f32.mrb[0].mxu0
        %v3937 = vadd.f32 %v3863, %v3936
        %v3938 = vpop.f32.mrb[0].mxu0
        %3939 = vdwg.mxu0
        %3940 = vmatprep.subr.mxu0 0.0
        %v3941 = vand.u32 %v3638, 4294901760
        %v3942 = vsub.f32 %v3638, %v3941
        %v3943 = vand.u32 %v3942, 4294901760
        %3944 = vmatpush1.msra.mxu0 %v3943
        %3945 = vmatprep.subr.mxu0 0.0
        %3946 = vmatpush1.msra.mxu0 0.0
        %3947 = vmatprep.subr.mxu0 0.0
        %3948 = vmatpush1.msra.mxu0 0.0
        %3949 = vmatprep.subr.mxu0 0.0
        %3950 = vmatpush1.msra.mxu0 0.0
        %3951 = vmatprep.subr.mxu0 0.0
        %3952 = vmatpush1.msra.mxu0 0.0
        %3953 = vmatprep.subr.mxu0 0.0
        %3954 = vmatpush1.msra.mxu0 0.0
        %3955 = vmatprep.subr.mxu0 0.0
        %3956 = vmatpush1.msra.mxu0 0.0
        %3957 = vmatprep.subr.mxu0 0.0
        %3958 = vmatpush1.msra.mxu0 0.0
        %3959 = vmatprep.subr.mxu0 0.0
        %3960 = vmatpush1.msra.mxu0 0.0
        %3961 = vmatprep.subr.mxu0 0.0
        %3962 = vmatpush1.msra.mxu0 0.0
        %3963 = vmatprep.subr.mxu0 0.0
        %3964 = vmatpush1.msra.mxu0 0.0
        %3965 = vmatprep.subr.mxu0 0.0
        %3966 = vmatpush1.msra.mxu0 0.0
        %3967 = vmatprep.subr.mxu0 0.0
        %3968 = vmatpush1.msra.mxu0 0.0
        %3969 = vmatprep.subr.mxu0 0.0
        %3970 = vmatpush1.msra.mxu0 0.0
        %3971 = vmatprep.subr.mxu0 0.0
        %3972 = vmatpush1.msra.mxu0 0.0
        %3973 = vmatprep.subr.mxu0 0.0
        %3974 = vmatpush1.msra.mxu0 0.0
        %3975 = vmatprep.subr.mxu0 0.0
        %3976 = vmatpush1.msra.mxu0 0.0
        %3977 = vmatprep.subr.mxu0 0.0
        %3978 = vmatpush1.msra.mxu0 0.0
        %3979 = vmatprep.subr.mxu0 0.0
        %3980 = vmatpush1.msra.mxu0 0.0
        %3981 = vmatprep.subr.mxu0 0.0
        %3982 = vmatpush1.msra.mxu0 0.0
        %3983 = vmatprep.subr.mxu0 0.0
        %3984 = vmatpush1.msra.mxu0 0.0
        %3985 = vmatprep.subr.mxu0 0.0
        %3986 = vmatpush1.msra.mxu0 0.0
        %3987 = vmatprep.subr.mxu0 0.0
        %3988 = vmatpush1.msra.mxu0 0.0
        %3989 = vmatprep.subr.mxu0 0.0
        %3990 = vmatpush1.msra.mxu0 0.0
        %3991 = vmatprep.subr.mxu0 0.0
        %3992 = vmatpush1.msra.mxu0 0.0
        %3993 = vmatprep.subr.mxu0 0.0
        %3994 = vmatpush1.msra.mxu0 0.0
        %3995 = vmatprep.subr.mxu0 0.0
        %3996 = vmatpush1.msra.mxu0 0.0
        %3997 = vmatprep.subr.mxu0 0.0
        %3998 = vmatpush1.msra.mxu0 0.0
        %3999 = vmatprep.subr.mxu0 0.0
        %4000 = vmatpush1.msra.mxu0 0.0
        %4001 = vmatprep.subr.mxu0 0.0
        %4002 = vmatpush1.msra.mxu0 0.0
        %4003 = vmatprep.subr.mxu0 0.0
        %4004 = vmatpush1.msra.mxu0 0.0
        %4005 = vmatprep.subr.mxu0 0.0
        %4006 = vmatpush1.msra.mxu0 0.0
        %4007 = vmatprep.mubr.f32.mxu0 0.0
        %v4008 = vand.u32 %v3635, 4294901760
        %4009 = vmatmul.mubr.f32.gmra.mrb[0].mxu0 %v4008
        %v4010 = vpop.f32.mrb[0].mxu0
        %v4011 = vadd.f32 %v3937, %v4010
        %v4012 = vpop.f32.mrb[0].mxu0
        %4013 = vdwg.mxu0
        %4014 = vmatprep.subr.mxu0 0.0
        %v4015 = vand.u32 %v3638, 4294901760
        %4016 = vmatpush1.msra.mxu0 %v4015
        %4017 = vmatprep.subr.mxu0 0.0
        %4018 = vmatpush1.msra.mxu0 0.0
        %4019 = vmatprep.subr.mxu0 0.0
        %4020 = vmatpush1.msra.mxu0 0.0
        %4021 = vmatprep.subr.mxu0 0.0
        %4022 = vmatpush1.msra.mxu0 0.0
        %4023 = vmatprep.subr.mxu0 0.0
        %4024 = vmatpush1.msra.mxu0 0.0
        %4025 = vmatprep.subr.mxu0 0.0
        %4026 = vmatpush1.msra.mxu0 0.0
        %4027 = vmatprep.subr.mxu0 0.0
        %4028 = vmatpush1.msra.mxu0 0.0
        %4029 = vmatprep.subr.mxu0 0.0
        %4030 = vmatpush1.msra.mxu0 0.0
        %4031 = vmatprep.subr.mxu0 0.0
        %4032 = vmatpush1.msra.mxu0 0.0
        %4033 = vmatprep.subr.mxu0 0.0
        %4034 = vmatpush1.msra.mxu0 0.0
        %4035 = vmatprep.subr.mxu0 0.0
        %4036 = vmatpush1.msra.mxu0 0.0
        %4037 = vmatprep.subr.mxu0 0.0
        %4038 = vmatpush1.msra.mxu0 0.0
        %4039 = vmatprep.subr.mxu0 0.0
        %4040 = vmatpush1.msra.mxu0 0.0
        %4041 = vmatprep.subr.mxu0 0.0
        %4042 = vmatpush1.msra.mxu0 0.0
        %4043 = vmatprep.subr.mxu0 0.0
        %4044 = vmatpush1.msra.mxu0 0.0
        %4045 = vmatprep.subr.mxu0 0.0
        %4046 = vmatpush1.msra.mxu0 0.0
        %4047 = vmatprep.subr.mxu0 0.0
        %4048 = vmatpush1.msra.mxu0 0.0
        %4049 = vmatprep.subr.mxu0 0.0
        %4050 = vmatpush1.msra.mxu0 0.0
        %4051 = vmatprep.subr.mxu0 0.0
        %4052 = vmatpush1.msra.mxu0 0.0
        %4053 = vmatprep.subr.mxu0 0.0
        %4054 = vmatpush1.msra.mxu0 0.0
        %4055 = vmatprep.subr.mxu0 0.0
        %4056 = vmatpush1.msra.mxu0 0.0
        %4057 = vmatprep.subr.mxu0 0.0
        %4058 = vmatpush1.msra.mxu0 0.0
        %4059 = vmatprep.subr.mxu0 0.0
        %4060 = vmatpush1.msra.mxu0 0.0
        %4061 = vmatprep.subr.mxu0 0.0
        %4062 = vmatpush1.msra.mxu0 0.0
        %4063 = vmatprep.subr.mxu0 0.0
        %4064 = vmatpush1.msra.mxu0 0.0
        %4065 = vmatprep.subr.mxu0 0.0
        %4066 = vmatpush1.msra.mxu0 0.0
        %4067 = vmatprep.subr.mxu0 0.0
        %4068 = vmatpush1.msra.mxu0 0.0
        %4069 = vmatprep.subr.mxu0 0.0
        %4070 = vmatpush1.msra.mxu0 0.0
        %4071 = vmatprep.subr.mxu0 0.0
        %4072 = vmatpush1.msra.mxu0 0.0
        %4073 = vmatprep.subr.mxu0 0.0
        %4074 = vmatpush1.msra.mxu0 0.0
        %4075 = vmatprep.subr.mxu0 0.0
        %4076 = vmatpush1.msra.mxu0 0.0
        %4077 = vmatprep.subr.mxu0 0.0
        %4078 = vmatpush1.msra.mxu0 0.0
        %4079 = vmatprep.mubr.f32.mxu0 0.0
        %v4080 = vand.u32 %v3635, 4294901760
        %4081 = vmatmul.mubr.f32.gmra.mrb[0].mxu0 %v4080
        %v4082 = vpop.f32.mrb[0].mxu0
        %v4083 = vadd.f32 %v4011, %v4082
        %v4084 = vpop.f32.mrb[0].mxu0
        %4085 = vdwg.mxu0
        %v4086 = vmul.f32 %v4083, 0.00390625
        %v4087 = vmul.f32 %v4086, %v4086
        %4089 = vrot.lane.b32.xlu0 %v4087, 1
        %v4090 = vpop.permute.xlu0 %4089
        %v4092 = vsub.f32 %v4086, %v4090
        %v4093 = vmax.f32 %v4092, 0.0
        %v4094 = vadd.f32 %v4093, 1e-05
        %v4095 = vrsqrt.pop %v4094
        %4097 = vrot.lane.b32.xlu0 %v4095, 127
        %v4098 = vpop.permute.xlu0 %4097
        %v4100 = vmul.f32 %v3165, %v4098
        %v4101 = vmul.f32 %v4086, %v4100
        %v4102 = vsub.f32 %v3166, %v4101
        %4104 = vset.pattern.permute.xlu0 0
        %4105 = vperm.xlu0 %4104, %v4100
        %v4106 = vpop.permute.xlu0 %4105
        %v4108 = vmul.f32 %v3161, %v4106
        %v4109 = vmul.f32 %v3163, %v4106
        %4111 = vset.pattern.permute.xlu0 0
        %4112 = vperm.xlu0 %4111, %v4102
        %v4113 = vpop.permute.xlu0 %4112
        %v4115 = vadd.f32 %v4108, %v4113
        %v4116 = vadd.f32 %v4109, %v4113
        %v4118 = vadd.f32 %v4115, %v598
        %v4119 = vadd.f32 %v4116, %v617
        %v4122 = vcombine.low %v4118, %v4119
        %4124 = vst [vmem:[%s541] sm:$0xff] %v4122
        %s4125 = sand.u32 %s401, 1
        %s4126 = scalar_lea.sflag [#allocation3], %s4125
        %s4127 = sand.u32 %s401, 1
        %s4128 = smul.addr %s4127, 8
        %s4129 = scalar_lea.vmem [#allocation2], %s4128
        // Predicated region
        $region89: #{tpu_custom_call.1} parent=87 // pred_check
          %p4130 = pneg %p411
        $region90: #{tpu_custom_call.1} parent=87 // pred_check_branch
          %4132 = sbr.rel (%p4130) target = $region92
        $region91: #{tpu_custom_call.1} parent=87 // pred_region
          %s4134 = ssub.s32 128, 128
          %4135 = vsyncadd %s4126, %s4134
          %s4136 = smul.addr %s31, 2
          %s4137 = smul.addr %s4136, 64
          %s4138 = scalar_lea.hbm %s17, %s4137
          %s4140 = sshll.u32 %s4129, 4
          %s4141 = int_to_ptr.vmem [resolvable:$true] %s4140
          %4143 = dma.vmem_to_hbm [thread:$0]  %s4141, 128, %s4138, %s4126
        $region92: #{tpu_custom_call.1} parent=87 // pred_fallthru
          _
      $region88: #{tpu_custom_call.1} parent=5 // pred_fallthru
        _
      %p4144 = scmp.le.s32.totalorder 2, %s26
      // Predicated region
      $region93: #{tpu_custom_call.1} parent=5 // pred_check
        %p4145 = pneg %p4144
      $region94: #{tpu_custom_call.1} parent=5 // pred_check_branch
        %4147 = sbr.rel (%p4145) target = $region96
      $region95: #{tpu_custom_call.1} parent=5 // pred_region
        %s4148 = ssub.s32 %s26, 2
        // Predicated region
        $region97: #{tpu_custom_call.1} parent=95 // pred_check
          %p4149 = pneg %p417
        $region98: #{tpu_custom_call.1} parent=95 // pred_check_branch
          %4151 = sbr.rel (%p4149) target = $region100
        $region99: #{tpu_custom_call.1} parent=95 // pred_region
          %s4152 = sand.u32 %s402, 1
          %s4153 = scalar_lea.sflag [#allocation3], %s4152
          %s4154 = sand.u32 %s402, 1
          %s4155 = smul.addr %s4154, 8
          %s4156 = scalar_lea.vmem [#allocation2], %s4155
          %4157 = dma.done %s4153, 128
        $region100: #{tpu_custom_call.1} parent=95 // pred_fallthru
          _
      $region96: #{tpu_custom_call.1} parent=5 // pred_fallthru
        _
    $region6: #{tpu_custom_call.1} parent=1 // loop_footer
      %s30 = sadd.s32 1, %s26
    $region7: #{tpu_custom_call.1} parent=1 // loop_footer_branch
      %25 = sbr.rel target = $region3
    $region8: #{tpu_custom_call.1} parent=1 // loop_exit
      _
    %4158 = vsyncpa [#allocation3], 1
    %s4159 = scalar_lea.sflag [#allocation3], 1
    %4160 = vsyncpa %s4159, 1

// kernel: tpu_custom_call.1
$region0: #{tpu_custom_call.1}
  #allocation0 [shape = 'u32[]', space=smem, size = 0x4, offset = 0x4, fixed_abs, tag = 'smem constant byte address 0x4 - core index']
  #allocation1 [shape = 'u32[144,128]{1,0:T(1,128)}', space=vmem, size = 0x12000, scoped, tag = 'internal scratch']
  %s0 = inlined_call_operand.vmem [shape: f32[2,4,256], index: 0, kind: input, shape index: {}]
  %s1 = inlined_call_operand.vmem [shape: f32[12,4], index: 1, kind: input, shape index: {}]
  %s2 = inlined_call_operand.vmem [shape: f32[12,1], index: 2, kind: input, shape index: {}]
  %s3 = inlined_call_operand.vmem [shape: f32[12,1], index: 3, kind: input, shape index: {}]
  %s4 = inlined_call_operand.vmem [shape: f32[12,1], index: 4, kind: input, shape index: {}]
  %s5 = inlined_call_operand.vmem [shape: f32[12,9], index: 5, kind: input, shape index: {}]
  %s6 = inlined_call_operand.vmem [shape: f32[12,1], index: 6, kind: input, shape index: {}]
  %s7 = inlined_call_operand.vmem [shape: f32[12,1], index: 7, kind: input, shape index: {}]
  %s8 = inlined_call_operand.vmem [shape: f32[12,1], index: 8, kind: input, shape index: {}]
  %s9 = inlined_call_operand.vmem [shape: f32[4,12], index: 9, kind: input, shape index: {}]
  %s10 = inlined_call_operand.vmem [shape: f32[4,1], index: 10, kind: input, shape index: {}]
  %s11 = inlined_call_operand.vmem [shape: f32[4,1], index: 11, kind: input, shape index: {}]
  %s12 = inlined_call_operand.vmem [shape: f32[4,1], index: 12, kind: input, shape index: {}]
  %s13 = inlined_call_operand.vmem [shape: f32[4,12], index: 13, kind: input, shape index: {}]
  %s14 = inlined_call_operand.vmem [shape: f32[12,4], index: 14, kind: input, shape index: {}]
  %s15 = inlined_call_operand.vmem [shape: f32[4,4], index: 15, kind: input, shape index: {}]
  %s16 = inlined_call_operand.vmem [shape: f32[4,4], index: 16, kind: input, shape index: {}]
  %s17 = inlined_call_operand.hbm [shape: f32[2,4,256], index: 17, kind: output, shape index: {}]
  %s18 = sld [smem:[#allocation0]]
  $region101: #{tpu_custom_call.1} parent=0
    _
  %s20 = ssub.s32 1, %s18
  %s21 = scalar_select 0, %s20, %s18
  $region1: #{tpu_custom_call.1} parent=0
    #allocation2 [shape = 'u8[8192]{0}', space=vmem, size = 0x2000, scoped, tag = 'output window, operand 0']
    #allocation3 [shape = 's32[2]{0}', space=sflag, size = 0x8, scoped, tag = 'scoped memory for tpu_custom_call.1']
    %22 = vsyncpa [#allocation3], 0
    %s23 = scalar_lea.sflag [#allocation3], 1
    %24 = vsyncpa %s23, 0
    loop: start=0, step=1, limit=4
    $region2: #{tpu_custom_call.1} parent=1 // loop_pre_header
      _
    $region3: #{tpu_custom_call.1} parent=1 // loop_header
      %s26 = sphi 0, %s30
      %p27 = scmp.ge.s32.totalorder %s26, 4
      %s36 = sphi 0, %s38
      %s39 = sphi 0, %s36
      %s40 = sphi 0, %s39
      %s56 = sphi 0, %s40
      %s60 = sphi 0, %s60
      %s62 = sphi 0, %s60
      %s63 = sphi 0, %s62
      %s77 = sphi 0, %s63
      %s81 = sphi 0, %s81
      %s83 = sphi 0, %s81
      %s84 = sphi 0, %s83
      %s98 = sphi 0, %s84
      %s102 = sphi 0, %s102
      %s104 = sphi 0, %s102
      %s105 = sphi 0, %s104
      %s119 = sphi 0, %s105
      %s123 = sphi 0, %s123
      %s125 = sphi 0, %s123
      %s126 = sphi 0, %s125
      %s140 = sphi 0, %s126
      %s144 = sphi 0, %s144
      %s146 = sphi 0, %s144
      %s147 = sphi 0, %s146
      %s161 = sphi 0, %s147
      %s165 = sphi 0, %s165
      %s167 = sphi 0, %s165
      %s168 = sphi 0, %s167
      %s182 = sphi 0, %s168
      %s186 = sphi 0, %s186
      %s188 = sphi 0, %s186
      %s189 = sphi 0, %s188
      %s203 = sphi 0, %s189
      %s207 = sphi 0, %s207
      %s209 = sphi 0, %s207
      %s210 = sphi 0, %s209
      %s224 = sphi 0, %s210
      %s228 = sphi 0, %s228
      %s230 = sphi 0, %s228
      %s231 = sphi 0, %s230
      %s245 = sphi 0, %s231
      %s249 = sphi 0, %s249
      %s251 = sphi 0, %s249
      %s252 = sphi 0, %s251
      %s266 = sphi 0, %s252
      %s270 = sphi 0, %s270
      %s272 = sphi 0, %s270
      %s273 = sphi 0, %s272
      %s287 = sphi 0, %s273
      %s291 = sphi 0, %s291
      %s293 = sphi 0, %s291
      %s294 = sphi 0, %s293
      %s308 = sphi 0, %s294
      %s312 = sphi 0, %s312
      %s314 = sphi 0, %s312
      %s315 = sphi 0, %s314
      %s329 = sphi 0, %s315
      %s333 = sphi 0, %s333
      %s335 = sphi 0, %s333
      %s336 = sphi 0, %s335
      %s350 = sphi 0, %s336
      %s354 = sphi 0, %s354
      %s356 = sphi 0, %s354
      %s357 = sphi 0, %s356
      %s371 = sphi 0, %s357
      %s375 = sphi 0, %s375
      %s377 = sphi 0, %s375
      %s378 = sphi 0, %s377
      %s392 = sphi 0, %s378
      %s398 = sphi 0, %s400
      %s401 = sphi 0, %s398
      %s402 = sphi 0, %s401
      %s418 = sphi 0, %s402
    $region4: #{tpu_custom_call.1} parent=1 // loop_header_branch
      %29 = sbr.rel (%p27) target = $region8
    $region5: #{tpu_custom_call.1} parent=1 // loop_body
      %s31 = ssub.s32 %s26, 1
      %s32 = ssub.s32 %s26, 2
      %s33 = sadd.s32 %s26, 1
      %s34 = ssub.s32 %s26, %s33
      %p35 = scmp.eq.s32.totalorder %s34, 0
      %s37 = sadd.s32 %s36, 1
      %s38 = scalar_select %p35, %s36, %s37
      %p41 = pneg %p35
      %p42 = scmp.eq.s32.totalorder %s26, 1
      %p43 = por %p41, %p42
      %p44 = scmp.ne.s32.totalorder %s36, %s39
      %p45 = scmp.eq.s32.totalorder %s26, 0
      %p46 = por %p44, %p45
      %p47 = scmp.ne.s32.totalorder %s36, %s39
      %p48 = scmp.eq.s32.totalorder %s31, 1
      %p49 = por %p47, %p48
      %p50 = scmp.ne.s32.totalorder %s39, %s40
      %p51 = scmp.eq.s32.totalorder %s31, 0
      %p52 = por %p50, %p51
      %p53 = scmp.ne.s32.totalorder %s39, %s40
      %p54 = scmp.eq.s32.totalorder %s32, 1
      %p55 = por %p53, %p54
      %p57 = scmp.ne.s32.totalorder %s40, %s56
      %p58 = scmp.eq.s32.totalorder %s32, 0
      %p59 = por %p57, %p58
      %s61 = sadd.s32 %s60, 1
      %p64 = scmp.eq.s32.totalorder %s26, 1
      %p65 = scmp.ne.s32.totalorder %s60, %s62
      %p66 = scmp.eq.s32.totalorder %s26, 0
      %p67 = por %p65, %p66
      %p68 = scmp.ne.s32.totalorder %s60, %s62
      %p69 = scmp.eq.s32.totalorder %s31, 1
      %p70 = por %p68, %p69
      %p71 = scmp.ne.s32.totalorder %s62, %s63
      %p72 = scmp.eq.s32.totalorder %s31, 0
      %p73 = por %p71, %p72
      %p74 = scmp.ne.s32.totalorder %s62, %s63
      %p75 = scmp.eq.s32.totalorder %s32, 1
      %p76 = por %p74, %p75
      %p78 = scmp.ne.s32.totalorder %s63, %s77
      %p79 = scmp.eq.s32.totalorder %s32, 0
      %p80 = por %p78, %p79
      %s82 = sadd.s32 %s81, 1
      %p85 = scmp.eq.s32.totalorder %s26, 1
      %p86 = scmp.ne.s32.totalorder %s81, %s83
      %p87 = scmp.eq.s32.totalorder %s26, 0
      %p88 = por %p86, %p87
      %p89 = scmp.ne.s32.totalorder %s81, %s83
      %p90 = scmp.eq.s32.totalorder %s31, 1
      %p91 = por %p89, %p90
      %p92 = scmp.ne.s32.totalorder %s83, %s84
      %p93 = scmp.eq.s32.totalorder %s31, 0
      %p94 = por %p92, %p93
      %p95 = scmp.ne.s32.totalorder %s83, %s84
      %p96 = scmp.eq.s32.totalorder %s32, 1
      %p97 = por %p95, %p96
      %p99 = scmp.ne.s32.totalorder %s84, %s98
      %p100 = scmp.eq.s32.totalorder %s32, 0
      %p101 = por %p99, %p100
      %s103 = sadd.s32 %s102, 1
      %p106 = scmp.eq.s32.totalorder %s26, 1
      %p107 = scmp.ne.s32.totalorder %s102, %s104
      %p108 = scmp.eq.s32.totalorder %s26, 0
      %p109 = por %p107, %p108
      %p110 = scmp.ne.s32.totalorder %s102, %s104
      %p111 = scmp.eq.s32.totalorder %s31, 1
      %p112 = por %p110, %p111
      %p113 = scmp.ne.s32.totalorder %s104, %s105
      %p114 = scmp.eq.s32.totalorder %s31, 0
      %p115 = por %p113, %p114
      %p116 = scmp.ne.s32.totalorder %s104, %s105
      %p117 = scmp.eq.s32.totalorder %s32, 1
      %p118 = por %p116, %p117
      %p120 = scmp.ne.s32.totalorder %s105, %s119
      %p121 = scmp.eq.s32.totalorder %s32, 0
      %p122 = por %p120, %p121
      %s124 = sadd.s32 %s123, 1
      %p127 = scmp.eq.s32.totalorder %s26, 1
      %p128 = scmp.ne.s32.totalorder %s123, %s125
      %p129 = scmp.eq.s32.totalorder %s26, 0
      %p130 = por %p128, %p129
      %p131 = scmp.ne.s32.totalorder %s123, %s125
      %p132 = scmp.eq.s32.totalorder %s31, 1
      %p133 = por %p131, %p132
      %p134 = scmp.ne.s32.totalorder %s125, %s126
      %p135 = scmp.eq.s32.totalorder %s31, 0
      %p136 = por %p134, %p135
      %p137 = scmp.ne.s32.totalorder %s125, %s126
      %p138 = scmp.eq.s32.totalorder %s32, 1
      %p139 = por %p137, %p138
      %p141 = scmp.ne.s32.totalorder %s126, %s140
      %p142 = scmp.eq.s32.totalorder %s32, 0
      %p143 = por %p141, %p142
      %s145 = sadd.s32 %s144, 1
      %p148 = scmp.eq.s32.totalorder %s26, 1
      %p149 = scmp.ne.s32.totalorder %s144, %s146
      %p150 = scmp.eq.s32.totalorder %s26, 0
      %p151 = por %p149, %p150
      %p152 = scmp.ne.s32.totalorder %s144, %s146
      %p153 = scmp.eq.s32.totalorder %s31, 1
      %p154 = por %p152, %p153
      %p155 = scmp.ne.s32.totalorder %s146, %s147
      %p156 = scmp.eq.s32.totalorder %s31, 0
      %p157 = por %p155, %p156
      %p158 = scmp.ne.s32.totalorder %s146, %s147
      %p159 = scmp.eq.s32.totalorder %s32, 1
      %p160 = por %p158, %p159
      %p162 = scmp.ne.s32.totalorder %s147, %s161
      %p163 = scmp.eq.s32.totalorder %s32, 0
      %p164 = por %p162, %p163
      %s166 = sadd.s32 %s165, 1
      %p169 = scmp.eq.s32.totalorder %s26, 1
      %p170 = scmp.ne.s32.totalorder %s165, %s167
      %p171 = scmp.eq.s32.totalorder %s26, 0
      %p172 = por %p170, %p171
      %p173 = scmp.ne.s32.totalorder %s165, %s167
      %p174 = scmp.eq.s32.totalorder %s31, 1
      %p175 = por %p173, %p174
      %p176 = scmp.ne.s32.totalorder %s167, %s168
      %p177 = scmp.eq.s32.totalorder %s31, 0
      %p178 = por %p176, %p177
      %p179 = scmp.ne.s32.totalorder %s167, %s168
      %p180 = scmp.eq.s32.totalorder %s32, 1
      %p181 = por %p179, %p180
      %p183 = scmp.ne.s32.totalorder %s168, %s182
      %p184 = scmp.eq.s32.totalorder %s32, 0
      %p185 = por %p183, %p184
      %s187 = sadd.s32 %s186, 1
      %p190 = scmp.eq.s32.totalorder %s26, 1
      %p191 = scmp.ne.s32.totalorder %s186, %s188
      %p192 = scmp.eq.s32.totalorder %s26, 0
      %p193 = por %p191, %p192
      %p194 = scmp.ne.s32.totalorder %s186, %s188
      %p195 = scmp.eq.s32.totalorder %s31, 1
      %p196 = por %p194, %p195
      %p197 = scmp.ne.s32.totalorder %s188, %s189
      %p198 = scmp.eq.s32.totalorder %s31, 0
      %p199 = por %p197, %p198
      %p200 = scmp.ne.s32.totalorder %s188, %s189
      %p201 = scmp.eq.s32.totalorder %s32, 1
      %p202 = por %p200, %p201
      %p204 = scmp.ne.s32.totalorder %s189, %s203
      %p205 = scmp.eq.s32.totalorder %s32, 0
      %p206 = por %p204, %p205
      %s208 = sadd.s32 %s207, 1
      %p211 = scmp.eq.s32.totalorder %s26, 1
      %p212 = scmp.ne.s32.totalorder %s207, %s209
      %p213 = scmp.eq.s32.totalorder %s26, 0
      %p214 = por %p212, %p213
      %p215 = scmp.ne.s32.totalorder %s207, %s209
      %p216 = scmp.eq.s32.totalorder %s31, 1
      %p217 = por %p215, %p216
      %p218 = scmp.ne.s32.totalorder %s209, %s210
      %p219 = scmp.eq.s32.totalorder %s31, 0
      %p220 = por %p218, %p219
      %p221 = scmp.ne.s32.totalorder %s209, %s210
      %p222 = scmp.eq.s32.totalorder %s32, 1
      %p223 = por %p221, %p222
      %p225 = scmp.ne.s32.totalorder %s210, %s224
      %p226 = scmp.eq.s32.totalorder %s32, 0
      %p227 = por %p225, %p226
      %s229 = sadd.s32 %s228, 1
      %p232 = scmp.eq.s32.totalorder %s26, 1
      %p233 = scmp.ne.s32.totalorder %s228, %s230
      %p234 = scmp.eq.s32.totalorder %s26, 0
      %p235 = por %p233, %p234
      %p236 = scmp.ne.s32.totalorder %s228, %s230
      %p237 = scmp.eq.s32.totalorder %s31, 1
      %p238 = por %p236, %p237
      %p239 = scmp.ne.s32.totalorder %s230, %s231
      %p240 = scmp.eq.s32.totalorder %s31, 0
      %p241 = por %p239, %p240
      %p242 = scmp.ne.s32.totalorder %s230, %s231
      %p243 = scmp.eq.s32.totalorder %s32, 1
      %p244 = por %p242, %p243
      %p246 = scmp.ne.s32.totalorder %s231, %s245
      %p247 = scmp.eq.s32.totalorder %s32, 0
      %p248 = por %p246, %p247
      %s250 = sadd.s32 %s249, 1
      %p253 = scmp.eq.s32.totalorder %s26, 1
      %p254 = scmp.ne.s32.totalorder %s249, %s251
      %p255 = scmp.eq.s32.totalorder %s26, 0
      %p256 = por %p254, %p255
      %p257 = scmp.ne.s32.totalorder %s249, %s251
      %p258 = scmp.eq.s32.totalorder %s31, 1
      %p259 = por %p257, %p258
      %p260 = scmp.ne.s32.totalorder %s251, %s252
      %p261 = scmp.eq.s32.totalorder %s31, 0
      %p262 = por %p260, %p261
      %p263 = scmp.ne.s32.totalorder %s251, %s252
      %p264 = scmp.eq.s32.totalorder %s32, 1
      %p265 = por %p263, %p264
      %p267 = scmp.ne.s32.totalorder %s252, %s266
      %p268 = scmp.eq.s32.totalorder %s32, 0
      %p269 = por %p267, %p268
      %s271 = sadd.s32 %s270, 1
      %p274 = scmp.eq.s32.totalorder %s26, 1
      %p275 = scmp.ne.s32.totalorder %s270, %s272
      %p276 = scmp.eq.s32.totalorder %s26, 0
      %p277 = por %p275, %p276
      %p278 = scmp.ne.s32.totalorder %s270, %s272
      %p279 = scmp.eq.s32.totalorder %s31, 1
      %p280 = por %p278, %p279
      %p281 = scmp.ne.s32.totalorder %s272, %s273
      %p282 = scmp.eq.s32.totalorder %s31, 0
      %p283 = por %p281, %p282
      %p284 = scmp.ne.s32.totalorder %s272, %s273
      %p285 = scmp.eq.s32.totalorder %s32, 1
      %p286 = por %p284, %p285
      %p288 = scmp.ne.s32.totalorder %s273, %s287
      %p289 = scmp.eq.s32.totalorder %s32, 0
      %p290 = por %p288, %p289
      %s292 = sadd.s32 %s291, 1
      %p295 = scmp.eq.s32.totalorder %s26, 1
      %p296 = scmp.ne.s32.totalorder %s291, %s293
      %p297 = scmp.eq.s32.totalorder %s26, 0
      %p298 = por %p296, %p297
      %p299 = scmp.ne.s32.totalorder %s291, %s293
      %p300 = scmp.eq.s32.totalorder %s31, 1
      %p301 = por %p299, %p300
      %p302 = scmp.ne.s32.totalorder %s293, %s294
      %p303 = scmp.eq.s32.totalorder %s31, 0
      %p304 = por %p302, %p303
      %p305 = scmp.ne.s32.totalorder %s293, %s294
      %p306 = scmp.eq.s32.totalorder %s32, 1
      %p307 = por %p305, %p306
      %p309 = scmp.ne.s32.totalorder %s294, %s308
      %p310 = scmp.eq.s32.totalorder %s32, 0
      %p311 = por %p309, %p310
      %s313 = sadd.s32 %s312, 1
      %p316 = scmp.eq.s32.totalorder %s26, 1
      %p317 = scmp.ne.s32.totalorder %s312, %s314
      %p318 = scmp.eq.s32.totalorder %s26, 0
      %p319 = por %p317, %p318
      %p320 = scmp.ne.s32.totalorder %s312, %s314
      %p321 = scmp.eq.s32.totalorder %s31, 1
      %p322 = por %p320, %p321
      %p323 = scmp.ne.s32.totalorder %s314, %s315
      %p324 = scmp.eq.s32.totalorder %s31, 0
      %p325 = por %p323, %p324
      %p326 = scmp.ne.s32.totalorder %s314, %s315
      %p327 = scmp.eq.s32.totalorder %s32, 1
      %p328 = por %p326, %p327
      %p330 = scmp.ne.s32.totalorder %s315, %s329
      %p331 = scmp.eq.s32.totalorder %s32, 0
      %p332 = por %p330, %p331
      %s334 = sadd.s32 %s333, 1
      %p337 = scmp.eq.s32.totalorder %s26, 1
      %p338 = scmp.ne.s32.totalorder %s333, %s335
      %p339 = scmp.eq.s32.totalorder %s26, 0
      %p340 = por %p338, %p339
      %p341 = scmp.ne.s32.totalorder %s333, %s335
      %p342 = scmp.eq.s32.totalorder %s31, 1
      %p343 = por %p341, %p342
      %p344 = scmp.ne.s32.totalorder %s335, %s336
      %p345 = scmp.eq.s32.totalorder %s31, 0
      %p346 = por %p344, %p345
      %p347 = scmp.ne.s32.totalorder %s335, %s336
      %p348 = scmp.eq.s32.totalorder %s32, 1
      %p349 = por %p347, %p348
      %p351 = scmp.ne.s32.totalorder %s336, %s350
      %p352 = scmp.eq.s32.totalorder %s32, 0
      %p353 = por %p351, %p352
      %s355 = sadd.s32 %s354, 1
      %p358 = scmp.eq.s32.totalorder %s26, 1
      %p359 = scmp.ne.s32.totalorder %s354, %s356
      %p360 = scmp.eq.s32.totalorder %s26, 0
      %p361 = por %p359, %p360
      %p362 = scmp.ne.s32.totalorder %s354, %s356
      %p363 = scmp.eq.s32.totalorder %s31, 1
      %p364 = por %p362, %p363
      %p365 = scmp.ne.s32.totalorder %s356, %s357
      %p366 = scmp.eq.s32.totalorder %s31, 0
      %p367 = por %p365, %p366
      %p368 = scmp.ne.s32.totalorder %s356, %s357
      %p369 = scmp.eq.s32.totalorder %s32, 1
      %p370 = por %p368, %p369
      %p372 = scmp.ne.s32.totalorder %s357, %s371
      %p373 = scmp.eq.s32.totalorder %s32, 0
      %p374 = por %p372, %p373
      %s376 = sadd.s32 %s375, 1
      %p379 = scmp.eq.s32.totalorder %s26, 1
      %p380 = scmp.ne.s32.totalorder %s375, %s377
      %p381 = scmp.eq.s32.totalorder %s26, 0
      %p382 = por %p380, %p381
      %p383 = scmp.ne.s32.totalorder %s375, %s377
      %p384 = scmp.eq.s32.totalorder %s31, 1
      %p385 = por %p383, %p384
      %p386 = scmp.ne.s32.totalorder %s377, %s378
      %p387 = scmp.eq.s32.totalorder %s31, 0
      %p388 = por %p386, %p387
      %p389 = scmp.ne.s32.totalorder %s377, %s378
      %p390 = scmp.eq.s32.totalorder %s32, 1
      %p391 = por %p389, %p390
      %p393 = scmp.ne.s32.totalorder %s378, %s392
      %p394 = scmp.eq.s32.totalorder %s32, 0
      %p395 = por %p393, %p394
      %s396 = ssub.s32 %s26, %s33
      %p397 = scmp.eq.s32.totalorder %s396, 0
      %s399 = sadd.s32 %s398, 1
      %s400 = scalar_select %p397, %s398, %s399
      %p403 = pneg %p397
      %p404 = scmp.eq.s32.totalorder %s26, 1
      %p405 = por %p403, %p404
      %p406 = scmp.ne.s32.totalorder %s398, %s401
      %p407 = scmp.eq.s32.totalorder %s26, 0
      %p408 = por %p406, %p407
      %p409 = scmp.ne.s32.totalorder %s398, %s401
      %p410 = scmp.eq.s32.totalorder %s31, 1
      %p411 = por %p409, %p410
      %p412 = scmp.ne.s32.totalorder %s401, %s402
      %p413 = scmp.eq.s32.totalorder %s31, 0
      %p414 = por %p412, %p413
      %p415 = scmp.ne.s32.totalorder %s401, %s402
      %p416 = scmp.eq.s32.totalorder %s32, 1
      %p417 = por %p415, %p416
      %p419 = scmp.ne.s32.totalorder %s402, %s418
      %p420 = scmp.eq.s32.totalorder %s32, 0
      %p421 = por %p419, %p420
      %p422 = scmp.le.s32.totalorder 1, %s26
      %p423 = scmp.lt.s32.totalorder %s26, 3
      %p424 = pnand %p422, %p423
      %p425 = pneg %p424
      // Predicated region
      $region9: #{tpu_custom_call.1} parent=5 // pred_check
        _
      $region10: #{tpu_custom_call.1} parent=5 // pred_check_branch
        %427 = sbr.rel (%p424) target = $region12
      $region11: #{tpu_custom_call.1} parent=5 // pred_region
        %s428 = ssub.s32 %s26, 1
        // Predicated region
        $region13: #{tpu_custom_call.1} parent=11 // pred_check
          %p429 = pneg %p73
        $region14: #{tpu_custom_call.1} parent=11 // pred_check_branch
          %431 = sbr.rel (%p429) target = $region16
        $region15: #{tpu_custom_call.1} parent=11 // pred_region
          _
        $region16: #{tpu_custom_call.1} parent=11 // pred_fallthru
          _
        // Predicated region
        $region17: #{tpu_custom_call.1} parent=11 // pred_check
          %p432 = pneg %p94
        $region18: #{tpu_custom_call.1} parent=11 // pred_check_branch
          %434 = sbr.rel (%p432) target = $region20
        $region19: #{tpu_custom_call.1} parent=11 // pred_region
          _
        $region20: #{tpu_custom_call.1} parent=11 // pred_fallthru
          _
        // Predicated region
        $region21: #{tpu_custom_call.1} parent=11 // pred_check
          %p435 = pneg %p115
        $region22: #{tpu_custom_call.1} parent=11 // pred_check_branch
          %437 = sbr.rel (%p435) target = $region24
        $region23: #{tpu_custom_call.1} parent=11 // pred_region
          _
        $region24: #{tpu_custom_call.1} parent=11 // pred_fallthru
          _
        // Predicated region
        $region25: #{tpu_custom_call.1} parent=11 // pred_check
          %p438 = pneg %p136
        $region26: #{tpu_custom_call.1} parent=11 // pred_check_branch
          %440 = sbr.rel (%p438) target = $region28
        $region27: #{tpu_custom_call.1} parent=11 // pred_region
          _
        $region28: #{tpu_custom_call.1} parent=11 // pred_fallthru
          _
        // Predicated region
        $region29: #{tpu_custom_call.1} parent=11 // pred_check
          %p441 = pneg %p157
        $region30: #{tpu_custom_call.1} parent=11 // pred_check_branch
          %443 = sbr.rel (%p441) target = $region32
        $region31: #{tpu_custom_call.1} parent=11 // pred_region
          _
        $region32: #{tpu_custom_call.1} parent=11 // pred_fallthru
          _
        // Predicated region
        $region33: #{tpu_custom_call.1} parent=11 // pred_check
          %p444 = pneg %p178
        $region34: #{tpu_custom_call.1} parent=11 // pred_check_branch
          %446 = sbr.rel (%p444) target = $region36
        $region35: #{tpu_custom_call.1} parent=11 // pred_region
          _
        $region36: #{tpu_custom_call.1} parent=11 // pred_fallthru
          _
        // Predicated region
        $region37: #{tpu_custom_call.1} parent=11 // pred_check
          %p447 = pneg %p199
        $region38: #{tpu_custom_call.1} parent=11 // pred_check_branch
          %449 = sbr.rel (%p447) target = $region40
        $region39: #{tpu_custom_call.1} parent=11 // pred_region
          _
        $region40: #{tpu_custom_call.1} parent=11 // pred_fallthru
          _
        // Predicated region
        $region41: #{tpu_custom_call.1} parent=11 // pred_check
          %p450 = pneg %p220
        $region42: #{tpu_custom_call.1} parent=11 // pred_check_branch
          %452 = sbr.rel (%p450) target = $region44
        $region43: #{tpu_custom_call.1} parent=11 // pred_region
          _
        $region44: #{tpu_custom_call.1} parent=11 // pred_fallthru
          _
        // Predicated region
        $region45: #{tpu_custom_call.1} parent=11 // pred_check
          %p453 = pneg %p241
        $region46: #{tpu_custom_call.1} parent=11 // pred_check_branch
          %455 = sbr.rel (%p453) target = $region48
        $region47: #{tpu_custom_call.1} parent=11 // pred_region
          _
        $region48: #{tpu_custom_call.1} parent=11 // pred_fallthru
          _
        // Predicated region
        $region49: #{tpu_custom_call.1} parent=11 // pred_check
          %p456 = pneg %p262
        $region50: #{tpu_custom_call.1} parent=11 // pred_check_branch
          %458 = sbr.rel (%p456) target = $region52
        $region51: #{tpu_custom_call.1} parent=11 // pred_region
          _
        $region52: #{tpu_custom_call.1} parent=11 // pred_fallthru
          _
        // Predicated region
        $region53: #{tpu_custom_call.1} parent=11 // pred_check
          %p459 = pneg %p283
        $region54: #{tpu_custom_call.1} parent=11 // pred_check_branch
          %461 = sbr.rel (%p459) target = $region56
        $region55: #{tpu_custom_call.1} parent=11 // pred_region
          _
        $region56: #{tpu_custom_call.1} parent=11 // pred_fallthru
          _
        // Predicated region
        $region57: #{tpu_custom_call.1} parent=11 // pred_check
          %p462 = pneg %p304
        $region58: #{tpu_custom_call.1} parent=11 // pred_check_branch
          %464 = sbr.rel (%p462) target = $region60
        $region59: #{tpu_custom_call.1} parent=11 // pred_region
          _
        $region60: #{tpu_custom_call.1} parent=11 // pred_fallthru
          _
        // Predicated region
        $region61: #{tpu_custom_call.1} parent=11 // pred_check
          %p465 = pneg %p325
        $region62: #{tpu_custom_call.1} parent=11 // pred_check_branch
          %467 = sbr.rel (%p465) target = $region64
        $region63: #{tpu_custom_call.1} parent=11 // pred_region
          _
        $region64: #{tpu_custom_call.1} parent=11 // pred_fallthru
          _
        // Predicated region
        $region65: #{tpu_custom_call.1} parent=11 // pred_check
          %p468 = pneg %p346
        $region66: #{tpu_custom_call.1} parent=11 // pred_check_branch
          %470 = sbr.rel (%p468) target = $region68
        $region67: #{tpu_custom_call.1} parent=11 // pred_region
          _
        $region68: #{tpu_custom_call.1} parent=11 // pred_fallthru
          _
        // Predicated region
        $region69: #{tpu_custom_call.1} parent=11 // pred_check
          %p471 = pneg %p367
        $region70: #{tpu_custom_call.1} parent=11 // pred_check_branch
          %473 = sbr.rel (%p471) target = $region72
        $region71: #{tpu_custom_call.1} parent=11 // pred_region
          _
        $region72: #{tpu_custom_call.1} parent=11 // pred_fallthru
          _
        // Predicated region
        $region73: #{tpu_custom_call.1} parent=11 // pred_check
          %p474 = pneg %p388
        $region74: #{tpu_custom_call.1} parent=11 // pred_check_branch
          %476 = sbr.rel (%p474) target = $region76
        $region75: #{tpu_custom_call.1} parent=11 // pred_region
          _
        $region76: #{tpu_custom_call.1} parent=11 // pred_fallthru
          _
      $region12: #{tpu_custom_call.1} parent=5 // pred_fallthru
        _
      %p477 = scmp.lt.s32.totalorder %s26, 2
      // Predicated region
      $region77: #{tpu_custom_call.1} parent=5 // pred_check
        %p478 = pneg %p477
      $region78: #{tpu_custom_call.1} parent=5 // pred_check_branch
        %480 = sbr.rel (%p478) target = $region80
      $region79: #{tpu_custom_call.1} parent=5 // pred_region
        // Predicated region
        $region81: #{tpu_custom_call.1} parent=79 // pred_check
          %p481 = pneg %p46
        $region82: #{tpu_custom_call.1} parent=79 // pred_check_branch
          %483 = sbr.rel (%p481) target = $region84
        $region83: #{tpu_custom_call.1} parent=79 // pred_region
          %p484 = scmp.lt.s32.totalorder %s26, 1
          %s485 = scalar_select %p484, %s26, 1
          %s486 = smul.addr %s485, 2
          %s487 = smul.addr %s486, 4
          %s488 = scalar_lea.vmem %s0, %s487
        $region84: #{tpu_custom_call.1} parent=79 // pred_fallthru
          _
      $region80: #{tpu_custom_call.1} parent=5 // pred_fallthru
        _
      %p489 = scmp.le.s32.totalorder 1, %s26
      %p490 = scmp.lt.s32.totalorder %s26, 3
      %p491 = pnand %p489, %p490
      %p492 = pneg %p491
      // Predicated region
      $region85: #{tpu_custom_call.1} parent=5 // pred_check
        _
      $region86: #{tpu_custom_call.1} parent=5 // pred_check_branch
        %494 = sbr.rel (%p491) target = $region88
      $region87: #{tpu_custom_call.1} parent=5 // pred_region
        %s495 = ssub.s32 %s26, 1
        %p496 = scmp.lt.s32.totalorder %s31, 1
        %s497 = scalar_select %p496, %s31, 1
        %s498 = smul.addr %s497, 2
        %s499 = smul.addr %s498, 4
        %s500 = scalar_lea.vmem %s0, %s499
        %p501 = pneg %p52
        %p502 = pneg %p49
        %p503 = pneg %p73
        %p504 = pneg %p70
        %p505 = pneg %p94
        %p506 = pneg %p91
        %p507 = pneg %p115
        %p508 = pneg %p112
        %p509 = pneg %p136
        %p510 = pneg %p133
        %p511 = pneg %p157
        %p512 = pneg %p154
        %p513 = pneg %p178
        %p514 = pneg %p175
        %p515 = pneg %p199
        %p516 = pneg %p196
        %p517 = pneg %p220
        %p518 = pneg %p217
        %p519 = pneg %p241
        %p520 = pneg %p238
        %p521 = pneg %p262
        %p522 = pneg %p259
        %p523 = pneg %p283
        %p524 = pneg %p280
        %p525 = pneg %p304
        %p526 = pneg %p301
        %p527 = pneg %p325
        %p528 = pneg %p322
        %p529 = pneg %p346
        %p530 = pneg %p343
        %p531 = pneg %p367
        %p532 = pneg %p364
        %p533 = pneg %p388
        %p534 = pneg %p385
        %p535 = pneg %p414
        %p536 = pneg %p411
        %s537 = sand.u32 %s401, 1
        %s538 = scalar_lea.sflag [#allocation3], %s537
        %s539 = sand.u32 %s401, 1
        %s540 = smul.addr %s539, 8
        %s541 = scalar_lea.vmem [#allocation2], %s540
        %p542 = scmp.lt.s32.totalorder %s31, 1
        %s543 = scalar_select %p542, %s31, 1
        %s544 = smul.addr %s543, 2
        %s545 = smul.addr %s544, 4
        %s546 = scalar_lea.vmem %s0, %s545
        %v547 = vlaneseq
        %v548 = vand.u32 %v547, 127
        %v549 = vadd.s32 %v548, 128
        %vm550 = vcmp.lt.s32.totalorder %v548, 0
        %v551 = vsub.s32 0, %v548
        %v552 = vsel %vm550, %v551, %v548
        %v553 = vshrl.u32 %v552, 4
        %v554 = vand.u32 %v552, 15
        %v555 = vsub.s32 0, %v554
        %v556 = vsel %vm550, %v555, %v554
        %vm557 = vcmp.lt.s32.totalorder %v549, 0
        %v558 = vsub.s32 0, %v549
        %v559 = vsel %vm557, %v558, %v549
        %v560 = vshrl.u32 %v559, 4
        %v561 = vand.u32 %v559, 15
        %v562 = vsub.s32 0, %v561
        %v563 = vsel %vm557, %v562, %v561
        %vm564 = vcmp.ne.s32.totalorder %v556, 0
        %vm565 = vcmp.ne.s32.totalorder %v563, 0
        %vm566 = vcmp.lt.s32.totalorder %v556, 0
        %vm567 = vcmp.lt.s32.totalorder %v563, 0
        %vm568 = vmand %vm566, %vm564
        %vm569 = vmand %vm567, %vm565
        %v570 = vadd.s32 %v556, 16
        %v571 = vadd.s32 %v563, 16
        %v572 = vsel %vm568, %v570, %v556
        %v573 = vsel %vm569, %v571, %v563
        %vm574 = vcmp.le.s32.totalorder %v572, 14
        %vm575 = vcmp.le.s32.totalorder %v573, 14
        %v576 = vsel %vm574, 1, 0
        %v577 = vsel %vm575, 1, 0
        %v578 = vcvt.s32.f32 %v576
        %v579 = vcvt.s32.f32 %v577
        %vm580 = vcmp.ge.s32.totalorder %v572, 1
        %vm581 = vcmp.ge.s32.totalorder %v573, 1
        %v582 = vsel %vm580, 1, 0
        %v583 = vsel %vm581, 1, 0
        %v584 = vcvt.s32.f32 %v582
        %v585 = vcvt.s32.f32 %v583
        %vm586 = vcmp.ge.s32.totalorder %v548, 16
        %vm587 = vcmp.ge.s32.totalorder %v549, 16
        %v588 = vsel %vm586, 1, 0
        %v589 = vsel %vm587, 1, 0
        %v590 = vcvt.s32.f32 %v588
        %v591 = vcvt.s32.f32 %v589
        %vm592 = vcmp.lt.s32.totalorder %v548, 240
        %vm593 = vcmp.lt.s32.totalorder %v549, 240
        %v594 = vsel %vm592, 1, 0
        %v595 = vsel %vm593, 1, 0
        %v596 = vcvt.s32.f32 %v594
        %v597 = vcvt.s32.f32 %v595
        %v598 = vld [vmem:[%s546] sm:$0xff]
        %v599 = vld [vmem:[%s1] sm:$0xff]
        %v600 = vld [vmem:[%s1 + $0x8] sm:$0xf]
        %v601 = vld [vmem:[%s9] sm:$0xf]
        %v602 = vld [vmem:[%s5] sm:$0xff]
        %v603 = vld [vmem:[%s5 + $0x8] sm:$0xf]
        %v604 = vld [vmem:[%s2] sm:$0xff]
        %v605 = vld [vmem:[%s2 + $0x8] sm:$0xf]
        %607 = vset.pattern.permute.xlu0 0
        %608 = vperm.xlu0 %607, %v604
        %v609 = vpop.permute.xlu0 %608
        %612 = vset.pattern.permute.xlu0 0
        %613 = vperm.xlu0 %612, %v605
        %v614 = vpop.permute.xlu0 %613
        %v617 = vcombine.high %v598, %v598
        %vm618 = vcmask 31744
        %v620 = vsel %vm618, %v599, 0
        %v623 = vsel %vm618, %v600, 0
        %vm625 = vcmask 1043456
        %v626 = vsel %vm625, %v598, 0
        %v628 = vsel %vm625, %v617, 0
        %630 = vmatprep.subr.mxu0 %v628
        %631 = vmatpush1.msra.mxu0 %v626
        %632 = vmatprep.subr.mxu0 0.0
        %633 = vmatpush1.msra.mxu0 0.0
        %634 = vmatprep.subr.mxu0 0.0
        %635 = vmatpush1.msra.mxu0 0.0
        %636 = vmatprep.subr.mxu0 0.0
        %637 = vmatpush1.msra.mxu0 0.0
        %638 = vmatprep.subr.mxu0 0.0
        %639 = vmatpush1.msra.mxu0 0.0
        %640 = vmatprep.subr.mxu0 0.0
        %641 = vmatpush1.msra.mxu0 0.0
        %642 = vmatprep.subr.mxu0 0.0
        %643 = vmatpush1.msra.mxu0 0.0
        %644 = vmatprep.subr.mxu0 0.0
        %645 = vmatpush1.msra.mxu0 0.0
        %646 = vmatprep.subr.mxu0 0.0
        %647 = vmatpush1.msra.mxu0 0.0
        %648 = vmatprep.subr.mxu0 0.0
        %649 = vmatpush1.msra.mxu0 0.0
        %650 = vmatprep.subr.mxu0 0.0
        %651 = vmatpush1.msra.mxu0 0.0
        %652 = vmatprep.subr.mxu0 0.0
        %653 = vmatpush1.msra.mxu0 0.0
        %654 = vmatprep.subr.mxu0 0.0
        %655 = vmatpush1.msra.mxu0 0.0
        %656 = vmatprep.subr.mxu0 0.0
        %657 = vmatpush1.msra.mxu0 0.0
        %658 = vmatprep.subr.mxu0 0.0
        %659 = vmatpush1.msra.mxu0 0.0
        %660 = vmatprep.subr.mxu0 0.0
        %661 = vmatpush1.msra.mxu0 0.0
        %662 = vmatprep.subr.mxu0 0.0
        %663 = vmatpush1.msra.mxu0 0.0
        %664 = vmatprep.subr.mxu0 0.0
        %665 = vmatpush1.msra.mxu0 0.0
        %666 = vmatprep.subr.mxu0 0.0
        %667 = vmatpush1.msra.mxu0 0.0
        %668 = vmatprep.subr.mxu0 0.0
        %669 = vmatpush1.msra.mxu0 0.0
        %670 = vmatprep.subr.mxu0 0.0
        %671 = vmatpush1.msra.mxu0 0.0
        %672 = vmatprep.subr.mxu0 0.0
        %673 = vmatpush1.msra.mxu0 0.0
        %674 = vmatprep.subr.mxu0 0.0
        %675 = vmatpush1.msra.mxu0 0.0
        %676 = vmatprep.subr.mxu0 0.0
        %677 = vmatpush1.msra.mxu0 0.0
        %678 = vmatprep.subr.mxu0 0.0
        %679 = vmatpush1.msra.mxu0 0.0
        %680 = vmatprep.subr.mxu0 0.0
        %681 = vmatpush1.msra.mxu0 0.0
        %682 = vmatprep.subr.mxu0 0.0
        %683 = vmatpush1.msra.mxu0 0.0
        %684 = vmatprep.subr.mxu0 0.0
        %685 = vmatpush1.msra.mxu0 0.0
        %686 = vmatprep.subr.mxu0 0.0
        %687 = vmatpush1.msra.mxu0 0.0
        %688 = vmatprep.subr.mxu0 0.0
        %689 = vmatpush1.msra.mxu0 0.0
        %690 = vmatprep.subr.mxu0 0.0
        %691 = vmatpush1.msra.mxu0 0.0
        %692 = vmatprep.subr.mxu0 0.0
        %693 = vmatpush1.msra.mxu0 0.0
        %694 = vmatprep.mubr.f32.mxu0 0.0
        %695 = vmatmul.mubr.f32.gmra.mrb[0].mxu0 %v620
        %v696 = vpop.f32.mrb[0].mxu0
        %v697 = vadd.f32 %v609, %v696
        %v698 = vpop.f32.mrb[0].mxu0
        %v699 = vadd.f32 %v609, %v698
        %700 = vmatprep.mubr.f32.mxu0 0.0
        %701 = vmatmul.mubr.f32.gmra.mrb[0].mxu0 %v623
        %v702 = vpop.f32.mrb[0].mxu0
        %v703 = vadd.f32 %v614, %v702
        %v704 = vpop.f32.mrb[0].mxu0
        %v705 = vadd.f32 %v614, %v704
        %706 = vdwg.mxu0
        %v707 = vsub.f32 0.0, %v697
        %v708 = vsub.f32 0.0, %v699
        %v709 = vsub.f32 0.0, %v703
        %v710 = vsub.f32 0.0, %v705
        %v711 = vmul.f32 %v707, 1.442695
        %v712 = vpow.pop %v711
        %v713 = vmul.f32 %v708, 1.442695
        %v714 = vpow.pop %v713
        %v715 = vmul.f32 %v709, 1.442695
        %v716 = vpow.pop %v715
        %v717 = vmul.f32 %v710, 1.442695
        %v718 = vpow.pop %v717
        %v719 = vadd.f32 %v712, 1.0
        %v720 = vadd.f32 %v714, 1.0
        %v721 = vadd.f32 %v716, 1.0
        %v722 = vadd.f32 %v718, 1.0
        %v723 = vrcp.pop %v719
        %v724 = vrcp.pop %v720
        %v725 = vrcp.pop %v721
        %v726 = vrcp.pop %v722
        %v727 = vmul.f32 %v697, %v723
        %v728 = vmul.f32 %v699, %v724
        %v729 = vmul.f32 %v703, %v725
        %v730 = vmul.f32 %v705, %v726
        %v731 = vld [vmem:[%s3] sm:$0xff]
        %v732 = vld [vmem:[%s3 + $0x8] sm:$0xf]
        %v733 = vld [vmem:[%s4] sm:$0xff]
        %v734 = vld [vmem:[%s4 + $0x8] sm:$0xf]
        %v735 = vld [vmem:[%s13] sm:$0xf]
        %v736 = vld [vmem:[%s14] sm:$0xff]
        %v737 = vld [vmem:[%s14 + $0x8] sm:$0xf]
        %v738 = vadd.f32 %v727, %v728
        %739 = vadd.xlane.f32.xlu0 %v738
        %v740 = vpop.xlane.xlu0 %739
        %v741 = vsel %vm625, %v729, 0.0
        %v742 = vsel %vm625, %v730, 0.0
        %v743 = vadd.f32 %v741, %v742
        %744 = vadd.xlane.f32.xlu0 %v743
        %v745 = vpop.xlane.xlu0 %744
        %v746 = vmul.f32 %v727, %v727
        %v747 = vmul.f32 %v728, %v728
        %v748 = vmul.f32 %v729, %v729
        %v749 = vmul.f32 %v730, %v730
        %v750 = vadd.f32 %v746, %v747
        %751 = vadd.xlane.f32.xlu0 %v750
        %v752 = vpop.xlane.xlu0 %751
        %v753 = vsel %vm625, %v748, 0.0
        %v754 = vsel %vm625, %v749, 0.0
        %v755 = vadd.f32 %v753, %v754
        %756 = vadd.xlane.f32.xlu0 %v755
        %v757 = vpop.xlane.xlu0 %756
        %vm758 = vcmask 7168
        %v759 = vsel %vm758, %v740, %v752
        %v760 = vsel %vm758, %v745, %v757
        %vm761 = vcmask 97280
        %v763 = vsel %vm761, %v735, 0
        %v766 = vsel %vm625, %v760, 0
        %768 = vmatprep.subr.mxu0 0.0
        %v769 = vand.u32 %v759, 4294901760
        %770 = vmatpush1.msra.mxu0 %v769
        %771 = vmatprep.subr.mxu0 0.0
        %v772 = vand.u32 %v766, 4294901760
        %773 = vmatpush1.msra.mxu0 %v772
        %774 = vmatprep.subr.mxu0 0.0
        %775 = vmatpush1.msra.mxu0 0.0
        %776 = vmatprep.subr.mxu0 0.0
        %777 = vmatpush1.msra.mxu0 0.0
        %778 = vmatprep.subr.mxu0 0.0
        %779 = vmatpush1.msra.mxu0 0.0
        %780 = vmatprep.subr.mxu0 0.0
        %781 = vmatpush1.msra.mxu0 0.0
        %782 = vmatprep.subr.mxu0 0.0
        %783 = vmatpush1.msra.mxu0 0.0
        %784 = vmatprep.subr.mxu0 0.0
        %785 = vmatpush1.msra.mxu0 0.0
        %786 = vmatprep.subr.mxu0 0.0
        %787 = vmatpush1.msra.mxu0 0.0
        %788 = vmatprep.subr.mxu0 0.0
        %789 = vmatpush1.msra.mxu0 0.0
        %790 = vmatprep.subr.mxu0 0.0
        %791 = vmatpush1.msra.mxu0 0.0
        %792 = vmatprep.subr.mxu0 0.0
        %793 = vmatpush1.msra.mxu0 0.0
        %794 = vmatprep.subr.mxu0 0.0
        %795 = vmatpush1.msra.mxu0 0.0
        %796 = vmatprep.subr.mxu0 0.0
        %797 = vmatpush1.msra.mxu0 0.0
        %798 = vmatprep.subr.mxu0 0.0
        %799 = vmatpush1.msra.mxu0 0.0
        %800 = vmatprep.subr.mxu0 0.0
        %801 = vmatpush1.msra.mxu0 0.0
        %802 = vmatprep.subr.mxu0 0.0
        %803 = vmatpush1.msra.mxu0 0.0
        %804 = vmatprep.subr.mxu0 0.0
        %805 = vmatpush1.msra.mxu0 0.0
        %806 = vmatprep.subr.mxu0 0.0
        %807 = vmatpush1.msra.mxu0 0.0
        %808 = vmatprep.subr.mxu0 0.0
        %809 = vmatpush1.msra.mxu0 0.0
        %810 = vmatprep.subr.mxu0 0.0
        %811 = vmatpush1.msra.mxu0 0.0
        %812 = vmatprep.subr.mxu0 0.0
        %813 = vmatpush1.msra.mxu0 0.0
        %814 = vmatprep.subr.mxu0 0.0
        %815 = vmatpush1.msra.mxu0 0.0
        %816 = vmatprep.subr.mxu0 0.0
        %817 = vmatpush1.msra.mxu0 0.0
        %818 = vmatprep.subr.mxu0 0.0
        %819 = vmatpush1.msra.mxu0 0.0
        %820 = vmatprep.subr.mxu0 0.0
        %821 = vmatpush1.msra.mxu0 0.0
        %822 = vmatprep.subr.mxu0 0.0
        %823 = vmatpush1.msra.mxu0 0.0
        %824 = vmatprep.subr.mxu0 0.0
        %825 = vmatpush1.msra.mxu0 0.0
        %826 = vmatprep.subr.mxu0 0.0
        %827 = vmatpush1.msra.mxu0 0.0
        %828 = vmatprep.subr.mxu0 0.0
        %829 = vmatpush1.msra.mxu0 0.0
        %830 = vmatprep.subr.mxu0 0.0
        %831 = vmatpush1.msra.mxu0 0.0
        %832 = vmatprep.subr.mxu0 0.0
        %833 = vmatpush1.msra.mxu0 0.0
        %834 = vmatprep.mubr.f32.mxu0 0.0
        %v835 = vand.u32 %v763, 4294901760
        %v836 = vsub.f32 %v763, %v835
        %v837 = vand.u32 %v836, 4294901760
        %v838 = vsub.f32 %v836, %v837
        %v839 = vand.u32 %v838, 4294901760
        %840 = vmatmul.mubr.f32.gmra.mrb[0].mxu0 %v839
        %v841 = vpop.f32.mrb[0].mxu0
        %v842 = vadd.f32 0.0, %v841
        %v843 = vpop.f32.mrb[0].mxu0
        %844 = vdwg.mxu0
        %845 = vmatprep.subr.mxu0 0.0
        %v846 = vand.u32 %v759, 4294901760
        %v847 = vsub.f32 %v759, %v846
        %v848 = vand.u32 %v847, 4294901760
        %v849 = vsub.f32 %v847, %v848
        %v850 = vand.u32 %v849, 4294901760
        %851 = vmatpush1.msra.mxu0 %v850
        %852 = vmatprep.subr.mxu0 0.0
        %v853 = vand.u32 %v766, 4294901760
        %v854 = vsub.f32 %v766, %v853
        %v855 = vand.u32 %v854, 4294901760
        %v856 = vsub.f32 %v854, %v855
        %v857 = vand.u32 %v856, 4294901760
        %858 = vmatpush1.msra.mxu0 %v857
        %859 = vmatprep.subr.mxu0 0.0
        %860 = vmatpush1.msra.mxu0 0.0
        %861 = vmatprep.subr.mxu0 0.0
        %862 = vmatpush1.msra.mxu0 0.0
        %863 = vmatprep.subr.mxu0 0.0
        %864 = vmatpush1.msra.mxu0 0.0
        %865 = vmatprep.subr.mxu0 0.0
        %866 = vmatpush1.msra.mxu0 0.0
        %867 = vmatprep.subr.mxu0 0.0
        %868 = vmatpush1.msra.mxu0 0.0
        %869 = vmatprep.subr.mxu0 0.0
        %870 = vmatpush1.msra.mxu0 0.0
        %871 = vmatprep.subr.mxu0 0.0
        %872 = vmatpush1.msra.mxu0 0.0
        %873 = vmatprep.subr.mxu0 0.0
        %874 = vmatpush1.msra.mxu0 0.0
        %875 = vmatprep.subr.mxu0 0.0
        %876 = vmatpush1.msra.mxu0 0.0
        %877 = vmatprep.subr.mxu0 0.0
        %878 = vmatpush1.msra.mxu0 0.0
        %879 = vmatprep.subr.mxu0 0.0
        %880 = vmatpush1.msra.mxu0 0.0
        %881 = vmatprep.subr.mxu0 0.0
        %882 = vmatpush1.msra.mxu0 0.0
        %883 = vmatprep.subr.mxu0 0.0
        %884 = vmatpush1.msra.mxu0 0.0
        %885 = vmatprep.subr.mxu0 0.0
        %886 = vmatpush1.msra.mxu0 0.0
        %887 = vmatprep.subr.mxu0 0.0
        %888 = vmatpush1.msra.mxu0 0.0
        %889 = vmatprep.subr.mxu0 0.0
        %890 = vmatpush1.msra.mxu0 0.0
        %891 = vmatprep.subr.mxu0 0.0
        %892 = vmatpush1.msra.mxu0 0.0
        %893 = vmatprep.subr.mxu0 0.0
        %894 = vmatpush1.msra.mxu0 0.0
        %895 = vmatprep.subr.mxu0 0.0
        %896 = vmatpush1.msra.mxu0 0.0
        %897 = vmatprep.subr.mxu0 0.0
        %898 = vmatpush1.msra.mxu0 0.0
        %899 = vmatprep.subr.mxu0 0.0
        %900 = vmatpush1.msra.mxu0 0.0
        %901 = vmatprep.subr.mxu0 0.0
        %902 = vmatpush1.msra.mxu0 0.0
        %903 = vmatprep.subr.mxu0 0.0
        %904 = vmatpush1.msra.mxu0 0.0
        %905 = vmatprep.subr.mxu0 0.0
        %906 = vmatpush1.msra.mxu0 0.0
        %907 = vmatprep.subr.mxu0 0.0
        %908 = vmatpush1.msra.mxu0 0.0
        %909 = vmatprep.subr.mxu0 0.0
        %910 = vmatpush1.msra.mxu0 0.0
        %911 = vmatprep.subr.mxu0 0.0
        %912 = vmatpush1.msra.mxu0 0.0
        %913 = vmatprep.subr.mxu0 0.0
        %914 = vmatpush1.msra.mxu0 0.0
        %915 = vmatprep.subr.mxu0 0.0
        %916 = vmatpush1.msra.mxu0 0.0
        %917 = vmatprep.subr.mxu0 0.0
        %918 = vmatpush1.msra.mxu0 0.0
        %919 = vmatprep.mubr.f32.mxu0 0.0
        %v920 = vand.u32 %v763, 4294901760
        %921 = vmatmul.mubr.f32.gmra.mrb[0].mxu0 %v920
        %v922 = vpop.f32.mrb[0].mxu0
        %v923 = vadd.f32 %v842, %v922
        %v924 = vpop.f32.mrb[0].mxu0
        %925 = vdwg.mxu0
        %926 = vmatprep.subr.mxu0 0.0
        %v927 = vand.u32 %v759, 4294901760
        %v928 = vsub.f32 %v759, %v927
        %929 = vmatpush1.msra.mxu0 %v928
        %930 = vmatprep.subr.mxu0 0.0
        %v931 = vand.u32 %v766, 4294901760
        %v932 = vsub.f32 %v766, %v931
        %933 = vmatpush1.msra.mxu0 %v932
        %934 = vmatprep.subr.mxu0 0.0
        %935 = vmatpush1.msra.mxu0 0.0
        %936 = vmatprep.subr.mxu0 0.0
        %937 = vmatpush1.msra.mxu0 0.0
        %938 = vmatprep.subr.mxu0 0.0
        %939 = vmatpush1.msra.mxu0 0.0
        %940 = vmatprep.subr.mxu0 0.0
        %941 = vmatpush1.msra.mxu0 0.0
        %942 = vmatprep.subr.mxu0 0.0
        %943 = vmatpush1.msra.mxu0 0.0
        %944 = vmatprep.subr.mxu0 0.0
        %945 = vmatpush1.msra.mxu0 0.0
        %946 = vmatprep.subr.mxu0 0.0
        %947 = vmatpush1.msra.mxu0 0.0
        %948 = vmatprep.subr.mxu0 0.0
        %949 = vmatpush1.msra.mxu0 0.0
        %950 = vmatprep.subr.mxu0 0.0
        %951 = vmatpush1.msra.mxu0 0.0
        %952 = vmatprep.subr.mxu0 0.0
        %953 = vmatpush1.msra.mxu0 0.0
        %954 = vmatprep.subr.mxu0 0.0
        %955 = vmatpush1.msra.mxu0 0.0
        %956 = vmatprep.subr.mxu0 0.0
        %957 = vmatpush1.msra.mxu0 0.0
        %958 = vmatprep.subr.mxu0 0.0
        %959 = vmatpush1.msra.mxu0 0.0
        %960 = vmatprep.subr.mxu0 0.0
        %961 = vmatpush1.msra.mxu0 0.0
        %962 = vmatprep.subr.mxu0 0.0
        %963 = vmatpush1.msra.mxu0 0.0
        %964 = vmatprep.subr.mxu0 0.0
        %965 = vmatpush1.msra.mxu0 0.0
        %966 = vmatprep.subr.mxu0 0.0
        %967 = vmatpush1.msra.mxu0 0.0
        %968 = vmatprep.subr.mxu0 0.0
        %969 = vmatpush1.msra.mxu0 0.0
        %970 = vmatprep.subr.mxu0 0.0
        %971 = vmatpush1.msra.mxu0 0.0
        %972 = vmatprep.subr.mxu0 0.0
        %973 = vmatpush1.msra.mxu0 0.0
        %974 = vmatprep.subr.mxu0 0.0
        %975 = vmatpush1.msra.mxu0 0.0
        %976 = vmatprep.subr.mxu0 0.0
        %977 = vmatpush1.msra.mxu0 0.0
        %978 = vmatprep.subr.mxu0 0.0
        %979 = vmatpush1.msra.mxu0 0.0
        %980 = vmatprep.subr.mxu0 0.0
        %981 = vmatpush1.msra.mxu0 0.0
        %982 = vmatprep.subr.mxu0 0.0
        %983 = vmatpush1.msra.mxu0 0.0
        %984 = vmatprep.subr.mxu0 0.0
        %985 = vmatpush1.msra.mxu0 0.0
        %986 = vmatprep.subr.mxu0 0.0
        %987 = vmatpush1.msra.mxu0 0.0
        %988 = vmatprep.subr.mxu0 0.0
        %989 = vmatpush1.msra.mxu0 0.0
        %990 = vmatprep.subr.mxu0 0.0
        %991 = vmatpush1.msra.mxu0 0.0
        %992 = vmatprep.subr.mxu0 0.0
        %993 = vmatpush1.msra.mxu0 0.0
        %994 = vmatprep.mubr.f32.mxu0 0.0
        %v995 = vand.u32 %v763, 4294901760
        %v996 = vsub.f32 %v763, %v995
        %997 = vmatmul.mubr.f32.gmra.mrb[0].mxu0 %v996
        %v998 = vpop.f32.mrb[0].mxu0
        %v999 = vadd.f32 %v923, %v998
        %v1000 = vpop.f32.mrb[0].mxu0
        %1001 = vdwg.mxu0
        %1002 = vmatprep.subr.mxu0 0.0
        %v1003 = vand.u32 %v759, 4294901760
        %1004 = vmatpush1.msra.mxu0 %v1003
        %1005 = vmatprep.subr.mxu0 0.0
        %v1006 = vand.u32 %v766, 4294901760
        %1007 = vmatpush1.msra.mxu0 %v1006
        %1008 = vmatprep.subr.mxu0 0.0
        %1009 = vmatpush1.msra.mxu0 0.0
        %1010 = vmatprep.subr.mxu0 0.0
        %1011 = vmatpush1.msra.mxu0 0.0
        %1012 = vmatprep.subr.mxu0 0.0
        %1013 = vmatpush1.msra.mxu0 0.0
        %1014 = vmatprep.subr.mxu0 0.0
        %1015 = vmatpush1.msra.mxu0 0.0
        %1016 = vmatprep.subr.mxu0 0.0
        %1017 = vmatpush1.msra.mxu0 0.0
        %1018 = vmatprep.subr.mxu0 0.0
        %1019 = vmatpush1.msra.mxu0 0.0
        %1020 = vmatprep.subr.mxu0 0.0
        %1021 = vmatpush1.msra.mxu0 0.0
        %1022 = vmatprep.subr.mxu0 0.0
        %1023 = vmatpush1.msra.mxu0 0.0
        %1024 = vmatprep.subr.mxu0 0.0
        %1025 = vmatpush1.msra.mxu0 0.0
        %1026 = vmatprep.subr.mxu0 0.0
        %1027 = vmatpush1.msra.mxu0 0.0
        %1028 = vmatprep.subr.mxu0 0.0
        %1029 = vmatpush1.msra.mxu0 0.0
        %1030 = vmatprep.subr.mxu0 0.0
        %1031 = vmatpush1.msra.mxu0 0.0
        %1032 = vmatprep.subr.mxu0 0.0
        %1033 = vmatpush1.msra.mxu0 0.0
        %1034 = vmatprep.subr.mxu0 0.0
        %1035 = vmatpush1.msra.mxu0 0.0
        %1036 = vmatprep.subr.mxu0 0.0
        %1037 = vmatpush1.msra.mxu0 0.0
        %1038 = vmatprep.subr.mxu0 0.0
        %1039 = vmatpush1.msra.mxu0 0.0
        %1040 = vmatprep.subr.mxu0 0.0
        %1041 = vmatpush1.msra.mxu0 0.0
        %1042 = vmatprep.subr.mxu0 0.0
        %1043 = vmatpush1.msra.mxu0 0.0
        %1044 = vmatprep.subr.mxu0 0.0
        %1045 = vmatpush1.msra.mxu0 0.0
        %1046 = vmatprep.subr.mxu0 0.0
        %1047 = vmatpush1.msra.mxu0 0.0
        %1048 = vmatprep.subr.mxu0 0.0
        %1049 = vmatpush1.msra.mxu0 0.0
        %1050 = vmatprep.subr.mxu0 0.0
        %1051 = vmatpush1.msra.mxu0 0.0
        %1052 = vmatprep.subr.mxu0 0.0
        %1053 = vmatpush1.msra.mxu0 0.0
        %1054 = vmatprep.subr.mxu0 0.0
        %1055 = vmatpush1.msra.mxu0 0.0
        %1056 = vmatprep.subr.mxu0 0.0
        %1057 = vmatpush1.msra.mxu0 0.0
        %1058 = vmatprep.subr.mxu0 0.0
        %1059 = vmatpush1.msra.mxu0 0.0
        %1060 = vmatprep.subr.mxu0 0.0
        %1061 = vmatpush1.msra.mxu0 0.0
        %1062 = vmatprep.subr.mxu0 0.0
        %1063 = vmatpush1.msra.mxu0 0.0
        %1064 = vmatprep.subr.mxu0 0.0
        %1065 = vmatpush1.msra.mxu0 0.0
        %1066 = vmatprep.subr.mxu0 0.0
        %1067 = vmatpush1.msra.mxu0 0.0
        %1068 = vmatprep.mubr.f32.mxu0 0.0
        %v1069 = vand.u32 %v763, 4294901760
        %v1070 = vsub.f32 %v763, %v1069
        %v1071 = vand.u32 %v1070, 4294901760
        %1072 = vmatmul.mubr.f32.gmra.mrb[0].mxu0 %v1071
        %v1073 = vpop.f32.mrb[0].mxu0
        %v1074 = vadd.f32 %v999, %v1073
        %v1075 = vpop.f32.mrb[0].mxu0
        %1076 = vdwg.mxu0
        %1077 = vmatprep.subr.mxu0 0.0
        %v1078 = vand.u32 %v759, 4294901760
        %v1079 = vsub.f32 %v759, %v1078
        %v1080 = vand.u32 %v1079, 4294901760
        %1081 = vmatpush1.msra.mxu0 %v1080
        %1082 = vmatprep.subr.mxu0 0.0
        %v1083 = vand.u32 %v766, 4294901760
        %v1084 = vsub.f32 %v766, %v1083
        %v1085 = vand.u32 %v1084, 4294901760
        %1086 = vmatpush1.msra.mxu0 %v1085
        %1087 = vmatprep.subr.mxu0 0.0
        %1088 = vmatpush1.msra.mxu0 0.0
        %1089 = vmatprep.subr.mxu0 0.0
        %1090 = vmatpush1.msra.mxu0 0.0
        %1091 = vmatprep.subr.mxu0 0.0
        %1092 = vmatpush1.msra.mxu0 0.0
        %1093 = vmatprep.subr.mxu0 0.0
        %1094 = vmatpush1.msra.mxu0 0.0
        %1095 = vmatprep.subr.mxu0 0.0
        %1096 = vmatpush1.msra.mxu0 0.0
        %1097 = vmatprep.subr.mxu0 0.0
        %1098 = vmatpush1.msra.mxu0 0.0
        %1099 = vmatprep.subr.mxu0 0.0
        %1100 = vmatpush1.msra.mxu0 0.0
        %1101 = vmatprep.subr.mxu0 0.0
        %1102 = vmatpush1.msra.mxu0 0.0
        %1103 = vmatprep.subr.mxu0 0.0
        %1104 = vmatpush1.msra.mxu0 0.0
        %1105 = vmatprep.subr.mxu0 0.0
        %1106 = vmatpush1.msra.mxu0 0.0
        %1107 = vmatprep.subr.mxu0 0.0
        %1108 = vmatpush1.msra.mxu0 0.0
        %1109 = vmatprep.subr.mxu0 0.0
        %1110 = vmatpush1.msra.mxu0 0.0
        %1111 = vmatprep.subr.mxu0 0.0
        %1112 = vmatpush1.msra.mxu0 0.0
        %1113 = vmatprep.subr.mxu0 0.0
        %1114 = vmatpush1.msra.mxu0 0.0
        %1115 = vmatprep.subr.mxu0 0.0
        %1116 = vmatpush1.msra.mxu0 0.0
        %1117 = vmatprep.subr.mxu0 0.0
        %1118 = vmatpush1.msra.mxu0 0.0
        %1119 = vmatprep.subr.mxu0 0.0
        %1120 = vmatpush1.msra.mxu0 0.0
        %1121 = vmatprep.subr.mxu0 0.0
        %1122 = vmatpush1.msra.mxu0 0.0
        %1123 = vmatprep.subr.mxu0 0.0
        %1124 = vmatpush1.msra.mxu0 0.0
        %1125 = vmatprep.subr.mxu0 0.0
        %1126 = vmatpush1.msra.mxu0 0.0
        %1127 = vmatprep.subr.mxu0 0.0
        %1128 = vmatpush1.msra.mxu0 0.0
        %1129 = vmatprep.subr.mxu0 0.0
        %1130 = vmatpush1.msra.mxu0 0.0
        %1131 = vmatprep.subr.mxu0 0.0
        %1132 = vmatpush1.msra.mxu0 0.0
        %1133 = vmatprep.subr.mxu0 0.0
        %1134 = vmatpush1.msra.mxu0 0.0
        %1135 = vmatprep.subr.mxu0 0.0
        %1136 = vmatpush1.msra.mxu0 0.0
        %1137 = vmatprep.subr.mxu0 0.0
        %1138 = vmatpush1.msra.mxu0 0.0
        %1139 = vmatprep.subr.mxu0 0.0
        %1140 = vmatpush1.msra.mxu0 0.0
        %1141 = vmatprep.subr.mxu0 0.0
        %1142 = vmatpush1.msra.mxu0 0.0
        %1143 = vmatprep.subr.mxu0 0.0
        %1144 = vmatpush1.msra.mxu0 0.0
        %1145 = vmatprep.subr.mxu0 0.0
        %1146 = vmatpush1.msra.mxu0 0.0
        %1147 = vmatprep.mubr.f32.mxu0 0.0
        %v1148 = vand.u32 %v763, 4294901760
        %1149 = vmatmul.mubr.f32.gmra.mrb[0].mxu0 %v1148
        %v1150 = vpop.f32.mrb[0].mxu0
        %v1151 = vadd.f32 %v1074, %v1150
        %v1152 = vpop.f32.mrb[0].mxu0
        %1153 = vdwg.mxu0
        %1154 = vmatprep.subr.mxu0 0.0
        %v1155 = vand.u32 %v759, 4294901760
        %1156 = vmatpush1.msra.mxu0 %v1155
        %1157 = vmatprep.subr.mxu0 0.0
        %v1158 = vand.u32 %v766, 4294901760
        %1159 = vmatpush1.msra.mxu0 %v1158
        %1160 = vmatprep.subr.mxu0 0.0
        %1161 = vmatpush1.msra.mxu0 0.0
        %1162 = vmatprep.subr.mxu0 0.0
        %1163 = vmatpush1.msra.mxu0 0.0
        %1164 = vmatprep.subr.mxu0 0.0
        %1165 = vmatpush1.msra.mxu0 0.0
        %1166 = vmatprep.subr.mxu0 0.0
        %1167 = vmatpush1.msra.mxu0 0.0
        %1168 = vmatprep.subr.mxu0 0.0
        %1169 = vmatpush1.msra.mxu0 0.0
        %1170 = vmatprep.subr.mxu0 0.0
        %1171 = vmatpush1.msra.mxu0 0.0
        %1172 = vmatprep.subr.mxu0 0.0
        %1173 = vmatpush1.msra.mxu0 0.0
        %1174 = vmatprep.subr.mxu0 0.0
        %1175 = vmatpush1.msra.mxu0 0.0
        %1176 = vmatprep.subr.mxu0 0.0
        %1177 = vmatpush1.msra.mxu0 0.0
        %1178 = vmatprep.subr.mxu0 0.0
        %1179 = vmatpush1.msra.mxu0 0.0
        %1180 = vmatprep.subr.mxu0 0.0
        %1181 = vmatpush1.msra.mxu0 0.0
        %1182 = vmatprep.subr.mxu0 0.0
        %1183 = vmatpush1.msra.mxu0 0.0
        %1184 = vmatprep.subr.mxu0 0.0
        %1185 = vmatpush1.msra.mxu0 0.0
        %1186 = vmatprep.subr.mxu0 0.0
        %1187 = vmatpush1.msra.mxu0 0.0
        %1188 = vmatprep.subr.mxu0 0.0
        %1189 = vmatpush1.msra.mxu0 0.0
        %1190 = vmatprep.subr.mxu0 0.0
        %1191 = vmatpush1.msra.mxu0 0.0
        %1192 = vmatprep.subr.mxu0 0.0
        %1193 = vmatpush1.msra.mxu0 0.0
        %1194 = vmatprep.subr.mxu0 0.0
        %1195 = vmatpush1.msra.mxu0 0.0
        %1196 = vmatprep.subr.mxu0 0.0
        %1197 = vmatpush1.msra.mxu0 0.0
        %1198 = vmatprep.subr.mxu0 0.0
        %1199 = vmatpush1.msra.mxu0 0.0
        %1200 = vmatprep.subr.mxu0 0.0
        %1201 = vmatpush1.msra.mxu0 0.0
        %1202 = vmatprep.subr.mxu0 0.0
        %1203 = vmatpush1.msra.mxu0 0.0
        %1204 = vmatprep.subr.mxu0 0.0
        %1205 = vmatpush1.msra.mxu0 0.0
        %1206 = vmatprep.subr.mxu0 0.0
        %1207 = vmatpush1.msra.mxu0 0.0
        %1208 = vmatprep.subr.mxu0 0.0
        %1209 = vmatpush1.msra.mxu0 0.0
        %1210 = vmatprep.subr.mxu0 0.0
        %1211 = vmatpush1.msra.mxu0 0.0
        %1212 = vmatprep.subr.mxu0 0.0
        %1213 = vmatpush1.msra.mxu0 0.0
        %1214 = vmatprep.subr.mxu0 0.0
        %1215 = vmatpush1.msra.mxu0 0.0
        %1216 = vmatprep.subr.mxu0 0.0
        %1217 = vmatpush1.msra.mxu0 0.0
        %1218 = vmatprep.subr.mxu0 0.0
        %1219 = vmatpush1.msra.mxu0 0.0
        %1220 = vmatprep.mubr.f32.mxu0 0.0
        %v1221 = vand.u32 %v763, 4294901760
        %1222 = vmatmul.mubr.f32.gmra.mrb[0].mxu0 %v1221
        %v1223 = vpop.f32.mrb[0].mxu0
        %v1224 = vadd.f32 %v1151, %v1223
        %v1225 = vpop.f32.mrb[0].mxu0
        %1226 = vdwg.mxu0
        %v1228 = vsel %vm618, %v736, 0
        %v1231 = vsel %vm618, %v737, 0
        %v1234 = vsel %vm625, %v1224, 0
        %1236 = vmatprep.subr.mxu0 0.0
        %v1237 = vand.u32 %v1234, 4294901760
        %1238 = vmatpush1.msra.mxu0 %v1237
        %1239 = vmatprep.subr.mxu0 0.0
        %1240 = vmatpush1.msra.mxu0 0.0
        %1241 = vmatprep.subr.mxu0 0.0
        %1242 = vmatpush1.msra.mxu0 0.0
        %1243 = vmatprep.subr.mxu0 0.0
        %1244 = vmatpush1.msra.mxu0 0.0
        %1245 = vmatprep.subr.mxu0 0.0
        %1246 = vmatpush1.msra.mxu0 0.0
        %1247 = vmatprep.subr.mxu0 0.0
        %1248 = vmatpush1.msra.mxu0 0.0
        %1249 = vmatprep.subr.mxu0 0.0
        %1250 = vmatpush1.msra.mxu0 0.0
        %1251 = vmatprep.subr.mxu0 0.0
        %1252 = vmatpush1.msra.mxu0 0.0
        %1253 = vmatprep.subr.mxu0 0.0
        %1254 = vmatpush1.msra.mxu0 0.0
        %1255 = vmatprep.subr.mxu0 0.0
        %1256 = vmatpush1.msra.mxu0 0.0
        %1257 = vmatprep.subr.mxu0 0.0
        %1258 = vmatpush1.msra.mxu0 0.0
        %1259 = vmatprep.subr.mxu0 0.0
        %1260 = vmatpush1.msra.mxu0 0.0
        %1261 = vmatprep.subr.mxu0 0.0
        %1262 = vmatpush1.msra.mxu0 0.0
        %1263 = vmatprep.subr.mxu0 0.0
        %1264 = vmatpush1.msra.mxu0 0.0
        %1265 = vmatprep.subr.mxu0 0.0
        %1266 = vmatpush1.msra.mxu0 0.0
        %1267 = vmatprep.subr.mxu0 0.0
        %1268 = vmatpush1.msra.mxu0 0.0
        %1269 = vmatprep.subr.mxu0 0.0
        %1270 = vmatpush1.msra.mxu0 0.0
        %1271 = vmatprep.subr.mxu0 0.0
        %1272 = vmatpush1.msra.mxu0 0.0
        %1273 = vmatprep.subr.mxu0 0.0
        %1274 = vmatpush1.msra.mxu0 0.0
        %1275 = vmatprep.subr.mxu0 0.0
        %1276 = vmatpush1.msra.mxu0 0.0
        %1277 = vmatprep.subr.mxu0 0.0
        %1278 = vmatpush1.msra.mxu0 0.0
        %1279 = vmatprep.subr.mxu0 0.0
        %1280 = vmatpush1.msra.mxu0 0.0
        %1281 = vmatprep.subr.mxu0 0.0
        %1282 = vmatpush1.msra.mxu0 0.0
        %1283 = vmatprep.subr.mxu0 0.0
        %1284 = vmatpush1.msra.mxu0 0.0
        %1285 = vmatprep.subr.mxu0 0.0
        %1286 = vmatpush1.msra.mxu0 0.0
        %1287 = vmatprep.subr.mxu0 0.0
        %1288 = vmatpush1.msra.mxu0 0.0
        %1289 = vmatprep.subr.mxu0 0.0
        %1290 = vmatpush1.msra.mxu0 0.0
        %1291 = vmatprep.subr.mxu0 0.0
        %1292 = vmatpush1.msra.mxu0 0.0
        %1293 = vmatprep.subr.mxu0 0.0
        %1294 = vmatpush1.msra.mxu0 0.0
        %1295 = vmatprep.subr.mxu0 0.0
        %1296 = vmatpush1.msra.mxu0 0.0
        %1297 = vmatprep.subr.mxu0 0.0
        %1298 = vmatpush1.msra.mxu0 0.0
        %1299 = vmatprep.subr.mxu0 0.0
        %1300 = vmatpush1.msra.mxu0 0.0
        %1301 = vmatprep.mubr.f32.mxu0 0.0
        %v1302 = vand.u32 %v1228, 4294901760
        %v1303 = vsub.f32 %v1228, %v1302
        %v1304 = vand.u32 %v1303, 4294901760
        %v1305 = vsub.f32 %v1303, %v1304
        %v1306 = vand.u32 %v1305, 4294901760
        %1307 = vmatmul.mubr.f32.gmra.mrb[0].mxu0 %v1306
        %v1308 = vpop.f32.mrb[0].mxu0
        %v1309 = vadd.f32 0.0, %v1308
        %v1310 = vpop.f32.mrb[0].mxu0
        %1311 = vmatprep.mubr.f32.mxu0 0.0
        %v1312 = vand.u32 %v1231, 4294901760
        %v1313 = vsub.f32 %v1231, %v1312
        %v1314 = vand.u32 %v1313, 4294901760
        %v1315 = vsub.f32 %v1313, %v1314
        %v1316 = vand.u32 %v1315, 4294901760
        %1317 = vmatmul.mubr.f32.gmra.mrb[0].mxu0 %v1316
        %v1318 = vpop.f32.mrb[0].mxu0
        %v1319 = vadd.f32 0.0, %v1318
        %v1320 = vpop.f32.mrb[0].mxu0
        %1321 = vdwg.mxu0
        %1322 = vmatprep.subr.mxu0 0.0
        %v1323 = vand.u32 %v1234, 4294901760
        %v1324 = vsub.f32 %v1234, %v1323
        %v1325 = vand.u32 %v1324, 4294901760
        %v1326 = vsub.f32 %v1324, %v1325
        %v1327 = vand.u32 %v1326, 4294901760
        %1328 = vmatpush1.msra.mxu0 %v1327
        %1329 = vmatprep.subr.mxu0 0.0
        %1330 = vmatpush1.msra.mxu0 0.0
        %1331 = vmatprep.subr.mxu0 0.0
        %1332 = vmatpush1.msra.mxu0 0.0
        %1333 = vmatprep.subr.mxu0 0.0
        %1334 = vmatpush1.msra.mxu0 0.0
        %1335 = vmatprep.subr.mxu0 0.0
        %1336 = vmatpush1.msra.mxu0 0.0
        %1337 = vmatprep.subr.mxu0 0.0
        %1338 = vmatpush1.msra.mxu0 0.0
        %1339 = vmatprep.subr.mxu0 0.0
        %1340 = vmatpush1.msra.mxu0 0.0
        %1341 = vmatprep.subr.mxu0 0.0
        %1342 = vmatpush1.msra.mxu0 0.0
        %1343 = vmatprep.subr.mxu0 0.0
        %1344 = vmatpush1.msra.mxu0 0.0
        %1345 = vmatprep.subr.mxu0 0.0
        %1346 = vmatpush1.msra.mxu0 0.0
        %1347 = vmatprep.subr.mxu0 0.0
        %1348 = vmatpush1.msra.mxu0 0.0
        %1349 = vmatprep.subr.mxu0 0.0
        %1350 = vmatpush1.msra.mxu0 0.0
        %1351 = vmatprep.subr.mxu0 0.0
        %1352 = vmatpush1.msra.mxu0 0.0
        %1353 = vmatprep.subr.mxu0 0.0
        %1354 = vmatpush1.msra.mxu0 0.0
        %1355 = vmatprep.subr.mxu0 0.0
        %1356 = vmatpush1.msra.mxu0 0.0
        %1357 = vmatprep.subr.mxu0 0.0
        %1358 = vmatpush1.msra.mxu0 0.0
        %1359 = vmatprep.subr.mxu0 0.0
        %1360 = vmatpush1.msra.mxu0 0.0
        %1361 = vmatprep.subr.mxu0 0.0
        %1362 = vmatpush1.msra.mxu0 0.0
        %1363 = vmatprep.subr.mxu0 0.0
        %1364 = vmatpush1.msra.mxu0 0.0
        %1365 = vmatprep.subr.mxu0 0.0
        %1366 = vmatpush1.msra.mxu0 0.0
        %1367 = vmatprep.subr.mxu0 0.0
        %1368 = vmatpush1.msra.mxu0 0.0
        %1369 = vmatprep.subr.mxu0 0.0
        %1370 = vmatpush1.msra.mxu0 0.0
        %1371 = vmatprep.subr.mxu0 0.0
        %1372 = vmatpush1.msra.mxu0 0.0
        %1373 = vmatprep.subr.mxu0 0.0
        %1374 = vmatpush1.msra.mxu0 0.0
        %1375 = vmatprep.subr.mxu0 0.0
        %1376 = vmatpush1.msra.mxu0 0.0
        %1377 = vmatprep.subr.mxu0 0.0
        %1378 = vmatpush1.msra.mxu0 0.0
        %1379 = vmatprep.subr.mxu0 0.0
        %1380 = vmatpush1.msra.mxu0 0.0
        %1381 = vmatprep.subr.mxu0 0.0
        %1382 = vmatpush1.msra.mxu0 0.0
        %1383 = vmatprep.subr.mxu0 0.0
        %1384 = vmatpush1.msra.mxu0 0.0
        %1385 = vmatprep.subr.mxu0 0.0
        %1386 = vmatpush1.msra.mxu0 0.0
        %1387 = vmatprep.subr.mxu0 0.0
        %1388 = vmatpush1.msra.mxu0 0.0
        %1389 = vmatprep.subr.mxu0 0.0
        %1390 = vmatpush1.msra.mxu0 0.0
        %1391 = vmatprep.mubr.f32.mxu0 0.0
        %v1392 = vand.u32 %v1228, 4294901760
        %1393 = vmatmul.mubr.f32.gmra.mrb[0].mxu0 %v1392
        %v1394 = vpop.f32.mrb[0].mxu0
        %v1395 = vadd.f32 %v1309, %v1394
        %v1396 = vpop.f32.mrb[0].mxu0
        %1397 = vmatprep.mubr.f32.mxu0 0.0
        %v1398 = vand.u32 %v1231, 4294901760
        %1399 = vmatmul.mubr.f32.gmra.mrb[0].mxu0 %v1398
        %v1400 = vpop.f32.mrb[0].mxu0
        %v1401 = vadd.f32 %v1319, %v1400
        %v1402 = vpop.f32.mrb[0].mxu0
        %1403 = vdwg.mxu0
        %1404 = vmatprep.subr.mxu0 0.0
        %v1405 = vand.u32 %v1234, 4294901760
        %v1406 = vsub.f32 %v1234, %v1405
        %1407 = vmatpush1.msra.mxu0 %v1406
        %1408 = vmatprep.subr.mxu0 0.0
        %1409 = vmatpush1.msra.mxu0 0.0
        %1410 = vmatprep.subr.mxu0 0.0
        %1411 = vmatpush1.msra.mxu0 0.0
        %1412 = vmatprep.subr.mxu0 0.0
        %1413 = vmatpush1.msra.mxu0 0.0
        %1414 = vmatprep.subr.mxu0 0.0
        %1415 = vmatpush1.msra.mxu0 0.0
        %1416 = vmatprep.subr.mxu0 0.0
        %1417 = vmatpush1.msra.mxu0 0.0
        %1418 = vmatprep.subr.mxu0 0.0
        %1419 = vmatpush1.msra.mxu0 0.0
        %1420 = vmatprep.subr.mxu0 0.0
        %1421 = vmatpush1.msra.mxu0 0.0
        %1422 = vmatprep.subr.mxu0 0.0
        %1423 = vmatpush1.msra.mxu0 0.0
        %1424 = vmatprep.subr.mxu0 0.0
        %1425 = vmatpush1.msra.mxu0 0.0
        %1426 = vmatprep.subr.mxu0 0.0
        %1427 = vmatpush1.msra.mxu0 0.0
        %1428 = vmatprep.subr.mxu0 0.0
        %1429 = vmatpush1.msra.mxu0 0.0
        %1430 = vmatprep.subr.mxu0 0.0
        %1431 = vmatpush1.msra.mxu0 0.0
        %1432 = vmatprep.subr.mxu0 0.0
        %1433 = vmatpush1.msra.mxu0 0.0
        %1434 = vmatprep.subr.mxu0 0.0
        %1435 = vmatpush1.msra.mxu0 0.0
        %1436 = vmatprep.subr.mxu0 0.0
        %1437 = vmatpush1.msra.mxu0 0.0
        %1438 = vmatprep.subr.mxu0 0.0
        %1439 = vmatpush1.msra.mxu0 0.0
        %1440 = vmatprep.subr.mxu0 0.0
        %1441 = vmatpush1.msra.mxu0 0.0
        %1442 = vmatprep.subr.mxu0 0.0
        %1443 = vmatpush1.msra.mxu0 0.0
        %1444 = vmatprep.subr.mxu0 0.0
        %1445 = vmatpush1.msra.mxu0 0.0
        %1446 = vmatprep.subr.mxu0 0.0
        %1447 = vmatpush1.msra.mxu0 0.0
        %1448 = vmatprep.subr.mxu0 0.0
        %1449 = vmatpush1.msra.mxu0 0.0
        %1450 = vmatprep.subr.mxu0 0.0
        %1451 = vmatpush1.msra.mxu0 0.0
        %1452 = vmatprep.subr.mxu0 0.0
        %1453 = vmatpush1.msra.mxu0 0.0
        %1454 = vmatprep.subr.mxu0 0.0
        %1455 = vmatpush1.msra.mxu0 0.0
        %1456 = vmatprep.subr.mxu0 0.0
        %1457 = vmatpush1.msra.mxu0 0.0
        %1458 = vmatprep.subr.mxu0 0.0
        %1459 = vmatpush1.msra.mxu0 0.0
        %1460 = vmatprep.subr.mxu0 0.0
        %1461 = vmatpush1.msra.mxu0 0.0
        %1462 = vmatprep.subr.mxu0 0.0
        %1463 = vmatpush1.msra.mxu0 0.0
        %1464 = vmatprep.subr.mxu0 0.0
        %1465 = vmatpush1.msra.mxu0 0.0
        %1466 = vmatprep.subr.mxu0 0.0
        %1467 = vmatpush1.msra.mxu0 0.0
        %1468 = vmatprep.subr.mxu0 0.0
        %1469 = vmatpush1.msra.mxu0 0.0
        %1470 = vmatprep.mubr.f32.mxu0 0.0
        %v1471 = vand.u32 %v1228, 4294901760
        %v1472 = vsub.f32 %v1228, %v1471
        %1473 = vmatmul.mubr.f32.gmra.mrb[0].mxu0 %v1472
        %v1474 = vpop.f32.mrb[0].mxu0
        %v1475 = vadd.f32 %v1395, %v1474
        %v1476 = vpop.f32.mrb[0].mxu0
        %1477 = vmatprep.mubr.f32.mxu0 0.0
        %v1478 = vand.u32 %v1231, 4294901760
        %v1479 = vsub.f32 %v1231, %v1478
        %1480 = vmatmul.mubr.f32.gmra.mrb[0].mxu0 %v1479
        %v1481 = vpop.f32.mrb[0].mxu0
        %v1482 = vadd.f32 %v1401, %v1481
        %v1483 = vpop.f32.mrb[0].mxu0
        %1484 = vdwg.mxu0
        %1485 = vmatprep.subr.mxu0 0.0
        %v1486 = vand.u32 %v1234, 4294901760
        %1487 = vmatpush1.msra.mxu0 %v1486
        %1488 = vmatprep.subr.mxu0 0.0
        %1489 = vmatpush1.msra.mxu0 0.0
        %1490 = vmatprep.subr.mxu0 0.0
        %1491 = vmatpush1.msra.mxu0 0.0
        %1492 = vmatprep.subr.mxu0 0.0
        %1493 = vmatpush1.msra.mxu0 0.0
        %1494 = vmatprep.subr.mxu0 0.0
        %1495 = vmatpush1.msra.mxu0 0.0
        %1496 = vmatprep.subr.mxu0 0.0
        %1497 = vmatpush1.msra.mxu0 0.0
        %1498 = vmatprep.subr.mxu0 0.0
        %1499 = vmatpush1.msra.mxu0 0.0
        %1500 = vmatprep.subr.mxu0 0.0
        %1501 = vmatpush1.msra.mxu0 0.0
        %1502 = vmatprep.subr.mxu0 0.0
        %1503 = vmatpush1.msra.mxu0 0.0
        %1504 = vmatprep.subr.mxu0 0.0
        %1505 = vmatpush1.msra.mxu0 0.0
        %1506 = vmatprep.subr.mxu0 0.0
        %1507 = vmatpush1.msra.mxu0 0.0
        %1508 = vmatprep.subr.mxu0 0.0
        %1509 = vmatpush1.msra.mxu0 0.0
        %1510 = vmatprep.subr.mxu0 0.0
        %1511 = vmatpush1.msra.mxu0 0.0
        %1512 = vmatprep.subr.mxu0 0.0
        %1513 = vmatpush1.msra.mxu0 0.0
        %1514 = vmatprep.subr.mxu0 0.0
        %1515 = vmatpush1.msra.mxu0 0.0
        %1516 = vmatprep.subr.mxu0 0.0
        %1517 = vmatpush1.msra.mxu0 0.0
        %1518 = vmatprep.subr.mxu0 0.0
        %1519 = vmatpush1.msra.mxu0 0.0
        %1520 = vmatprep.subr.mxu0 0.0
        %1521 = vmatpush1.msra.mxu0 0.0
        %1522 = vmatprep.subr.mxu0 0.0
        %1523 = vmatpush1.msra.mxu0 0.0
        %1524 = vmatprep.subr.mxu0 0.0
        %1525 = vmatpush1.msra.mxu0 0.0
        %1526 = vmatprep.subr.mxu0 0.0
        %1527 = vmatpush1.msra.mxu0 0.0
        %1528 = vmatprep.subr.mxu0 0.0
        %1529 = vmatpush1.msra.mxu0 0.0
        %1530 = vmatprep.subr.mxu0 0.0
        %1531 = vmatpush1.msra.mxu0 0.0
        %1532 = vmatprep.subr.mxu0 0.0
        %1533 = vmatpush1.msra.mxu0 0.0
        %1534 = vmatprep.subr.mxu0 0.0
        %1535 = vmatpush1.msra.mxu0 0.0
        %1536 = vmatprep.subr.mxu0 0.0
        %1537 = vmatpush1.msra.mxu0 0.0
        %1538 = vmatprep.subr.mxu0 0.0
        %1539 = vmatpush1.msra.mxu0 0.0
        %1540 = vmatprep.subr.mxu0 0.0
        %1541 = vmatpush1.msra.mxu0 0.0
        %1542 = vmatprep.subr.mxu0 0.0
        %1543 = vmatpush1.msra.mxu0 0.0
        %1544 = vmatprep.subr.mxu0 0.0
        %1545 = vmatpush1.msra.mxu0 0.0
        %1546 = vmatprep.subr.mxu0 0.0
        %1547 = vmatpush1.msra.mxu0 0.0
        %1548 = vmatprep.subr.mxu0 0.0
        %1549 = vmatpush1.msra.mxu0 0.0
        %1550 = vmatprep.mubr.f32.mxu0 0.0
        %v1551 = vand.u32 %v1228, 4294901760
        %v1552 = vsub.f32 %v1228, %v1551
        %v1553 = vand.u32 %v1552, 4294901760
        %1554 = vmatmul.mubr.f32.gmra.mrb[0].mxu0 %v1553
        %v1555 = vpop.f32.mrb[0].mxu0
        %v1556 = vadd.f32 %v1475, %v1555
        %v1557 = vpop.f32.mrb[0].mxu0
        %1558 = vmatprep.mubr.f32.mxu0 0.0
        %v1559 = vand.u32 %v1231, 4294901760
        %v1560 = vsub.f32 %v1231, %v1559
        %v1561 = vand.u32 %v1560, 4294901760
        %1562 = vmatmul.mubr.f32.gmra.mrb[0].mxu0 %v1561
        %v1563 = vpop.f32.mrb[0].mxu0
        %v1564 = vadd.f32 %v1482, %v1563
        %v1565 = vpop.f32.mrb[0].mxu0
        %1566 = vdwg.mxu0
        %1567 = vmatprep.subr.mxu0 0.0
        %v1568 = vand.u32 %v1234, 4294901760
        %v1569 = vsub.f32 %v1234, %v1568
        %v1570 = vand.u32 %v1569, 4294901760
        %1571 = vmatpush1.msra.mxu0 %v1570
        %1572 = vmatprep.subr.mxu0 0.0
        %1573 = vmatpush1.msra.mxu0 0.0
        %1574 = vmatprep.subr.mxu0 0.0
        %1575 = vmatpush1.msra.mxu0 0.0
        %1576 = vmatprep.subr.mxu0 0.0
        %1577 = vmatpush1.msra.mxu0 0.0
        %1578 = vmatprep.subr.mxu0 0.0
        %1579 = vmatpush1.msra.mxu0 0.0
        %1580 = vmatprep.subr.mxu0 0.0
        %1581 = vmatpush1.msra.mxu0 0.0
        %1582 = vmatprep.subr.mxu0 0.0
        %1583 = vmatpush1.msra.mxu0 0.0
        %1584 = vmatprep.subr.mxu0 0.0
        %1585 = vmatpush1.msra.mxu0 0.0
        %1586 = vmatprep.subr.mxu0 0.0
        %1587 = vmatpush1.msra.mxu0 0.0
        %1588 = vmatprep.subr.mxu0 0.0
        %1589 = vmatpush1.msra.mxu0 0.0
        %1590 = vmatprep.subr.mxu0 0.0
        %1591 = vmatpush1.msra.mxu0 0.0
        %1592 = vmatprep.subr.mxu0 0.0
        %1593 = vmatpush1.msra.mxu0 0.0
        %1594 = vmatprep.subr.mxu0 0.0
        %1595 = vmatpush1.msra.mxu0 0.0
        %1596 = vmatprep.subr.mxu0 0.0
        %1597 = vmatpush1.msra.mxu0 0.0
        %1598 = vmatprep.subr.mxu0 0.0
        %1599 = vmatpush1.msra.mxu0 0.0
        %1600 = vmatprep.subr.mxu0 0.0
        %1601 = vmatpush1.msra.mxu0 0.0
        %1602 = vmatprep.subr.mxu0 0.0
        %1603 = vmatpush1.msra.mxu0 0.0
        %1604 = vmatprep.subr.mxu0 0.0
        %1605 = vmatpush1.msra.mxu0 0.0
        %1606 = vmatprep.subr.mxu0 0.0
        %1607 = vmatpush1.msra.mxu0 0.0
        %1608 = vmatprep.subr.mxu0 0.0
        %1609 = vmatpush1.msra.mxu0 0.0
        %1610 = vmatprep.subr.mxu0 0.0
        %1611 = vmatpush1.msra.mxu0 0.0
        %1612 = vmatprep.subr.mxu0 0.0
        %1613 = vmatpush1.msra.mxu0 0.0
        %1614 = vmatprep.subr.mxu0 0.0
        %1615 = vmatpush1.msra.mxu0 0.0
        %1616 = vmatprep.subr.mxu0 0.0
        %1617 = vmatpush1.msra.mxu0 0.0
        %1618 = vmatprep.subr.mxu0 0.0
        %1619 = vmatpush1.msra.mxu0 0.0
        %1620 = vmatprep.subr.mxu0 0.0
        %1621 = vmatpush1.msra.mxu0 0.0
        %1622 = vmatprep.subr.mxu0 0.0
        %1623 = vmatpush1.msra.mxu0 0.0
        %1624 = vmatprep.subr.mxu0 0.0
        %1625 = vmatpush1.msra.mxu0 0.0
        %1626 = vmatprep.subr.mxu0 0.0
        %1627 = vmatpush1.msra.mxu0 0.0
        %1628 = vmatprep.subr.mxu0 0.0
        %1629 = vmatpush1.msra.mxu0 0.0
        %1630 = vmatprep.subr.mxu0 0.0
        %1631 = vmatpush1.msra.mxu0 0.0
        %1632 = vmatprep.subr.mxu0 0.0
        %1633 = vmatpush1.msra.mxu0 0.0
        %1634 = vmatprep.mubr.f32.mxu0 0.0
        %v1635 = vand.u32 %v1228, 4294901760
        %1636 = vmatmul.mubr.f32.gmra.mrb[0].mxu0 %v1635
        %v1637 = vpop.f32.mrb[0].mxu0
        %v1638 = vadd.f32 %v1556, %v1637
        %v1639 = vpop.f32.mrb[0].mxu0
        %1640 = vmatprep.mubr.f32.mxu0 0.0
        %v1641 = vand.u32 %v1231, 4294901760
        %1642 = vmatmul.mubr.f32.gmra.mrb[0].mxu0 %v1641
        %v1643 = vpop.f32.mrb[0].mxu0
        %v1644 = vadd.f32 %v1564, %v1643
        %v1645 = vpop.f32.mrb[0].mxu0
        %1646 = vdwg.mxu0
        %1647 = vmatprep.subr.mxu0 0.0
        %v1648 = vand.u32 %v1234, 4294901760
        %1649 = vmatpush1.msra.mxu0 %v1648
        %1650 = vmatprep.subr.mxu0 0.0
        %1651 = vmatpush1.msra.mxu0 0.0
        %1652 = vmatprep.subr.mxu0 0.0
        %1653 = vmatpush1.msra.mxu0 0.0
        %1654 = vmatprep.subr.mxu0 0.0
        %1655 = vmatpush1.msra.mxu0 0.0
        %1656 = vmatprep.subr.mxu0 0.0
        %1657 = vmatpush1.msra.mxu0 0.0
        %1658 = vmatprep.subr.mxu0 0.0
        %1659 = vmatpush1.msra.mxu0 0.0
        %1660 = vmatprep.subr.mxu0 0.0
        %1661 = vmatpush1.msra.mxu0 0.0
        %1662 = vmatprep.subr.mxu0 0.0
        %1663 = vmatpush1.msra.mxu0 0.0
        %1664 = vmatprep.subr.mxu0 0.0
        %1665 = vmatpush1.msra.mxu0 0.0
        %1666 = vmatprep.subr.mxu0 0.0
        %1667 = vmatpush1.msra.mxu0 0.0
        %1668 = vmatprep.subr.mxu0 0.0
        %1669 = vmatpush1.msra.mxu0 0.0
        %1670 = vmatprep.subr.mxu0 0.0
        %1671 = vmatpush1.msra.mxu0 0.0
        %1672 = vmatprep.subr.mxu0 0.0
        %1673 = vmatpush1.msra.mxu0 0.0
        %1674 = vmatprep.subr.mxu0 0.0
        %1675 = vmatpush1.msra.mxu0 0.0
        %1676 = vmatprep.subr.mxu0 0.0
        %1677 = vmatpush1.msra.mxu0 0.0
        %1678 = vmatprep.subr.mxu0 0.0
        %1679 = vmatpush1.msra.mxu0 0.0
        %1680 = vmatprep.subr.mxu0 0.0
        %1681 = vmatpush1.msra.mxu0 0.0
        %1682 = vmatprep.subr.mxu0 0.0
        %1683 = vmatpush1.msra.mxu0 0.0
        %1684 = vmatprep.subr.mxu0 0.0
        %1685 = vmatpush1.msra.mxu0 0.0
        %1686 = vmatprep.subr.mxu0 0.0
        %1687 = vmatpush1.msra.mxu0 0.0
        %1688 = vmatprep.subr.mxu0 0.0
        %1689 = vmatpush1.msra.mxu0 0.0
        %1690 = vmatprep.subr.mxu0 0.0
        %1691 = vmatpush1.msra.mxu0 0.0
        %1692 = vmatprep.subr.mxu0 0.0
        %1693 = vmatpush1.msra.mxu0 0.0
        %1694 = vmatprep.subr.mxu0 0.0
        %1695 = vmatpush1.msra.mxu0 0.0
        %1696 = vmatprep.subr.mxu0 0.0
        %1697 = vmatpush1.msra.mxu0 0.0
        %1698 = vmatprep.subr.mxu0 0.0
        %1699 = vmatpush1.msra.mxu0 0.0
        %1700 = vmatprep.subr.mxu0 0.0
        %1701 = vmatpush1.msra.mxu0 0.0
        %1702 = vmatprep.subr.mxu0 0.0
        %1703 = vmatpush1.msra.mxu0 0.0
        %1704 = vmatprep.subr.mxu0 0.0
        %1705 = vmatpush1.msra.mxu0 0.0
        %1706 = vmatprep.subr.mxu0 0.0
        %1707 = vmatpush1.msra.mxu0 0.0
        %1708 = vmatprep.subr.mxu0 0.0
        %1709 = vmatpush1.msra.mxu0 0.0
        %1710 = vmatprep.subr.mxu0 0.0
        %1711 = vmatpush1.msra.mxu0 0.0
        %1712 = vmatprep.mubr.f32.mxu0 0.0
        %v1713 = vand.u32 %v1228, 4294901760
        %1714 = vmatmul.mubr.f32.gmra.mrb[0].mxu0 %v1713
        %v1715 = vpop.f32.mrb[0].mxu0
        %v1716 = vadd.f32 %v1638, %v1715
        %v1717 = vpop.f32.mrb[0].mxu0
        %1718 = vmatprep.mubr.f32.mxu0 0.0
        %v1719 = vand.u32 %v1231, 4294901760
        %1720 = vmatmul.mubr.f32.gmra.mrb[0].mxu0 %v1719
        %v1721 = vpop.f32.mrb[0].mxu0
        %v1722 = vadd.f32 %v1644, %v1721
        %v1723 = vpop.f32.mrb[0].mxu0
        %1724 = vdwg.mxu0
        %v1725 = vmul.f32 %v1716, 0.0013020834
        %v1726 = vmul.f32 %v1722, 0.0013020834
        %v1727 = vmul.f32 %v1725, %v1725
        %v1728 = vmul.f32 %v1726, %v1726
        %1731 = vrot.lane.b32.xlu0 %v1727, 1
        %v1732 = vpop.permute.xlu0 %1731
        %1733 = vrot.lane.b32.xlu0 %v1728, 1
        %v1734 = vpop.permute.xlu0 %1733
        %v1737 = vsub.f32 %v1725, %v1732
        %v1738 = vsub.f32 %v1726, %v1734
        %v1739 = vmax.f32 %v1737, 0.0
        %v1740 = vmax.f32 %v1738, 0.0
        %v1741 = vadd.f32 %v1739, 1e-05
        %v1742 = vadd.f32 %v1740, 1e-05
        %v1743 = vrsqrt.pop %v1741
        %v1744 = vrsqrt.pop %v1742
        %1747 = vrot.lane.b32.xlu0 %v1743, 127
        %v1748 = vpop.permute.xlu0 %1747
        %1749 = vrot.lane.b32.xlu0 %v1744, 127
        %v1750 = vpop.permute.xlu0 %1749
        %v1753 = vmul.f32 %v731, %v1748
        %v1754 = vmul.f32 %v732, %v1750
        %v1755 = vmul.f32 %v1725, %v1753
        %v1756 = vmul.f32 %v1726, %v1754
        %v1757 = vsub.f32 %v733, %v1755
        %v1758 = vsub.f32 %v734, %v1756
        %1760 = vset.pattern.permute.xlu0 0
        %1761 = vperm.xlu0 %1760, %v1753
        %v1762 = vpop.permute.xlu0 %1761
        %1765 = vset.pattern.permute.xlu0 0
        %1766 = vperm.xlu0 %1765, %v1754
        %v1767 = vpop.permute.xlu0 %1766
        %v1769 = vmul.f32 %v727, %v1762
        %v1770 = vmul.f32 %v728, %v1762
        %v1771 = vmul.f32 %v729, %v1767
        %v1772 = vmul.f32 %v730, %v1767
        %1774 = vset.pattern.permute.xlu0 0
        %1775 = vperm.xlu0 %1774, %v1757
        %v1776 = vpop.permute.xlu0 %1775
        %1779 = vset.pattern.permute.xlu0 0
        %1780 = vperm.xlu0 %1779, %v1758
        %v1781 = vpop.permute.xlu0 %1780
        %v1783 = vadd.f32 %v1769, %v1776
        %v1784 = vadd.f32 %v1770, %v1776
        %v1785 = vadd.f32 %v1771, %v1781
        %v1786 = vadd.f32 %v1772, %v1781
        %v1787 = vmul.f32 %v1783, %v578
        %v1788 = vmul.f32 %v1784, %v579
        %v1789 = vmul.f32 %v1785, %v578
        %v1790 = vmul.f32 %v1786, %v579
        %1791 = vrot.lane.b32.xlu0 %v1787, 1
        %v1792 = vpop.permute.xlu0 %1791
        %1793 = vrot.lane.b32.xlu0 %v1789, 1
        %v1794 = vpop.permute.xlu0 %1793
        %1795 = vrot.lane.b32.xlu0 %v1788, 1
        %v1796 = vpop.permute.xlu0 %1795
        %1797 = vrot.lane.b32.xlu0 %v1790, 1
        %v1798 = vpop.permute.xlu0 %1797
        %vm1799 = vcmp.lt.s32.totalorder %v548, 1
        %v1800 = vsel %vm1799, %v1792, %v1796
        %v1801 = vsel %vm1799, %v1794, %v1798
        %v1802 = vsel %vm1799, %v1796, %v1792
        %v1803 = vsel %vm1799, %v1798, %v1794
        %v1804 = vmul.f32 %v1783, %v584
        %v1805 = vmul.f32 %v1784, %v585
        %v1806 = vmul.f32 %v1785, %v584
        %v1807 = vmul.f32 %v1786, %v585
        %1808 = vrot.lane.b32.xlu0 %v1804, 127
        %v1809 = vpop.permute.xlu0 %1808
        %1810 = vrot.lane.b32.xlu0 %v1806, 127
        %v1811 = vpop.permute.xlu0 %1810
        %1812 = vrot.lane.b32.xlu0 %v1805, 127
        %v1813 = vpop.permute.xlu0 %1812
        %1814 = vrot.lane.b32.xlu0 %v1807, 127
        %v1815 = vpop.permute.xlu0 %1814
        %vm1816 = vcmp.lt.s32.totalorder %v548, 127
        %v1817 = vsel %vm1816, %v1809, %v1813
        %v1818 = vsel %vm1816, %v1811, %v1815
        %v1819 = vsel %vm1816, %v1813, %v1809
        %v1820 = vsel %vm1816, %v1815, %v1811
        %1822 = vset.pattern.permute.xlu0 0
        %1823 = vperm.xlu0 %1822, %v602
        %v1824 = vpop.permute.xlu0 %1823
        %1827 = vset.pattern.permute.xlu0 0
        %1828 = vperm.xlu0 %1827, %v603
        %v1829 = vpop.permute.xlu0 %1828
        %v1831 = vmul.f32 %v1802, %v1824
        %v1832 = vmul.f32 %v1800, %v1824
        %v1833 = vmul.f32 %v1803, %v1829
        %v1834 = vmul.f32 %v1801, %v1829
        %1835 = vset.pattern.permute.xlu0 1
        %1836 = vperm.xlu0 %1835, %v602
        %v1837 = vpop.permute.xlu0 %1836
        %1839 = vset.pattern.permute.xlu0 1
        %1840 = vperm.xlu0 %1839, %v603
        %v1841 = vpop.permute.xlu0 %1840
        %v1843 = vmul.f32 %v1783, %v1837
        %v1844 = vmul.f32 %v1784, %v1837
        %v1845 = vmul.f32 %v1785, %v1841
        %v1846 = vmul.f32 %v1786, %v1841
        %v1847 = vadd.f32 %v1831, %v1843
        %v1848 = vadd.f32 %v1832, %v1844
        %v1849 = vadd.f32 %v1833, %v1845
        %v1850 = vadd.f32 %v1834, %v1846
        %1851 = vset.pattern.permute.xlu0 2
        %1852 = vperm.xlu0 %1851, %v602
        %v1853 = vpop.permute.xlu0 %1852
        %1855 = vset.pattern.permute.xlu0 2
        %1856 = vperm.xlu0 %1855, %v603
        %v1857 = vpop.permute.xlu0 %1856
        %v1859 = vmul.f32 %v1817, %v1853
        %v1860 = vmul.f32 %v1819, %v1853
        %v1861 = vmul.f32 %v1818, %v1857
        %v1862 = vmul.f32 %v1820, %v1857
        %v1863 = vadd.f32 %v1847, %v1859
        %v1864 = vadd.f32 %v1848, %v1860
        %v1865 = vadd.f32 %v1849, %v1861
        %v1866 = vadd.f32 %v1850, %v1862
        %1867 = vrot.lane.b32.xlu0 %v1863, 16
        %v1868 = vpop.permute.xlu0 %1867
        %1869 = vrot.lane.b32.xlu0 %v1865, 16
        %v1870 = vpop.permute.xlu0 %1869
        %1871 = vrot.lane.b32.xlu0 %v1864, 16
        %v1872 = vpop.permute.xlu0 %1871
        %1873 = vrot.lane.b32.xlu0 %v1866, 16
        %v1874 = vpop.permute.xlu0 %1873
        %vm1875 = vcmp.lt.s32.totalorder %v548, 16
        %v1876 = vsel %vm1875, %v1868, %v1872
        %v1877 = vsel %vm1875, %v1870, %v1874
        %v1878 = vsel %vm1875, %v1872, %v1868
        %v1879 = vsel %vm1875, %v1874, %v1870
        %v1880 = vmul.f32 %v1878, %v590
        %v1881 = vmul.f32 %v1876, %v591
        %v1882 = vmul.f32 %v1879, %v590
        %v1883 = vmul.f32 %v1877, %v591
        %1884 = vset.pattern.permute.xlu0 3
        %1885 = vperm.xlu0 %1884, %v602
        %v1886 = vpop.permute.xlu0 %1885
        %1888 = vset.pattern.permute.xlu0 3
        %1889 = vperm.xlu0 %1888, %v603
        %v1890 = vpop.permute.xlu0 %1889
        %v1892 = vmul.f32 %v1802, %v1886
        %v1893 = vmul.f32 %v1800, %v1886
        %v1894 = vmul.f32 %v1803, %v1890
        %v1895 = vmul.f32 %v1801, %v1890
        %1896 = vset.pattern.permute.xlu0 4
        %1897 = vperm.xlu0 %1896, %v602
        %v1898 = vpop.permute.xlu0 %1897
        %1900 = vset.pattern.permute.xlu0 4
        %1901 = vperm.xlu0 %1900, %v603
        %v1902 = vpop.permute.xlu0 %1901
        %v1904 = vmul.f32 %v1783, %v1898
        %v1905 = vmul.f32 %v1784, %v1898
        %v1906 = vmul.f32 %v1785, %v1902
        %v1907 = vmul.f32 %v1786, %v1902
        %v1908 = vadd.f32 %v1892, %v1904
        %v1909 = vadd.f32 %v1893, %v1905
        %v1910 = vadd.f32 %v1894, %v1906
        %v1911 = vadd.f32 %v1895, %v1907
        %1912 = vset.pattern.permute.xlu0 5
        %1913 = vperm.xlu0 %1912, %v602
        %v1914 = vpop.permute.xlu0 %1913
        %1916 = vset.pattern.permute.xlu0 5
        %1917 = vperm.xlu0 %1916, %v603
        %v1918 = vpop.permute.xlu0 %1917
        %v1920 = vmul.f32 %v1817, %v1914
        %v1921 = vmul.f32 %v1819, %v1914
        %v1922 = vmul.f32 %v1818, %v1918
        %v1923 = vmul.f32 %v1820, %v1918
        %v1924 = vadd.f32 %v1908, %v1920
        %v1925 = vadd.f32 %v1909, %v1921
        %v1926 = vadd.f32 %v1910, %v1922
        %v1927 = vadd.f32 %v1911, %v1923
        %v1928 = vadd.f32 %v1880, %v1924
        %v1929 = vadd.f32 %v1881, %v1925
        %v1930 = vadd.f32 %v1882, %v1926
        %v1931 = vadd.f32 %v1883, %v1927
        %1932 = vset.pattern.permute.xlu0 6
        %1933 = vperm.xlu0 %1932, %v602
        %v1934 = vpop.permute.xlu0 %1933
        %1936 = vset.pattern.permute.xlu0 6
        %1937 = vperm.xlu0 %1936, %v603
        %v1938 = vpop.permute.xlu0 %1937
        %v1940 = vmul.f32 %v1802, %v1934
        %v1941 = vmul.f32 %v1800, %v1934
        %v1942 = vmul.f32 %v1803, %v1938
        %v1943 = vmul.f32 %v1801, %v1938
        %1944 = vset.pattern.permute.xlu0 7
        %1945 = vperm.xlu0 %1944, %v602
        %v1946 = vpop.permute.xlu0 %1945
        %1948 = vset.pattern.permute.xlu0 7
        %1949 = vperm.xlu0 %1948, %v603
        %v1950 = vpop.permute.xlu0 %1949
        %v1952 = vmul.f32 %v1783, %v1946
        %v1953 = vmul.f32 %v1784, %v1946
        %v1954 = vmul.f32 %v1785, %v1950
        %v1955 = vmul.f32 %v1786, %v1950
        %v1956 = vadd.f32 %v1940, %v1952
        %v1957 = vadd.f32 %v1941, %v1953
        %v1958 = vadd.f32 %v1942, %v1954
        %v1959 = vadd.f32 %v1943, %v1955
        %1960 = vset.pattern.permute.xlu0 8
        %1961 = vperm.xlu0 %1960, %v602
        %v1962 = vpop.permute.xlu0 %1961
        %1964 = vset.pattern.permute.xlu0 8
        %1965 = vperm.xlu0 %1964, %v603
        %v1966 = vpop.permute.xlu0 %1965
        %v1968 = vmul.f32 %v1817, %v1962
        %v1969 = vmul.f32 %v1819, %v1962
        %v1970 = vmul.f32 %v1818, %v1966
        %v1971 = vmul.f32 %v1820, %v1966
        %v1972 = vadd.f32 %v1956, %v1968
        %v1973 = vadd.f32 %v1957, %v1969
        %v1974 = vadd.f32 %v1958, %v1970
        %v1975 = vadd.f32 %v1959, %v1971
        %1976 = vrot.lane.b32.xlu0 %v1972, 112
        %v1977 = vpop.permute.xlu0 %1976
        %1978 = vrot.lane.b32.xlu0 %v1974, 112
        %v1979 = vpop.permute.xlu0 %1978
        %1980 = vrot.lane.b32.xlu0 %v1973, 112
        %v1981 = vpop.permute.xlu0 %1980
        %1982 = vrot.lane.b32.xlu0 %v1975, 112
        %v1983 = vpop.permute.xlu0 %1982
        %vm1984 = vcmp.lt.s32.totalorder %v548, 112
        %v1985 = vsel %vm1984, %v1977, %v1981
        %v1986 = vsel %vm1984, %v1979, %v1983
        %v1987 = vsel %vm1984, %v1981, %v1977
        %v1988 = vsel %vm1984, %v1983, %v1979
        %v1989 = vmul.f32 %v1985, %v596
        %v1990 = vmul.f32 %v1987, %v597
        %v1991 = vmul.f32 %v1986, %v596
        %v1992 = vmul.f32 %v1988, %v597
        %v1993 = vadd.f32 %v1928, %v1989
        %v1994 = vadd.f32 %v1929, %v1990
        %v1995 = vadd.f32 %v1930, %v1991
        %v1996 = vadd.f32 %v1931, %v1992
        %v1997 = vld [vmem:[%s6] sm:$0xff]
        %v1998 = vld [vmem:[%s6 + $0x8] sm:$0xf]
        %2000 = vset.pattern.permute.xlu0 0
        %2001 = vperm.xlu0 %2000, %v1997
        %v2002 = vpop.permute.xlu0 %2001
        %2005 = vset.pattern.permute.xlu0 0
        %2006 = vperm.xlu0 %2005, %v1998
        %v2007 = vpop.permute.xlu0 %2006
        %v2009 = vadd.f32 %v1993, %v2002
        %v2010 = vadd.f32 %v1994, %v2002
        %v2011 = vadd.f32 %v1995, %v2007
        %v2012 = vadd.f32 %v1996, %v2007
        %v2013 = vsub.f32 0.0, %v2009
        %v2014 = vsub.f32 0.0, %v2010
        %v2015 = vsub.f32 0.0, %v2011
        %v2016 = vsub.f32 0.0, %v2012
        %v2017 = vmul.f32 %v2013, 1.442695
        %v2018 = vpow.pop %v2017
        %v2019 = vmul.f32 %v2014, 1.442695
        %v2020 = vpow.pop %v2019
        %v2021 = vmul.f32 %v2015, 1.442695
        %v2022 = vpow.pop %v2021
        %v2023 = vmul.f32 %v2016, 1.442695
        %v2024 = vpow.pop %v2023
        %v2025 = vadd.f32 %v2018, 1.0
        %v2026 = vadd.f32 %v2020, 1.0
        %v2027 = vadd.f32 %v2022, 1.0
        %v2028 = vadd.f32 %v2024, 1.0
        %v2029 = vrcp.pop %v2025
        %v2030 = vrcp.pop %v2026
        %v2031 = vrcp.pop %v2027
        %v2032 = vrcp.pop %v2028
        %v2033 = vmul.f32 %v2009, %v2029
        %v2034 = vmul.f32 %v2010, %v2030
        %v2035 = vmul.f32 %v2011, %v2031
        %v2036 = vmul.f32 %v2012, %v2032
        %v2037 = vld [vmem:[%s7] sm:$0xff]
        %v2038 = vld [vmem:[%s7 + $0x8] sm:$0xf]
        %v2039 = vld [vmem:[%s8] sm:$0xff]
        %v2040 = vld [vmem:[%s8 + $0x8] sm:$0xf]
        %v2041 = vadd.f32 %v2033, %v2034
        %2042 = vadd.xlane.f32.xlu0 %v2041
        %v2043 = vpop.xlane.xlu0 %2042
        %v2044 = vsel %vm625, %v2035, 0.0
        %v2045 = vsel %vm625, %v2036, 0.0
        %v2046 = vadd.f32 %v2044, %v2045
        %2047 = vadd.xlane.f32.xlu0 %v2046
        %v2048 = vpop.xlane.xlu0 %2047
        %v2049 = vmul.f32 %v2033, %v2033
        %v2050 = vmul.f32 %v2034, %v2034
        %v2051 = vmul.f32 %v2035, %v2035
        %v2052 = vmul.f32 %v2036, %v2036
        %v2053 = vadd.f32 %v2049, %v2050
        %2054 = vadd.xlane.f32.xlu0 %v2053
        %v2055 = vpop.xlane.xlu0 %2054
        %v2056 = vsel %vm625, %v2051, 0.0
        %v2057 = vsel %vm625, %v2052, 0.0
        %v2058 = vadd.f32 %v2056, %v2057
        %2059 = vadd.xlane.f32.xlu0 %v2058
        %v2060 = vpop.xlane.xlu0 %2059
        %v2061 = vsel %vm758, %v2043, %v2055
        %v2062 = vsel %vm758, %v2048, %v2060
        %v2064 = vsel %vm625, %v2062, 0
        %2066 = vmatprep.subr.mxu0 0.0
        %v2067 = vand.u32 %v2061, 4294901760
        %2068 = vmatpush1.msra.mxu0 %v2067
        %2069 = vmatprep.subr.mxu0 0.0
        %v2070 = vand.u32 %v2064, 4294901760
        %2071 = vmatpush1.msra.mxu0 %v2070
        %2072 = vmatprep.subr.mxu0 0.0
        %2073 = vmatpush1.msra.mxu0 0.0
        %2074 = vmatprep.subr.mxu0 0.0
        %2075 = vmatpush1.msra.mxu0 0.0
        %2076 = vmatprep.subr.mxu0 0.0
        %2077 = vmatpush1.msra.mxu0 0.0
        %2078 = vmatprep.subr.mxu0 0.0
        %2079 = vmatpush1.msra.mxu0 0.0
        %2080 = vmatprep.subr.mxu0 0.0
        %2081 = vmatpush1.msra.mxu0 0.0
        %2082 = vmatprep.subr.mxu0 0.0
        %2083 = vmatpush1.msra.mxu0 0.0
        %2084 = vmatprep.subr.mxu0 0.0
        %2085 = vmatpush1.msra.mxu0 0.0
        %2086 = vmatprep.subr.mxu0 0.0
        %2087 = vmatpush1.msra.mxu0 0.0
        %2088 = vmatprep.subr.mxu0 0.0
        %2089 = vmatpush1.msra.mxu0 0.0
        %2090 = vmatprep.subr.mxu0 0.0
        %2091 = vmatpush1.msra.mxu0 0.0
        %2092 = vmatprep.subr.mxu0 0.0
        %2093 = vmatpush1.msra.mxu0 0.0
        %2094 = vmatprep.subr.mxu0 0.0
        %2095 = vmatpush1.msra.mxu0 0.0
        %2096 = vmatprep.subr.mxu0 0.0
        %2097 = vmatpush1.msra.mxu0 0.0
        %2098 = vmatprep.subr.mxu0 0.0
        %2099 = vmatpush1.msra.mxu0 0.0
        %2100 = vmatprep.subr.mxu0 0.0
        %2101 = vmatpush1.msra.mxu0 0.0
        %2102 = vmatprep.subr.mxu0 0.0
        %2103 = vmatpush1.msra.mxu0 0.0
        %2104 = vmatprep.subr.mxu0 0.0
        %2105 = vmatpush1.msra.mxu0 0.0
        %2106 = vmatprep.subr.mxu0 0.0
        %2107 = vmatpush1.msra.mxu0 0.0
        %2108 = vmatprep.subr.mxu0 0.0
        %2109 = vmatpush1.msra.mxu0 0.0
        %2110 = vmatprep.subr.mxu0 0.0
        %2111 = vmatpush1.msra.mxu0 0.0
        %2112 = vmatprep.subr.mxu0 0.0
        %2113 = vmatpush1.msra.mxu0 0.0
        %2114 = vmatprep.subr.mxu0 0.0
        %2115 = vmatpush1.msra.mxu0 0.0
        %2116 = vmatprep.subr.mxu0 0.0
        %2117 = vmatpush1.msra.mxu0 0.0
        %2118 = vmatprep.subr.mxu0 0.0
        %2119 = vmatpush1.msra.mxu0 0.0
        %2120 = vmatprep.subr.mxu0 0.0
        %2121 = vmatpush1.msra.mxu0 0.0
        %2122 = vmatprep.subr.mxu0 0.0
        %2123 = vmatpush1.msra.mxu0 0.0
        %2124 = vmatprep.subr.mxu0 0.0
        %2125 = vmatpush1.msra.mxu0 0.0
        %2126 = vmatprep.subr.mxu0 0.0
        %2127 = vmatpush1.msra.mxu0 0.0
        %2128 = vmatprep.subr.mxu0 0.0
        %2129 = vmatpush1.msra.mxu0 0.0
        %2130 = vmatprep.subr.mxu0 0.0
        %2131 = vmatpush1.msra.mxu0 0.0
        %2132 = vmatprep.mubr.f32.mxu0 0.0
        %v2133 = vand.u32 %v763, 4294901760
        %v2134 = vsub.f32 %v763, %v2133
        %v2135 = vand.u32 %v2134, 4294901760
        %v2136 = vsub.f32 %v2134, %v2135
        %v2137 = vand.u32 %v2136, 4294901760
        %2138 = vmatmul.mubr.f32.gmra.mrb[0].mxu0 %v2137
        %v2139 = vpop.f32.mrb[0].mxu0
        %v2140 = vadd.f32 0.0, %v2139
        %v2141 = vpop.f32.mrb[0].mxu0
        %2142 = vdwg.mxu0
        %2143 = vmatprep.subr.mxu0 0.0
        %v2144 = vand.u32 %v2061, 4294901760
        %v2145 = vsub.f32 %v2061, %v2144
        %v2146 = vand.u32 %v2145, 4294901760
        %v2147 = vsub.f32 %v2145, %v2146
        %v2148 = vand.u32 %v2147, 4294901760
        %2149 = vmatpush1.msra.mxu0 %v2148
        %2150 = vmatprep.subr.mxu0 0.0
        %v2151 = vand.u32 %v2064, 4294901760
        %v2152 = vsub.f32 %v2064, %v2151
        %v2153 = vand.u32 %v2152, 4294901760
        %v2154 = vsub.f32 %v2152, %v2153
        %v2155 = vand.u32 %v2154, 4294901760
        %2156 = vmatpush1.msra.mxu0 %v2155
        %2157 = vmatprep.subr.mxu0 0.0
        %2158 = vmatpush1.msra.mxu0 0.0
        %2159 = vmatprep.subr.mxu0 0.0
        %2160 = vmatpush1.msra.mxu0 0.0
        %2161 = vmatprep.subr.mxu0 0.0
        %2162 = vmatpush1.msra.mxu0 0.0
        %2163 = vmatprep.subr.mxu0 0.0
        %2164 = vmatpush1.msra.mxu0 0.0
        %2165 = vmatprep.subr.mxu0 0.0
        %2166 = vmatpush1.msra.mxu0 0.0
        %2167 = vmatprep.subr.mxu0 0.0
        %2168 = vmatpush1.msra.mxu0 0.0
        %2169 = vmatprep.subr.mxu0 0.0
        %2170 = vmatpush1.msra.mxu0 0.0
        %2171 = vmatprep.subr.mxu0 0.0
        %2172 = vmatpush1.msra.mxu0 0.0
        %2173 = vmatprep.subr.mxu0 0.0
        %2174 = vmatpush1.msra.mxu0 0.0
        %2175 = vmatprep.subr.mxu0 0.0
        %2176 = vmatpush1.msra.mxu0 0.0
        %2177 = vmatprep.subr.mxu0 0.0
        %2178 = vmatpush1.msra.mxu0 0.0
        %2179 = vmatprep.subr.mxu0 0.0
        %2180 = vmatpush1.msra.mxu0 0.0
        %2181 = vmatprep.subr.mxu0 0.0
        %2182 = vmatpush1.msra.mxu0 0.0
        %2183 = vmatprep.subr.mxu0 0.0
        %2184 = vmatpush1.msra.mxu0 0.0
        %2185 = vmatprep.subr.mxu0 0.0
        %2186 = vmatpush1.msra.mxu0 0.0
        %2187 = vmatprep.subr.mxu0 0.0
        %2188 = vmatpush1.msra.mxu0 0.0
        %2189 = vmatprep.subr.mxu0 0.0
        %2190 = vmatpush1.msra.mxu0 0.0
        %2191 = vmatprep.subr.mxu0 0.0
        %2192 = vmatpush1.msra.mxu0 0.0
        %2193 = vmatprep.subr.mxu0 0.0
        %2194 = vmatpush1.msra.mxu0 0.0
        %2195 = vmatprep.subr.mxu0 0.0
        %2196 = vmatpush1.msra.mxu0 0.0
        %2197 = vmatprep.subr.mxu0 0.0
        %2198 = vmatpush1.msra.mxu0 0.0
        %2199 = vmatprep.subr.mxu0 0.0
        %2200 = vmatpush1.msra.mxu0 0.0
        %2201 = vmatprep.subr.mxu0 0.0
        %2202 = vmatpush1.msra.mxu0 0.0
        %2203 = vmatprep.subr.mxu0 0.0
        %2204 = vmatpush1.msra.mxu0 0.0
        %2205 = vmatprep.subr.mxu0 0.0
        %2206 = vmatpush1.msra.mxu0 0.0
        %2207 = vmatprep.subr.mxu0 0.0
        %2208 = vmatpush1.msra.mxu0 0.0
        %2209 = vmatprep.subr.mxu0 0.0
        %2210 = vmatpush1.msra.mxu0 0.0
        %2211 = vmatprep.subr.mxu0 0.0
        %2212 = vmatpush1.msra.mxu0 0.0
        %2213 = vmatprep.subr.mxu0 0.0
        %2214 = vmatpush1.msra.mxu0 0.0
        %2215 = vmatprep.subr.mxu0 0.0
        %2216 = vmatpush1.msra.mxu0 0.0
        %2217 = vmatprep.mubr.f32.mxu0 0.0
        %v2218 = vand.u32 %v763, 4294901760
        %2219 = vmatmul.mubr.f32.gmra.mrb[0].mxu0 %v2218
        %v2220 = vpop.f32.mrb[0].mxu0
        %v2221 = vadd.f32 %v2140, %v2220
        %v2222 = vpop.f32.mrb[0].mxu0
        %2223 = vdwg.mxu0
        %2224 = vmatprep.subr.mxu0 0.0
        %v2225 = vand.u32 %v2061, 4294901760
        %v2226 = vsub.f32 %v2061, %v2225
        %2227 = vmatpush1.msra.mxu0 %v2226
        %2228 = vmatprep.subr.mxu0 0.0
        %v2229 = vand.u32 %v2064, 4294901760
        %v2230 = vsub.f32 %v2064, %v2229
        %2231 = vmatpush1.msra.mxu0 %v2230
        %2232 = vmatprep.subr.mxu0 0.0
        %2233 = vmatpush1.msra.mxu0 0.0
        %2234 = vmatprep.subr.mxu0 0.0
        %2235 = vmatpush1.msra.mxu0 0.0
        %2236 = vmatprep.subr.mxu0 0.0
        %2237 = vmatpush1.msra.mxu0 0.0
        %2238 = vmatprep.subr.mxu0 0.0
        %2239 = vmatpush1.msra.mxu0 0.0
        %2240 = vmatprep.subr.mxu0 0.0
        %2241 = vmatpush1.msra.mxu0 0.0
        %2242 = vmatprep.subr.mxu0 0.0
        %2243 = vmatpush1.msra.mxu0 0.0
        %2244 = vmatprep.subr.mxu0 0.0
        %2245 = vmatpush1.msra.mxu0 0.0
        %2246 = vmatprep.subr.mxu0 0.0
        %2247 = vmatpush1.msra.mxu0 0.0
        %2248 = vmatprep.subr.mxu0 0.0
        %2249 = vmatpush1.msra.mxu0 0.0
        %2250 = vmatprep.subr.mxu0 0.0
        %2251 = vmatpush1.msra.mxu0 0.0
        %2252 = vmatprep.subr.mxu0 0.0
        %2253 = vmatpush1.msra.mxu0 0.0
        %2254 = vmatprep.subr.mxu0 0.0
        %2255 = vmatpush1.msra.mxu0 0.0
        %2256 = vmatprep.subr.mxu0 0.0
        %2257 = vmatpush1.msra.mxu0 0.0
        %2258 = vmatprep.subr.mxu0 0.0
        %2259 = vmatpush1.msra.mxu0 0.0
        %2260 = vmatprep.subr.mxu0 0.0
        %2261 = vmatpush1.msra.mxu0 0.0
        %2262 = vmatprep.subr.mxu0 0.0
        %2263 = vmatpush1.msra.mxu0 0.0
        %2264 = vmatprep.subr.mxu0 0.0
        %2265 = vmatpush1.msra.mxu0 0.0
        %2266 = vmatprep.subr.mxu0 0.0
        %2267 = vmatpush1.msra.mxu0 0.0
        %2268 = vmatprep.subr.mxu0 0.0
        %2269 = vmatpush1.msra.mxu0 0.0
        %2270 = vmatprep.subr.mxu0 0.0
        %2271 = vmatpush1.msra.mxu0 0.0
        %2272 = vmatprep.subr.mxu0 0.0
        %2273 = vmatpush1.msra.mxu0 0.0
        %2274 = vmatprep.subr.mxu0 0.0
        %2275 = vmatpush1.msra.mxu0 0.0
        %2276 = vmatprep.subr.mxu0 0.0
        %2277 = vmatpush1.msra.mxu0 0.0
        %2278 = vmatprep.subr.mxu0 0.0
        %2279 = vmatpush1.msra.mxu0 0.0
        %2280 = vmatprep.subr.mxu0 0.0
        %2281 = vmatpush1.msra.mxu0 0.0
        %2282 = vmatprep.subr.mxu0 0.0
        %2283 = vmatpush1.msra.mxu0 0.0
        %2284 = vmatprep.subr.mxu0 0.0
        %2285 = vmatpush1.msra.mxu0 0.0
        %2286 = vmatprep.subr.mxu0 0.0
        %2287 = vmatpush1.msra.mxu0 0.0
        %2288 = vmatprep.subr.mxu0 0.0
        %2289 = vmatpush1.msra.mxu0 0.0
        %2290 = vmatprep.subr.mxu0 0.0
        %2291 = vmatpush1.msra.mxu0 0.0
        %2292 = vmatprep.mubr.f32.mxu0 0.0
        %v2293 = vand.u32 %v763, 4294901760
        %v2294 = vsub.f32 %v763, %v2293
        %2295 = vmatmul.mubr.f32.gmra.mrb[0].mxu0 %v2294
        %v2296 = vpop.f32.mrb[0].mxu0
        %v2297 = vadd.f32 %v2221, %v2296
        %v2298 = vpop.f32.mrb[0].mxu0
        %2299 = vdwg.mxu0
        %2300 = vmatprep.subr.mxu0 0.0
        %v2301 = vand.u32 %v2061, 4294901760
        %2302 = vmatpush1.msra.mxu0 %v2301
        %2303 = vmatprep.subr.mxu0 0.0
        %v2304 = vand.u32 %v2064, 4294901760
        %2305 = vmatpush1.msra.mxu0 %v2304
        %2306 = vmatprep.subr.mxu0 0.0
        %2307 = vmatpush1.msra.mxu0 0.0
        %2308 = vmatprep.subr.mxu0 0.0
        %2309 = vmatpush1.msra.mxu0 0.0
        %2310 = vmatprep.subr.mxu0 0.0
        %2311 = vmatpush1.msra.mxu0 0.0
        %2312 = vmatprep.subr.mxu0 0.0
        %2313 = vmatpush1.msra.mxu0 0.0
        %2314 = vmatprep.subr.mxu0 0.0
        %2315 = vmatpush1.msra.mxu0 0.0
        %2316 = vmatprep.subr.mxu0 0.0
        %2317 = vmatpush1.msra.mxu0 0.0
        %2318 = vmatprep.subr.mxu0 0.0
        %2319 = vmatpush1.msra.mxu0 0.0
        %2320 = vmatprep.subr.mxu0 0.0
        %2321 = vmatpush1.msra.mxu0 0.0
        %2322 = vmatprep.subr.mxu0 0.0
        %2323 = vmatpush1.msra.mxu0 0.0
        %2324 = vmatprep.subr.mxu0 0.0
        %2325 = vmatpush1.msra.mxu0 0.0
        %2326 = vmatprep.subr.mxu0 0.0
        %2327 = vmatpush1.msra.mxu0 0.0
        %2328 = vmatprep.subr.mxu0 0.0
        %2329 = vmatpush1.msra.mxu0 0.0
        %2330 = vmatprep.subr.mxu0 0.0
        %2331 = vmatpush1.msra.mxu0 0.0
        %2332 = vmatprep.subr.mxu0 0.0
        %2333 = vmatpush1.msra.mxu0 0.0
        %2334 = vmatprep.subr.mxu0 0.0
        %2335 = vmatpush1.msra.mxu0 0.0
        %2336 = vmatprep.subr.mxu0 0.0
        %2337 = vmatpush1.msra.mxu0 0.0
        %2338 = vmatprep.subr.mxu0 0.0
        %2339 = vmatpush1.msra.mxu0 0.0
        %2340 = vmatprep.subr.mxu0 0.0
        %2341 = vmatpush1.msra.mxu0 0.0
        %2342 = vmatprep.subr.mxu0 0.0
        %2343 = vmatpush1.msra.mxu0 0.0
        %2344 = vmatprep.subr.mxu0 0.0
        %2345 = vmatpush1.msra.mxu0 0.0
        %2346 = vmatprep.subr.mxu0 0.0
        %2347 = vmatpush1.msra.mxu0 0.0
        %2348 = vmatprep.subr.mxu0 0.0
        %2349 = vmatpush1.msra.mxu0 0.0
        %2350 = vmatprep.subr.mxu0 0.0
        %2351 = vmatpush1.msra.mxu0 0.0
        %2352 = vmatprep.subr.mxu0 0.0
        %2353 = vmatpush1.msra.mxu0 0.0
        %2354 = vmatprep.subr.mxu0 0.0
        %2355 = vmatpush1.msra.mxu0 0.0
        %2356 = vmatprep.subr.mxu0 0.0
        %2357 = vmatpush1.msra.mxu0 0.0
        %2358 = vmatprep.subr.mxu0 0.0
        %2359 = vmatpush1.msra.mxu0 0.0
        %2360 = vmatprep.subr.mxu0 0.0
        %2361 = vmatpush1.msra.mxu0 0.0
        %2362 = vmatprep.subr.mxu0 0.0
        %2363 = vmatpush1.msra.mxu0 0.0
        %2364 = vmatprep.subr.mxu0 0.0
        %2365 = vmatpush1.msra.mxu0 0.0
        %2366 = vmatprep.mubr.f32.mxu0 0.0
        %v2367 = vand.u32 %v763, 4294901760
        %v2368 = vsub.f32 %v763, %v2367
        %v2369 = vand.u32 %v2368, 4294901760
        %2370 = vmatmul.mubr.f32.gmra.mrb[0].mxu0 %v2369
        %v2371 = vpop.f32.mrb[0].mxu0
        %v2372 = vadd.f32 %v2297, %v2371
        %v2373 = vpop.f32.mrb[0].mxu0
        %2374 = vdwg.mxu0
        %2375 = vmatprep.subr.mxu0 0.0
        %v2376 = vand.u32 %v2061, 4294901760
        %v2377 = vsub.f32 %v2061, %v2376
        %v2378 = vand.u32 %v2377, 4294901760
        %2379 = vmatpush1.msra.mxu0 %v2378
        %2380 = vmatprep.subr.mxu0 0.0
        %v2381 = vand.u32 %v2064, 4294901760
        %v2382 = vsub.f32 %v2064, %v2381
        %v2383 = vand.u32 %v2382, 4294901760
        %2384 = vmatpush1.msra.mxu0 %v2383
        %2385 = vmatprep.subr.mxu0 0.0
        %2386 = vmatpush1.msra.mxu0 0.0
        %2387 = vmatprep.subr.mxu0 0.0
        %2388 = vmatpush1.msra.mxu0 0.0
        %2389 = vmatprep.subr.mxu0 0.0
        %2390 = vmatpush1.msra.mxu0 0.0
        %2391 = vmatprep.subr.mxu0 0.0
        %2392 = vmatpush1.msra.mxu0 0.0
        %2393 = vmatprep.subr.mxu0 0.0
        %2394 = vmatpush1.msra.mxu0 0.0
        %2395 = vmatprep.subr.mxu0 0.0
        %2396 = vmatpush1.msra.mxu0 0.0
        %2397 = vmatprep.subr.mxu0 0.0
        %2398 = vmatpush1.msra.mxu0 0.0
        %2399 = vmatprep.subr.mxu0 0.0
        %2400 = vmatpush1.msra.mxu0 0.0
        %2401 = vmatprep.subr.mxu0 0.0
        %2402 = vmatpush1.msra.mxu0 0.0
        %2403 = vmatprep.subr.mxu0 0.0
        %2404 = vmatpush1.msra.mxu0 0.0
        %2405 = vmatprep.subr.mxu0 0.0
        %2406 = vmatpush1.msra.mxu0 0.0
        %2407 = vmatprep.subr.mxu0 0.0
        %2408 = vmatpush1.msra.mxu0 0.0
        %2409 = vmatprep.subr.mxu0 0.0
        %2410 = vmatpush1.msra.mxu0 0.0
        %2411 = vmatprep.subr.mxu0 0.0
        %2412 = vmatpush1.msra.mxu0 0.0
        %2413 = vmatprep.subr.mxu0 0.0
        %2414 = vmatpush1.msra.mxu0 0.0
        %2415 = vmatprep.subr.mxu0 0.0
        %2416 = vmatpush1.msra.mxu0 0.0
        %2417 = vmatprep.subr.mxu0 0.0
        %2418 = vmatpush1.msra.mxu0 0.0
        %2419 = vmatprep.subr.mxu0 0.0
        %2420 = vmatpush1.msra.mxu0 0.0
        %2421 = vmatprep.subr.mxu0 0.0
        %2422 = vmatpush1.msra.mxu0 0.0
        %2423 = vmatprep.subr.mxu0 0.0
        %2424 = vmatpush1.msra.mxu0 0.0
        %2425 = vmatprep.subr.mxu0 0.0
        %2426 = vmatpush1.msra.mxu0 0.0
        %2427 = vmatprep.subr.mxu0 0.0
        %2428 = vmatpush1.msra.mxu0 0.0
        %2429 = vmatprep.subr.mxu0 0.0
        %2430 = vmatpush1.msra.mxu0 0.0
        %2431 = vmatprep.subr.mxu0 0.0
        %2432 = vmatpush1.msra.mxu0 0.0
        %2433 = vmatprep.subr.mxu0 0.0
        %2434 = vmatpush1.msra.mxu0 0.0
        %2435 = vmatprep.subr.mxu0 0.0
        %2436 = vmatpush1.msra.mxu0 0.0
        %2437 = vmatprep.subr.mxu0 0.0
        %2438 = vmatpush1.msra.mxu0 0.0
        %2439 = vmatprep.subr.mxu0 0.0
        %2440 = vmatpush1.msra.mxu0 0.0
        %2441 = vmatprep.subr.mxu0 0.0
        %2442 = vmatpush1.msra.mxu0 0.0
        %2443 = vmatprep.subr.mxu0 0.0
        %2444 = vmatpush1.msra.mxu0 0.0
        %2445 = vmatprep.mubr.f32.mxu0 0.0
        %v2446 = vand.u32 %v763, 4294901760
        %2447 = vmatmul.mubr.f32.gmra.mrb[0].mxu0 %v2446
        %v2448 = vpop.f32.mrb[0].mxu0
        %v2449 = vadd.f32 %v2372, %v2448
        %v2450 = vpop.f32.mrb[0].mxu0
        %2451 = vdwg.mxu0
        %2452 = vmatprep.subr.mxu0 0.0
        %v2453 = vand.u32 %v2061, 4294901760
        %2454 = vmatpush1.msra.mxu0 %v2453
        %2455 = vmatprep.subr.mxu0 0.0
        %v2456 = vand.u32 %v2064, 4294901760
        %2457 = vmatpush1.msra.mxu0 %v2456
        %2458 = vmatprep.subr.mxu0 0.0
        %2459 = vmatpush1.msra.mxu0 0.0
        %2460 = vmatprep.subr.mxu0 0.0
        %2461 = vmatpush1.msra.mxu0 0.0
        %2462 = vmatprep.subr.mxu0 0.0
        %2463 = vmatpush1.msra.mxu0 0.0
        %2464 = vmatprep.subr.mxu0 0.0
        %2465 = vmatpush1.msra.mxu0 0.0
        %2466 = vmatprep.subr.mxu0 0.0
        %2467 = vmatpush1.msra.mxu0 0.0
        %2468 = vmatprep.subr.mxu0 0.0
        %2469 = vmatpush1.msra.mxu0 0.0
        %2470 = vmatprep.subr.mxu0 0.0
        %2471 = vmatpush1.msra.mxu0 0.0
        %2472 = vmatprep.subr.mxu0 0.0
        %2473 = vmatpush1.msra.mxu0 0.0
        %2474 = vmatprep.subr.mxu0 0.0
        %2475 = vmatpush1.msra.mxu0 0.0
        %2476 = vmatprep.subr.mxu0 0.0
        %2477 = vmatpush1.msra.mxu0 0.0
        %2478 = vmatprep.subr.mxu0 0.0
        %2479 = vmatpush1.msra.mxu0 0.0
        %2480 = vmatprep.subr.mxu0 0.0
        %2481 = vmatpush1.msra.mxu0 0.0
        %2482 = vmatprep.subr.mxu0 0.0
        %2483 = vmatpush1.msra.mxu0 0.0
        %2484 = vmatprep.subr.mxu0 0.0
        %2485 = vmatpush1.msra.mxu0 0.0
        %2486 = vmatprep.subr.mxu0 0.0
        %2487 = vmatpush1.msra.mxu0 0.0
        %2488 = vmatprep.subr.mxu0 0.0
        %2489 = vmatpush1.msra.mxu0 0.0
        %2490 = vmatprep.subr.mxu0 0.0
        %2491 = vmatpush1.msra.mxu0 0.0
        %2492 = vmatprep.subr.mxu0 0.0
        %2493 = vmatpush1.msra.mxu0 0.0
        %2494 = vmatprep.subr.mxu0 0.0
        %2495 = vmatpush1.msra.mxu0 0.0
        %2496 = vmatprep.subr.mxu0 0.0
        %2497 = vmatpush1.msra.mxu0 0.0
        %2498 = vmatprep.subr.mxu0 0.0
        %2499 = vmatpush1.msra.mxu0 0.0
        %2500 = vmatprep.subr.mxu0 0.0
        %2501 = vmatpush1.msra.mxu0 0.0
        %2502 = vmatprep.subr.mxu0 0.0
        %2503 = vmatpush1.msra.mxu0 0.0
        %2504 = vmatprep.subr.mxu0 0.0
        %2505 = vmatpush1.msra.mxu0 0.0
        %2506 = vmatprep.subr.mxu0 0.0
        %2507 = vmatpush1.msra.mxu0 0.0
        %2508 = vmatprep.subr.mxu0 0.0
        %2509 = vmatpush1.msra.mxu0 0.0
        %2510 = vmatprep.subr.mxu0 0.0
        %2511 = vmatpush1.msra.mxu0 0.0
        %2512 = vmatprep.subr.mxu0 0.0
        %2513 = vmatpush1.msra.mxu0 0.0
        %2514 = vmatprep.subr.mxu0 0.0
        %2515 = vmatpush1.msra.mxu0 0.0
        %2516 = vmatprep.subr.mxu0 0.0
        %2517 = vmatpush1.msra.mxu0 0.0
        %2518 = vmatprep.mubr.f32.mxu0 0.0
        %v2519 = vand.u32 %v763, 4294901760
        %2520 = vmatmul.mubr.f32.gmra.mrb[0].mxu0 %v2519
        %v2521 = vpop.f32.mrb[0].mxu0
        %v2522 = vadd.f32 %v2449, %v2521
        %v2523 = vpop.f32.mrb[0].mxu0
        %2524 = vdwg.mxu0
        %v2526 = vsel %vm625, %v2522, 0
        %2528 = vmatprep.subr.mxu0 0.0
        %v2529 = vand.u32 %v2526, 4294901760
        %2530 = vmatpush1.msra.mxu0 %v2529
        %2531 = vmatprep.subr.mxu0 0.0
        %2532 = vmatpush1.msra.mxu0 0.0
        %2533 = vmatprep.subr.mxu0 0.0
        %2534 = vmatpush1.msra.mxu0 0.0
        %2535 = vmatprep.subr.mxu0 0.0
        %2536 = vmatpush1.msra.mxu0 0.0
        %2537 = vmatprep.subr.mxu0 0.0
        %2538 = vmatpush1.msra.mxu0 0.0
        %2539 = vmatprep.subr.mxu0 0.0
        %2540 = vmatpush1.msra.mxu0 0.0
        %2541 = vmatprep.subr.mxu0 0.0
        %2542 = vmatpush1.msra.mxu0 0.0
        %2543 = vmatprep.subr.mxu0 0.0
        %2544 = vmatpush1.msra.mxu0 0.0
        %2545 = vmatprep.subr.mxu0 0.0
        %2546 = vmatpush1.msra.mxu0 0.0
        %2547 = vmatprep.subr.mxu0 0.0
        %2548 = vmatpush1.msra.mxu0 0.0
        %2549 = vmatprep.subr.mxu0 0.0
        %2550 = vmatpush1.msra.mxu0 0.0
        %2551 = vmatprep.subr.mxu0 0.0
        %2552 = vmatpush1.msra.mxu0 0.0
        %2553 = vmatprep.subr.mxu0 0.0
        %2554 = vmatpush1.msra.mxu0 0.0
        %2555 = vmatprep.subr.mxu0 0.0
        %2556 = vmatpush1.msra.mxu0 0.0
        %2557 = vmatprep.subr.mxu0 0.0
        %2558 = vmatpush1.msra.mxu0 0.0
        %2559 = vmatprep.subr.mxu0 0.0
        %2560 = vmatpush1.msra.mxu0 0.0
        %2561 = vmatprep.subr.mxu0 0.0
        %2562 = vmatpush1.msra.mxu0 0.0
        %2563 = vmatprep.subr.mxu0 0.0
        %2564 = vmatpush1.msra.mxu0 0.0
        %2565 = vmatprep.subr.mxu0 0.0
        %2566 = vmatpush1.msra.mxu0 0.0
        %2567 = vmatprep.subr.mxu0 0.0
        %2568 = vmatpush1.msra.mxu0 0.0
        %2569 = vmatprep.subr.mxu0 0.0
        %2570 = vmatpush1.msra.mxu0 0.0
        %2571 = vmatprep.subr.mxu0 0.0
        %2572 = vmatpush1.msra.mxu0 0.0
        %2573 = vmatprep.subr.mxu0 0.0
        %2574 = vmatpush1.msra.mxu0 0.0
        %2575 = vmatprep.subr.mxu0 0.0
        %2576 = vmatpush1.msra.mxu0 0.0
        %2577 = vmatprep.subr.mxu0 0.0
        %2578 = vmatpush1.msra.mxu0 0.0
        %2579 = vmatprep.subr.mxu0 0.0
        %2580 = vmatpush1.msra.mxu0 0.0
        %2581 = vmatprep.subr.mxu0 0.0
        %2582 = vmatpush1.msra.mxu0 0.0
        %2583 = vmatprep.subr.mxu0 0.0
        %2584 = vmatpush1.msra.mxu0 0.0
        %2585 = vmatprep.subr.mxu0 0.0
        %2586 = vmatpush1.msra.mxu0 0.0
        %2587 = vmatprep.subr.mxu0 0.0
        %2588 = vmatpush1.msra.mxu0 0.0
        %2589 = vmatprep.subr.mxu0 0.0
        %2590 = vmatpush1.msra.mxu0 0.0
        %2591 = vmatprep.subr.mxu0 0.0
        %2592 = vmatpush1.msra.mxu0 0.0
        %2593 = vmatprep.mubr.f32.mxu0 0.0
        %v2594 = vand.u32 %v1228, 4294901760
        %v2595 = vsub.f32 %v1228, %v2594
        %v2596 = vand.u32 %v2595, 4294901760
        %v2597 = vsub.f32 %v2595, %v2596
        %v2598 = vand.u32 %v2597, 4294901760
        %2599 = vmatmul.mubr.f32.gmra.mrb[0].mxu0 %v2598
        %v2600 = vpop.f32.mrb[0].mxu0
        %v2601 = vadd.f32 0.0, %v2600
        %v2602 = vpop.f32.mrb[0].mxu0
        %2603 = vmatprep.mubr.f32.mxu0 0.0
        %v2604 = vand.u32 %v1231, 4294901760
        %v2605 = vsub.f32 %v1231, %v2604
        %v2606 = vand.u32 %v2605, 4294901760
        %v2607 = vsub.f32 %v2605, %v2606
        %v2608 = vand.u32 %v2607, 4294901760
        %2609 = vmatmul.mubr.f32.gmra.mrb[0].mxu0 %v2608
        %v2610 = vpop.f32.mrb[0].mxu0
        %v2611 = vadd.f32 0.0, %v2610
        %v2612 = vpop.f32.mrb[0].mxu0
        %2613 = vdwg.mxu0
        %2614 = vmatprep.subr.mxu0 0.0
        %v2615 = vand.u32 %v2526, 4294901760
        %v2616 = vsub.f32 %v2526, %v2615
        %v2617 = vand.u32 %v2616, 4294901760
        %v2618 = vsub.f32 %v2616, %v2617
        %v2619 = vand.u32 %v2618, 4294901760
        %2620 = vmatpush1.msra.mxu0 %v2619
        %2621 = vmatprep.subr.mxu0 0.0
        %2622 = vmatpush1.msra.mxu0 0.0
        %2623 = vmatprep.subr.mxu0 0.0
        %2624 = vmatpush1.msra.mxu0 0.0
        %2625 = vmatprep.subr.mxu0 0.0
        %2626 = vmatpush1.msra.mxu0 0.0
        %2627 = vmatprep.subr.mxu0 0.0
        %2628 = vmatpush1.msra.mxu0 0.0
        %2629 = vmatprep.subr.mxu0 0.0
        %2630 = vmatpush1.msra.mxu0 0.0
        %2631 = vmatprep.subr.mxu0 0.0
        %2632 = vmatpush1.msra.mxu0 0.0
        %2633 = vmatprep.subr.mxu0 0.0
        %2634 = vmatpush1.msra.mxu0 0.0
        %2635 = vmatprep.subr.mxu0 0.0
        %2636 = vmatpush1.msra.mxu0 0.0
        %2637 = vmatprep.subr.mxu0 0.0
        %2638 = vmatpush1.msra.mxu0 0.0
        %2639 = vmatprep.subr.mxu0 0.0
        %2640 = vmatpush1.msra.mxu0 0.0
        %2641 = vmatprep.subr.mxu0 0.0
        %2642 = vmatpush1.msra.mxu0 0.0
        %2643 = vmatprep.subr.mxu0 0.0
        %2644 = vmatpush1.msra.mxu0 0.0
        %2645 = vmatprep.subr.mxu0 0.0
        %2646 = vmatpush1.msra.mxu0 0.0
        %2647 = vmatprep.subr.mxu0 0.0
        %2648 = vmatpush1.msra.mxu0 0.0
        %2649 = vmatprep.subr.mxu0 0.0
        %2650 = vmatpush1.msra.mxu0 0.0
        %2651 = vmatprep.subr.mxu0 0.0
        %2652 = vmatpush1.msra.mxu0 0.0
        %2653 = vmatprep.subr.mxu0 0.0
        %2654 = vmatpush1.msra.mxu0 0.0
        %2655 = vmatprep.subr.mxu0 0.0
        %2656 = vmatpush1.msra.mxu0 0.0
        %2657 = vmatprep.subr.mxu0 0.0
        %2658 = vmatpush1.msra.mxu0 0.0
        %2659 = vmatprep.subr.mxu0 0.0
        %2660 = vmatpush1.msra.mxu0 0.0
        %2661 = vmatprep.subr.mxu0 0.0
        %2662 = vmatpush1.msra.mxu0 0.0
        %2663 = vmatprep.subr.mxu0 0.0
        %2664 = vmatpush1.msra.mxu0 0.0
        %2665 = vmatprep.subr.mxu0 0.0
        %2666 = vmatpush1.msra.mxu0 0.0
        %2667 = vmatprep.subr.mxu0 0.0
        %2668 = vmatpush1.msra.mxu0 0.0
        %2669 = vmatprep.subr.mxu0 0.0
        %2670 = vmatpush1.msra.mxu0 0.0
        %2671 = vmatprep.subr.mxu0 0.0
        %2672 = vmatpush1.msra.mxu0 0.0
        %2673 = vmatprep.subr.mxu0 0.0
        %2674 = vmatpush1.msra.mxu0 0.0
        %2675 = vmatprep.subr.mxu0 0.0
        %2676 = vmatpush1.msra.mxu0 0.0
        %2677 = vmatprep.subr.mxu0 0.0
        %2678 = vmatpush1.msra.mxu0 0.0
        %2679 = vmatprep.subr.mxu0 0.0
        %2680 = vmatpush1.msra.mxu0 0.0
        %2681 = vmatprep.subr.mxu0 0.0
        %2682 = vmatpush1.msra.mxu0 0.0
        %2683 = vmatprep.mubr.f32.mxu0 0.0
        %v2684 = vand.u32 %v1228, 4294901760
        %2685 = vmatmul.mubr.f32.gmra.mrb[0].mxu0 %v2684
        %v2686 = vpop.f32.mrb[0].mxu0
        %v2687 = vadd.f32 %v2601, %v2686
        %v2688 = vpop.f32.mrb[0].mxu0
        %2689 = vmatprep.mubr.f32.mxu0 0.0
        %v2690 = vand.u32 %v1231, 4294901760
        %2691 = vmatmul.mubr.f32.gmra.mrb[0].mxu0 %v2690
        %v2692 = vpop.f32.mrb[0].mxu0
        %v2693 = vadd.f32 %v2611, %v2692
        %v2694 = vpop.f32.mrb[0].mxu0
        %2695 = vdwg.mxu0
        %2696 = vmatprep.subr.mxu0 0.0
        %v2697 = vand.u32 %v2526, 4294901760
        %v2698 = vsub.f32 %v2526, %v2697
        %2699 = vmatpush1.msra.mxu0 %v2698
        %2700 = vmatprep.subr.mxu0 0.0
        %2701 = vmatpush1.msra.mxu0 0.0
        %2702 = vmatprep.subr.mxu0 0.0
        %2703 = vmatpush1.msra.mxu0 0.0
        %2704 = vmatprep.subr.mxu0 0.0
        %2705 = vmatpush1.msra.mxu0 0.0
        %2706 = vmatprep.subr.mxu0 0.0
        %2707 = vmatpush1.msra.mxu0 0.0
        %2708 = vmatprep.subr.mxu0 0.0
        %2709 = vmatpush1.msra.mxu0 0.0
        %2710 = vmatprep.subr.mxu0 0.0
        %2711 = vmatpush1.msra.mxu0 0.0
        %2712 = vmatprep.subr.mxu0 0.0
        %2713 = vmatpush1.msra.mxu0 0.0
        %2714 = vmatprep.subr.mxu0 0.0
        %2715 = vmatpush1.msra.mxu0 0.0
        %2716 = vmatprep.subr.mxu0 0.0
        %2717 = vmatpush1.msra.mxu0 0.0
        %2718 = vmatprep.subr.mxu0 0.0
        %2719 = vmatpush1.msra.mxu0 0.0
        %2720 = vmatprep.subr.mxu0 0.0
        %2721 = vmatpush1.msra.mxu0 0.0
        %2722 = vmatprep.subr.mxu0 0.0
        %2723 = vmatpush1.msra.mxu0 0.0
        %2724 = vmatprep.subr.mxu0 0.0
        %2725 = vmatpush1.msra.mxu0 0.0
        %2726 = vmatprep.subr.mxu0 0.0
        %2727 = vmatpush1.msra.mxu0 0.0
        %2728 = vmatprep.subr.mxu0 0.0
        %2729 = vmatpush1.msra.mxu0 0.0
        %2730 = vmatprep.subr.mxu0 0.0
        %2731 = vmatpush1.msra.mxu0 0.0
        %2732 = vmatprep.subr.mxu0 0.0
        %2733 = vmatpush1.msra.mxu0 0.0
        %2734 = vmatprep.subr.mxu0 0.0
        %2735 = vmatpush1.msra.mxu0 0.0
        %2736 = vmatprep.subr.mxu0 0.0
        %2737 = vmatpush1.msra.mxu0 0.0
        %2738 = vmatprep.subr.mxu0 0.0
        %2739 = vmatpush1.msra.mxu0 0.0
        %2740 = vmatprep.subr.mxu0 0.0
        %2741 = vmatpush1.msra.mxu0 0.0
        %2742 = vmatprep.subr.mxu0 0.0
        %2743 = vmatpush1.msra.mxu0 0.0
        %2744 = vmatprep.subr.mxu0 0.0
        %2745 = vmatpush1.msra.mxu0 0.0
        %2746 = vmatprep.subr.mxu0 0.0
        %2747 = vmatpush1.msra.mxu0 0.0
        %2748 = vmatprep.subr.mxu0 0.0
        %2749 = vmatpush1.msra.mxu0 0.0
        %2750 = vmatprep.subr.mxu0 0.0
        %2751 = vmatpush1.msra.mxu0 0.0
        %2752 = vmatprep.subr.mxu0 0.0
        %2753 = vmatpush1.msra.mxu0 0.0
        %2754 = vmatprep.subr.mxu0 0.0
        %2755 = vmatpush1.msra.mxu0 0.0
        %2756 = vmatprep.subr.mxu0 0.0
        %2757 = vmatpush1.msra.mxu0 0.0
        %2758 = vmatprep.subr.mxu0 0.0
        %2759 = vmatpush1.msra.mxu0 0.0
        %2760 = vmatprep.subr.mxu0 0.0
        %2761 = vmatpush1.msra.mxu0 0.0
        %2762 = vmatprep.mubr.f32.mxu0 0.0
        %v2763 = vand.u32 %v1228, 4294901760
        %v2764 = vsub.f32 %v1228, %v2763
        %2765 = vmatmul.mubr.f32.gmra.mrb[0].mxu0 %v2764
        %v2766 = vpop.f32.mrb[0].mxu0
        %v2767 = vadd.f32 %v2687, %v2766
        %v2768 = vpop.f32.mrb[0].mxu0
        %2769 = vmatprep.mubr.f32.mxu0 0.0
        %v2770 = vand.u32 %v1231, 4294901760
        %v2771 = vsub.f32 %v1231, %v2770
        %2772 = vmatmul.mubr.f32.gmra.mrb[0].mxu0 %v2771
        %v2773 = vpop.f32.mrb[0].mxu0
        %v2774 = vadd.f32 %v2693, %v2773
        %v2775 = vpop.f32.mrb[0].mxu0
        %2776 = vdwg.mxu0
        %2777 = vmatprep.subr.mxu0 0.0
        %v2778 = vand.u32 %v2526, 4294901760
        %2779 = vmatpush1.msra.mxu0 %v2778
        %2780 = vmatprep.subr.mxu0 0.0
        %2781 = vmatpush1.msra.mxu0 0.0
        %2782 = vmatprep.subr.mxu0 0.0
        %2783 = vmatpush1.msra.mxu0 0.0
        %2784 = vmatprep.subr.mxu0 0.0
        %2785 = vmatpush1.msra.mxu0 0.0
        %2786 = vmatprep.subr.mxu0 0.0
        %2787 = vmatpush1.msra.mxu0 0.0
        %2788 = vmatprep.subr.mxu0 0.0
        %2789 = vmatpush1.msra.mxu0 0.0
        %2790 = vmatprep.subr.mxu0 0.0
        %2791 = vmatpush1.msra.mxu0 0.0
        %2792 = vmatprep.subr.mxu0 0.0
        %2793 = vmatpush1.msra.mxu0 0.0
        %2794 = vmatprep.subr.mxu0 0.0
        %2795 = vmatpush1.msra.mxu0 0.0
        %2796 = vmatprep.subr.mxu0 0.0
        %2797 = vmatpush1.msra.mxu0 0.0
        %2798 = vmatprep.subr.mxu0 0.0
        %2799 = vmatpush1.msra.mxu0 0.0
        %2800 = vmatprep.subr.mxu0 0.0
        %2801 = vmatpush1.msra.mxu0 0.0
        %2802 = vmatprep.subr.mxu0 0.0
        %2803 = vmatpush1.msra.mxu0 0.0
        %2804 = vmatprep.subr.mxu0 0.0
        %2805 = vmatpush1.msra.mxu0 0.0
        %2806 = vmatprep.subr.mxu0 0.0
        %2807 = vmatpush1.msra.mxu0 0.0
        %2808 = vmatprep.subr.mxu0 0.0
        %2809 = vmatpush1.msra.mxu0 0.0
        %2810 = vmatprep.subr.mxu0 0.0
        %2811 = vmatpush1.msra.mxu0 0.0
        %2812 = vmatprep.subr.mxu0 0.0
        %2813 = vmatpush1.msra.mxu0 0.0
        %2814 = vmatprep.subr.mxu0 0.0
        %2815 = vmatpush1.msra.mxu0 0.0
        %2816 = vmatprep.subr.mxu0 0.0
        %2817 = vmatpush1.msra.mxu0 0.0
        %2818 = vmatprep.subr.mxu0 0.0
        %2819 = vmatpush1.msra.mxu0 0.0
        %2820 = vmatprep.subr.mxu0 0.0
        %2821 = vmatpush1.msra.mxu0 0.0
        %2822 = vmatprep.subr.mxu0 0.0
        %2823 = vmatpush1.msra.mxu0 0.0
        %2824 = vmatprep.subr.mxu0 0.0
        %2825 = vmatpush1.msra.mxu0 0.0
        %2826 = vmatprep.subr.mxu0 0.0
        %2827 = vmatpush1.msra.mxu0 0.0
        %2828 = vmatprep.subr.mxu0 0.0
        %2829 = vmatpush1.msra.mxu0 0.0
        %2830 = vmatprep.subr.mxu0 0.0
        %2831 = vmatpush1.msra.mxu0 0.0
        %2832 = vmatprep.subr.mxu0 0.0
        %2833 = vmatpush1.msra.mxu0 0.0
        %2834 = vmatprep.subr.mxu0 0.0
        %2835 = vmatpush1.msra.mxu0 0.0
        %2836 = vmatprep.subr.mxu0 0.0
        %2837 = vmatpush1.msra.mxu0 0.0
        %2838 = vmatprep.subr.mxu0 0.0
        %2839 = vmatpush1.msra.mxu0 0.0
        %2840 = vmatprep.subr.mxu0 0.0
        %2841 = vmatpush1.msra.mxu0 0.0
        %2842 = vmatprep.mubr.f32.mxu0 0.0
        %v2843 = vand.u32 %v1228, 4294901760
        %v2844 = vsub.f32 %v1228, %v2843
        %v2845 = vand.u32 %v2844, 4294901760
        %2846 = vmatmul.mubr.f32.gmra.mrb[0].mxu0 %v2845
        %v2847 = vpop.f32.mrb[0].mxu0
        %v2848 = vadd.f32 %v2767, %v2847
        %v2849 = vpop.f32.mrb[0].mxu0
        %2850 = vmatprep.mubr.f32.mxu0 0.0
        %v2851 = vand.u32 %v1231, 4294901760
        %v2852 = vsub.f32 %v1231, %v2851
        %v2853 = vand.u32 %v2852, 4294901760
        %2854 = vmatmul.mubr.f32.gmra.mrb[0].mxu0 %v2853
        %v2855 = vpop.f32.mrb[0].mxu0
        %v2856 = vadd.f32 %v2774, %v2855
        %v2857 = vpop.f32.mrb[0].mxu0
        %2858 = vdwg.mxu0
        %2859 = vmatprep.subr.mxu0 0.0
        %v2860 = vand.u32 %v2526, 4294901760
        %v2861 = vsub.f32 %v2526, %v2860
        %v2862 = vand.u32 %v2861, 4294901760
        %2863 = vmatpush1.msra.mxu0 %v2862
        %2864 = vmatprep.subr.mxu0 0.0
        %2865 = vmatpush1.msra.mxu0 0.0
        %2866 = vmatprep.subr.mxu0 0.0
        %2867 = vmatpush1.msra.mxu0 0.0
        %2868 = vmatprep.subr.mxu0 0.0
        %2869 = vmatpush1.msra.mxu0 0.0
        %2870 = vmatprep.subr.mxu0 0.0
        %2871 = vmatpush1.msra.mxu0 0.0
        %2872 = vmatprep.subr.mxu0 0.0
        %2873 = vmatpush1.msra.mxu0 0.0
        %2874 = vmatprep.subr.mxu0 0.0
        %2875 = vmatpush1.msra.mxu0 0.0
        %2876 = vmatprep.subr.mxu0 0.0
        %2877 = vmatpush1.msra.mxu0 0.0
        %2878 = vmatprep.subr.mxu0 0.0
        %2879 = vmatpush1.msra.mxu0 0.0
        %2880 = vmatprep.subr.mxu0 0.0
        %2881 = vmatpush1.msra.mxu0 0.0
        %2882 = vmatprep.subr.mxu0 0.0
        %2883 = vmatpush1.msra.mxu0 0.0
        %2884 = vmatprep.subr.mxu0 0.0
        %2885 = vmatpush1.msra.mxu0 0.0
        %2886 = vmatprep.subr.mxu0 0.0
        %2887 = vmatpush1.msra.mxu0 0.0
        %2888 = vmatprep.subr.mxu0 0.0
        %2889 = vmatpush1.msra.mxu0 0.0
        %2890 = vmatprep.subr.mxu0 0.0
        %2891 = vmatpush1.msra.mxu0 0.0
        %2892 = vmatprep.subr.mxu0 0.0
        %2893 = vmatpush1.msra.mxu0 0.0
        %2894 = vmatprep.subr.mxu0 0.0
        %2895 = vmatpush1.msra.mxu0 0.0
        %2896 = vmatprep.subr.mxu0 0.0
        %2897 = vmatpush1.msra.mxu0 0.0
        %2898 = vmatprep.subr.mxu0 0.0
        %2899 = vmatpush1.msra.mxu0 0.0
        %2900 = vmatprep.subr.mxu0 0.0
        %2901 = vmatpush1.msra.mxu0 0.0
        %2902 = vmatprep.subr.mxu0 0.0
        %2903 = vmatpush1.msra.mxu0 0.0
        %2904 = vmatprep.subr.mxu0 0.0
        %2905 = vmatpush1.msra.mxu0 0.0
        %2906 = vmatprep.subr.mxu0 0.0
        %2907 = vmatpush1.msra.mxu0 0.0
        %2908 = vmatprep.subr.mxu0 0.0
        %2909 = vmatpush1.msra.mxu0 0.0
        %2910 = vmatprep.subr.mxu0 0.0
        %2911 = vmatpush1.msra.mxu0 0.0
        %2912 = vmatprep.subr.mxu0 0.0
        %2913 = vmatpush1.msra.mxu0 0.0
        %2914 = vmatprep.subr.mxu0 0.0
        %2915 = vmatpush1.msra.mxu0 0.0
        %2916 = vmatprep.subr.mxu0 0.0
        %2917 = vmatpush1.msra.mxu0 0.0
        %2918 = vmatprep.subr.mxu0 0.0
        %2919 = vmatpush1.msra.mxu0 0.0
        %2920 = vmatprep.subr.mxu0 0.0
        %2921 = vmatpush1.msra.mxu0 0.0
        %2922 = vmatprep.subr.mxu0 0.0
        %2923 = vmatpush1.msra.mxu0 0.0
        %2924 = vmatprep.subr.mxu0 0.0
        %2925 = vmatpush1.msra.mxu0 0.0
        %2926 = vmatprep.mubr.f32.mxu0 0.0
        %v2927 = vand.u32 %v1228, 4294901760
        %2928 = vmatmul.mubr.f32.gmra.mrb[0].mxu0 %v2927
        %v2929 = vpop.f32.mrb[0].mxu0
        %v2930 = vadd.f32 %v2848, %v2929
        %v2931 = vpop.f32.mrb[0].mxu0
        %2932 = vmatprep.mubr.f32.mxu0 0.0
        %v2933 = vand.u32 %v1231, 4294901760
        %2934 = vmatmul.mubr.f32.gmra.mrb[0].mxu0 %v2933
        %v2935 = vpop.f32.mrb[0].mxu0
        %v2936 = vadd.f32 %v2856, %v2935
        %v2937 = vpop.f32.mrb[0].mxu0
        %2938 = vdwg.mxu0
        %2939 = vmatprep.subr.mxu0 0.0
        %v2940 = vand.u32 %v2526, 4294901760
        %2941 = vmatpush1.msra.mxu0 %v2940
        %2942 = vmatprep.subr.mxu0 0.0
        %2943 = vmatpush1.msra.mxu0 0.0
        %2944 = vmatprep.subr.mxu0 0.0
        %2945 = vmatpush1.msra.mxu0 0.0
        %2946 = vmatprep.subr.mxu0 0.0
        %2947 = vmatpush1.msra.mxu0 0.0
        %2948 = vmatprep.subr.mxu0 0.0
        %2949 = vmatpush1.msra.mxu0 0.0
        %2950 = vmatprep.subr.mxu0 0.0
        %2951 = vmatpush1.msra.mxu0 0.0
        %2952 = vmatprep.subr.mxu0 0.0
        %2953 = vmatpush1.msra.mxu0 0.0
        %2954 = vmatprep.subr.mxu0 0.0
        %2955 = vmatpush1.msra.mxu0 0.0
        %2956 = vmatprep.subr.mxu0 0.0
        %2957 = vmatpush1.msra.mxu0 0.0
        %2958 = vmatprep.subr.mxu0 0.0
        %2959 = vmatpush1.msra.mxu0 0.0
        %2960 = vmatprep.subr.mxu0 0.0
        %2961 = vmatpush1.msra.mxu0 0.0
        %2962 = vmatprep.subr.mxu0 0.0
        %2963 = vmatpush1.msra.mxu0 0.0
        %2964 = vmatprep.subr.mxu0 0.0
        %2965 = vmatpush1.msra.mxu0 0.0
        %2966 = vmatprep.subr.mxu0 0.0
        %2967 = vmatpush1.msra.mxu0 0.0
        %2968 = vmatprep.subr.mxu0 0.0
        %2969 = vmatpush1.msra.mxu0 0.0
        %2970 = vmatprep.subr.mxu0 0.0
        %2971 = vmatpush1.msra.mxu0 0.0
        %2972 = vmatprep.subr.mxu0 0.0
        %2973 = vmatpush1.msra.mxu0 0.0
        %2974 = vmatprep.subr.mxu0 0.0
        %2975 = vmatpush1.msra.mxu0 0.0
        %2976 = vmatprep.subr.mxu0 0.0
        %2977 = vmatpush1.msra.mxu0 0.0
        %2978 = vmatprep.subr.mxu0 0.0
        %2979 = vmatpush1.msra.mxu0 0.0
        %2980 = vmatprep.subr.mxu0 0.0
        %2981 = vmatpush1.msra.mxu0 0.0
        %2982 = vmatprep.subr.mxu0 0.0
        %2983 = vmatpush1.msra.mxu0 0.0
        %2984 = vmatprep.subr.mxu0 0.0
        %2985 = vmatpush1.msra.mxu0 0.0
        %2986 = vmatprep.subr.mxu0 0.0
        %2987 = vmatpush1.msra.mxu0 0.0
        %2988 = vmatprep.subr.mxu0 0.0
        %2989 = vmatpush1.msra.mxu0 0.0
        %2990 = vmatprep.subr.mxu0 0.0
        %2991 = vmatpush1.msra.mxu0 0.0
        %2992 = vmatprep.subr.mxu0 0.0
        %2993 = vmatpush1.msra.mxu0 0.0
        %2994 = vmatprep.subr.mxu0 0.0
        %2995 = vmatpush1.msra.mxu0 0.0
        %2996 = vmatprep.subr.mxu0 0.0
        %2997 = vmatpush1.msra.mxu0 0.0
        %2998 = vmatprep.subr.mxu0 0.0
        %2999 = vmatpush1.msra.mxu0 0.0
        %3000 = vmatprep.subr.mxu0 0.0
        %3001 = vmatpush1.msra.mxu0 0.0
        %3002 = vmatprep.subr.mxu0 0.0
        %3003 = vmatpush1.msra.mxu0 0.0
        %3004 = vmatprep.mubr.f32.mxu0 0.0
        %v3005 = vand.u32 %v1228, 4294901760
        %3006 = vmatmul.mubr.f32.gmra.mrb[0].mxu0 %v3005
        %v3007 = vpop.f32.mrb[0].mxu0
        %v3008 = vadd.f32 %v2930, %v3007
        %v3009 = vpop.f32.mrb[0].mxu0
        %3010 = vmatprep.mubr.f32.mxu0 0.0
        %v3011 = vand.u32 %v1231, 4294901760
        %3012 = vmatmul.mubr.f32.gmra.mrb[0].mxu0 %v3011
        %v3013 = vpop.f32.mrb[0].mxu0
        %v3014 = vadd.f32 %v2936, %v3013
        %v3015 = vpop.f32.mrb[0].mxu0
        %3016 = vdwg.mxu0
        %v3017 = vmul.f32 %v3008, 0.0013020834
        %v3018 = vmul.f32 %v3014, 0.0013020834
        %v3019 = vmul.f32 %v3017, %v3017
        %v3020 = vmul.f32 %v3018, %v3018
        %3023 = vrot.lane.b32.xlu0 %v3019, 1
        %v3024 = vpop.permute.xlu0 %3023
        %3025 = vrot.lane.b32.xlu0 %v3020, 1
        %v3026 = vpop.permute.xlu0 %3025
        %v3029 = vsub.f32 %v3017, %v3024
        %v3030 = vsub.f32 %v3018, %v3026
        %v3031 = vmax.f32 %v3029, 0.0
        %v3032 = vmax.f32 %v3030, 0.0
        %v3033 = vadd.f32 %v3031, 1e-05
        %v3034 = vadd.f32 %v3032, 1e-05
        %v3035 = vrsqrt.pop %v3033
        %v3036 = vrsqrt.pop %v3034
        %3039 = vrot.lane.b32.xlu0 %v3035, 127
        %v3040 = vpop.permute.xlu0 %3039
        %3041 = vrot.lane.b32.xlu0 %v3036, 127
        %v3042 = vpop.permute.xlu0 %3041
        %v3045 = vmul.f32 %v2037, %v3040
        %v3046 = vmul.f32 %v2038, %v3042
        %v3047 = vmul.f32 %v3017, %v3045
        %v3048 = vmul.f32 %v3018, %v3046
        %v3049 = vsub.f32 %v2039, %v3047
        %v3050 = vsub.f32 %v2040, %v3048
        %3052 = vset.pattern.permute.xlu0 0
        %3053 = vperm.xlu0 %3052, %v3045
        %v3054 = vpop.permute.xlu0 %3053
        %3057 = vset.pattern.permute.xlu0 0
        %3058 = vperm.xlu0 %3057, %v3046
        %v3059 = vpop.permute.xlu0 %3058
        %v3061 = vmul.f32 %v2033, %v3054
        %v3062 = vmul.f32 %v2034, %v3054
        %v3063 = vmul.f32 %v2035, %v3059
        %v3064 = vmul.f32 %v2036, %v3059
        %3066 = vset.pattern.permute.xlu0 0
        %3067 = vperm.xlu0 %3066, %v3049
        %v3068 = vpop.permute.xlu0 %3067
        %3071 = vset.pattern.permute.xlu0 0
        %3072 = vperm.xlu0 %3071, %v3050
        %v3073 = vpop.permute.xlu0 %3072
        %v3075 = vadd.f32 %v3061, %v3068
        %v3076 = vadd.f32 %v3062, %v3068
        %v3077 = vadd.f32 %v3063, %v3073
        %v3078 = vadd.f32 %v3064, %v3073
        %v3079 = vld [vmem:[%s10] sm:$0xf]
        %3081 = vset.pattern.permute.xlu0 0
        %3082 = vperm.xlu0 %3081, %v3079
        %v3083 = vpop.permute.xlu0 %3082
        %v3086 = vsel %vm761, %v601, 0
        %v3089 = vsel %vm625, %v3077, 0
        %v3092 = vsel %vm625, %v3078, 0
        %3094 = vmatprep.subr.mxu0 %v3076
        %3095 = vmatpush1.msra.mxu0 %v3075
        %3096 = vmatprep.subr.mxu0 %v3092
        %3097 = vmatpush1.msra.mxu0 %v3089
        %3098 = vmatprep.subr.mxu0 0.0
        %3099 = vmatpush1.msra.mxu0 0.0
        %3100 = vmatprep.subr.mxu0 0.0
        %3101 = vmatpush1.msra.mxu0 0.0
        %3102 = vmatprep.subr.mxu0 0.0
        %3103 = vmatpush1.msra.mxu0 0.0
        %3104 = vmatprep.subr.mxu0 0.0
        %3105 = vmatpush1.msra.mxu0 0.0
        %3106 = vmatprep.subr.mxu0 0.0
        %3107 = vmatpush1.msra.mxu0 0.0
        %3108 = vmatprep.subr.mxu0 0.0
        %3109 = vmatpush1.msra.mxu0 0.0
        %3110 = vmatprep.subr.mxu0 0.0
        %3111 = vmatpush1.msra.mxu0 0.0
        %3112 = vmatprep.subr.mxu0 0.0
        %3113 = vmatpush1.msra.mxu0 0.0
        %3114 = vmatprep.subr.mxu0 0.0
        %3115 = vmatpush1.msra.mxu0 0.0
        %3116 = vmatprep.subr.mxu0 0.0
        %3117 = vmatpush1.msra.mxu0 0.0
        %3118 = vmatprep.subr.mxu0 0.0
        %3119 = vmatpush1.msra.mxu0 0.0
        %3120 = vmatprep.subr.mxu0 0.0
        %3121 = vmatpush1.msra.mxu0 0.0
        %3122 = vmatprep.subr.mxu0 0.0
        %3123 = vmatpush1.msra.mxu0 0.0
        %3124 = vmatprep.subr.mxu0 0.0
        %3125 = vmatpush1.msra.mxu0 0.0
        %3126 = vmatprep.subr.mxu0 0.0
        %3127 = vmatpush1.msra.mxu0 0.0
        %3128 = vmatprep.subr.mxu0 0.0
        %3129 = vmatpush1.msra.mxu0 0.0
        %3130 = vmatprep.subr.mxu0 0.0
        %3131 = vmatpush1.msra.mxu0 0.0
        %3132 = vmatprep.subr.mxu0 0.0
        %3133 = vmatpush1.msra.mxu0 0.0
        %3134 = vmatprep.subr.mxu0 0.0
        %3135 = vmatpush1.msra.mxu0 0.0
        %3136 = vmatprep.subr.mxu0 0.0
        %3137 = vmatpush1.msra.mxu0 0.0
        %3138 = vmatprep.subr.mxu0 0.0
        %3139 = vmatpush1.msra.mxu0 0.0
        %3140 = vmatprep.subr.mxu0 0.0
        %3141 = vmatpush1.msra.mxu0 0.0
        %3142 = vmatprep.subr.mxu0 0.0
        %3143 = vmatpush1.msra.mxu0 0.0
        %3144 = vmatprep.subr.mxu0 0.0
        %3145 = vmatpush1.msra.mxu0 0.0
        %3146 = vmatprep.subr.mxu0 0.0
        %3147 = vmatpush1.msra.mxu0 0.0
        %3148 = vmatprep.subr.mxu0 0.0
        %3149 = vmatpush1.msra.mxu0 0.0
        %3150 = vmatprep.subr.mxu0 0.0
        %3151 = vmatpush1.msra.mxu0 0.0
        %3152 = vmatprep.subr.mxu0 0.0
        %3153 = vmatpush1.msra.mxu0 0.0
        %3154 = vmatprep.subr.mxu0 0.0
        %3155 = vmatpush1.msra.mxu0 0.0
        %3156 = vmatprep.subr.mxu0 0.0
        %3157 = vmatpush1.msra.mxu0 0.0
        %3158 = vmatprep.mubr.f32.mxu0 0.0
        %3159 = vmatmul.mubr.f32.gmra.mrb[0].mxu0 %v3086
        %v3160 = vpop.f32.mrb[0].mxu0
        %v3161 = vadd.f32 %v3083, %v3160
        %v3162 = vpop.f32.mrb[0].mxu0
        %v3163 = vadd.f32 %v3083, %v3162
        %3164 = vdwg.mxu0
        %v3165 = vld [vmem:[%s11] sm:$0xf]
        %v3166 = vld [vmem:[%s12] sm:$0xf]
        %v3167 = vld [vmem:[%s15] sm:$0xf]
        %v3168 = vld [vmem:[%s16] sm:$0xf]
        %v3169 = vsel %vm625, %v3161, 0.0
        %v3170 = vsel %vm625, %v3163, 0.0
        %v3171 = vadd.f32 %v3169, %v3170
        %3172 = vadd.xlane.f32.xlu0 %v3171
        %v3173 = vpop.xlane.xlu0 %3172
        %v3174 = vmul.f32 %v3161, %v3161
        %v3175 = vmul.f32 %v3163, %v3163
        %v3176 = vsel %vm625, %v3174, 0.0
        %v3177 = vsel %vm625, %v3175, 0.0
        %v3178 = vadd.f32 %v3176, %v3177
        %3179 = vadd.xlane.f32.xlu0 %v3178
        %v3180 = vpop.xlane.xlu0 %3179
        %v3181 = vsel %vm758, %v3173, %v3180
        %v3183 = vsel %vm618, %v3167, 0
        %v3186 = vsel %vm625, %v3181, 0
        %3188 = vmatprep.subr.mxu0 0.0
        %v3189 = vand.u32 %v3186, 4294901760
        %3190 = vmatpush1.msra.mxu0 %v3189
        %3191 = vmatprep.subr.mxu0 0.0
        %3192 = vmatpush1.msra.mxu0 0.0
        %3193 = vmatprep.subr.mxu0 0.0
        %3194 = vmatpush1.msra.mxu0 0.0
        %3195 = vmatprep.subr.mxu0 0.0
        %3196 = vmatpush1.msra.mxu0 0.0
        %3197 = vmatprep.subr.mxu0 0.0
        %3198 = vmatpush1.msra.mxu0 0.0
        %3199 = vmatprep.subr.mxu0 0.0
        %3200 = vmatpush1.msra.mxu0 0.0
        %3201 = vmatprep.subr.mxu0 0.0
        %3202 = vmatpush1.msra.mxu0 0.0
        %3203 = vmatprep.subr.mxu0 0.0
        %3204 = vmatpush1.msra.mxu0 0.0
        %3205 = vmatprep.subr.mxu0 0.0
        %3206 = vmatpush1.msra.mxu0 0.0
        %3207 = vmatprep.subr.mxu0 0.0
        %3208 = vmatpush1.msra.mxu0 0.0
        %3209 = vmatprep.subr.mxu0 0.0
        %3210 = vmatpush1.msra.mxu0 0.0
        %3211 = vmatprep.subr.mxu0 0.0
        %3212 = vmatpush1.msra.mxu0 0.0
        %3213 = vmatprep.subr.mxu0 0.0
        %3214 = vmatpush1.msra.mxu0 0.0
        %3215 = vmatprep.subr.mxu0 0.0
        %3216 = vmatpush1.msra.mxu0 0.0
        %3217 = vmatprep.subr.mxu0 0.0
        %3218 = vmatpush1.msra.mxu0 0.0
        %3219 = vmatprep.subr.mxu0 0.0
        %3220 = vmatpush1.msra.mxu0 0.0
        %3221 = vmatprep.subr.mxu0 0.0
        %3222 = vmatpush1.msra.mxu0 0.0
        %3223 = vmatprep.subr.mxu0 0.0
        %3224 = vmatpush1.msra.mxu0 0.0
        %3225 = vmatprep.subr.mxu0 0.0
        %3226 = vmatpush1.msra.mxu0 0.0
        %3227 = vmatprep.subr.mxu0 0.0
        %3228 = vmatpush1.msra.mxu0 0.0
        %3229 = vmatprep.subr.mxu0 0.0
        %3230 = vmatpush1.msra.mxu0 0.0
        %3231 = vmatprep.subr.mxu0 0.0
        %3232 = vmatpush1.msra.mxu0 0.0
        %3233 = vmatprep.subr.mxu0 0.0
        %3234 = vmatpush1.msra.mxu0 0.0
        %3235 = vmatprep.subr.mxu0 0.0
        %3236 = vmatpush1.msra.mxu0 0.0
        %3237 = vmatprep.subr.mxu0 0.0
        %3238 = vmatpush1.msra.mxu0 0.0
        %3239 = vmatprep.subr.mxu0 0.0
        %3240 = vmatpush1.msra.mxu0 0.0
        %3241 = vmatprep.subr.mxu0 0.0
        %3242 = vmatpush1.msra.mxu0 0.0
        %3243 = vmatprep.subr.mxu0 0.0
        %3244 = vmatpush1.msra.mxu0 0.0
        %3245 = vmatprep.subr.mxu0 0.0
        %3246 = vmatpush1.msra.mxu0 0.0
        %3247 = vmatprep.subr.mxu0 0.0
        %3248 = vmatpush1.msra.mxu0 0.0
        %3249 = vmatprep.subr.mxu0 0.0
        %3250 = vmatpush1.msra.mxu0 0.0
        %3251 = vmatprep.subr.mxu0 0.0
        %3252 = vmatpush1.msra.mxu0 0.0
        %3253 = vmatprep.mubr.f32.mxu0 0.0
        %v3254 = vand.u32 %v3183, 4294901760
        %v3255 = vsub.f32 %v3183, %v3254
        %v3256 = vand.u32 %v3255, 4294901760
        %v3257 = vsub.f32 %v3255, %v3256
        %v3258 = vand.u32 %v3257, 4294901760
        %3259 = vmatmul.mubr.f32.gmra.mrb[0].mxu0 %v3258
        %v3260 = vpop.f32.mrb[0].mxu0
        %v3261 = vadd.f32 0.0, %v3260
        %v3262 = vpop.f32.mrb[0].mxu0
        %3263 = vdwg.mxu0
        %3264 = vmatprep.subr.mxu0 0.0
        %v3265 = vand.u32 %v3186, 4294901760
        %v3266 = vsub.f32 %v3186, %v3265
        %v3267 = vand.u32 %v3266, 4294901760
        %v3268 = vsub.f32 %v3266, %v3267
        %v3269 = vand.u32 %v3268, 4294901760
        %3270 = vmatpush1.msra.mxu0 %v3269
        %3271 = vmatprep.subr.mxu0 0.0
        %3272 = vmatpush1.msra.mxu0 0.0
        %3273 = vmatprep.subr.mxu0 0.0
        %3274 = vmatpush1.msra.mxu0 0.0
        %3275 = vmatprep.subr.mxu0 0.0
        %3276 = vmatpush1.msra.mxu0 0.0
        %3277 = vmatprep.subr.mxu0 0.0
        %3278 = vmatpush1.msra.mxu0 0.0
        %3279 = vmatprep.subr.mxu0 0.0
        %3280 = vmatpush1.msra.mxu0 0.0
        %3281 = vmatprep.subr.mxu0 0.0
        %3282 = vmatpush1.msra.mxu0 0.0
        %3283 = vmatprep.subr.mxu0 0.0
        %3284 = vmatpush1.msra.mxu0 0.0
        %3285 = vmatprep.subr.mxu0 0.0
        %3286 = vmatpush1.msra.mxu0 0.0
        %3287 = vmatprep.subr.mxu0 0.0
        %3288 = vmatpush1.msra.mxu0 0.0
        %3289 = vmatprep.subr.mxu0 0.0
        %3290 = vmatpush1.msra.mxu0 0.0
        %3291 = vmatprep.subr.mxu0 0.0
        %3292 = vmatpush1.msra.mxu0 0.0
        %3293 = vmatprep.subr.mxu0 0.0
        %3294 = vmatpush1.msra.mxu0 0.0
        %3295 = vmatprep.subr.mxu0 0.0
        %3296 = vmatpush1.msra.mxu0 0.0
        %3297 = vmatprep.subr.mxu0 0.0
        %3298 = vmatpush1.msra.mxu0 0.0
        %3299 = vmatprep.subr.mxu0 0.0
        %3300 = vmatpush1.msra.mxu0 0.0
        %3301 = vmatprep.subr.mxu0 0.0
        %3302 = vmatpush1.msra.mxu0 0.0
        %3303 = vmatprep.subr.mxu0 0.0
        %3304 = vmatpush1.msra.mxu0 0.0
        %3305 = vmatprep.subr.mxu0 0.0
        %3306 = vmatpush1.msra.mxu0 0.0
        %3307 = vmatprep.subr.mxu0 0.0
        %3308 = vmatpush1.msra.mxu0 0.0
        %3309 = vmatprep.subr.mxu0 0.0
        %3310 = vmatpush1.msra.mxu0 0.0
        %3311 = vmatprep.subr.mxu0 0.0
        %3312 = vmatpush1.msra.mxu0 0.0
        %3313 = vmatprep.subr.mxu0 0.0
        %3314 = vmatpush1.msra.mxu0 0.0
        %3315 = vmatprep.subr.mxu0 0.0
        %3316 = vmatpush1.msra.mxu0 0.0
        %3317 = vmatprep.subr.mxu0 0.0
        %3318 = vmatpush1.msra.mxu0 0.0
        %3319 = vmatprep.subr.mxu0 0.0
        %3320 = vmatpush1.msra.mxu0 0.0
        %3321 = vmatprep.subr.mxu0 0.0
        %3322 = vmatpush1.msra.mxu0 0.0
        %3323 = vmatprep.subr.mxu0 0.0
        %3324 = vmatpush1.msra.mxu0 0.0
        %3325 = vmatprep.subr.mxu0 0.0
        %3326 = vmatpush1.msra.mxu0 0.0
        %3327 = vmatprep.subr.mxu0 0.0
        %3328 = vmatpush1.msra.mxu0 0.0
        %3329 = vmatprep.subr.mxu0 0.0
        %3330 = vmatpush1.msra.mxu0 0.0
        %3331 = vmatprep.subr.mxu0 0.0
        %3332 = vmatpush1.msra.mxu0 0.0
        %3333 = vmatprep.mubr.f32.mxu0 0.0
        %v3334 = vand.u32 %v3183, 4294901760
        %3335 = vmatmul.mubr.f32.gmra.mrb[0].mxu0 %v3334
        %v3336 = vpop.f32.mrb[0].mxu0
        %v3337 = vadd.f32 %v3261, %v3336
        %v3338 = vpop.f32.mrb[0].mxu0
        %3339 = vdwg.mxu0
        %3340 = vmatprep.subr.mxu0 0.0
        %v3341 = vand.u32 %v3186, 4294901760
        %v3342 = vsub.f32 %v3186, %v3341
        %3343 = vmatpush1.msra.mxu0 %v3342
        %3344 = vmatprep.subr.mxu0 0.0
        %3345 = vmatpush1.msra.mxu0 0.0
        %3346 = vmatprep.subr.mxu0 0.0
        %3347 = vmatpush1.msra.mxu0 0.0
        %3348 = vmatprep.subr.mxu0 0.0
        %3349 = vmatpush1.msra.mxu0 0.0
        %3350 = vmatprep.subr.mxu0 0.0
        %3351 = vmatpush1.msra.mxu0 0.0
        %3352 = vmatprep.subr.mxu0 0.0
        %3353 = vmatpush1.msra.mxu0 0.0
        %3354 = vmatprep.subr.mxu0 0.0
        %3355 = vmatpush1.msra.mxu0 0.0
        %3356 = vmatprep.subr.mxu0 0.0
        %3357 = vmatpush1.msra.mxu0 0.0
        %3358 = vmatprep.subr.mxu0 0.0
        %3359 = vmatpush1.msra.mxu0 0.0
        %3360 = vmatprep.subr.mxu0 0.0
        %3361 = vmatpush1.msra.mxu0 0.0
        %3362 = vmatprep.subr.mxu0 0.0
        %3363 = vmatpush1.msra.mxu0 0.0
        %3364 = vmatprep.subr.mxu0 0.0
        %3365 = vmatpush1.msra.mxu0 0.0
        %3366 = vmatprep.subr.mxu0 0.0
        %3367 = vmatpush1.msra.mxu0 0.0
        %3368 = vmatprep.subr.mxu0 0.0
        %3369 = vmatpush1.msra.mxu0 0.0
        %3370 = vmatprep.subr.mxu0 0.0
        %3371 = vmatpush1.msra.mxu0 0.0
        %3372 = vmatprep.subr.mxu0 0.0
        %3373 = vmatpush1.msra.mxu0 0.0
        %3374 = vmatprep.subr.mxu0 0.0
        %3375 = vmatpush1.msra.mxu0 0.0
        %3376 = vmatprep.subr.mxu0 0.0
        %3377 = vmatpush1.msra.mxu0 0.0
        %3378 = vmatprep.subr.mxu0 0.0
        %3379 = vmatpush1.msra.mxu0 0.0
        %3380 = vmatprep.subr.mxu0 0.0
        %3381 = vmatpush1.msra.mxu0 0.0
        %3382 = vmatprep.subr.mxu0 0.0
        %3383 = vmatpush1.msra.mxu0 0.0
        %3384 = vmatprep.subr.mxu0 0.0
        %3385 = vmatpush1.msra.mxu0 0.0
        %3386 = vmatprep.subr.mxu0 0.0
        %3387 = vmatpush1.msra.mxu0 0.0
        %3388 = vmatprep.subr.mxu0 0.0
        %3389 = vmatpush1.msra.mxu0 0.0
        %3390 = vmatprep.subr.mxu0 0.0
        %3391 = vmatpush1.msra.mxu0 0.0
        %3392 = vmatprep.subr.mxu0 0.0
        %3393 = vmatpush1.msra.mxu0 0.0
        %3394 = vmatprep.subr.mxu0 0.0
        %3395 = vmatpush1.msra.mxu0 0.0
        %3396 = vmatprep.subr.mxu0 0.0
        %3397 = vmatpush1.msra.mxu0 0.0
        %3398 = vmatprep.subr.mxu0 0.0
        %3399 = vmatpush1.msra.mxu0 0.0
        %3400 = vmatprep.subr.mxu0 0.0
        %3401 = vmatpush1.msra.mxu0 0.0
        %3402 = vmatprep.subr.mxu0 0.0
        %3403 = vmatpush1.msra.mxu0 0.0
        %3404 = vmatprep.subr.mxu0 0.0
        %3405 = vmatpush1.msra.mxu0 0.0
        %3406 = vmatprep.mubr.f32.mxu0 0.0
        %v3407 = vand.u32 %v3183, 4294901760
        %v3408 = vsub.f32 %v3183, %v3407
        %3409 = vmatmul.mubr.f32.gmra.mrb[0].mxu0 %v3408
        %v3410 = vpop.f32.mrb[0].mxu0
        %v3411 = vadd.f32 %v3337, %v3410
        %v3412 = vpop.f32.mrb[0].mxu0
        %3413 = vdwg.mxu0
        %3414 = vmatprep.subr.mxu0 0.0
        %v3415 = vand.u32 %v3186, 4294901760
        %3416 = vmatpush1.msra.mxu0 %v3415
        %3417 = vmatprep.subr.mxu0 0.0
        %3418 = vmatpush1.msra.mxu0 0.0
        %3419 = vmatprep.subr.mxu0 0.0
        %3420 = vmatpush1.msra.mxu0 0.0
        %3421 = vmatprep.subr.mxu0 0.0
        %3422 = vmatpush1.msra.mxu0 0.0
        %3423 = vmatprep.subr.mxu0 0.0
        %3424 = vmatpush1.msra.mxu0 0.0
        %3425 = vmatprep.subr.mxu0 0.0
        %3426 = vmatpush1.msra.mxu0 0.0
        %3427 = vmatprep.subr.mxu0 0.0
        %3428 = vmatpush1.msra.mxu0 0.0
        %3429 = vmatprep.subr.mxu0 0.0
        %3430 = vmatpush1.msra.mxu0 0.0
        %3431 = vmatprep.subr.mxu0 0.0
        %3432 = vmatpush1.msra.mxu0 0.0
        %3433 = vmatprep.subr.mxu0 0.0
        %3434 = vmatpush1.msra.mxu0 0.0
        %3435 = vmatprep.subr.mxu0 0.0
        %3436 = vmatpush1.msra.mxu0 0.0
        %3437 = vmatprep.subr.mxu0 0.0
        %3438 = vmatpush1.msra.mxu0 0.0
        %3439 = vmatprep.subr.mxu0 0.0
        %3440 = vmatpush1.msra.mxu0 0.0
        %3441 = vmatprep.subr.mxu0 0.0
        %3442 = vmatpush1.msra.mxu0 0.0
        %3443 = vmatprep.subr.mxu0 0.0
        %3444 = vmatpush1.msra.mxu0 0.0
        %3445 = vmatprep.subr.mxu0 0.0
        %3446 = vmatpush1.msra.mxu0 0.0
        %3447 = vmatprep.subr.mxu0 0.0
        %3448 = vmatpush1.msra.mxu0 0.0
        %3449 = vmatprep.subr.mxu0 0.0
        %3450 = vmatpush1.msra.mxu0 0.0
        %3451 = vmatprep.subr.mxu0 0.0
        %3452 = vmatpush1.msra.mxu0 0.0
        %3453 = vmatprep.subr.mxu0 0.0
        %3454 = vmatpush1.msra.mxu0 0.0
        %3455 = vmatprep.subr.mxu0 0.0
        %3456 = vmatpush1.msra.mxu0 0.0
        %3457 = vmatprep.subr.mxu0 0.0
        %3458 = vmatpush1.msra.mxu0 0.0
        %3459 = vmatprep.subr.mxu0 0.0
        %3460 = vmatpush1.msra.mxu0 0.0
        %3461 = vmatprep.subr.mxu0 0.0
        %3462 = vmatpush1.msra.mxu0 0.0
        %3463 = vmatprep.subr.mxu0 0.0
        %3464 = vmatpush1.msra.mxu0 0.0
        %3465 = vmatprep.subr.mxu0 0.0
        %3466 = vmatpush1.msra.mxu0 0.0
        %3467 = vmatprep.subr.mxu0 0.0
        %3468 = vmatpush1.msra.mxu0 0.0
        %3469 = vmatprep.subr.mxu0 0.0
        %3470 = vmatpush1.msra.mxu0 0.0
        %3471 = vmatprep.subr.mxu0 0.0
        %3472 = vmatpush1.msra.mxu0 0.0
        %3473 = vmatprep.subr.mxu0 0.0
        %3474 = vmatpush1.msra.mxu0 0.0
        %3475 = vmatprep.subr.mxu0 0.0
        %3476 = vmatpush1.msra.mxu0 0.0
        %3477 = vmatprep.subr.mxu0 0.0
        %3478 = vmatpush1.msra.mxu0 0.0
        %3479 = vmatprep.mubr.f32.mxu0 0.0
        %v3480 = vand.u32 %v3183, 4294901760
        %v3481 = vsub.f32 %v3183, %v3480
        %v3482 = vand.u32 %v3481, 4294901760
        %3483 = vmatmul.mubr.f32.gmra.mrb[0].mxu0 %v3482
        %v3484 = vpop.f32.mrb[0].mxu0
        %v3485 = vadd.f32 %v3411, %v3484
        %v3486 = vpop.f32.mrb[0].mxu0
        %3487 = vdwg.mxu0
        %3488 = vmatprep.subr.mxu0 0.0
        %v3489 = vand.u32 %v3186, 4294901760
        %v3490 = vsub.f32 %v3186, %v3489
        %v3491 = vand.u32 %v3490, 4294901760
        %3492 = vmatpush1.msra.mxu0 %v3491
        %3493 = vmatprep.subr.mxu0 0.0
        %3494 = vmatpush1.msra.mxu0 0.0
        %3495 = vmatprep.subr.mxu0 0.0
        %3496 = vmatpush1.msra.mxu0 0.0
        %3497 = vmatprep.subr.mxu0 0.0
        %3498 = vmatpush1.msra.mxu0 0.0
        %3499 = vmatprep.subr.mxu0 0.0
        %3500 = vmatpush1.msra.mxu0 0.0
        %3501 = vmatprep.subr.mxu0 0.0
        %3502 = vmatpush1.msra.mxu0 0.0
        %3503 = vmatprep.subr.mxu0 0.0
        %3504 = vmatpush1.msra.mxu0 0.0
        %3505 = vmatprep.subr.mxu0 0.0
        %3506 = vmatpush1.msra.mxu0 0.0
        %3507 = vmatprep.subr.mxu0 0.0
        %3508 = vmatpush1.msra.mxu0 0.0
        %3509 = vmatprep.subr.mxu0 0.0
        %3510 = vmatpush1.msra.mxu0 0.0
        %3511 = vmatprep.subr.mxu0 0.0
        %3512 = vmatpush1.msra.mxu0 0.0
        %3513 = vmatprep.subr.mxu0 0.0
        %3514 = vmatpush1.msra.mxu0 0.0
        %3515 = vmatprep.subr.mxu0 0.0
        %3516 = vmatpush1.msra.mxu0 0.0
        %3517 = vmatprep.subr.mxu0 0.0
        %3518 = vmatpush1.msra.mxu0 0.0
        %3519 = vmatprep.subr.mxu0 0.0
        %3520 = vmatpush1.msra.mxu0 0.0
        %3521 = vmatprep.subr.mxu0 0.0
        %3522 = vmatpush1.msra.mxu0 0.0
        %3523 = vmatprep.subr.mxu0 0.0
        %3524 = vmatpush1.msra.mxu0 0.0
        %3525 = vmatprep.subr.mxu0 0.0
        %3526 = vmatpush1.msra.mxu0 0.0
        %3527 = vmatprep.subr.mxu0 0.0
        %3528 = vmatpush1.msra.mxu0 0.0
        %3529 = vmatprep.subr.mxu0 0.0
        %3530 = vmatpush1.msra.mxu0 0.0
        %3531 = vmatprep.subr.mxu0 0.0
        %3532 = vmatpush1.msra.mxu0 0.0
        %3533 = vmatprep.subr.mxu0 0.0
        %3534 = vmatpush1.msra.mxu0 0.0
        %3535 = vmatprep.subr.mxu0 0.0
        %3536 = vmatpush1.msra.mxu0 0.0
        %3537 = vmatprep.subr.mxu0 0.0
        %3538 = vmatpush1.msra.mxu0 0.0
        %3539 = vmatprep.subr.mxu0 0.0
        %3540 = vmatpush1.msra.mxu0 0.0
        %3541 = vmatprep.subr.mxu0 0.0
        %3542 = vmatpush1.msra.mxu0 0.0
        %3543 = vmatprep.subr.mxu0 0.0
        %3544 = vmatpush1.msra.mxu0 0.0
        %3545 = vmatprep.subr.mxu0 0.0
        %3546 = vmatpush1.msra.mxu0 0.0
        %3547 = vmatprep.subr.mxu0 0.0
        %3548 = vmatpush1.msra.mxu0 0.0
        %3549 = vmatprep.subr.mxu0 0.0
        %3550 = vmatpush1.msra.mxu0 0.0
        %3551 = vmatprep.subr.mxu0 0.0
        %3552 = vmatpush1.msra.mxu0 0.0
        %3553 = vmatprep.subr.mxu0 0.0
        %3554 = vmatpush1.msra.mxu0 0.0
        %3555 = vmatprep.mubr.f32.mxu0 0.0
        %v3556 = vand.u32 %v3183, 4294901760
        %3557 = vmatmul.mubr.f32.gmra.mrb[0].mxu0 %v3556
        %v3558 = vpop.f32.mrb[0].mxu0
        %v3559 = vadd.f32 %v3485, %v3558
        %v3560 = vpop.f32.mrb[0].mxu0
        %3561 = vdwg.mxu0
        %3562 = vmatprep.subr.mxu0 0.0
        %v3563 = vand.u32 %v3186, 4294901760
        %3564 = vmatpush1.msra.mxu0 %v3563
        %3565 = vmatprep.subr.mxu0 0.0
        %3566 = vmatpush1.msra.mxu0 0.0
        %3567 = vmatprep.subr.mxu0 0.0
        %3568 = vmatpush1.msra.mxu0 0.0
        %3569 = vmatprep.subr.mxu0 0.0
        %3570 = vmatpush1.msra.mxu0 0.0
        %3571 = vmatprep.subr.mxu0 0.0
        %3572 = vmatpush1.msra.mxu0 0.0
        %3573 = vmatprep.subr.mxu0 0.0
        %3574 = vmatpush1.msra.mxu0 0.0
        %3575 = vmatprep.subr.mxu0 0.0
        %3576 = vmatpush1.msra.mxu0 0.0
        %3577 = vmatprep.subr.mxu0 0.0
        %3578 = vmatpush1.msra.mxu0 0.0
        %3579 = vmatprep.subr.mxu0 0.0
        %3580 = vmatpush1.msra.mxu0 0.0
        %3581 = vmatprep.subr.mxu0 0.0
        %3582 = vmatpush1.msra.mxu0 0.0
        %3583 = vmatprep.subr.mxu0 0.0
        %3584 = vmatpush1.msra.mxu0 0.0
        %3585 = vmatprep.subr.mxu0 0.0
        %3586 = vmatpush1.msra.mxu0 0.0
        %3587 = vmatprep.subr.mxu0 0.0
        %3588 = vmatpush1.msra.mxu0 0.0
        %3589 = vmatprep.subr.mxu0 0.0
        %3590 = vmatpush1.msra.mxu0 0.0
        %3591 = vmatprep.subr.mxu0 0.0
        %3592 = vmatpush1.msra.mxu0 0.0
        %3593 = vmatprep.subr.mxu0 0.0
        %3594 = vmatpush1.msra.mxu0 0.0
        %3595 = vmatprep.subr.mxu0 0.0
        %3596 = vmatpush1.msra.mxu0 0.0
        %3597 = vmatprep.subr.mxu0 0.0
        %3598 = vmatpush1.msra.mxu0 0.0
        %3599 = vmatprep.subr.mxu0 0.0
        %3600 = vmatpush1.msra.mxu0 0.0
        %3601 = vmatprep.subr.mxu0 0.0
        %3602 = vmatpush1.msra.mxu0 0.0
        %3603 = vmatprep.subr.mxu0 0.0
        %3604 = vmatpush1.msra.mxu0 0.0
        %3605 = vmatprep.subr.mxu0 0.0
        %3606 = vmatpush1.msra.mxu0 0.0
        %3607 = vmatprep.subr.mxu0 0.0
        %3608 = vmatpush1.msra.mxu0 0.0
        %3609 = vmatprep.subr.mxu0 0.0
        %3610 = vmatpush1.msra.mxu0 0.0
        %3611 = vmatprep.subr.mxu0 0.0
        %3612 = vmatpush1.msra.mxu0 0.0
        %3613 = vmatprep.subr.mxu0 0.0
        %3614 = vmatpush1.msra.mxu0 0.0
        %3615 = vmatprep.subr.mxu0 0.0
        %3616 = vmatpush1.msra.mxu0 0.0
        %3617 = vmatprep.subr.mxu0 0.0
        %3618 = vmatpush1.msra.mxu0 0.0
        %3619 = vmatprep.subr.mxu0 0.0
        %3620 = vmatpush1.msra.mxu0 0.0
        %3621 = vmatprep.subr.mxu0 0.0
        %3622 = vmatpush1.msra.mxu0 0.0
        %3623 = vmatprep.subr.mxu0 0.0
        %3624 = vmatpush1.msra.mxu0 0.0
        %3625 = vmatprep.subr.mxu0 0.0
        %3626 = vmatpush1.msra.mxu0 0.0
        %3627 = vmatprep.mubr.f32.mxu0 0.0
        %v3628 = vand.u32 %v3183, 4294901760
        %3629 = vmatmul.mubr.f32.gmra.mrb[0].mxu0 %v3628
        %v3630 = vpop.f32.mrb[0].mxu0
        %v3631 = vadd.f32 %v3559, %v3630
        %v3632 = vpop.f32.mrb[0].mxu0
        %3633 = vdwg.mxu0
        %v3635 = vsel %vm618, %v3168, 0
        %v3638 = vsel %vm625, %v3631, 0
        %3640 = vmatprep.subr.mxu0 0.0
        %v3641 = vand.u32 %v3638, 4294901760
        %3642 = vmatpush1.msra.mxu0 %v3641
        %3643 = vmatprep.subr.mxu0 0.0
        %3644 = vmatpush1.msra.mxu0 0.0
        %3645 = vmatprep.subr.mxu0 0.0
        %3646 = vmatpush1.msra.mxu0 0.0
        %3647 = vmatprep.subr.mxu0 0.0
        %3648 = vmatpush1.msra.mxu0 0.0
        %3649 = vmatprep.subr.mxu0 0.0
        %3650 = vmatpush1.msra.mxu0 0.0
        %3651 = vmatprep.subr.mxu0 0.0
        %3652 = vmatpush1.msra.mxu0 0.0
        %3653 = vmatprep.subr.mxu0 0.0
        %3654 = vmatpush1.msra.mxu0 0.0
        %3655 = vmatprep.subr.mxu0 0.0
        %3656 = vmatpush1.msra.mxu0 0.0
        %3657 = vmatprep.subr.mxu0 0.0
        %3658 = vmatpush1.msra.mxu0 0.0
        %3659 = vmatprep.subr.mxu0 0.0
        %3660 = vmatpush1.msra.mxu0 0.0
        %3661 = vmatprep.subr.mxu0 0.0
        %3662 = vmatpush1.msra.mxu0 0.0
        %3663 = vmatprep.subr.mxu0 0.0
        %3664 = vmatpush1.msra.mxu0 0.0
        %3665 = vmatprep.subr.mxu0 0.0
        %3666 = vmatpush1.msra.mxu0 0.0
        %3667 = vmatprep.subr.mxu0 0.0
        %3668 = vmatpush1.msra.mxu0 0.0
        %3669 = vmatprep.subr.mxu0 0.0
        %3670 = vmatpush1.msra.mxu0 0.0
        %3671 = vmatprep.subr.mxu0 0.0
        %3672 = vmatpush1.msra.mxu0 0.0
        %3673 = vmatprep.subr.mxu0 0.0
        %3674 = vmatpush1.msra.mxu0 0.0
        %3675 = vmatprep.subr.mxu0 0.0
        %3676 = vmatpush1.msra.mxu0 0.0
        %3677 = vmatprep.subr.mxu0 0.0
        %3678 = vmatpush1.msra.mxu0 0.0
        %3679 = vmatprep.subr.mxu0 0.0
        %3680 = vmatpush1.msra.mxu0 0.0
        %3681 = vmatprep.subr.mxu0 0.0
        %3682 = vmatpush1.msra.mxu0 0.0
        %3683 = vmatprep.subr.mxu0 0.0
        %3684 = vmatpush1.msra.mxu0 0.0
        %3685 = vmatprep.subr.mxu0 0.0
        %3686 = vmatpush1.msra.mxu0 0.0
        %3687 = vmatprep.subr.mxu0 0.0
        %3688 = vmatpush1.msra.mxu0 0.0
        %3689 = vmatprep.subr.mxu0 0.0
        %3690 = vmatpush1.msra.mxu0 0.0
        %3691 = vmatprep.subr.mxu0 0.0
        %3692 = vmatpush1.msra.mxu0 0.0
        %3693 = vmatprep.subr.mxu0 0.0
        %3694 = vmatpush1.msra.mxu0 0.0
        %3695 = vmatprep.subr.mxu0 0.0
        %3696 = vmatpush1.msra.mxu0 0.0
        %3697 = vmatprep.subr.mxu0 0.0
        %3698 = vmatpush1.msra.mxu0 0.0
        %3699 = vmatprep.subr.mxu0 0.0
        %3700 = vmatpush1.msra.mxu0 0.0
        %3701 = vmatprep.subr.mxu0 0.0
        %3702 = vmatpush1.msra.mxu0 0.0
        %3703 = vmatprep.subr.mxu0 0.0
        %3704 = vmatpush1.msra.mxu0 0.0
        %3705 = vmatprep.mubr.f32.mxu0 0.0
        %v3706 = vand.u32 %v3635, 4294901760
        %v3707 = vsub.f32 %v3635, %v3706
        %v3708 = vand.u32 %v3707, 4294901760
        %v3709 = vsub.f32 %v3707, %v3708
        %v3710 = vand.u32 %v3709, 4294901760
        %3711 = vmatmul.mubr.f32.gmra.mrb[0].mxu0 %v3710
        %v3712 = vpop.f32.mrb[0].mxu0
        %v3713 = vadd.f32 0.0, %v3712
        %v3714 = vpop.f32.mrb[0].mxu0
        %3715 = vdwg.mxu0
        %3716 = vmatprep.subr.mxu0 0.0
        %v3717 = vand.u32 %v3638, 4294901760
        %v3718 = vsub.f32 %v3638, %v3717
        %v3719 = vand.u32 %v3718, 4294901760
        %v3720 = vsub.f32 %v3718, %v3719
        %v3721 = vand.u32 %v3720, 4294901760
        %3722 = vmatpush1.msra.mxu0 %v3721
        %3723 = vmatprep.subr.mxu0 0.0
        %3724 = vmatpush1.msra.mxu0 0.0
        %3725 = vmatprep.subr.mxu0 0.0
        %3726 = vmatpush1.msra.mxu0 0.0
        %3727 = vmatprep.subr.mxu0 0.0
        %3728 = vmatpush1.msra.mxu0 0.0
        %3729 = vmatprep.subr.mxu0 0.0
        %3730 = vmatpush1.msra.mxu0 0.0
        %3731 = vmatprep.subr.mxu0 0.0
        %3732 = vmatpush1.msra.mxu0 0.0
        %3733 = vmatprep.subr.mxu0 0.0
        %3734 = vmatpush1.msra.mxu0 0.0
        %3735 = vmatprep.subr.mxu0 0.0
        %3736 = vmatpush1.msra.mxu0 0.0
        %3737 = vmatprep.subr.mxu0 0.0
        %3738 = vmatpush1.msra.mxu0 0.0
        %3739 = vmatprep.subr.mxu0 0.0
        %3740 = vmatpush1.msra.mxu0 0.0
        %3741 = vmatprep.subr.mxu0 0.0
        %3742 = vmatpush1.msra.mxu0 0.0
        %3743 = vmatprep.subr.mxu0 0.0
        %3744 = vmatpush1.msra.mxu0 0.0
        %3745 = vmatprep.subr.mxu0 0.0
        %3746 = vmatpush1.msra.mxu0 0.0
        %3747 = vmatprep.subr.mxu0 0.0
        %3748 = vmatpush1.msra.mxu0 0.0
        %3749 = vmatprep.subr.mxu0 0.0
        %3750 = vmatpush1.msra.mxu0 0.0
        %3751 = vmatprep.subr.mxu0 0.0
        %3752 = vmatpush1.msra.mxu0 0.0
        %3753 = vmatprep.subr.mxu0 0.0
        %3754 = vmatpush1.msra.mxu0 0.0
        %3755 = vmatprep.subr.mxu0 0.0
        %3756 = vmatpush1.msra.mxu0 0.0
        %3757 = vmatprep.subr.mxu0 0.0
        %3758 = vmatpush1.msra.mxu0 0.0
        %3759 = vmatprep.subr.mxu0 0.0
        %3760 = vmatpush1.msra.mxu0 0.0
        %3761 = vmatprep.subr.mxu0 0.0
        %3762 = vmatpush1.msra.mxu0 0.0
        %3763 = vmatprep.subr.mxu0 0.0
        %3764 = vmatpush1.msra.mxu0 0.0
        %3765 = vmatprep.subr.mxu0 0.0
        %3766 = vmatpush1.msra.mxu0 0.0
        %3767 = vmatprep.subr.mxu0 0.0
        %3768 = vmatpush1.msra.mxu0 0.0
        %3769 = vmatprep.subr.mxu0 0.0
        %3770 = vmatpush1.msra.mxu0 0.0
        %3771 = vmatprep.subr.mxu0 0.0
        %3772 = vmatpush1.msra.mxu0 0.0
        %3773 = vmatprep.subr.mxu0 0.0
        %3774 = vmatpush1.msra.mxu0 0.0
        %3775 = vmatprep.subr.mxu0 0.0
        %3776 = vmatpush1.msra.mxu0 0.0
        %3777 = vmatprep.subr.mxu0 0.0
        %3778 = vmatpush1.msra.mxu0 0.0
        %3779 = vmatprep.subr.mxu0 0.0
        %3780 = vmatpush1.msra.mxu0 0.0
        %3781 = vmatprep.subr.mxu0 0.0
        %3782 = vmatpush1.msra.mxu0 0.0
        %3783 = vmatprep.subr.mxu0 0.0
        %3784 = vmatpush1.msra.mxu0 0.0
        %3785 = vmatprep.mubr.f32.mxu0 0.0
        %v3786 = vand.u32 %v3635, 4294901760
        %3787 = vmatmul.mubr.f32.gmra.mrb[0].mxu0 %v3786
        %v3788 = vpop.f32.mrb[0].mxu0
        %v3789 = vadd.f32 %v3713, %v3788
        %v3790 = vpop.f32.mrb[0].mxu0
        %3791 = vdwg.mxu0
        %3792 = vmatprep.subr.mxu0 0.0
        %v3793 = vand.u32 %v3638, 4294901760
        %v3794 = vsub.f32 %v3638, %v3793
        %3795 = vmatpush1.msra.mxu0 %v3794
        %3796 = vmatprep.subr.mxu0 0.0
        %3797 = vmatpush1.msra.mxu0 0.0
        %3798 = vmatprep.subr.mxu0 0.0
        %3799 = vmatpush1.msra.mxu0 0.0
        %3800 = vmatprep.subr.mxu0 0.0
        %3801 = vmatpush1.msra.mxu0 0.0
        %3802 = vmatprep.subr.mxu0 0.0
        %3803 = vmatpush1.msra.mxu0 0.0
        %3804 = vmatprep.subr.mxu0 0.0
        %3805 = vmatpush1.msra.mxu0 0.0
        %3806 = vmatprep.subr.mxu0 0.0
        %3807 = vmatpush1.msra.mxu0 0.0
        %3808 = vmatprep.subr.mxu0 0.0
        %3809 = vmatpush1.msra.mxu0 0.0
        %3810 = vmatprep.subr.mxu0 0.0
        %3811 = vmatpush1.msra.mxu0 0.0
        %3812 = vmatprep.subr.mxu0 0.0
        %3813 = vmatpush1.msra.mxu0 0.0
        %3814 = vmatprep.subr.mxu0 0.0
        %3815 = vmatpush1.msra.mxu0 0.0
        %3816 = vmatprep.subr.mxu0 0.0
        %3817 = vmatpush1.msra.mxu0 0.0
        %3818 = vmatprep.subr.mxu0 0.0
        %3819 = vmatpush1.msra.mxu0 0.0
        %3820 = vmatprep.subr.mxu0 0.0
        %3821 = vmatpush1.msra.mxu0 0.0
        %3822 = vmatprep.subr.mxu0 0.0
        %3823 = vmatpush1.msra.mxu0 0.0
        %3824 = vmatprep.subr.mxu0 0.0
        %3825 = vmatpush1.msra.mxu0 0.0
        %3826 = vmatprep.subr.mxu0 0.0
        %3827 = vmatpush1.msra.mxu0 0.0
        %3828 = vmatprep.subr.mxu0 0.0
        %3829 = vmatpush1.msra.mxu0 0.0
        %3830 = vmatprep.subr.mxu0 0.0
        %3831 = vmatpush1.msra.mxu0 0.0
        %3832 = vmatprep.subr.mxu0 0.0
        %3833 = vmatpush1.msra.mxu0 0.0
        %3834 = vmatprep.subr.mxu0 0.0
        %3835 = vmatpush1.msra.mxu0 0.0
        %3836 = vmatprep.subr.mxu0 0.0
        %3837 = vmatpush1.msra.mxu0 0.0
        %3838 = vmatprep.subr.mxu0 0.0
        %3839 = vmatpush1.msra.mxu0 0.0
        %3840 = vmatprep.subr.mxu0 0.0
        %3841 = vmatpush1.msra.mxu0 0.0
        %3842 = vmatprep.subr.mxu0 0.0
        %3843 = vmatpush1.msra.mxu0 0.0
        %3844 = vmatprep.subr.mxu0 0.0
        %3845 = vmatpush1.msra.mxu0 0.0
        %3846 = vmatprep.subr.mxu0 0.0
        %3847 = vmatpush1.msra.mxu0 0.0
        %3848 = vmatprep.subr.mxu0 0.0
        %3849 = vmatpush1.msra.mxu0 0.0
        %3850 = vmatprep.subr.mxu0 0.0
        %3851 = vmatpush1.msra.mxu0 0.0
        %3852 = vmatprep.subr.mxu0 0.0
        %3853 = vmatpush1.msra.mxu0 0.0
        %3854 = vmatprep.subr.mxu0 0.0
        %3855 = vmatpush1.msra.mxu0 0.0
        %3856 = vmatprep.subr.mxu0 0.0
        %3857 = vmatpush1.msra.mxu0 0.0
        %3858 = vmatprep.mubr.f32.mxu0 0.0
        %v3859 = vand.u32 %v3635, 4294901760
        %v3860 = vsub.f32 %v3635, %v3859
        %3861 = vmatmul.mubr.f32.gmra.mrb[0].mxu0 %v3860
        %v3862 = vpop.f32.mrb[0].mxu0
        %v3863 = vadd.f32 %v3789, %v3862
        %v3864 = vpop.f32.mrb[0].mxu0
        %3865 = vdwg.mxu0
        %3866 = vmatprep.subr.mxu0 0.0
        %v3867 = vand.u32 %v3638, 4294901760
        %3868 = vmatpush1.msra.mxu0 %v3867
        %3869 = vmatprep.subr.mxu0 0.0
        %3870 = vmatpush1.msra.mxu0 0.0
        %3871 = vmatprep.subr.mxu0 0.0
        %3872 = vmatpush1.msra.mxu0 0.0
        %3873 = vmatprep.subr.mxu0 0.0
        %3874 = vmatpush1.msra.mxu0 0.0
        %3875 = vmatprep.subr.mxu0 0.0
        %3876 = vmatpush1.msra.mxu0 0.0
        %3877 = vmatprep.subr.mxu0 0.0
        %3878 = vmatpush1.msra.mxu0 0.0
        %3879 = vmatprep.subr.mxu0 0.0
        %3880 = vmatpush1.msra.mxu0 0.0
        %3881 = vmatprep.subr.mxu0 0.0
        %3882 = vmatpush1.msra.mxu0 0.0
        %3883 = vmatprep.subr.mxu0 0.0
        %3884 = vmatpush1.msra.mxu0 0.0
        %3885 = vmatprep.subr.mxu0 0.0
        %3886 = vmatpush1.msra.mxu0 0.0
        %3887 = vmatprep.subr.mxu0 0.0
        %3888 = vmatpush1.msra.mxu0 0.0
        %3889 = vmatprep.subr.mxu0 0.0
        %3890 = vmatpush1.msra.mxu0 0.0
        %3891 = vmatprep.subr.mxu0 0.0
        %3892 = vmatpush1.msra.mxu0 0.0
        %3893 = vmatprep.subr.mxu0 0.0
        %3894 = vmatpush1.msra.mxu0 0.0
        %3895 = vmatprep.subr.mxu0 0.0
        %3896 = vmatpush1.msra.mxu0 0.0
        %3897 = vmatprep.subr.mxu0 0.0
        %3898 = vmatpush1.msra.mxu0 0.0
        %3899 = vmatprep.subr.mxu0 0.0
        %3900 = vmatpush1.msra.mxu0 0.0
        %3901 = vmatprep.subr.mxu0 0.0
        %3902 = vmatpush1.msra.mxu0 0.0
        %3903 = vmatprep.subr.mxu0 0.0
        %3904 = vmatpush1.msra.mxu0 0.0
        %3905 = vmatprep.subr.mxu0 0.0
        %3906 = vmatpush1.msra.mxu0 0.0
        %3907 = vmatprep.subr.mxu0 0.0
        %3908 = vmatpush1.msra.mxu0 0.0
        %3909 = vmatprep.subr.mxu0 0.0
        %3910 = vmatpush1.msra.mxu0 0.0
        %3911 = vmatprep.subr.mxu0 0.0
        %3912 = vmatpush1.msra.mxu0 0.0
        %3913 = vmatprep.subr.mxu0 0.0
        %3914 = vmatpush1.msra.mxu0 0.0
        %3915 = vmatprep.subr.mxu0 0.0
        %3916 = vmatpush1.msra.mxu0 0.0
        %3917 = vmatprep.subr.mxu0 0.0
        %3918 = vmatpush1.msra.mxu0 0.0
        %3919 = vmatprep.subr.mxu0 0.0
        %3920 = vmatpush1.msra.mxu0 0.0
        %3921 = vmatprep.subr.mxu0 0.0
        %3922 = vmatpush1.msra.mxu0 0.0
        %3923 = vmatprep.subr.mxu0 0.0
        %3924 = vmatpush1.msra.mxu0 0.0
        %3925 = vmatprep.subr.mxu0 0.0
        %3926 = vmatpush1.msra.mxu0 0.0
        %3927 = vmatprep.subr.mxu0 0.0
        %3928 = vmatpush1.msra.mxu0 0.0
        %3929 = vmatprep.subr.mxu0 0.0
        %3930 = vmatpush1.msra.mxu0 0.0
        %3931 = vmatprep.mubr.f32.mxu0 0.0
        %v3932 = vand.u32 %v3635, 4294901760
        %v3933 = vsub.f32 %v3635, %v3932
        %v3934 = vand.u32 %v3933, 4294901760
        %3935 = vmatmul.mubr.f32.gmra.mrb[0].mxu0 %v3934
        %v3936 = vpop.f32.mrb[0].mxu0
        %v3937 = vadd.f32 %v3863, %v3936
        %v3938 = vpop.f32.mrb[0].mxu0
        %3939 = vdwg.mxu0
        %3940 = vmatprep.subr.mxu0 0.0
        %v3941 = vand.u32 %v3638, 4294901760
        %v3942 = vsub.f32 %v3638, %v3941
        %v3943 = vand.u32 %v3942, 4294901760
        %3944 = vmatpush1.msra.mxu0 %v3943
        %3945 = vmatprep.subr.mxu0 0.0
        %3946 = vmatpush1.msra.mxu0 0.0
        %3947 = vmatprep.subr.mxu0 0.0
        %3948 = vmatpush1.msra.mxu0 0.0
        %3949 = vmatprep.subr.mxu0 0.0
        %3950 = vmatpush1.msra.mxu0 0.0
        %3951 = vmatprep.subr.mxu0 0.0
        %3952 = vmatpush1.msra.mxu0 0.0
        %3953 = vmatprep.subr.mxu0 0.0
        %3954 = vmatpush1.msra.mxu0 0.0
        %3955 = vmatprep.subr.mxu0 0.0
        %3956 = vmatpush1.msra.mxu0 0.0
        %3957 = vmatprep.subr.mxu0 0.0
        %3958 = vmatpush1.msra.mxu0 0.0
        %3959 = vmatprep.subr.mxu0 0.0
        %3960 = vmatpush1.msra.mxu0 0.0
        %3961 = vmatprep.subr.mxu0 0.0
        %3962 = vmatpush1.msra.mxu0 0.0
        %3963 = vmatprep.subr.mxu0 0.0
        %3964 = vmatpush1.msra.mxu0 0.0
        %3965 = vmatprep.subr.mxu0 0.0
        %3966 = vmatpush1.msra.mxu0 0.0
        %3967 = vmatprep.subr.mxu0 0.0
        %3968 = vmatpush1.msra.mxu0 0.0
        %3969 = vmatprep.subr.mxu0 0.0
        %3970 = vmatpush1.msra.mxu0 0.0
        %3971 = vmatprep.subr.mxu0 0.0
        %3972 = vmatpush1.msra.mxu0 0.0
        %3973 = vmatprep.subr.mxu0 0.0
        %3974 = vmatpush1.msra.mxu0 0.0
        %3975 = vmatprep.subr.mxu0 0.0
        %3976 = vmatpush1.msra.mxu0 0.0
        %3977 = vmatprep.subr.mxu0 0.0
        %3978 = vmatpush1.msra.mxu0 0.0
        %3979 = vmatprep.subr.mxu0 0.0
        %3980 = vmatpush1.msra.mxu0 0.0
        %3981 = vmatprep.subr.mxu0 0.0
        %3982 = vmatpush1.msra.mxu0 0.0
        %3983 = vmatprep.subr.mxu0 0.0
        %3984 = vmatpush1.msra.mxu0 0.0
        %3985 = vmatprep.subr.mxu0 0.0
        %3986 = vmatpush1.msra.mxu0 0.0
        %3987 = vmatprep.subr.mxu0 0.0
        %3988 = vmatpush1.msra.mxu0 0.0
        %3989 = vmatprep.subr.mxu0 0.0
        %3990 = vmatpush1.msra.mxu0 0.0
        %3991 = vmatprep.subr.mxu0 0.0
        %3992 = vmatpush1.msra.mxu0 0.0
        %3993 = vmatprep.subr.mxu0 0.0
        %3994 = vmatpush1.msra.mxu0 0.0
        %3995 = vmatprep.subr.mxu0 0.0
        %3996 = vmatpush1.msra.mxu0 0.0
        %3997 = vmatprep.subr.mxu0 0.0
        %3998 = vmatpush1.msra.mxu0 0.0
        %3999 = vmatprep.subr.mxu0 0.0
        %4000 = vmatpush1.msra.mxu0 0.0
        %4001 = vmatprep.subr.mxu0 0.0
        %4002 = vmatpush1.msra.mxu0 0.0
        %4003 = vmatprep.subr.mxu0 0.0
        %4004 = vmatpush1.msra.mxu0 0.0
        %4005 = vmatprep.subr.mxu0 0.0
        %4006 = vmatpush1.msra.mxu0 0.0
        %4007 = vmatprep.mubr.f32.mxu0 0.0
        %v4008 = vand.u32 %v3635, 4294901760
        %4009 = vmatmul.mubr.f32.gmra.mrb[0].mxu0 %v4008
        %v4010 = vpop.f32.mrb[0].mxu0
        %v4011 = vadd.f32 %v3937, %v4010
        %v4012 = vpop.f32.mrb[0].mxu0
        %4013 = vdwg.mxu0
        %4014 = vmatprep.subr.mxu0 0.0
        %v4015 = vand.u32 %v3638, 4294901760
        %4016 = vmatpush1.msra.mxu0 %v4015
        %4017 = vmatprep.subr.mxu0 0.0
        %4018 = vmatpush1.msra.mxu0 0.0
        %4019 = vmatprep.subr.mxu0 0.0
        %4020 = vmatpush1.msra.mxu0 0.0
        %4021 = vmatprep.subr.mxu0 0.0
        %4022 = vmatpush1.msra.mxu0 0.0
        %4023 = vmatprep.subr.mxu0 0.0
        %4024 = vmatpush1.msra.mxu0 0.0
        %4025 = vmatprep.subr.mxu0 0.0
        %4026 = vmatpush1.msra.mxu0 0.0
        %4027 = vmatprep.subr.mxu0 0.0
        %4028 = vmatpush1.msra.mxu0 0.0
        %4029 = vmatprep.subr.mxu0 0.0
        %4030 = vmatpush1.msra.mxu0 0.0
        %4031 = vmatprep.subr.mxu0 0.0
        %4032 = vmatpush1.msra.mxu0 0.0
        %4033 = vmatprep.subr.mxu0 0.0
        %4034 = vmatpush1.msra.mxu0 0.0
        %4035 = vmatprep.subr.mxu0 0.0
        %4036 = vmatpush1.msra.mxu0 0.0
        %4037 = vmatprep.subr.mxu0 0.0
        %4038 = vmatpush1.msra.mxu0 0.0
        %4039 = vmatprep.subr.mxu0 0.0
        %4040 = vmatpush1.msra.mxu0 0.0
        %4041 = vmatprep.subr.mxu0 0.0
        %4042 = vmatpush1.msra.mxu0 0.0
        %4043 = vmatprep.subr.mxu0 0.0
        %4044 = vmatpush1.msra.mxu0 0.0
        %4045 = vmatprep.subr.mxu0 0.0
        %4046 = vmatpush1.msra.mxu0 0.0
        %4047 = vmatprep.subr.mxu0 0.0
        %4048 = vmatpush1.msra.mxu0 0.0
        %4049 = vmatprep.subr.mxu0 0.0
        %4050 = vmatpush1.msra.mxu0 0.0
        %4051 = vmatprep.subr.mxu0 0.0
        %4052 = vmatpush1.msra.mxu0 0.0
        %4053 = vmatprep.subr.mxu0 0.0
        %4054 = vmatpush1.msra.mxu0 0.0
        %4055 = vmatprep.subr.mxu0 0.0
        %4056 = vmatpush1.msra.mxu0 0.0
        %4057 = vmatprep.subr.mxu0 0.0
        %4058 = vmatpush1.msra.mxu0 0.0
        %4059 = vmatprep.subr.mxu0 0.0
        %4060 = vmatpush1.msra.mxu0 0.0
        %4061 = vmatprep.subr.mxu0 0.0
        %4062 = vmatpush1.msra.mxu0 0.0
        %4063 = vmatprep.subr.mxu0 0.0
        %4064 = vmatpush1.msra.mxu0 0.0
        %4065 = vmatprep.subr.mxu0 0.0
        %4066 = vmatpush1.msra.mxu0 0.0
        %4067 = vmatprep.subr.mxu0 0.0
        %4068 = vmatpush1.msra.mxu0 0.0
        %4069 = vmatprep.subr.mxu0 0.0
        %4070 = vmatpush1.msra.mxu0 0.0
        %4071 = vmatprep.subr.mxu0 0.0
        %4072 = vmatpush1.msra.mxu0 0.0
        %4073 = vmatprep.subr.mxu0 0.0
        %4074 = vmatpush1.msra.mxu0 0.0
        %4075 = vmatprep.subr.mxu0 0.0
        %4076 = vmatpush1.msra.mxu0 0.0
        %4077 = vmatprep.subr.mxu0 0.0
        %4078 = vmatpush1.msra.mxu0 0.0
        %4079 = vmatprep.mubr.f32.mxu0 0.0
        %v4080 = vand.u32 %v3635, 4294901760
        %4081 = vmatmul.mubr.f32.gmra.mrb[0].mxu0 %v4080
        %v4082 = vpop.f32.mrb[0].mxu0
        %v4083 = vadd.f32 %v4011, %v4082
        %v4084 = vpop.f32.mrb[0].mxu0
        %4085 = vdwg.mxu0
        %v4086 = vmul.f32 %v4083, 0.00390625
        %v4087 = vmul.f32 %v4086, %v4086
        %4089 = vrot.lane.b32.xlu0 %v4087, 1
        %v4090 = vpop.permute.xlu0 %4089
        %v4092 = vsub.f32 %v4086, %v4090
        %v4093 = vmax.f32 %v4092, 0.0
        %v4094 = vadd.f32 %v4093, 1e-05
        %v4095 = vrsqrt.pop %v4094
        %4097 = vrot.lane.b32.xlu0 %v4095, 127
        %v4098 = vpop.permute.xlu0 %4097
        %v4100 = vmul.f32 %v3165, %v4098
        %v4101 = vmul.f32 %v4086, %v4100
        %v4102 = vsub.f32 %v3166, %v4101
        %4104 = vset.pattern.permute.xlu0 0
        %4105 = vperm.xlu0 %4104, %v4100
        %v4106 = vpop.permute.xlu0 %4105
        %v4108 = vmul.f32 %v3161, %v4106
        %v4109 = vmul.f32 %v3163, %v4106
        %4111 = vset.pattern.permute.xlu0 0
        %4112 = vperm.xlu0 %4111, %v4102
        %v4113 = vpop.permute.xlu0 %4112
        %v4115 = vadd.f32 %v4108, %v4113
        %v4116 = vadd.f32 %v4109, %v4113
        %v4118 = vadd.f32 %v4115, %v598
        %v4119 = vadd.f32 %v4116, %v617
        %v4122 = vcombine.low %v4118, %v4119
        %4124 = vst [vmem:[%s541] sm:$0xff] %v4122
        %s4125 = sand.u32 %s401, 1
        %s4126 = scalar_lea.sflag [#allocation3], %s4125
        %s4127 = sand.u32 %s401, 1
        %s4128 = smul.addr %s4127, 8
        %s4129 = scalar_lea.vmem [#allocation2], %s4128
        // Predicated region
        $region89: #{tpu_custom_call.1} parent=87 // pred_check
          %p4130 = pneg %p411
        $region90: #{tpu_custom_call.1} parent=87 // pred_check_branch
          %4132 = sbr.rel (%p4130) target = $region92
        $region91: #{tpu_custom_call.1} parent=87 // pred_region
          %s4134 = ssub.s32 128, 128
          %4135 = vsyncadd %s4126, %s4134
          %s4136 = smul.addr %s31, 2
          %s4137 = smul.addr %s4136, 64
          %s4138 = scalar_lea.hbm %s17, %s4137
          %s4140 = sshll.u32 %s4129, 4
          %s4141 = int_to_ptr.vmem [resolvable:$true] %s4140
          %4143 = dma.vmem_to_hbm [thread:$0]  %s4141, 128, %s4138, %s4126
        $region92: #{tpu_custom_call.1} parent=87 // pred_fallthru
          _
      $region88: #{tpu_custom_call.1} parent=5 // pred_fallthru
        _
      %p4144 = scmp.le.s32.totalorder 2, %s26
      // Predicated region
      $region93: #{tpu_custom_call.1} parent=5 // pred_check
        %p4145 = pneg %p4144
      $region94: #{tpu_custom_call.1} parent=5 // pred_check_branch
        %4147 = sbr.rel (%p4145) target = $region96
      $region95: #{tpu_custom_call.1} parent=5 // pred_region
        %s4148 = ssub.s32 %s26, 2
        // Predicated region
        $region97: #{tpu_custom_call.1} parent=95 // pred_check
          %p4149 = pneg %p417
        $region98: #{tpu_custom_call.1} parent=95 // pred_check_branch
          %4151 = sbr.rel (%p4149) target = $region100
        $region99: #{tpu_custom_call.1} parent=95 // pred_region
          %s4152 = sand.u32 %s402, 1
          %s4153 = scalar_lea.sflag [#allocation3], %s4152
          %s4154 = sand.u32 %s402, 1
          %s4155 = smul.addr %s4154, 8
          %s4156 = scalar_lea.vmem [#allocation2], %s4155
          %4157 = dma.done %s4153, 128
        $region100: #{tpu_custom_call.1} parent=95 // pred_fallthru
          _
      $region96: #{tpu_custom_call.1} parent=5 // pred_fallthru
        _
    $region6: #{tpu_custom_call.1} parent=1 // loop_footer
      %s30 = sadd.s32 1, %s26
    $region7: #{tpu_custom_call.1} parent=1 // loop_footer_branch
      %25 = sbr.rel target = $region3
    $region8: #{tpu_custom_call.1} parent=1 // loop_exit
      _
    %4158 = vsyncpa [#allocation3], 1
    %s4159 = scalar_lea.sflag [#allocation3], 1
    %4160 = vsyncpa %s4159, 1

</llo_original>
